<compile_context>
chip_gen: v6e
topology: v6e:2x2x1
jax: 0.10.0
libtpu: 0.0.40
codegen_flags: <defaults>
</compile_context>

<pallas_src>
import jax
import jax.numpy as jnp
from jax import lax
from jax.experimental import pallas as pl
from jax.experimental.pallas import tpu as pltpu

N_SUB = 4  # RK4 sub-steps per output time interval


def _cnf_kernel(ts_ref, b2_ref, csum_ref, z0_ref, logp0_ref,
                w1_ref, b1_ref, wt_ref, w2t_ref, c_ref, out_ref):
    T, N, dp1 = out_ref.shape
    d = dp1 - 1
    H = w1_ref.shape[1]

    # ---- Hoist all invariant reads / broadcasts once (rhs is inlined ~64x). ----
    b1_b = jnp.broadcast_to(b1_ref[...], (N, H))               # [N, H]
    wt_b = jnp.broadcast_to(wt_ref[...], (N, H))               # [N, H]
    c_b = jnp.broadcast_to(c_ref[...], (N, H))                 # [N, H]
    w1_b = [jnp.broadcast_to(w1_ref[j:j + 1, :], (N, H)) for j in range(d)]
    w2_b = [jnp.broadcast_to(w2t_ref[j:j + 1, :], (N, H)) for j in range(d)]
    b2 = [b2_ref[j] for j in range(d)]                         # scalars
    neg_csum = -csum_ref[0]                                    # -sum_k c_k

    def rhs(z_cols, t):
        # First layer: contraction dim d is tiny -> VPU FMAs (no MXU).
        pre = b1_b + t * wt_b                                  # [N, H]
        for j in range(d):
            pre = pre + z_cols[j] * w1_b[j]                    # [N,1]*[N,H]
        h = jnp.tanh(pre)                                      # EUP
        h2 = h * h
        # Second layer + exact trace: VPU products + independent XLU reduces.
        dz = tuple(jnp.sum(h * w2_b[j], axis=-1, keepdims=True) + b2[j]
                   for j in range(d))                          # d x [N, 1]
        dlogp = neg_csum + jnp.sum(h2 * c_b, axis=-1, keepdims=True)  # [N, 1]
        return dz, dlogp

    # odeint semantics: trajectory at ts[0] is the initial condition.
    z_cols = tuple(z0_ref[:, j:j + 1] for j in range(d))       # d x [N, 1]
    logp = logp0_ref[...]                                      # [N, 1]
    out_ref[0] = jnp.concatenate(z_cols + (logp,), axis=-1)    # [N, d+1]

    # Fully static unroll over the (tiny, static) T-1 intervals so the
    # scheduler can overlap stores / ts reads with the next interval's compute.
    for i in range(1, T):
        t0 = ts_ref[i - 1]
        t1 = ts_ref[i]
        dt = (t1 - t0) / N_SUB
        for k in range(N_SUB):  # static unroll: tiny fixed trip count
            t = t0 + k * dt
            k1z, k1l = rhs(z_cols, t)
            k2z, k2l = rhs(tuple(z + 0.5 * dt * g for z, g in zip(z_cols, k1z)),
                           t + 0.5 * dt)
            k3z, k3l = rhs(tuple(z + 0.5 * dt * g for z, g in zip(z_cols, k2z)),
                           t + 0.5 * dt)
            k4z, k4l = rhs(tuple(z + dt * g for z, g in zip(z_cols, k3z)),
                           t + dt)
            z_cols = tuple(z + (dt / 6.0) * (a + 2.0 * b + 2.0 * c2 + e)
                           for z, a, b, c2, e in zip(z_cols, k1z, k2z, k3z, k4z))
            logp = logp + (dt / 6.0) * (k1l + 2.0 * k2l + 2.0 * k3l + k4l)
        out_ref[i] = jnp.concatenate(z_cols + (logp,), axis=-1)


def cnf_forward(ts, z0, logp_diff_t0, params):
    """Pallas CNF forward. Returns (zt [T,N,d], logp_t [T,N,1])."""
    W1, b1, wt, W2, b2 = params
    T = ts.shape[0]
    N, d = z0.shape
    H = W1.shape[1]

    W1f = W1.astype(jnp.float32)                      # [d, H]
    W2t = W2.T.astype(jnp.float32)                    # [d, H] row j = W2[:, j]
    b1r = b1.reshape(1, H).astype(jnp.float32)
    wtr = wt.reshape(1, H).astype(jnp.float32)
    b2v = b2.reshape(d).astype(jnp.float32)           # SMEM scalars

    # Exact trace helper: c_k = sum_i W1[i,k] * W2[k,i]
    c = jnp.einsum('ik,ki->k', W1f, W2.astype(jnp.float32))     # [H]
    cr = c.reshape(1, H)
    csum = jnp.sum(c).reshape(1)                                 # SMEM scalar

    out = pl.pallas_call(
        _cnf_kernel,
        out_shape=jax.ShapeDtypeStruct((T, N, d + 1), jnp.float32),
        in_specs=[
            pl.BlockSpec(memory_space=pltpu.MemorySpace.SMEM),  # ts    [T]
            pl.BlockSpec(memory_space=pltpu.MemorySpace.SMEM),  # b2    [d]
            pl.BlockSpec(memory_space=pltpu.MemorySpace.SMEM),  # csum  [1]
            pl.BlockSpec(memory_space=pltpu.MemorySpace.VMEM),  # z0    [N,d]
            pl.BlockSpec(memory_space=pltpu.MemorySpace.VMEM),  # logp0 [N,1]
            pl.BlockSpec(memory_space=pltpu.MemorySpace.VMEM),  # W1    [d,H]
            pl.BlockSpec(memory_space=pltpu.MemorySpace.VMEM),  # b1    [1,H]
            pl.BlockSpec(memory_space=pltpu.MemorySpace.VMEM),  # wt    [1,H]
            pl.BlockSpec(memory_space=pltpu.MemorySpace.VMEM),  # W2^T  [d,H]
            pl.BlockSpec(memory_space=pltpu.MemorySpace.VMEM),  # c     [1,H]
        ],
        out_specs=pl.BlockSpec(memory_space=pltpu.MemorySpace.VMEM),
    )(ts.astype(jnp.float32), b2v, csum,
      z0.astype(jnp.float32), logp_diff_t0.astype(jnp.float32),
      W1f, b1r, wtr, W2t, cr)

    return out[:, :, :d], out[:, :, d:d + 1]


def cnf_forward_ref(ts, z0, logp_diff_t0, params):
    """Pure-JAX reference (same fixed-step RK4, same net, unfused math)."""
    W1, b1, wt, W2, b2 = params
    H = W1.shape[1]
    d = z0.shape[1]
    b1r = b1.reshape(1, H); wtr = wt.reshape(1, H); b2r = b2.reshape(1, d)
    c = jnp.einsum('ik,ki->k', W1, W2).reshape(1, H)

    def rhs(z, t):
        h = jnp.tanh(z @ W1 + b1r + t * wtr)
        dz = h @ W2 + b2r
        dlogp = -jnp.sum((1.0 - h * h) * c, axis=-1, keepdims=True)
        return dz, dlogp

    zt = [z0]
    lt = [logp_diff_t0]
    z, logp = z0, logp_diff_t0
    for i in range(1, ts.shape[0]):
        t0, t1 = ts[i - 1], ts[i]
        dt = (t1 - t0) / N_SUB
        for k in range(N_SUB):
            t = t0 + k * dt
            k1z, k1l = rhs(z, t)
            k2z, k2l = rhs(z + 0.5 * dt * k1z, t + 0.5 * dt)
            k3z, k3l = rhs(z + 0.5 * dt * k2z, t + 0.5 * dt)
            k4z, k4l = rhs(z + dt * k3z, t + dt)
            z = z + (dt / 6.0) * (k1z + 2.0 * k2z + 2.0 * k3z + k4z)
            logp = logp + (dt / 6.0) * (k1l + 2.0 * k2l + 2.0 * k3l + k4l)
        zt.append(z)
        lt.append(logp)
    return jnp.stack(zt, 0), jnp.stack(lt, 0)


if __name__ == "__main__":
    T, N, d, H = 5, 8, 2, 32

    key = jax.random.PRNGKey(0)
    k1, k2, k3, k4, k5, kz = jax.random.split(key, 6)
    W1 = 0.5 * jax.random.normal(k1, (d, H), jnp.float32)
    b1 = 0.1 * jax.random.normal(k2, (H,), jnp.float32)
    wt = 0.3 * jax.random.normal(k3, (H,), jnp.float32)
    W2 = 0.5 * jax.random.normal(k4, (H, d), jnp.float32)
    b2 = 0.1 * jax.random.normal(k5, (d,), jnp.float32)
    params = (W1, b1, wt, W2, b2)

    ts = jnp.linspace(0.0, 1.0, T, dtype=jnp.float32)
    z0 = jax.random.normal(kz, (N, d), jnp.float32)
    logp_diff_t0 = jnp.zeros((N, 1), jnp.float32)

    zt, logp_t = cnf_forward(ts, z0, logp_diff_t0, params)
    jax.block_until_ready((zt, logp_t))

    zt_ref, logp_ref = cnf_forward_ref(ts, z0, logp_diff_t0, params)
    assert zt.shape == (T, N, d) and logp_t.shape == (T, N, 1)
    assert bool(jnp.all(jnp.isfinite(zt))) and bool(jnp.all(jnp.isfinite(logp_t)))
    assert jnp.allclose(zt, zt_ref, atol=1e-3, rtol=1e-3)
    assert jnp.allclose(logp_t, logp_ref, atol=1e-3, rtol=1e-3)

    print("KERNEL_OK")
</pallas_src>

<mosaic_0001>
module attributes {stable_mosaic.version = 11 : i64} {
  func.func @_cnf_kernel(%arg0: memref<5xf32, #tpu.memory_space<smem>>, %arg1: memref<2xf32, #tpu.memory_space<smem>>, %arg2: memref<1xf32, #tpu.memory_space<smem>>, %arg3: memref<8x2xf32, #tpu.memory_space<vmem>>, %arg4: memref<8x1xf32, #tpu.memory_space<vmem>>, %arg5: memref<2x32xf32, #tpu.memory_space<vmem>>, %arg6: memref<1x32xf32, #tpu.memory_space<vmem>>, %arg7: memref<1x32xf32, #tpu.memory_space<vmem>>, %arg8: memref<2x32xf32, #tpu.memory_space<vmem>>, %arg9: memref<1x32xf32, #tpu.memory_space<vmem>>, %arg10: memref<5x8x3xf32, #tpu.memory_space<vmem>>) attributes {dimension_semantics = [], scalar_prefetch = 0 : i64, scratch_operands = 0 : i64, tpu.core_type = #tpu.core_type<tc>} {
    %c0 = arith.constant 0 : index
    %c0_0 = arith.constant 0 : index
    %0 = vector.load %arg6[%c0, %c0_0] : memref<1x32xf32, #tpu.memory_space<vmem>>, vector<1x32xf32>
    %1 = vector.shape_cast %0 : vector<1x32xf32> to vector<1x32xf32>
    %2 = vector.broadcast %1 : vector<1x32xf32> to vector<8x32xf32>
    %c0_1 = arith.constant 0 : index
    %c0_2 = arith.constant 0 : index
    %3 = vector.load %arg7[%c0_1, %c0_2] : memref<1x32xf32, #tpu.memory_space<vmem>>, vector<1x32xf32>
    %4 = vector.shape_cast %3 : vector<1x32xf32> to vector<1x32xf32>
    %5 = vector.broadcast %4 : vector<1x32xf32> to vector<8x32xf32>
    %c0_3 = arith.constant 0 : index
    %c0_4 = arith.constant 0 : index
    %6 = vector.load %arg9[%c0_3, %c0_4] : memref<1x32xf32, #tpu.memory_space<vmem>>, vector<1x32xf32>
    %7 = vector.shape_cast %6 : vector<1x32xf32> to vector<1x32xf32>
    %8 = vector.broadcast %7 : vector<1x32xf32> to vector<8x32xf32>
    %c0_5 = arith.constant 0 : index
    %c0_6 = arith.constant 0 : index
    %9 = vector.load %arg5[%c0_5, %c0_6] : memref<2x32xf32, #tpu.memory_space<vmem>>, vector<1x32xf32>
    %10 = vector.shape_cast %9 : vector<1x32xf32> to vector<1x32xf32>
    %11 = vector.broadcast %10 : vector<1x32xf32> to vector<8x32xf32>
    %c1 = arith.constant 1 : index
    %c0_7 = arith.constant 0 : index
    %12 = vector.load %arg5[%c1, %c0_7] : memref<2x32xf32, #tpu.memory_space<vmem>>, vector<1x32xf32>
    %13 = vector.shape_cast %12 : vector<1x32xf32> to vector<1x32xf32>
    %14 = vector.broadcast %13 : vector<1x32xf32> to vector<8x32xf32>
    %c0_8 = arith.constant 0 : index
    %c0_9 = arith.constant 0 : index
    %15 = vector.load %arg8[%c0_8, %c0_9] : memref<2x32xf32, #tpu.memory_space<vmem>>, vector<1x32xf32>
    %16 = vector.shape_cast %15 : vector<1x32xf32> to vector<1x32xf32>
    %17 = vector.broadcast %16 : vector<1x32xf32> to vector<8x32xf32>
    %c1_10 = arith.constant 1 : index
    %c0_11 = arith.constant 0 : index
    %18 = vector.load %arg8[%c1_10, %c0_11] : memref<2x32xf32, #tpu.memory_space<vmem>>, vector<1x32xf32>
    %19 = vector.shape_cast %18 : vector<1x32xf32> to vector<1x32xf32>
    %20 = vector.broadcast %19 : vector<1x32xf32> to vector<8x32xf32>
    %c0_12 = arith.constant 0 : index
    %21 = memref.load %arg1[%c0_12] : memref<2xf32, #tpu.memory_space<smem>>
    %c1_13 = arith.constant 1 : index
    %22 = memref.load %arg1[%c1_13] : memref<2xf32, #tpu.memory_space<smem>>
    %c0_14 = arith.constant 0 : index
    %23 = memref.load %arg2[%c0_14] : memref<1xf32, #tpu.memory_space<smem>>
    %cst = arith.constant 0.000000e+00 : f32
    %24 = arith.subf %cst, %23 : f32
    %c0_15 = arith.constant 0 : index
    %c0_16 = arith.constant 0 : index
    %25 = vector.load %arg3[%c0_15, %c0_16] : memref<8x2xf32, #tpu.memory_space<vmem>>, vector<8x1xf32>
    %c0_17 = arith.constant 0 : index
    %c1_18 = arith.constant 1 : index
    %26 = vector.load %arg3[%c0_17, %c1_18] : memref<8x2xf32, #tpu.memory_space<vmem>>, vector<8x1xf32>
    %c0_19 = arith.constant 0 : index
    %c0_20 = arith.constant 0 : index
    %27 = vector.load %arg4[%c0_19, %c0_20] : memref<8x1xf32, #tpu.memory_space<vmem>>, vector<8x1xf32>
    %28 = tpu.concatenate %25, %26, %27 in 1 : vector<8x1xf32>, vector<8x1xf32>, vector<8x1xf32> -> vector<8x3xf32>
    %c0_21 = arith.constant 0 : index
    %c0_22 = arith.constant 0 : index
    %c0_23 = arith.constant 0 : index
    %29 = vector.load %arg10[%c0_21, %c0_22, %c0_23] : memref<5x8x3xf32, #tpu.memory_space<vmem>>, vector<1x8x3xf32>
    %30 = vector.shape_cast %29 : vector<1x8x3xf32> to vector<8x3xf32>
    %31 = vector.shape_cast %28 : vector<8x3xf32> to vector<1x8x3xf32>
    tpu.vector_store %arg10[%c0_21, %c0_22, %c0_23], %31 {strides = array<i32>} : memref<5x8x3xf32, #tpu.memory_space<vmem>>, vector<1x8x3xf32>,
    %c0_24 = arith.constant 0 : index
    %32 = memref.load %arg0[%c0_24] : memref<5xf32, #tpu.memory_space<smem>>
    %c1_25 = arith.constant 1 : index
    %33 = memref.load %arg0[%c1_25] : memref<5xf32, #tpu.memory_space<smem>>
    %34 = arith.subf %33, %32 : f32
    %cst_26 = arith.constant 4.000000e+00 : f32
    %35 = arith.divf %34, %cst_26 : f32
    %cst_27 = arith.constant 0.000000e+00 : f32
    %36 = arith.mulf %cst_27, %35 : f32
    %37 = arith.addf %32, %36 : f32
    %38 = vector.broadcast %37 : f32 to vector<8x32xf32>
    %39 = arith.mulf %38, %5 : vector<8x32xf32>
    %40 = arith.addf %2, %39 : vector<8x32xf32>
    %41 = vector.broadcast %25 : vector<8x1xf32> to vector<8x32xf32>
    %42 = arith.mulf %41, %11 : vector<8x32xf32>
    %43 = arith.addf %40, %42 : vector<8x32xf32>
    %44 = vector.broadcast %26 : vector<8x1xf32> to vector<8x32xf32>
    %45 = arith.mulf %44, %14 : vector<8x32xf32>
    %46 = arith.addf %43, %45 : vector<8x32xf32>
    %47 = math.tanh %46 : vector<8x32xf32>
    %48 = arith.mulf %47, %47 : vector<8x32xf32>
    %49 = arith.mulf %47, %17 : vector<8x32xf32>
    %cst_28 = arith.constant dense<0.000000e+00> : vector<8xf32>
    %50 = vector.multi_reduction <add>, %49, %cst_28 [1] : vector<8x32xf32> to vector<8xf32>
    %51 = vector.shape_cast %50 : vector<8xf32> to vector<8x1xf32>
    %52 = vector.broadcast %21 : f32 to vector<8x1xf32>
    %53 = arith.addf %51, %52 : vector<8x1xf32>
    %54 = arith.mulf %47, %20 : vector<8x32xf32>
    %cst_29 = arith.constant dense<0.000000e+00> : vector<8xf32>
    %55 = vector.multi_reduction <add>, %54, %cst_29 [1] : vector<8x32xf32> to vector<8xf32>
    %56 = vector.shape_cast %55 : vector<8xf32> to vector<8x1xf32>
    %57 = vector.broadcast %22 : f32 to vector<8x1xf32>
    %58 = arith.addf %56, %57 : vector<8x1xf32>
    %59 = arith.mulf %48, %8 : vector<8x32xf32>
    %cst_30 = arith.constant dense<0.000000e+00> : vector<8xf32>
    %60 = vector.multi_reduction <add>, %59, %cst_30 [1] : vector<8x32xf32> to vector<8xf32>
    %61 = vector.shape_cast %60 : vector<8xf32> to vector<8x1xf32>
    %62 = vector.broadcast %24 : f32 to vector<8x1xf32>
    %63 = arith.addf %62, %61 : vector<8x1xf32>
    %cst_31 = arith.constant 5.000000e-01 : f32
    %64 = arith.mulf %cst_31, %35 : f32
    %65 = vector.broadcast %64 : f32 to vector<8x1xf32>
    %66 = arith.mulf %65, %53 : vector<8x1xf32>
    %67 = arith.addf %25, %66 : vector<8x1xf32>
    %cst_32 = arith.constant 5.000000e-01 : f32
    %68 = arith.mulf %cst_32, %35 : f32
    %69 = vector.broadcast %68 : f32 to vector<8x1xf32>
    %70 = arith.mulf %69, %58 : vector<8x1xf32>
    %71 = arith.addf %26, %70 : vector<8x1xf32>
    %cst_33 = arith.constant 5.000000e-01 : f32
    %72 = arith.mulf %cst_33, %35 : f32
    %73 = arith.addf %37, %72 : f32
    %74 = vector.broadcast %73 : f32 to vector<8x32xf32>
    %75 = arith.mulf %74, %5 : vector<8x32xf32>
    %76 = arith.addf %2, %75 : vector<8x32xf32>
    %77 = vector.broadcast %67 : vector<8x1xf32> to vector<8x32xf32>
    %78 = arith.mulf %77, %11 : vector<8x32xf32>
    %79 = arith.addf %76, %78 : vector<8x32xf32>
    %80 = vector.broadcast %71 : vector<8x1xf32> to vector<8x32xf32>
    %81 = arith.mulf %80, %14 : vector<8x32xf32>
    %82 = arith.addf %79, %81 : vector<8x32xf32>
    %83 = math.tanh %82 : vector<8x32xf32>
    %84 = arith.mulf %83, %83 : vector<8x32xf32>
    %85 = arith.mulf %83, %17 : vector<8x32xf32>
    %cst_34 = arith.constant dense<0.000000e+00> : vector<8xf32>
    %86 = vector.multi_reduction <add>, %85, %cst_34 [1] : vector<8x32xf32> to vector<8xf32>
    %87 = vector.shape_cast %86 : vector<8xf32> to vector<8x1xf32>
    %88 = vector.broadcast %21 : f32 to vector<8x1xf32>
    %89 = arith.addf %87, %88 : vector<8x1xf32>
    %90 = arith.mulf %83, %20 : vector<8x32xf32>
    %cst_35 = arith.constant dense<0.000000e+00> : vector<8xf32>
    %91 = vector.multi_reduction <add>, %90, %cst_35 [1] : vector<8x32xf32> to vector<8xf32>
    %92 = vector.shape_cast %91 : vector<8xf32> to vector<8x1xf32>
    %93 = vector.broadcast %22 : f32 to vector<8x1xf32>
    %94 = arith.addf %92, %93 : vector<8x1xf32>
    %95 = arith.mulf %84, %8 : vector<8x32xf32>
    %cst_36 = arith.constant dense<0.000000e+00> : vector<8xf32>
    %96 = vector.multi_reduction <add>, %95, %cst_36 [1] : vector<8x32xf32> to vector<8xf32>
    %97 = vector.shape_cast %96 : vector<8xf32> to vector<8x1xf32>
    %98 = vector.broadcast %24 : f32 to vector<8x1xf32>
    %99 = arith.addf %98, %97 : vector<8x1xf32>
    %cst_37 = arith.constant 5.000000e-01 : f32
    %100 = arith.mulf %cst_37, %35 : f32
    %101 = vector.broadcast %100 : f32 to vector<8x1xf32>
    %102 = arith.mulf %101, %89 : vector<8x1xf32>
    %103 = arith.addf %25, %102 : vector<8x1xf32>
    %cst_38 = arith.constant 5.000000e-01 : f32
    %104 = arith.mulf %cst_38, %35 : f32
    %105 = vector.broadcast %104 : f32 to vector<8x1xf32>
    %106 = arith.mulf %105, %94 : vector<8x1xf32>
    %107 = arith.addf %26, %106 : vector<8x1xf32>
    %cst_39 = arith.constant 5.000000e-01 : f32
    %108 = arith.mulf %cst_39, %35 : f32
    %109 = arith.addf %37, %108 : f32
    %110 = vector.broadcast %109 : f32 to vector<8x32xf32>
    %111 = arith.mulf %110, %5 : vector<8x32xf32>
    %112 = arith.addf %2, %111 : vector<8x32xf32>
    %113 = vector.broadcast %103 : vector<8x1xf32> to vector<8x32xf32>
    %114 = arith.mulf %113, %11 : vector<8x32xf32>
    %115 = arith.addf %112, %114 : vector<8x32xf32>
    %116 = vector.broadcast %107 : vector<8x1xf32> to vector<8x32xf32>
    %117 = arith.mulf %116, %14 : vector<8x32xf32>
    %118 = arith.addf %115, %117 : vector<8x32xf32>
    %119 = math.tanh %118 : vector<8x32xf32>
    %120 = arith.mulf %119, %119 : vector<8x32xf32>
    %121 = arith.mulf %119, %17 : vector<8x32xf32>
    %cst_40 = arith.constant dense<0.000000e+00> : vector<8xf32>
    %122 = vector.multi_reduction <add>, %121, %cst_40 [1] : vector<8x32xf32> to vector<8xf32>
    %123 = vector.shape_cast %122 : vector<8xf32> to vector<8x1xf32>
    %124 = vector.broadcast %21 : f32 to vector<8x1xf32>
    %125 = arith.addf %123, %124 : vector<8x1xf32>
    %126 = arith.mulf %119, %20 : vector<8x32xf32>
    %cst_41 = arith.constant dense<0.000000e+00> : vector<8xf32>
    %127 = vector.multi_reduction <add>, %126, %cst_41 [1] : vector<8x32xf32> to vector<8xf32>
    %128 = vector.shape_cast %127 : vector<8xf32> to vector<8x1xf32>
    %129 = vector.broadcast %22 : f32 to vector<8x1xf32>
    %130 = arith.addf %128, %129 : vector<8x1xf32>
    %131 = arith.mulf %120, %8 : vector<8x32xf32>
    %cst_42 = arith.constant dense<0.000000e+00> : vector<8xf32>
    %132 = vector.multi_reduction <add>, %131, %cst_42 [1] : vector<8x32xf32> to vector<8xf32>
    %133 = vector.shape_cast %132 : vector<8xf32> to vector<8x1xf32>
    %134 = vector.broadcast %24 : f32 to vector<8x1xf32>
    %135 = arith.addf %134, %133 : vector<8x1xf32>
    %136 = vector.broadcast %35 : f32 to vector<8x1xf32>
    %137 = arith.mulf %136, %125 : vector<8x1xf32>
    %138 = arith.addf %25, %137 : vector<8x1xf32>
    %139 = vector.broadcast %35 : f32 to vector<8x1xf32>
    %140 = arith.mulf %139, %130 : vector<8x1xf32>
    %141 = arith.addf %26, %140 : vector<8x1xf32>
    %142 = arith.addf %37, %35 : f32
    %143 = vector.broadcast %142 : f32 to vector<8x32xf32>
    %144 = arith.mulf %143, %5 : vector<8x32xf32>
    %145 = arith.addf %2, %144 : vector<8x32xf32>
    %146 = vector.broadcast %138 : vector<8x1xf32> to vector<8x32xf32>
    %147 = arith.mulf %146, %11 : vector<8x32xf32>
    %148 = arith.addf %145, %147 : vector<8x32xf32>
    %149 = vector.broadcast %141 : vector<8x1xf32> to vector<8x32xf32>
    %150 = arith.mulf %149, %14 : vector<8x32xf32>
    %151 = arith.addf %148, %150 : vector<8x32xf32>
    %152 = math.tanh %151 : vector<8x32xf32>
    %153 = arith.mulf %152, %152 : vector<8x32xf32>
    %154 = arith.mulf %152, %17 : vector<8x32xf32>
    %cst_43 = arith.constant dense<0.000000e+00> : vector<8xf32>
    %155 = vector.multi_reduction <add>, %154, %cst_43 [1] : vector<8x32xf32> to vector<8xf32>
    %156 = vector.shape_cast %155 : vector<8xf32> to vector<8x1xf32>
    %157 = vector.broadcast %21 : f32 to vector<8x1xf32>
    %158 = arith.addf %156, %157 : vector<8x1xf32>
    %159 = arith.mulf %152, %20 : vector<8x32xf32>
    %cst_44 = arith.constant dense<0.000000e+00> : vector<8xf32>
    %160 = vector.multi_reduction <add>, %159, %cst_44 [1] : vector<8x32xf32> to vector<8xf32>
    %161 = vector.shape_cast %160 : vector<8xf32> to vector<8x1xf32>
    %162 = vector.broadcast %22 : f32 to vector<8x1xf32>
    %163 = arith.addf %161, %162 : vector<8x1xf32>
    %164 = arith.mulf %153, %8 : vector<8x32xf32>
    %cst_45 = arith.constant dense<0.000000e+00> : vector<8xf32>
    %165 = vector.multi_reduction <add>, %164, %cst_45 [1] : vector<8x32xf32> to vector<8xf32>
    %166 = vector.shape_cast %165 : vector<8xf32> to vector<8x1xf32>
    %167 = vector.broadcast %24 : f32 to vector<8x1xf32>
    %168 = arith.addf %167, %166 : vector<8x1xf32>
    %cst_46 = arith.constant 6.000000e+00 : f32
    %169 = arith.divf %35, %cst_46 : f32
    %cst_47 = arith.constant 2.000000e+00 : f32
    %170 = vector.broadcast %cst_47 : f32 to vector<8x1xf32>
    %171 = arith.mulf %170, %89 : vector<8x1xf32>
    %172 = arith.addf %53, %171 : vector<8x1xf32>
    %cst_48 = arith.constant 2.000000e+00 : f32
    %173 = vector.broadcast %cst_48 : f32 to vector<8x1xf32>
    %174 = arith.mulf %173, %125 : vector<8x1xf32>
    %175 = arith.addf %172, %174 : vector<8x1xf32>
    %176 = arith.addf %175, %158 : vector<8x1xf32>
    %177 = vector.broadcast %169 : f32 to vector<8x1xf32>
    %178 = arith.mulf %177, %176 : vector<8x1xf32>
    %179 = arith.addf %25, %178 : vector<8x1xf32>
    %cst_49 = arith.constant 6.000000e+00 : f32
    %180 = arith.divf %35, %cst_49 : f32
    %cst_50 = arith.constant 2.000000e+00 : f32
    %181 = vector.broadcast %cst_50 : f32 to vector<8x1xf32>
    %182 = arith.mulf %181, %94 : vector<8x1xf32>
    %183 = arith.addf %58, %182 : vector<8x1xf32>
    %cst_51 = arith.constant 2.000000e+00 : f32
    %184 = vector.broadcast %cst_51 : f32 to vector<8x1xf32>
    %185 = arith.mulf %184, %130 : vector<8x1xf32>
    %186 = arith.addf %183, %185 : vector<8x1xf32>
    %187 = arith.addf %186, %163 : vector<8x1xf32>
    %188 = vector.broadcast %180 : f32 to vector<8x1xf32>
    %189 = arith.mulf %188, %187 : vector<8x1xf32>
    %190 = arith.addf %26, %189 : vector<8x1xf32>
    %cst_52 = arith.constant 6.000000e+00 : f32
    %191 = arith.divf %35, %cst_52 : f32
    %cst_53 = arith.constant 2.000000e+00 : f32
    %192 = vector.broadcast %cst_53 : f32 to vector<8x1xf32>
    %193 = arith.mulf %192, %99 : vector<8x1xf32>
    %194 = arith.addf %63, %193 : vector<8x1xf32>
    %cst_54 = arith.constant 2.000000e+00 : f32
    %195 = vector.broadcast %cst_54 : f32 to vector<8x1xf32>
    %196 = arith.mulf %195, %135 : vector<8x1xf32>
    %197 = arith.addf %194, %196 : vector<8x1xf32>
    %198 = arith.addf %197, %168 : vector<8x1xf32>
    %199 = vector.broadcast %191 : f32 to vector<8x1xf32>
    %200 = arith.mulf %199, %198 : vector<8x1xf32>
    %201 = arith.addf %27, %200 : vector<8x1xf32>
    %cst_55 = arith.constant 1.000000e+00 : f32
    %202 = arith.mulf %cst_55, %35 : f32
    %203 = arith.addf %32, %202 : f32
    %204 = vector.broadcast %203 : f32 to vector<8x32xf32>
    %205 = arith.mulf %204, %5 : vector<8x32xf32>
    %206 = arith.addf %2, %205 : vector<8x32xf32>
    %207 = vector.broadcast %179 : vector<8x1xf32> to vector<8x32xf32>
    %208 = arith.mulf %207, %11 : vector<8x32xf32>
    %209 = arith.addf %206, %208 : vector<8x32xf32>
    %210 = vector.broadcast %190 : vector<8x1xf32> to vector<8x32xf32>
    %211 = arith.mulf %210, %14 : vector<8x32xf32>
    %212 = arith.addf %209, %211 : vector<8x32xf32>
    %213 = math.tanh %212 : vector<8x32xf32>
    %214 = arith.mulf %213, %213 : vector<8x32xf32>
    %215 = arith.mulf %213, %17 : vector<8x32xf32>
    %cst_56 = arith.constant dense<0.000000e+00> : vector<8xf32>
    %216 = vector.multi_reduction <add>, %215, %cst_56 [1] : vector<8x32xf32> to vector<8xf32>
    %217 = vector.shape_cast %216 : vector<8xf32> to vector<8x1xf32>
    %218 = vector.broadcast %21 : f32 to vector<8x1xf32>
    %219 = arith.addf %217, %218 : vector<8x1xf32>
    %220 = arith.mulf %213, %20 : vector<8x32xf32>
    %cst_57 = arith.constant dense<0.000000e+00> : vector<8xf32>
    %221 = vector.multi_reduction <add>, %220, %cst_57 [1] : vector<8x32xf32> to vector<8xf32>
    %222 = vector.shape_cast %221 : vector<8xf32> to vector<8x1xf32>
    %223 = vector.broadcast %22 : f32 to vector<8x1xf32>
    %224 = arith.addf %222, %223 : vector<8x1xf32>
    %225 = arith.mulf %214, %8 : vector<8x32xf32>
    %cst_58 = arith.constant dense<0.000000e+00> : vector<8xf32>
    %226 = vector.multi_reduction <add>, %225, %cst_58 [1] : vector<8x32xf32> to vector<8xf32>
    %227 = vector.shape_cast %226 : vector<8xf32> to vector<8x1xf32>
    %228 = vector.broadcast %24 : f32 to vector<8x1xf32>
    %229 = arith.addf %228, %227 : vector<8x1xf32>
    %cst_59 = arith.constant 5.000000e-01 : f32
    %230 = arith.mulf %cst_59, %35 : f32
    %231 = vector.broadcast %230 : f32 to vector<8x1xf32>
    %232 = arith.mulf %231, %219 : vector<8x1xf32>
    %233 = arith.addf %179, %232 : vector<8x1xf32>
    %cst_60 = arith.constant 5.000000e-01 : f32
    %234 = arith.mulf %cst_60, %35 : f32
    %235 = vector.broadcast %234 : f32 to vector<8x1xf32>
    %236 = arith.mulf %235, %224 : vector<8x1xf32>
    %237 = arith.addf %190, %236 : vector<8x1xf32>
    %cst_61 = arith.constant 5.000000e-01 : f32
    %238 = arith.mulf %cst_61, %35 : f32
    %239 = arith.addf %203, %238 : f32
    %240 = vector.broadcast %239 : f32 to vector<8x32xf32>
    %241 = arith.mulf %240, %5 : vector<8x32xf32>
    %242 = arith.addf %2, %241 : vector<8x32xf32>
    %243 = vector.broadcast %233 : vector<8x1xf32> to vector<8x32xf32>
    %244 = arith.mulf %243, %11 : vector<8x32xf32>
    %245 = arith.addf %242, %244 : vector<8x32xf32>
    %246 = vector.broadcast %237 : vector<8x1xf32> to vector<8x32xf32>
    %247 = arith.mulf %246, %14 : vector<8x32xf32>
    %248 = arith.addf %245, %247 : vector<8x32xf32>
    %249 = math.tanh %248 : vector<8x32xf32>
    %250 = arith.mulf %249, %249 : vector<8x32xf32>
    %251 = arith.mulf %249, %17 : vector<8x32xf32>
    %cst_62 = arith.constant dense<0.000000e+00> : vector<8xf32>
    %252 = vector.multi_reduction <add>, %251, %cst_62 [1] : vector<8x32xf32> to vector<8xf32>
    %253 = vector.shape_cast %252 : vector<8xf32> to vector<8x1xf32>
    %254 = vector.broadcast %21 : f32 to vector<8x1xf32>
    %255 = arith.addf %253, %254 : vector<8x1xf32>
    %256 = arith.mulf %249, %20 : vector<8x32xf32>
    %cst_63 = arith.constant dense<0.000000e+00> : vector<8xf32>
    %257 = vector.multi_reduction <add>, %256, %cst_63 [1] : vector<8x32xf32> to vector<8xf32>
    %258 = vector.shape_cast %257 : vector<8xf32> to vector<8x1xf32>
    %259 = vector.broadcast %22 : f32 to vector<8x1xf32>
    %260 = arith.addf %258, %259 : vector<8x1xf32>
    %261 = arith.mulf %250, %8 : vector<8x32xf32>
    %cst_64 = arith.constant dense<0.000000e+00> : vector<8xf32>
    %262 = vector.multi_reduction <add>, %261, %cst_64 [1] : vector<8x32xf32> to vector<8xf32>
    %263 = vector.shape_cast %262 : vector<8xf32> to vector<8x1xf32>
    %264 = vector.broadcast %24 : f32 to vector<8x1xf32>
    %265 = arith.addf %264, %263 : vector<8x1xf32>
    %cst_65 = arith.constant 5.000000e-01 : f32
    %266 = arith.mulf %cst_65, %35 : f32
    %267 = vector.broadcast %266 : f32 to vector<8x1xf32>
    %268 = arith.mulf %267, %255 : vector<8x1xf32>
    %269 = arith.addf %179, %268 : vector<8x1xf32>
    %cst_66 = arith.constant 5.000000e-01 : f32
    %270 = arith.mulf %cst_66, %35 : f32
    %271 = vector.broadcast %270 : f32 to vector<8x1xf32>
    %272 = arith.mulf %271, %260 : vector<8x1xf32>
    %273 = arith.addf %190, %272 : vector<8x1xf32>
    %cst_67 = arith.constant 5.000000e-01 : f32
    %274 = arith.mulf %cst_67, %35 : f32
    %275 = arith.addf %203, %274 : f32
    %276 = vector.broadcast %275 : f32 to vector<8x32xf32>
    %277 = arith.mulf %276, %5 : vector<8x32xf32>
    %278 = arith.addf %2, %277 : vector<8x32xf32>
    %279 = vector.broadcast %269 : vector<8x1xf32> to vector<8x32xf32>
    %280 = arith.mulf %279, %11 : vector<8x32xf32>
    %281 = arith.addf %278, %280 : vector<8x32xf32>
    %282 = vector.broadcast %273 : vector<8x1xf32> to vector<8x32xf32>
    %283 = arith.mulf %282, %14 : vector<8x32xf32>
    %284 = arith.addf %281, %283 : vector<8x32xf32>
    %285 = math.tanh %284 : vector<8x32xf32>
    %286 = arith.mulf %285, %285 : vector<8x32xf32>
    %287 = arith.mulf %285, %17 : vector<8x32xf32>
    %cst_68 = arith.constant dense<0.000000e+00> : vector<8xf32>
    %288 = vector.multi_reduction <add>, %287, %cst_68 [1] : vector<8x32xf32> to vector<8xf32>
    %289 = vector.shape_cast %288 : vector<8xf32> to vector<8x1xf32>
    %290 = vector.broadcast %21 : f32 to vector<8x1xf32>
    %291 = arith.addf %289, %290 : vector<8x1xf32>
    %292 = arith.mulf %285, %20 : vector<8x32xf32>
    %cst_69 = arith.constant dense<0.000000e+00> : vector<8xf32>
    %293 = vector.multi_reduction <add>, %292, %cst_69 [1] : vector<8x32xf32> to vector<8xf32>
    %294 = vector.shape_cast %293 : vector<8xf32> to vector<8x1xf32>
    %295 = vector.broadcast %22 : f32 to vector<8x1xf32>
    %296 = arith.addf %294, %295 : vector<8x1xf32>
    %297 = arith.mulf %286, %8 : vector<8x32xf32>
    %cst_70 = arith.constant dense<0.000000e+00> : vector<8xf32>
    %298 = vector.multi_reduction <add>, %297, %cst_70 [1] : vector<8x32xf32> to vector<8xf32>
    %299 = vector.shape_cast %298 : vector<8xf32> to vector<8x1xf32>
    %300 = vector.broadcast %24 : f32 to vector<8x1xf32>
    %301 = arith.addf %300, %299 : vector<8x1xf32>
    %302 = vector.broadcast %35 : f32 to vector<8x1xf32>
    %303 = arith.mulf %302, %291 : vector<8x1xf32>
    %304 = arith.addf %179, %303 : vector<8x1xf32>
    %305 = vector.broadcast %35 : f32 to vector<8x1xf32>
    %306 = arith.mulf %305, %296 : vector<8x1xf32>
    %307 = arith.addf %190, %306 : vector<8x1xf32>
    %308 = arith.addf %203, %35 : f32
    %309 = vector.broadcast %308 : f32 to vector<8x32xf32>
    %310 = arith.mulf %309, %5 : vector<8x32xf32>
    %311 = arith.addf %2, %310 : vector<8x32xf32>
    %312 = vector.broadcast %304 : vector<8x1xf32> to vector<8x32xf32>
    %313 = arith.mulf %312, %11 : vector<8x32xf32>
    %314 = arith.addf %311, %313 : vector<8x32xf32>
    %315 = vector.broadcast %307 : vector<8x1xf32> to vector<8x32xf32>
    %316 = arith.mulf %315, %14 : vector<8x32xf32>
    %317 = arith.addf %314, %316 : vector<8x32xf32>
    %318 = math.tanh %317 : vector<8x32xf32>
    %319 = arith.mulf %318, %318 : vector<8x32xf32>
    %320 = arith.mulf %318, %17 : vector<8x32xf32>
    %cst_71 = arith.constant dense<0.000000e+00> : vector<8xf32>
    %321 = vector.multi_reduction <add>, %320, %cst_71 [1] : vector<8x32xf32> to vector<8xf32>
    %322 = vector.shape_cast %321 : vector<8xf32> to vector<8x1xf32>
    %323 = vector.broadcast %21 : f32 to vector<8x1xf32>
    %324 = arith.addf %322, %323 : vector<8x1xf32>
    %325 = arith.mulf %318, %20 : vector<8x32xf32>
    %cst_72 = arith.constant dense<0.000000e+00> : vector<8xf32>
    %326 = vector.multi_reduction <add>, %325, %cst_72 [1] : vector<8x32xf32> to vector<8xf32>
    %327 = vector.shape_cast %326 : vector<8xf32> to vector<8x1xf32>
    %328 = vector.broadcast %22 : f32 to vector<8x1xf32>
    %329 = arith.addf %327, %328 : vector<8x1xf32>
    %330 = arith.mulf %319, %8 : vector<8x32xf32>
    %cst_73 = arith.constant dense<0.000000e+00> : vector<8xf32>
    %331 = vector.multi_reduction <add>, %330, %cst_73 [1] : vector<8x32xf32> to vector<8xf32>
    %332 = vector.shape_cast %331 : vector<8xf32> to vector<8x1xf32>
    %333 = vector.broadcast %24 : f32 to vector<8x1xf32>
    %334 = arith.addf %333, %332 : vector<8x1xf32>
    %cst_74 = arith.constant 6.000000e+00 : f32
    %335 = arith.divf %35, %cst_74 : f32
    %cst_75 = arith.constant 2.000000e+00 : f32
    %336 = vector.broadcast %cst_75 : f32 to vector<8x1xf32>
    %337 = arith.mulf %336, %255 : vector<8x1xf32>
    %338 = arith.addf %219, %337 : vector<8x1xf32>
    %cst_76 = arith.constant 2.000000e+00 : f32
    %339 = vector.broadcast %cst_76 : f32 to vector<8x1xf32>
    %340 = arith.mulf %339, %291 : vector<8x1xf32>
    %341 = arith.addf %338, %340 : vector<8x1xf32>
    %342 = arith.addf %341, %324 : vector<8x1xf32>
    %343 = vector.broadcast %335 : f32 to vector<8x1xf32>
    %344 = arith.mulf %343, %342 : vector<8x1xf32>
    %345 = arith.addf %179, %344 : vector<8x1xf32>
    %cst_77 = arith.constant 6.000000e+00 : f32
    %346 = arith.divf %35, %cst_77 : f32
    %cst_78 = arith.constant 2.000000e+00 : f32
    %347 = vector.broadcast %cst_78 : f32 to vector<8x1xf32>
    %348 = arith.mulf %347, %260 : vector<8x1xf32>
    %349 = arith.addf %224, %348 : vector<8x1xf32>
    %cst_79 = arith.constant 2.000000e+00 : f32
    %350 = vector.broadcast %cst_79 : f32 to vector<8x1xf32>
    %351 = arith.mulf %350, %296 : vector<8x1xf32>
    %352 = arith.addf %349, %351 : vector<8x1xf32>
    %353 = arith.addf %352, %329 : vector<8x1xf32>
    %354 = vector.broadcast %346 : f32 to vector<8x1xf32>
    %355 = arith.mulf %354, %353 : vector<8x1xf32>
    %356 = arith.addf %190, %355 : vector<8x1xf32>
    %cst_80 = arith.constant 6.000000e+00 : f32
    %357 = arith.divf %35, %cst_80 : f32
    %cst_81 = arith.constant 2.000000e+00 : f32
    %358 = vector.broadcast %cst_81 : f32 to vector<8x1xf32>
    %359 = arith.mulf %358, %265 : vector<8x1xf32>
    %360 = arith.addf %229, %359 : vector<8x1xf32>
    %cst_82 = arith.constant 2.000000e+00 : f32
    %361 = vector.broadcast %cst_82 : f32 to vector<8x1xf32>
    %362 = arith.mulf %361, %301 : vector<8x1xf32>
    %363 = arith.addf %360, %362 : vector<8x1xf32>
    %364 = arith.addf %363, %334 : vector<8x1xf32>
    %365 = vector.broadcast %357 : f32 to vector<8x1xf32>
    %366 = arith.mulf %365, %364 : vector<8x1xf32>
    %367 = arith.addf %201, %366 : vector<8x1xf32>
    %cst_83 = arith.constant 2.000000e+00 : f32
    %368 = arith.mulf %cst_83, %35 : f32
    %369 = arith.addf %32, %368 : f32
    %370 = vector.broadcast %369 : f32 to vector<8x32xf32>
    %371 = arith.mulf %370, %5 : vector<8x32xf32>
    %372 = arith.addf %2, %371 : vector<8x32xf32>
    %373 = vector.broadcast %345 : vector<8x1xf32> to vector<8x32xf32>
    %374 = arith.mulf %373, %11 : vector<8x32xf32>
    %375 = arith.addf %372, %374 : vector<8x32xf32>
    %376 = vector.broadcast %356 : vector<8x1xf32> to vector<8x32xf32>
    %377 = arith.mulf %376, %14 : vector<8x32xf32>
    %378 = arith.addf %375, %377 : vector<8x32xf32>
    %379 = math.tanh %378 : vector<8x32xf32>
    %380 = arith.mulf %379, %379 : vector<8x32xf32>
    %381 = arith.mulf %379, %17 : vector<8x32xf32>
    %cst_84 = arith.constant dense<0.000000e+00> : vector<8xf32>
    %382 = vector.multi_reduction <add>, %381, %cst_84 [1] : vector<8x32xf32> to vector<8xf32>
    %383 = vector.shape_cast %382 : vector<8xf32> to vector<8x1xf32>
    %384 = vector.broadcast %21 : f32 to vector<8x1xf32>
    %385 = arith.addf %383, %384 : vector<8x1xf32>
    %386 = arith.mulf %379, %20 : vector<8x32xf32>
    %cst_85 = arith.constant dense<0.000000e+00> : vector<8xf32>
    %387 = vector.multi_reduction <add>, %386, %cst_85 [1] : vector<8x32xf32> to vector<8xf32>
    %388 = vector.shape_cast %387 : vector<8xf32> to vector<8x1xf32>
    %389 = vector.broadcast %22 : f32 to vector<8x1xf32>
    %390 = arith.addf %388, %389 : vector<8x1xf32>
    %391 = arith.mulf %380, %8 : vector<8x32xf32>
    %cst_86 = arith.constant dense<0.000000e+00> : vector<8xf32>
    %392 = vector.multi_reduction <add>, %391, %cst_86 [1] : vector<8x32xf32> to vector<8xf32>
    %393 = vector.shape_cast %392 : vector<8xf32> to vector<8x1xf32>
    %394 = vector.broadcast %24 : f32 to vector<8x1xf32>
    %395 = arith.addf %394, %393 : vector<8x1xf32>
    %cst_87 = arith.constant 5.000000e-01 : f32
    %396 = arith.mulf %cst_87, %35 : f32
    %397 = vector.broadcast %396 : f32 to vector<8x1xf32>
    %398 = arith.mulf %397, %385 : vector<8x1xf32>
    %399 = arith.addf %345, %398 : vector<8x1xf32>
    %cst_88 = arith.constant 5.000000e-01 : f32
    %400 = arith.mulf %cst_88, %35 : f32
    %401 = vector.broadcast %400 : f32 to vector<8x1xf32>
    %402 = arith.mulf %401, %390 : vector<8x1xf32>
    %403 = arith.addf %356, %402 : vector<8x1xf32>
    %cst_89 = arith.constant 5.000000e-01 : f32
    %404 = arith.mulf %cst_89, %35 : f32
    %405 = arith.addf %369, %404 : f32
    %406 = vector.broadcast %405 : f32 to vector<8x32xf32>
    %407 = arith.mulf %406, %5 : vector<8x32xf32>
    %408 = arith.addf %2, %407 : vector<8x32xf32>
    %409 = vector.broadcast %399 : vector<8x1xf32> to vector<8x32xf32>
    %410 = arith.mulf %409, %11 : vector<8x32xf32>
    %411 = arith.addf %408, %410 : vector<8x32xf32>
    %412 = vector.broadcast %403 : vector<8x1xf32> to vector<8x32xf32>
    %413 = arith.mulf %412, %14 : vector<8x32xf32>
    %414 = arith.addf %411, %413 : vector<8x32xf32>
    %415 = math.tanh %414 : vector<8x32xf32>
    %416 = arith.mulf %415, %415 : vector<8x32xf32>
    %417 = arith.mulf %415, %17 : vector<8x32xf32>
    %cst_90 = arith.constant dense<0.000000e+00> : vector<8xf32>
    %418 = vector.multi_reduction <add>, %417, %cst_90 [1] : vector<8x32xf32> to vector<8xf32>
    %419 = vector.shape_cast %418 : vector<8xf32> to vector<8x1xf32>
    %420 = vector.broadcast %21 : f32 to vector<8x1xf32>
    %421 = arith.addf %419, %420 : vector<8x1xf32>
    %422 = arith.mulf %415, %20 : vector<8x32xf32>
    %cst_91 = arith.constant dense<0.000000e+00> : vector<8xf32>
    %423 = vector.multi_reduction <add>, %422, %cst_91 [1] : vector<8x32xf32> to vector<8xf32>
    %424 = vector.shape_cast %423 : vector<8xf32> to vector<8x1xf32>
    %425 = vector.broadcast %22 : f32 to vector<8x1xf32>
    %426 = arith.addf %424, %425 : vector<8x1xf32>
    %427 = arith.mulf %416, %8 : vector<8x32xf32>
    %cst_92 = arith.constant dense<0.000000e+00> : vector<8xf32>
    %428 = vector.multi_reduction <add>, %427, %cst_92 [1] : vector<8x32xf32> to vector<8xf32>
    %429 = vector.shape_cast %428 : vector<8xf32> to vector<8x1xf32>
    %430 = vector.broadcast %24 : f32 to vector<8x1xf32>
    %431 = arith.addf %430, %429 : vector<8x1xf32>
    %cst_93 = arith.constant 5.000000e-01 : f32
    %432 = arith.mulf %cst_93, %35 : f32
    %433 = vector.broadcast %432 : f32 to vector<8x1xf32>
    %434 = arith.mulf %433, %421 : vector<8x1xf32>
    %435 = arith.addf %345, %434 : vector<8x1xf32>
    %cst_94 = arith.constant 5.000000e-01 : f32
    %436 = arith.mulf %cst_94, %35 : f32
    %437 = vector.broadcast %436 : f32 to vector<8x1xf32>
    %438 = arith.mulf %437, %426 : vector<8x1xf32>
    %439 = arith.addf %356, %438 : vector<8x1xf32>
    %cst_95 = arith.constant 5.000000e-01 : f32
    %440 = arith.mulf %cst_95, %35 : f32
    %441 = arith.addf %369, %440 : f32
    %442 = vector.broadcast %441 : f32 to vector<8x32xf32>
    %443 = arith.mulf %442, %5 : vector<8x32xf32>
    %444 = arith.addf %2, %443 : vector<8x32xf32>
    %445 = vector.broadcast %435 : vector<8x1xf32> to vector<8x32xf32>
    %446 = arith.mulf %445, %11 : vector<8x32xf32>
    %447 = arith.addf %444, %446 : vector<8x32xf32>
    %448 = vector.broadcast %439 : vector<8x1xf32> to vector<8x32xf32>
    %449 = arith.mulf %448, %14 : vector<8x32xf32>
    %450 = arith.addf %447, %449 : vector<8x32xf32>
    %451 = math.tanh %450 : vector<8x32xf32>
    %452 = arith.mulf %451, %451 : vector<8x32xf32>
    %453 = arith.mulf %451, %17 : vector<8x32xf32>
    %cst_96 = arith.constant dense<0.000000e+00> : vector<8xf32>
    %454 = vector.multi_reduction <add>, %453, %cst_96 [1] : vector<8x32xf32> to vector<8xf32>
    %455 = vector.shape_cast %454 : vector<8xf32> to vector<8x1xf32>
    %456 = vector.broadcast %21 : f32 to vector<8x1xf32>
    %457 = arith.addf %455, %456 : vector<8x1xf32>
    %458 = arith.mulf %451, %20 : vector<8x32xf32>
    %cst_97 = arith.constant dense<0.000000e+00> : vector<8xf32>
    %459 = vector.multi_reduction <add>, %458, %cst_97 [1] : vector<8x32xf32> to vector<8xf32>
    %460 = vector.shape_cast %459 : vector<8xf32> to vector<8x1xf32>
    %461 = vector.broadcast %22 : f32 to vector<8x1xf32>
    %462 = arith.addf %460, %461 : vector<8x1xf32>
    %463 = arith.mulf %452, %8 : vector<8x32xf32>
    %cst_98 = arith.constant dense<0.000000e+00> : vector<8xf32>
    %464 = vector.multi_reduction <add>, %463, %cst_98 [1] : vector<8x32xf32> to vector<8xf32>
    %465 = vector.shape_cast %464 : vector<8xf32> to vector<8x1xf32>
    %466 = vector.broadcast %24 : f32 to vector<8x1xf32>
    %467 = arith.addf %466, %465 : vector<8x1xf32>
    %468 = vector.broadcast %35 : f32 to vector<8x1xf32>
    %469 = arith.mulf %468, %457 : vector<8x1xf32>
    %470 = arith.addf %345, %469 : vector<8x1xf32>
    %471 = vector.broadcast %35 : f32 to vector<8x1xf32>
    %472 = arith.mulf %471, %462 : vector<8x1xf32>
    %473 = arith.addf %356, %472 : vector<8x1xf32>
    %474 = arith.addf %369, %35 : f32
    %475 = vector.broadcast %474 : f32 to vector<8x32xf32>
    %476 = arith.mulf %475, %5 : vector<8x32xf32>
    %477 = arith.addf %2, %476 : vector<8x32xf32>
    %478 = vector.broadcast %470 : vector<8x1xf32> to vector<8x32xf32>
    %479 = arith.mulf %478, %11 : vector<8x32xf32>
    %480 = arith.addf %477, %479 : vector<8x32xf32>
    %481 = vector.broadcast %473 : vector<8x1xf32> to vector<8x32xf32>
    %482 = arith.mulf %481, %14 : vector<8x32xf32>
    %483 = arith.addf %480, %482 : vector<8x32xf32>
    %484 = math.tanh %483 : vector<8x32xf32>
    %485 = arith.mulf %484, %484 : vector<8x32xf32>
    %486 = arith.mulf %484, %17 : vector<8x32xf32>
    %cst_99 = arith.constant dense<0.000000e+00> : vector<8xf32>
    %487 = vector.multi_reduction <add>, %486, %cst_99 [1] : vector<8x32xf32> to vector<8xf32>
    %488 = vector.shape_cast %487 : vector<8xf32> to vector<8x1xf32>
    %489 = vector.broadcast %21 : f32 to vector<8x1xf32>
    %490 = arith.addf %488, %489 : vector<8x1xf32>
    %491 = arith.mulf %484, %20 : vector<8x32xf32>
    %cst_100 = arith.constant dense<0.000000e+00> : vector<8xf32>
    %492 = vector.multi_reduction <add>, %491, %cst_100 [1] : vector<8x32xf32> to vector<8xf32>
    %493 = vector.shape_cast %492 : vector<8xf32> to vector<8x1xf32>
    %494 = vector.broadcast %22 : f32 to vector<8x1xf32>
    %495 = arith.addf %493, %494 : vector<8x1xf32>
    %496 = arith.mulf %485, %8 : vector<8x32xf32>
    %cst_101 = arith.constant dense<0.000000e+00> : vector<8xf32>
    %497 = vector.multi_reduction <add>, %496, %cst_101 [1] : vector<8x32xf32> to vector<8xf32>
    %498 = vector.shape_cast %497 : vector<8xf32> to vector<8x1xf32>
    %499 = vector.broadcast %24 : f32 to vector<8x1xf32>
    %500 = arith.addf %499, %498 : vector<8x1xf32>
    %cst_102 = arith.constant 6.000000e+00 : f32
    %501 = arith.divf %35, %cst_102 : f32
    %cst_103 = arith.constant 2.000000e+00 : f32
    %502 = vector.broadcast %cst_103 : f32 to vector<8x1xf32>
    %503 = arith.mulf %502, %421 : vector<8x1xf32>
    %504 = arith.addf %385, %503 : vector<8x1xf32>
    %cst_104 = arith.constant 2.000000e+00 : f32
    %505 = vector.broadcast %cst_104 : f32 to vector<8x1xf32>
    %506 = arith.mulf %505, %457 : vector<8x1xf32>
    %507 = arith.addf %504, %506 : vector<8x1xf32>
    %508 = arith.addf %507, %490 : vector<8x1xf32>
    %509 = vector.broadcast %501 : f32 to vector<8x1xf32>
    %510 = arith.mulf %509, %508 : vector<8x1xf32>
    %511 = arith.addf %345, %510 : vector<8x1xf32>
    %cst_105 = arith.constant 6.000000e+00 : f32
    %512 = arith.divf %35, %cst_105 : f32
    %cst_106 = arith.constant 2.000000e+00 : f32
    %513 = vector.broadcast %cst_106 : f32 to vector<8x1xf32>
    %514 = arith.mulf %513, %426 : vector<8x1xf32>
    %515 = arith.addf %390, %514 : vector<8x1xf32>
    %cst_107 = arith.constant 2.000000e+00 : f32
    %516 = vector.broadcast %cst_107 : f32 to vector<8x1xf32>
    %517 = arith.mulf %516, %462 : vector<8x1xf32>
    %518 = arith.addf %515, %517 : vector<8x1xf32>
    %519 = arith.addf %518, %495 : vector<8x1xf32>
    %520 = vector.broadcast %512 : f32 to vector<8x1xf32>
    %521 = arith.mulf %520, %519 : vector<8x1xf32>
    %522 = arith.addf %356, %521 : vector<8x1xf32>
    %cst_108 = arith.constant 6.000000e+00 : f32
    %523 = arith.divf %35, %cst_108 : f32
    %cst_109 = arith.constant 2.000000e+00 : f32
    %524 = vector.broadcast %cst_109 : f32 to vector<8x1xf32>
    %525 = arith.mulf %524, %431 : vector<8x1xf32>
    %526 = arith.addf %395, %525 : vector<8x1xf32>
    %cst_110 = arith.constant 2.000000e+00 : f32
    %527 = vector.broadcast %cst_110 : f32 to vector<8x1xf32>
    %528 = arith.mulf %527, %467 : vector<8x1xf32>
    %529 = arith.addf %526, %528 : vector<8x1xf32>
    %530 = arith.addf %529, %500 : vector<8x1xf32>
    %531 = vector.broadcast %523 : f32 to vector<8x1xf32>
    %532 = arith.mulf %531, %530 : vector<8x1xf32>
    %533 = arith.addf %367, %532 : vector<8x1xf32>
    %cst_111 = arith.constant 3.000000e+00 : f32
    %534 = arith.mulf %cst_111, %35 : f32
    %535 = arith.addf %32, %534 : f32
    %536 = vector.broadcast %535 : f32 to vector<8x32xf32>
    %537 = arith.mulf %536, %5 : vector<8x32xf32>
    %538 = arith.addf %2, %537 : vector<8x32xf32>
    %539 = vector.broadcast %511 : vector<8x1xf32> to vector<8x32xf32>
    %540 = arith.mulf %539, %11 : vector<8x32xf32>
    %541 = arith.addf %538, %540 : vector<8x32xf32>
    %542 = vector.broadcast %522 : vector<8x1xf32> to vector<8x32xf32>
    %543 = arith.mulf %542, %14 : vector<8x32xf32>
    %544 = arith.addf %541, %543 : vector<8x32xf32>
    %545 = math.tanh %544 : vector<8x32xf32>
    %546 = arith.mulf %545, %545 : vector<8x32xf32>
    %547 = arith.mulf %545, %17 : vector<8x32xf32>
    %cst_112 = arith.constant dense<0.000000e+00> : vector<8xf32>
    %548 = vector.multi_reduction <add>, %547, %cst_112 [1] : vector<8x32xf32> to vector<8xf32>
    %549 = vector.shape_cast %548 : vector<8xf32> to vector<8x1xf32>
    %550 = vector.broadcast %21 : f32 to vector<8x1xf32>
    %551 = arith.addf %549, %550 : vector<8x1xf32>
    %552 = arith.mulf %545, %20 : vector<8x32xf32>
    %cst_113 = arith.constant dense<0.000000e+00> : vector<8xf32>
    %553 = vector.multi_reduction <add>, %552, %cst_113 [1] : vector<8x32xf32> to vector<8xf32>
    %554 = vector.shape_cast %553 : vector<8xf32> to vector<8x1xf32>
    %555 = vector.broadcast %22 : f32 to vector<8x1xf32>
    %556 = arith.addf %554, %555 : vector<8x1xf32>
    %557 = arith.mulf %546, %8 : vector<8x32xf32>
    %cst_114 = arith.constant dense<0.000000e+00> : vector<8xf32>
    %558 = vector.multi_reduction <add>, %557, %cst_114 [1] : vector<8x32xf32> to vector<8xf32>
    %559 = vector.shape_cast %558 : vector<8xf32> to vector<8x1xf32>
    %560 = vector.broadcast %24 : f32 to vector<8x1xf32>
    %561 = arith.addf %560, %559 : vector<8x1xf32>
    %cst_115 = arith.constant 5.000000e-01 : f32
    %562 = arith.mulf %cst_115, %35 : f32
    %563 = vector.broadcast %562 : f32 to vector<8x1xf32>
    %564 = arith.mulf %563, %551 : vector<8x1xf32>
    %565 = arith.addf %511, %564 : vector<8x1xf32>
    %cst_116 = arith.constant 5.000000e-01 : f32
    %566 = arith.mulf %cst_116, %35 : f32
    %567 = vector.broadcast %566 : f32 to vector<8x1xf32>
    %568 = arith.mulf %567, %556 : vector<8x1xf32>
    %569 = arith.addf %522, %568 : vector<8x1xf32>
    %cst_117 = arith.constant 5.000000e-01 : f32
    %570 = arith.mulf %cst_117, %35 : f32
    %571 = arith.addf %535, %570 : f32
    %572 = vector.broadcast %571 : f32 to vector<8x32xf32>
    %573 = arith.mulf %572, %5 : vector<8x32xf32>
    %574 = arith.addf %2, %573 : vector<8x32xf32>
    %575 = vector.broadcast %565 : vector<8x1xf32> to vector<8x32xf32>
    %576 = arith.mulf %575, %11 : vector<8x32xf32>
    %577 = arith.addf %574, %576 : vector<8x32xf32>
    %578 = vector.broadcast %569 : vector<8x1xf32> to vector<8x32xf32>
    %579 = arith.mulf %578, %14 : vector<8x32xf32>
    %580 = arith.addf %577, %579 : vector<8x32xf32>
    %581 = math.tanh %580 : vector<8x32xf32>
    %582 = arith.mulf %581, %581 : vector<8x32xf32>
    %583 = arith.mulf %581, %17 : vector<8x32xf32>
    %cst_118 = arith.constant dense<0.000000e+00> : vector<8xf32>
    %584 = vector.multi_reduction <add>, %583, %cst_118 [1] : vector<8x32xf32> to vector<8xf32>
    %585 = vector.shape_cast %584 : vector<8xf32> to vector<8x1xf32>
    %586 = vector.broadcast %21 : f32 to vector<8x1xf32>
    %587 = arith.addf %585, %586 : vector<8x1xf32>
    %588 = arith.mulf %581, %20 : vector<8x32xf32>
    %cst_119 = arith.constant dense<0.000000e+00> : vector<8xf32>
    %589 = vector.multi_reduction <add>, %588, %cst_119 [1] : vector<8x32xf32> to vector<8xf32>
    %590 = vector.shape_cast %589 : vector<8xf32> to vector<8x1xf32>
    %591 = vector.broadcast %22 : f32 to vector<8x1xf32>
    %592 = arith.addf %590, %591 : vector<8x1xf32>
    %593 = arith.mulf %582, %8 : vector<8x32xf32>
    %cst_120 = arith.constant dense<0.000000e+00> : vector<8xf32>
    %594 = vector.multi_reduction <add>, %593, %cst_120 [1] : vector<8x32xf32> to vector<8xf32>
    %595 = vector.shape_cast %594 : vector<8xf32> to vector<8x1xf32>
    %596 = vector.broadcast %24 : f32 to vector<8x1xf32>
    %597 = arith.addf %596, %595 : vector<8x1xf32>
    %cst_121 = arith.constant 5.000000e-01 : f32
    %598 = arith.mulf %cst_121, %35 : f32
    %599 = vector.broadcast %598 : f32 to vector<8x1xf32>
    %600 = arith.mulf %599, %587 : vector<8x1xf32>
    %601 = arith.addf %511, %600 : vector<8x1xf32>
    %cst_122 = arith.constant 5.000000e-01 : f32
    %602 = arith.mulf %cst_122, %35 : f32
    %603 = vector.broadcast %602 : f32 to vector<8x1xf32>
    %604 = arith.mulf %603, %592 : vector<8x1xf32>
    %605 = arith.addf %522, %604 : vector<8x1xf32>
    %cst_123 = arith.constant 5.000000e-01 : f32
    %606 = arith.mulf %cst_123, %35 : f32
    %607 = arith.addf %535, %606 : f32
    %608 = vector.broadcast %607 : f32 to vector<8x32xf32>
    %609 = arith.mulf %608, %5 : vector<8x32xf32>
    %610 = arith.addf %2, %609 : vector<8x32xf32>
    %611 = vector.broadcast %601 : vector<8x1xf32> to vector<8x32xf32>
    %612 = arith.mulf %611, %11 : vector<8x32xf32>
    %613 = arith.addf %610, %612 : vector<8x32xf32>
    %614 = vector.broadcast %605 : vector<8x1xf32> to vector<8x32xf32>
    %615 = arith.mulf %614, %14 : vector<8x32xf32>
    %616 = arith.addf %613, %615 : vector<8x32xf32>
    %617 = math.tanh %616 : vector<8x32xf32>
    %618 = arith.mulf %617, %617 : vector<8x32xf32>
    %619 = arith.mulf %617, %17 : vector<8x32xf32>
    %cst_124 = arith.constant dense<0.000000e+00> : vector<8xf32>
    %620 = vector.multi_reduction <add>, %619, %cst_124 [1] : vector<8x32xf32> to vector<8xf32>
    %621 = vector.shape_cast %620 : vector<8xf32> to vector<8x1xf32>
    %622 = vector.broadcast %21 : f32 to vector<8x1xf32>
    %623 = arith.addf %621, %622 : vector<8x1xf32>
    %624 = arith.mulf %617, %20 : vector<8x32xf32>
    %cst_125 = arith.constant dense<0.000000e+00> : vector<8xf32>
    %625 = vector.multi_reduction <add>, %624, %cst_125 [1] : vector<8x32xf32> to vector<8xf32>
    %626 = vector.shape_cast %625 : vector<8xf32> to vector<8x1xf32>
    %627 = vector.broadcast %22 : f32 to vector<8x1xf32>
    %628 = arith.addf %626, %627 : vector<8x1xf32>
    %629 = arith.mulf %618, %8 : vector<8x32xf32>
    %cst_126 = arith.constant dense<0.000000e+00> : vector<8xf32>
    %630 = vector.multi_reduction <add>, %629, %cst_126 [1] : vector<8x32xf32> to vector<8xf32>
    %631 = vector.shape_cast %630 : vector<8xf32> to vector<8x1xf32>
    %632 = vector.broadcast %24 : f32 to vector<8x1xf32>
    %633 = arith.addf %632, %631 : vector<8x1xf32>
    %634 = vector.broadcast %35 : f32 to vector<8x1xf32>
    %635 = arith.mulf %634, %623 : vector<8x1xf32>
    %636 = arith.addf %511, %635 : vector<8x1xf32>
    %637 = vector.broadcast %35 : f32 to vector<8x1xf32>
    %638 = arith.mulf %637, %628 : vector<8x1xf32>
    %639 = arith.addf %522, %638 : vector<8x1xf32>
    %640 = arith.addf %535, %35 : f32
    %641 = vector.broadcast %640 : f32 to vector<8x32xf32>
    %642 = arith.mulf %641, %5 : vector<8x32xf32>
    %643 = arith.addf %2, %642 : vector<8x32xf32>
    %644 = vector.broadcast %636 : vector<8x1xf32> to vector<8x32xf32>
    %645 = arith.mulf %644, %11 : vector<8x32xf32>
    %646 = arith.addf %643, %645 : vector<8x32xf32>
    %647 = vector.broadcast %639 : vector<8x1xf32> to vector<8x32xf32>
    %648 = arith.mulf %647, %14 : vector<8x32xf32>
    %649 = arith.addf %646, %648 : vector<8x32xf32>
    %650 = math.tanh %649 : vector<8x32xf32>
    %651 = arith.mulf %650, %650 : vector<8x32xf32>
    %652 = arith.mulf %650, %17 : vector<8x32xf32>
    %cst_127 = arith.constant dense<0.000000e+00> : vector<8xf32>
    %653 = vector.multi_reduction <add>, %652, %cst_127 [1] : vector<8x32xf32> to vector<8xf32>
    %654 = vector.shape_cast %653 : vector<8xf32> to vector<8x1xf32>
    %655 = vector.broadcast %21 : f32 to vector<8x1xf32>
    %656 = arith.addf %654, %655 : vector<8x1xf32>
    %657 = arith.mulf %650, %20 : vector<8x32xf32>
    %cst_128 = arith.constant dense<0.000000e+00> : vector<8xf32>
    %658 = vector.multi_reduction <add>, %657, %cst_128 [1] : vector<8x32xf32> to vector<8xf32>
    %659 = vector.shape_cast %658 : vector<8xf32> to vector<8x1xf32>
    %660 = vector.broadcast %22 : f32 to vector<8x1xf32>
    %661 = arith.addf %659, %660 : vector<8x1xf32>
    %662 = arith.mulf %651, %8 : vector<8x32xf32>
    %cst_129 = arith.constant dense<0.000000e+00> : vector<8xf32>
    %663 = vector.multi_reduction <add>, %662, %cst_129 [1] : vector<8x32xf32> to vector<8xf32>
    %664 = vector.shape_cast %663 : vector<8xf32> to vector<8x1xf32>
    %665 = vector.broadcast %24 : f32 to vector<8x1xf32>
    %666 = arith.addf %665, %664 : vector<8x1xf32>
    %cst_130 = arith.constant 6.000000e+00 : f32
    %667 = arith.divf %35, %cst_130 : f32
    %cst_131 = arith.constant 2.000000e+00 : f32
    %668 = vector.broadcast %cst_131 : f32 to vector<8x1xf32>
    %669 = arith.mulf %668, %587 : vector<8x1xf32>
    %670 = arith.addf %551, %669 : vector<8x1xf32>
    %cst_132 = arith.constant 2.000000e+00 : f32
    %671 = vector.broadcast %cst_132 : f32 to vector<8x1xf32>
    %672 = arith.mulf %671, %623 : vector<8x1xf32>
    %673 = arith.addf %670, %672 : vector<8x1xf32>
    %674 = arith.addf %673, %656 : vector<8x1xf32>
    %675 = vector.broadcast %667 : f32 to vector<8x1xf32>
    %676 = arith.mulf %675, %674 : vector<8x1xf32>
    %677 = arith.addf %511, %676 : vector<8x1xf32>
    %cst_133 = arith.constant 6.000000e+00 : f32
    %678 = arith.divf %35, %cst_133 : f32
    %cst_134 = arith.constant 2.000000e+00 : f32
    %679 = vector.broadcast %cst_134 : f32 to vector<8x1xf32>
    %680 = arith.mulf %679, %592 : vector<8x1xf32>
    %681 = arith.addf %556, %680 : vector<8x1xf32>
    %cst_135 = arith.constant 2.000000e+00 : f32
    %682 = vector.broadcast %cst_135 : f32 to vector<8x1xf32>
    %683 = arith.mulf %682, %628 : vector<8x1xf32>
    %684 = arith.addf %681, %683 : vector<8x1xf32>
    %685 = arith.addf %684, %661 : vector<8x1xf32>
    %686 = vector.broadcast %678 : f32 to vector<8x1xf32>
    %687 = arith.mulf %686, %685 : vector<8x1xf32>
    %688 = arith.addf %522, %687 : vector<8x1xf32>
    %cst_136 = arith.constant 6.000000e+00 : f32
    %689 = arith.divf %35, %cst_136 : f32
    %cst_137 = arith.constant 2.000000e+00 : f32
    %690 = vector.broadcast %cst_137 : f32 to vector<8x1xf32>
    %691 = arith.mulf %690, %597 : vector<8x1xf32>
    %692 = arith.addf %561, %691 : vector<8x1xf32>
    %cst_138 = arith.constant 2.000000e+00 : f32
    %693 = vector.broadcast %cst_138 : f32 to vector<8x1xf32>
    %694 = arith.mulf %693, %633 : vector<8x1xf32>
    %695 = arith.addf %692, %694 : vector<8x1xf32>
    %696 = arith.addf %695, %666 : vector<8x1xf32>
    %697 = vector.broadcast %689 : f32 to vector<8x1xf32>
    %698 = arith.mulf %697, %696 : vector<8x1xf32>
    %699 = arith.addf %533, %698 : vector<8x1xf32>
    %700 = tpu.concatenate %677, %688, %699 in 1 : vector<8x1xf32>, vector<8x1xf32>, vector<8x1xf32> -> vector<8x3xf32>
    %c1_139 = arith.constant 1 : index
    %c0_140 = arith.constant 0 : index
    %c0_141 = arith.constant 0 : index
    %701 = vector.load %arg10[%c1_139, %c0_140, %c0_141] : memref<5x8x3xf32, #tpu.memory_space<vmem>>, vector<1x8x3xf32>
    %702 = vector.shape_cast %701 : vector<1x8x3xf32> to vector<8x3xf32>
    %703 = vector.shape_cast %700 : vector<8x3xf32> to vector<1x8x3xf32>
    tpu.vector_store %arg10[%c1_139, %c0_140, %c0_141], %703 {strides = array<i32>} : memref<5x8x3xf32, #tpu.memory_space<vmem>>, vector<1x8x3xf32>,
    %c1_142 = arith.constant 1 : index
    %704 = memref.load %arg0[%c1_142] : memref<5xf32, #tpu.memory_space<smem>>
    %c2 = arith.constant 2 : index
    %705 = memref.load %arg0[%c2] : memref<5xf32, #tpu.memory_space<smem>>
    %706 = arith.subf %705, %704 : f32
    %cst_143 = arith.constant 4.000000e+00 : f32
    %707 = arith.divf %706, %cst_143 : f32
    %cst_144 = arith.constant 0.000000e+00 : f32
    %708 = arith.mulf %cst_144, %707 : f32
    %709 = arith.addf %704, %708 : f32
    %710 = vector.broadcast %709 : f32 to vector<8x32xf32>
    %711 = arith.mulf %710, %5 : vector<8x32xf32>
    %712 = arith.addf %2, %711 : vector<8x32xf32>
    %713 = vector.broadcast %677 : vector<8x1xf32> to vector<8x32xf32>
    %714 = arith.mulf %713, %11 : vector<8x32xf32>
    %715 = arith.addf %712, %714 : vector<8x32xf32>
    %716 = vector.broadcast %688 : vector<8x1xf32> to vector<8x32xf32>
    %717 = arith.mulf %716, %14 : vector<8x32xf32>
    %718 = arith.addf %715, %717 : vector<8x32xf32>
    %719 = math.tanh %718 : vector<8x32xf32>
    %720 = arith.mulf %719, %719 : vector<8x32xf32>
    %721 = arith.mulf %719, %17 : vector<8x32xf32>
    %cst_145 = arith.constant dense<0.000000e+00> : vector<8xf32>
    %722 = vector.multi_reduction <add>, %721, %cst_145 [1] : vector<8x32xf32> to vector<8xf32>
    %723 = vector.shape_cast %722 : vector<8xf32> to vector<8x1xf32>
    %724 = vector.broadcast %21 : f32 to vector<8x1xf32>
    %725 = arith.addf %723, %724 : vector<8x1xf32>
    %726 = arith.mulf %719, %20 : vector<8x32xf32>
    %cst_146 = arith.constant dense<0.000000e+00> : vector<8xf32>
    %727 = vector.multi_reduction <add>, %726, %cst_146 [1] : vector<8x32xf32> to vector<8xf32>
    %728 = vector.shape_cast %727 : vector<8xf32> to vector<8x1xf32>
    %729 = vector.broadcast %22 : f32 to vector<8x1xf32>
    %730 = arith.addf %728, %729 : vector<8x1xf32>
    %731 = arith.mulf %720, %8 : vector<8x32xf32>
    %cst_147 = arith.constant dense<0.000000e+00> : vector<8xf32>
    %732 = vector.multi_reduction <add>, %731, %cst_147 [1] : vector<8x32xf32> to vector<8xf32>
    %733 = vector.shape_cast %732 : vector<8xf32> to vector<8x1xf32>
    %734 = vector.broadcast %24 : f32 to vector<8x1xf32>
    %735 = arith.addf %734, %733 : vector<8x1xf32>
    %cst_148 = arith.constant 5.000000e-01 : f32
    %736 = arith.mulf %cst_148, %707 : f32
    %737 = vector.broadcast %736 : f32 to vector<8x1xf32>
    %738 = arith.mulf %737, %725 : vector<8x1xf32>
    %739 = arith.addf %677, %738 : vector<8x1xf32>
    %cst_149 = arith.constant 5.000000e-01 : f32
    %740 = arith.mulf %cst_149, %707 : f32
    %741 = vector.broadcast %740 : f32 to vector<8x1xf32>
    %742 = arith.mulf %741, %730 : vector<8x1xf32>
    %743 = arith.addf %688, %742 : vector<8x1xf32>
    %cst_150 = arith.constant 5.000000e-01 : f32
    %744 = arith.mulf %cst_150, %707 : f32
    %745 = arith.addf %709, %744 : f32
    %746 = vector.broadcast %745 : f32 to vector<8x32xf32>
    %747 = arith.mulf %746, %5 : vector<8x32xf32>
    %748 = arith.addf %2, %747 : vector<8x32xf32>
    %749 = vector.broadcast %739 : vector<8x1xf32> to vector<8x32xf32>
    %750 = arith.mulf %749, %11 : vector<8x32xf32>
    %751 = arith.addf %748, %750 : vector<8x32xf32>
    %752 = vector.broadcast %743 : vector<8x1xf32> to vector<8x32xf32>
    %753 = arith.mulf %752, %14 : vector<8x32xf32>
    %754 = arith.addf %751, %753 : vector<8x32xf32>
    %755 = math.tanh %754 : vector<8x32xf32>
    %756 = arith.mulf %755, %755 : vector<8x32xf32>
    %757 = arith.mulf %755, %17 : vector<8x32xf32>
    %cst_151 = arith.constant dense<0.000000e+00> : vector<8xf32>
    %758 = vector.multi_reduction <add>, %757, %cst_151 [1] : vector<8x32xf32> to vector<8xf32>
    %759 = vector.shape_cast %758 : vector<8xf32> to vector<8x1xf32>
    %760 = vector.broadcast %21 : f32 to vector<8x1xf32>
    %761 = arith.addf %759, %760 : vector<8x1xf32>
    %762 = arith.mulf %755, %20 : vector<8x32xf32>
    %cst_152 = arith.constant dense<0.000000e+00> : vector<8xf32>
    %763 = vector.multi_reduction <add>, %762, %cst_152 [1] : vector<8x32xf32> to vector<8xf32>
    %764 = vector.shape_cast %763 : vector<8xf32> to vector<8x1xf32>
    %765 = vector.broadcast %22 : f32 to vector<8x1xf32>
    %766 = arith.addf %764, %765 : vector<8x1xf32>
    %767 = arith.mulf %756, %8 : vector<8x32xf32>
    %cst_153 = arith.constant dense<0.000000e+00> : vector<8xf32>
    %768 = vector.multi_reduction <add>, %767, %cst_153 [1] : vector<8x32xf32> to vector<8xf32>
    %769 = vector.shape_cast %768 : vector<8xf32> to vector<8x1xf32>
    %770 = vector.broadcast %24 : f32 to vector<8x1xf32>
    %771 = arith.addf %770, %769 : vector<8x1xf32>
    %cst_154 = arith.constant 5.000000e-01 : f32
    %772 = arith.mulf %cst_154, %707 : f32
    %773 = vector.broadcast %772 : f32 to vector<8x1xf32>
    %774 = arith.mulf %773, %761 : vector<8x1xf32>
    %775 = arith.addf %677, %774 : vector<8x1xf32>
    %cst_155 = arith.constant 5.000000e-01 : f32
    %776 = arith.mulf %cst_155, %707 : f32
    %777 = vector.broadcast %776 : f32 to vector<8x1xf32>
    %778 = arith.mulf %777, %766 : vector<8x1xf32>
    %779 = arith.addf %688, %778 : vector<8x1xf32>
    %cst_156 = arith.constant 5.000000e-01 : f32
    %780 = arith.mulf %cst_156, %707 : f32
    %781 = arith.addf %709, %780 : f32
    %782 = vector.broadcast %781 : f32 to vector<8x32xf32>
    %783 = arith.mulf %782, %5 : vector<8x32xf32>
    %784 = arith.addf %2, %783 : vector<8x32xf32>
    %785 = vector.broadcast %775 : vector<8x1xf32> to vector<8x32xf32>
    %786 = arith.mulf %785, %11 : vector<8x32xf32>
    %787 = arith.addf %784, %786 : vector<8x32xf32>
    %788 = vector.broadcast %779 : vector<8x1xf32> to vector<8x32xf32>
    %789 = arith.mulf %788, %14 : vector<8x32xf32>
    %790 = arith.addf %787, %789 : vector<8x32xf32>
    %791 = math.tanh %790 : vector<8x32xf32>
    %792 = arith.mulf %791, %791 : vector<8x32xf32>
    %793 = arith.mulf %791, %17 : vector<8x32xf32>
    %cst_157 = arith.constant dense<0.000000e+00> : vector<8xf32>
    %794 = vector.multi_reduction <add>, %793, %cst_157 [1] : vector<8x32xf32> to vector<8xf32>
    %795 = vector.shape_cast %794 : vector<8xf32> to vector<8x1xf32>
    %796 = vector.broadcast %21 : f32 to vector<8x1xf32>
    %797 = arith.addf %795, %796 : vector<8x1xf32>
    %798 = arith.mulf %791, %20 : vector<8x32xf32>
    %cst_158 = arith.constant dense<0.000000e+00> : vector<8xf32>
    %799 = vector.multi_reduction <add>, %798, %cst_158 [1] : vector<8x32xf32> to vector<8xf32>
    %800 = vector.shape_cast %799 : vector<8xf32> to vector<8x1xf32>
    %801 = vector.broadcast %22 : f32 to vector<8x1xf32>
    %802 = arith.addf %800, %801 : vector<8x1xf32>
    %803 = arith.mulf %792, %8 : vector<8x32xf32>
    %cst_159 = arith.constant dense<0.000000e+00> : vector<8xf32>
    %804 = vector.multi_reduction <add>, %803, %cst_159 [1] : vector<8x32xf32> to vector<8xf32>
    %805 = vector.shape_cast %804 : vector<8xf32> to vector<8x1xf32>
    %806 = vector.broadcast %24 : f32 to vector<8x1xf32>
    %807 = arith.addf %806, %805 : vector<8x1xf32>
    %808 = vector.broadcast %707 : f32 to vector<8x1xf32>
    %809 = arith.mulf %808, %797 : vector<8x1xf32>
    %810 = arith.addf %677, %809 : vector<8x1xf32>
    %811 = vector.broadcast %707 : f32 to vector<8x1xf32>
    %812 = arith.mulf %811, %802 : vector<8x1xf32>
    %813 = arith.addf %688, %812 : vector<8x1xf32>
    %814 = arith.addf %709, %707 : f32
    %815 = vector.broadcast %814 : f32 to vector<8x32xf32>
    %816 = arith.mulf %815, %5 : vector<8x32xf32>
    %817 = arith.addf %2, %816 : vector<8x32xf32>
    %818 = vector.broadcast %810 : vector<8x1xf32> to vector<8x32xf32>
    %819 = arith.mulf %818, %11 : vector<8x32xf32>
    %820 = arith.addf %817, %819 : vector<8x32xf32>
    %821 = vector.broadcast %813 : vector<8x1xf32> to vector<8x32xf32>
    %822 = arith.mulf %821, %14 : vector<8x32xf32>
    %823 = arith.addf %820, %822 : vector<8x32xf32>
    %824 = math.tanh %823 : vector<8x32xf32>
    %825 = arith.mulf %824, %824 : vector<8x32xf32>
    %826 = arith.mulf %824, %17 : vector<8x32xf32>
    %cst_160 = arith.constant dense<0.000000e+00> : vector<8xf32>
    %827 = vector.multi_reduction <add>, %826, %cst_160 [1] : vector<8x32xf32> to vector<8xf32>
    %828 = vector.shape_cast %827 : vector<8xf32> to vector<8x1xf32>
    %829 = vector.broadcast %21 : f32 to vector<8x1xf32>
    %830 = arith.addf %828, %829 : vector<8x1xf32>
    %831 = arith.mulf %824, %20 : vector<8x32xf32>
    %cst_161 = arith.constant dense<0.000000e+00> : vector<8xf32>
    %832 = vector.multi_reduction <add>, %831, %cst_161 [1] : vector<8x32xf32> to vector<8xf32>
    %833 = vector.shape_cast %832 : vector<8xf32> to vector<8x1xf32>
    %834 = vector.broadcast %22 : f32 to vector<8x1xf32>
    %835 = arith.addf %833, %834 : vector<8x1xf32>
    %836 = arith.mulf %825, %8 : vector<8x32xf32>
    %cst_162 = arith.constant dense<0.000000e+00> : vector<8xf32>
    %837 = vector.multi_reduction <add>, %836, %cst_162 [1] : vector<8x32xf32> to vector<8xf32>
    %838 = vector.shape_cast %837 : vector<8xf32> to vector<8x1xf32>
    %839 = vector.broadcast %24 : f32 to vector<8x1xf32>
    %840 = arith.addf %839, %838 : vector<8x1xf32>
    %cst_163 = arith.constant 6.000000e+00 : f32
    %841 = arith.divf %707, %cst_163 : f32
    %cst_164 = arith.constant 2.000000e+00 : f32
    %842 = vector.broadcast %cst_164 : f32 to vector<8x1xf32>
    %843 = arith.mulf %842, %761 : vector<8x1xf32>
    %844 = arith.addf %725, %843 : vector<8x1xf32>
    %cst_165 = arith.constant 2.000000e+00 : f32
    %845 = vector.broadcast %cst_165 : f32 to vector<8x1xf32>
    %846 = arith.mulf %845, %797 : vector<8x1xf32>
    %847 = arith.addf %844, %846 : vector<8x1xf32>
    %848 = arith.addf %847, %830 : vector<8x1xf32>
    %849 = vector.broadcast %841 : f32 to vector<8x1xf32>
    %850 = arith.mulf %849, %848 : vector<8x1xf32>
    %851 = arith.addf %677, %850 : vector<8x1xf32>
    %cst_166 = arith.constant 6.000000e+00 : f32
    %852 = arith.divf %707, %cst_166 : f32
    %cst_167 = arith.constant 2.000000e+00 : f32
    %853 = vector.broadcast %cst_167 : f32 to vector<8x1xf32>
    %854 = arith.mulf %853, %766 : vector<8x1xf32>
    %855 = arith.addf %730, %854 : vector<8x1xf32>
    %cst_168 = arith.constant 2.000000e+00 : f32
    %856 = vector.broadcast %cst_168 : f32 to vector<8x1xf32>
    %857 = arith.mulf %856, %802 : vector<8x1xf32>
    %858 = arith.addf %855, %857 : vector<8x1xf32>
    %859 = arith.addf %858, %835 : vector<8x1xf32>
    %860 = vector.broadcast %852 : f32 to vector<8x1xf32>
    %861 = arith.mulf %860, %859 : vector<8x1xf32>
    %862 = arith.addf %688, %861 : vector<8x1xf32>
    %cst_169 = arith.constant 6.000000e+00 : f32
    %863 = arith.divf %707, %cst_169 : f32
    %cst_170 = arith.constant 2.000000e+00 : f32
    %864 = vector.broadcast %cst_170 : f32 to vector<8x1xf32>
    %865 = arith.mulf %864, %771 : vector<8x1xf32>
    %866 = arith.addf %735, %865 : vector<8x1xf32>
    %cst_171 = arith.constant 2.000000e+00 : f32
    %867 = vector.broadcast %cst_171 : f32 to vector<8x1xf32>
    %868 = arith.mulf %867, %807 : vector<8x1xf32>
    %869 = arith.addf %866, %868 : vector<8x1xf32>
    %870 = arith.addf %869, %840 : vector<8x1xf32>
    %871 = vector.broadcast %863 : f32 to vector<8x1xf32>
    %872 = arith.mulf %871, %870 : vector<8x1xf32>
    %873 = arith.addf %699, %872 : vector<8x1xf32>
    %cst_172 = arith.constant 1.000000e+00 : f32
    %874 = arith.mulf %cst_172, %707 : f32
    %875 = arith.addf %704, %874 : f32
    %876 = vector.broadcast %875 : f32 to vector<8x32xf32>
    %877 = arith.mulf %876, %5 : vector<8x32xf32>
    %878 = arith.addf %2, %877 : vector<8x32xf32>
    %879 = vector.broadcast %851 : vector<8x1xf32> to vector<8x32xf32>
    %880 = arith.mulf %879, %11 : vector<8x32xf32>
    %881 = arith.addf %878, %880 : vector<8x32xf32>
    %882 = vector.broadcast %862 : vector<8x1xf32> to vector<8x32xf32>
    %883 = arith.mulf %882, %14 : vector<8x32xf32>
    %884 = arith.addf %881, %883 : vector<8x32xf32>
    %885 = math.tanh %884 : vector<8x32xf32>
    %886 = arith.mulf %885, %885 : vector<8x32xf32>
    %887 = arith.mulf %885, %17 : vector<8x32xf32>
    %cst_173 = arith.constant dense<0.000000e+00> : vector<8xf32>
    %888 = vector.multi_reduction <add>, %887, %cst_173 [1] : vector<8x32xf32> to vector<8xf32>
    %889 = vector.shape_cast %888 : vector<8xf32> to vector<8x1xf32>
    %890 = vector.broadcast %21 : f32 to vector<8x1xf32>
    %891 = arith.addf %889, %890 : vector<8x1xf32>
    %892 = arith.mulf %885, %20 : vector<8x32xf32>
    %cst_174 = arith.constant dense<0.000000e+00> : vector<8xf32>
    %893 = vector.multi_reduction <add>, %892, %cst_174 [1] : vector<8x32xf32> to vector<8xf32>
    %894 = vector.shape_cast %893 : vector<8xf32> to vector<8x1xf32>
    %895 = vector.broadcast %22 : f32 to vector<8x1xf32>
    %896 = arith.addf %894, %895 : vector<8x1xf32>
    %897 = arith.mulf %886, %8 : vector<8x32xf32>
    %cst_175 = arith.constant dense<0.000000e+00> : vector<8xf32>
    %898 = vector.multi_reduction <add>, %897, %cst_175 [1] : vector<8x32xf32> to vector<8xf32>
    %899 = vector.shape_cast %898 : vector<8xf32> to vector<8x1xf32>
    %900 = vector.broadcast %24 : f32 to vector<8x1xf32>
    %901 = arith.addf %900, %899 : vector<8x1xf32>
    %cst_176 = arith.constant 5.000000e-01 : f32
    %902 = arith.mulf %cst_176, %707 : f32
    %903 = vector.broadcast %902 : f32 to vector<8x1xf32>
    %904 = arith.mulf %903, %891 : vector<8x1xf32>
    %905 = arith.addf %851, %904 : vector<8x1xf32>
    %cst_177 = arith.constant 5.000000e-01 : f32
    %906 = arith.mulf %cst_177, %707 : f32
    %907 = vector.broadcast %906 : f32 to vector<8x1xf32>
    %908 = arith.mulf %907, %896 : vector<8x1xf32>
    %909 = arith.addf %862, %908 : vector<8x1xf32>
    %cst_178 = arith.constant 5.000000e-01 : f32
    %910 = arith.mulf %cst_178, %707 : f32
    %911 = arith.addf %875, %910 : f32
    %912 = vector.broadcast %911 : f32 to vector<8x32xf32>
    %913 = arith.mulf %912, %5 : vector<8x32xf32>
    %914 = arith.addf %2, %913 : vector<8x32xf32>
    %915 = vector.broadcast %905 : vector<8x1xf32> to vector<8x32xf32>
    %916 = arith.mulf %915, %11 : vector<8x32xf32>
    %917 = arith.addf %914, %916 : vector<8x32xf32>
    %918 = vector.broadcast %909 : vector<8x1xf32> to vector<8x32xf32>
    %919 = arith.mulf %918, %14 : vector<8x32xf32>
    %920 = arith.addf %917, %919 : vector<8x32xf32>
    %921 = math.tanh %920 : vector<8x32xf32>
    %922 = arith.mulf %921, %921 : vector<8x32xf32>
    %923 = arith.mulf %921, %17 : vector<8x32xf32>
    %cst_179 = arith.constant dense<0.000000e+00> : vector<8xf32>
    %924 = vector.multi_reduction <add>, %923, %cst_179 [1] : vector<8x32xf32> to vector<8xf32>
    %925 = vector.shape_cast %924 : vector<8xf32> to vector<8x1xf32>
    %926 = vector.broadcast %21 : f32 to vector<8x1xf32>
    %927 = arith.addf %925, %926 : vector<8x1xf32>
    %928 = arith.mulf %921, %20 : vector<8x32xf32>
    %cst_180 = arith.constant dense<0.000000e+00> : vector<8xf32>
    %929 = vector.multi_reduction <add>, %928, %cst_180 [1] : vector<8x32xf32> to vector<8xf32>
    %930 = vector.shape_cast %929 : vector<8xf32> to vector<8x1xf32>
    %931 = vector.broadcast %22 : f32 to vector<8x1xf32>
    %932 = arith.addf %930, %931 : vector<8x1xf32>
    %933 = arith.mulf %922, %8 : vector<8x32xf32>
    %cst_181 = arith.constant dense<0.000000e+00> : vector<8xf32>
    %934 = vector.multi_reduction <add>, %933, %cst_181 [1] : vector<8x32xf32> to vector<8xf32>
    %935 = vector.shape_cast %934 : vector<8xf32> to vector<8x1xf32>
    %936 = vector.broadcast %24 : f32 to vector<8x1xf32>
    %937 = arith.addf %936, %935 : vector<8x1xf32>
    %cst_182 = arith.constant 5.000000e-01 : f32
    %938 = arith.mulf %cst_182, %707 : f32
    %939 = vector.broadcast %938 : f32 to vector<8x1xf32>
    %940 = arith.mulf %939, %927 : vector<8x1xf32>
    %941 = arith.addf %851, %940 : vector<8x1xf32>
    %cst_183 = arith.constant 5.000000e-01 : f32
    %942 = arith.mulf %cst_183, %707 : f32
    %943 = vector.broadcast %942 : f32 to vector<8x1xf32>
    %944 = arith.mulf %943, %932 : vector<8x1xf32>
    %945 = arith.addf %862, %944 : vector<8x1xf32>
    %cst_184 = arith.constant 5.000000e-01 : f32
    %946 = arith.mulf %cst_184, %707 : f32
    %947 = arith.addf %875, %946 : f32
    %948 = vector.broadcast %947 : f32 to vector<8x32xf32>
    %949 = arith.mulf %948, %5 : vector<8x32xf32>
    %950 = arith.addf %2, %949 : vector<8x32xf32>
    %951 = vector.broadcast %941 : vector<8x1xf32> to vector<8x32xf32>
    %952 = arith.mulf %951, %11 : vector<8x32xf32>
    %953 = arith.addf %950, %952 : vector<8x32xf32>
    %954 = vector.broadcast %945 : vector<8x1xf32> to vector<8x32xf32>
    %955 = arith.mulf %954, %14 : vector<8x32xf32>
    %956 = arith.addf %953, %955 : vector<8x32xf32>
    %957 = math.tanh %956 : vector<8x32xf32>
    %958 = arith.mulf %957, %957 : vector<8x32xf32>
    %959 = arith.mulf %957, %17 : vector<8x32xf32>
    %cst_185 = arith.constant dense<0.000000e+00> : vector<8xf32>
    %960 = vector.multi_reduction <add>, %959, %cst_185 [1] : vector<8x32xf32> to vector<8xf32>
    %961 = vector.shape_cast %960 : vector<8xf32> to vector<8x1xf32>
    %962 = vector.broadcast %21 : f32 to vector<8x1xf32>
    %963 = arith.addf %961, %962 : vector<8x1xf32>
    %964 = arith.mulf %957, %20 : vector<8x32xf32>
    %cst_186 = arith.constant dense<0.000000e+00> : vector<8xf32>
    %965 = vector.multi_reduction <add>, %964, %cst_186 [1] : vector<8x32xf32> to vector<8xf32>
    %966 = vector.shape_cast %965 : vector<8xf32> to vector<8x1xf32>
    %967 = vector.broadcast %22 : f32 to vector<8x1xf32>
    %968 = arith.addf %966, %967 : vector<8x1xf32>
    %969 = arith.mulf %958, %8 : vector<8x32xf32>
    %cst_187 = arith.constant dense<0.000000e+00> : vector<8xf32>
    %970 = vector.multi_reduction <add>, %969, %cst_187 [1] : vector<8x32xf32> to vector<8xf32>
    %971 = vector.shape_cast %970 : vector<8xf32> to vector<8x1xf32>
    %972 = vector.broadcast %24 : f32 to vector<8x1xf32>
    %973 = arith.addf %972, %971 : vector<8x1xf32>
    %974 = vector.broadcast %707 : f32 to vector<8x1xf32>
    %975 = arith.mulf %974, %963 : vector<8x1xf32>
    %976 = arith.addf %851, %975 : vector<8x1xf32>
    %977 = vector.broadcast %707 : f32 to vector<8x1xf32>
    %978 = arith.mulf %977, %968 : vector<8x1xf32>
    %979 = arith.addf %862, %978 : vector<8x1xf32>
    %980 = arith.addf %875, %707 : f32
    %981 = vector.broadcast %980 : f32 to vector<8x32xf32>
    %982 = arith.mulf %981, %5 : vector<8x32xf32>
    %983 = arith.addf %2, %982 : vector<8x32xf32>
    %984 = vector.broadcast %976 : vector<8x1xf32> to vector<8x32xf32>
    %985 = arith.mulf %984, %11 : vector<8x32xf32>
    %986 = arith.addf %983, %985 : vector<8x32xf32>
    %987 = vector.broadcast %979 : vector<8x1xf32> to vector<8x32xf32>
    %988 = arith.mulf %987, %14 : vector<8x32xf32>
    %989 = arith.addf %986, %988 : vector<8x32xf32>
    %990 = math.tanh %989 : vector<8x32xf32>
    %991 = arith.mulf %990, %990 : vector<8x32xf32>
    %992 = arith.mulf %990, %17 : vector<8x32xf32>
    %cst_188 = arith.constant dense<0.000000e+00> : vector<8xf32>
    %993 = vector.multi_reduction <add>, %992, %cst_188 [1] : vector<8x32xf32> to vector<8xf32>
    %994 = vector.shape_cast %993 : vector<8xf32> to vector<8x1xf32>
    %995 = vector.broadcast %21 : f32 to vector<8x1xf32>
    %996 = arith.addf %994, %995 : vector<8x1xf32>
    %997 = arith.mulf %990, %20 : vector<8x32xf32>
    %cst_189 = arith.constant dense<0.000000e+00> : vector<8xf32>
    %998 = vector.multi_reduction <add>, %997, %cst_189 [1] : vector<8x32xf32> to vector<8xf32>
    %999 = vector.shape_cast %998 : vector<8xf32> to vector<8x1xf32>
    %1000 = vector.broadcast %22 : f32 to vector<8x1xf32>
    %1001 = arith.addf %999, %1000 : vector<8x1xf32>
    %1002 = arith.mulf %991, %8 : vector<8x32xf32>
    %cst_190 = arith.constant dense<0.000000e+00> : vector<8xf32>
    %1003 = vector.multi_reduction <add>, %1002, %cst_190 [1] : vector<8x32xf32> to vector<8xf32>
    %1004 = vector.shape_cast %1003 : vector<8xf32> to vector<8x1xf32>
    %1005 = vector.broadcast %24 : f32 to vector<8x1xf32>
    %1006 = arith.addf %1005, %1004 : vector<8x1xf32>
    %cst_191 = arith.constant 6.000000e+00 : f32
    %1007 = arith.divf %707, %cst_191 : f32
    %cst_192 = arith.constant 2.000000e+00 : f32
    %1008 = vector.broadcast %cst_192 : f32 to vector<8x1xf32>
    %1009 = arith.mulf %1008, %927 : vector<8x1xf32>
    %1010 = arith.addf %891, %1009 : vector<8x1xf32>
    %cst_193 = arith.constant 2.000000e+00 : f32
    %1011 = vector.broadcast %cst_193 : f32 to vector<8x1xf32>
    %1012 = arith.mulf %1011, %963 : vector<8x1xf32>
    %1013 = arith.addf %1010, %1012 : vector<8x1xf32>
    %1014 = arith.addf %1013, %996 : vector<8x1xf32>
    %1015 = vector.broadcast %1007 : f32 to vector<8x1xf32>
    %1016 = arith.mulf %1015, %1014 : vector<8x1xf32>
    %1017 = arith.addf %851, %1016 : vector<8x1xf32>
    %cst_194 = arith.constant 6.000000e+00 : f32
    %1018 = arith.divf %707, %cst_194 : f32
    %cst_195 = arith.constant 2.000000e+00 : f32
    %1019 = vector.broadcast %cst_195 : f32 to vector<8x1xf32>
    %1020 = arith.mulf %1019, %932 : vector<8x1xf32>
    %1021 = arith.addf %896, %1020 : vector<8x1xf32>
    %cst_196 = arith.constant 2.000000e+00 : f32
    %1022 = vector.broadcast %cst_196 : f32 to vector<8x1xf32>
    %1023 = arith.mulf %1022, %968 : vector<8x1xf32>
    %1024 = arith.addf %1021, %1023 : vector<8x1xf32>
    %1025 = arith.addf %1024, %1001 : vector<8x1xf32>
    %1026 = vector.broadcast %1018 : f32 to vector<8x1xf32>
    %1027 = arith.mulf %1026, %1025 : vector<8x1xf32>
    %1028 = arith.addf %862, %1027 : vector<8x1xf32>
    %cst_197 = arith.constant 6.000000e+00 : f32
    %1029 = arith.divf %707, %cst_197 : f32
    %cst_198 = arith.constant 2.000000e+00 : f32
    %1030 = vector.broadcast %cst_198 : f32 to vector<8x1xf32>
    %1031 = arith.mulf %1030, %937 : vector<8x1xf32>
    %1032 = arith.addf %901, %1031 : vector<8x1xf32>
    %cst_199 = arith.constant 2.000000e+00 : f32
    %1033 = vector.broadcast %cst_199 : f32 to vector<8x1xf32>
    %1034 = arith.mulf %1033, %973 : vector<8x1xf32>
    %1035 = arith.addf %1032, %1034 : vector<8x1xf32>
    %1036 = arith.addf %1035, %1006 : vector<8x1xf32>
    %1037 = vector.broadcast %1029 : f32 to vector<8x1xf32>
    %1038 = arith.mulf %1037, %1036 : vector<8x1xf32>
    %1039 = arith.addf %873, %1038 : vector<8x1xf32>
    %cst_200 = arith.constant 2.000000e+00 : f32
    %1040 = arith.mulf %cst_200, %707 : f32
    %1041 = arith.addf %704, %1040 : f32
    %1042 = vector.broadcast %1041 : f32 to vector<8x32xf32>
    %1043 = arith.mulf %1042, %5 : vector<8x32xf32>
    %1044 = arith.addf %2, %1043 : vector<8x32xf32>
    %1045 = vector.broadcast %1017 : vector<8x1xf32> to vector<8x32xf32>
    %1046 = arith.mulf %1045, %11 : vector<8x32xf32>
    %1047 = arith.addf %1044, %1046 : vector<8x32xf32>
    %1048 = vector.broadcast %1028 : vector<8x1xf32> to vector<8x32xf32>
    %1049 = arith.mulf %1048, %14 : vector<8x32xf32>
    %1050 = arith.addf %1047, %1049 : vector<8x32xf32>
    %1051 = math.tanh %1050 : vector<8x32xf32>
    %1052 = arith.mulf %1051, %1051 : vector<8x32xf32>
    %1053 = arith.mulf %1051, %17 : vector<8x32xf32>
    %cst_201 = arith.constant dense<0.000000e+00> : vector<8xf32>
    %1054 = vector.multi_reduction <add>, %1053, %cst_201 [1] : vector<8x32xf32> to vector<8xf32>
    %1055 = vector.shape_cast %1054 : vector<8xf32> to vector<8x1xf32>
    %1056 = vector.broadcast %21 : f32 to vector<8x1xf32>
    %1057 = arith.addf %1055, %1056 : vector<8x1xf32>
    %1058 = arith.mulf %1051, %20 : vector<8x32xf32>
    %cst_202 = arith.constant dense<0.000000e+00> : vector<8xf32>
    %1059 = vector.multi_reduction <add>, %1058, %cst_202 [1] : vector<8x32xf32> to vector<8xf32>
    %1060 = vector.shape_cast %1059 : vector<8xf32> to vector<8x1xf32>
    %1061 = vector.broadcast %22 : f32 to vector<8x1xf32>
    %1062 = arith.addf %1060, %1061 : vector<8x1xf32>
    %1063 = arith.mulf %1052, %8 : vector<8x32xf32>
    %cst_203 = arith.constant dense<0.000000e+00> : vector<8xf32>
    %1064 = vector.multi_reduction <add>, %1063, %cst_203 [1] : vector<8x32xf32> to vector<8xf32>
    %1065 = vector.shape_cast %1064 : vector<8xf32> to vector<8x1xf32>
    %1066 = vector.broadcast %24 : f32 to vector<8x1xf32>
    %1067 = arith.addf %1066, %1065 : vector<8x1xf32>
    %cst_204 = arith.constant 5.000000e-01 : f32
    %1068 = arith.mulf %cst_204, %707 : f32
    %1069 = vector.broadcast %1068 : f32 to vector<8x1xf32>
    %1070 = arith.mulf %1069, %1057 : vector<8x1xf32>
    %1071 = arith.addf %1017, %1070 : vector<8x1xf32>
    %cst_205 = arith.constant 5.000000e-01 : f32
    %1072 = arith.mulf %cst_205, %707 : f32
    %1073 = vector.broadcast %1072 : f32 to vector<8x1xf32>
    %1074 = arith.mulf %1073, %1062 : vector<8x1xf32>
    %1075 = arith.addf %1028, %1074 : vector<8x1xf32>
    %cst_206 = arith.constant 5.000000e-01 : f32
    %1076 = arith.mulf %cst_206, %707 : f32
    %1077 = arith.addf %1041, %1076 : f32
    %1078 = vector.broadcast %1077 : f32 to vector<8x32xf32>
    %1079 = arith.mulf %1078, %5 : vector<8x32xf32>
    %1080 = arith.addf %2, %1079 : vector<8x32xf32>
    %1081 = vector.broadcast %1071 : vector<8x1xf32> to vector<8x32xf32>
    %1082 = arith.mulf %1081, %11 : vector<8x32xf32>
    %1083 = arith.addf %1080, %1082 : vector<8x32xf32>
    %1084 = vector.broadcast %1075 : vector<8x1xf32> to vector<8x32xf32>
    %1085 = arith.mulf %1084, %14 : vector<8x32xf32>
    %1086 = arith.addf %1083, %1085 : vector<8x32xf32>
    %1087 = math.tanh %1086 : vector<8x32xf32>
    %1088 = arith.mulf %1087, %1087 : vector<8x32xf32>
    %1089 = arith.mulf %1087, %17 : vector<8x32xf32>
    %cst_207 = arith.constant dense<0.000000e+00> : vector<8xf32>
    %1090 = vector.multi_reduction <add>, %1089, %cst_207 [1] : vector<8x32xf32> to vector<8xf32>
    %1091 = vector.shape_cast %1090 : vector<8xf32> to vector<8x1xf32>
    %1092 = vector.broadcast %21 : f32 to vector<8x1xf32>
    %1093 = arith.addf %1091, %1092 : vector<8x1xf32>
    %1094 = arith.mulf %1087, %20 : vector<8x32xf32>
    %cst_208 = arith.constant dense<0.000000e+00> : vector<8xf32>
    %1095 = vector.multi_reduction <add>, %1094, %cst_208 [1] : vector<8x32xf32> to vector<8xf32>
    %1096 = vector.shape_cast %1095 : vector<8xf32> to vector<8x1xf32>
    %1097 = vector.broadcast %22 : f32 to vector<8x1xf32>
    %1098 = arith.addf %1096, %1097 : vector<8x1xf32>
    %1099 = arith.mulf %1088, %8 : vector<8x32xf32>
    %cst_209 = arith.constant dense<0.000000e+00> : vector<8xf32>
    %1100 = vector.multi_reduction <add>, %1099, %cst_209 [1] : vector<8x32xf32> to vector<8xf32>
    %1101 = vector.shape_cast %1100 : vector<8xf32> to vector<8x1xf32>
    %1102 = vector.broadcast %24 : f32 to vector<8x1xf32>
    %1103 = arith.addf %1102, %1101 : vector<8x1xf32>
    %cst_210 = arith.constant 5.000000e-01 : f32
    %1104 = arith.mulf %cst_210, %707 : f32
    %1105 = vector.broadcast %1104 : f32 to vector<8x1xf32>
    %1106 = arith.mulf %1105, %1093 : vector<8x1xf32>
    %1107 = arith.addf %1017, %1106 : vector<8x1xf32>
    %cst_211 = arith.constant 5.000000e-01 : f32
    %1108 = arith.mulf %cst_211, %707 : f32
    %1109 = vector.broadcast %1108 : f32 to vector<8x1xf32>
    %1110 = arith.mulf %1109, %1098 : vector<8x1xf32>
    %1111 = arith.addf %1028, %1110 : vector<8x1xf32>
    %cst_212 = arith.constant 5.000000e-01 : f32
    %1112 = arith.mulf %cst_212, %707 : f32
    %1113 = arith.addf %1041, %1112 : f32
    %1114 = vector.broadcast %1113 : f32 to vector<8x32xf32>
    %1115 = arith.mulf %1114, %5 : vector<8x32xf32>
    %1116 = arith.addf %2, %1115 : vector<8x32xf32>
    %1117 = vector.broadcast %1107 : vector<8x1xf32> to vector<8x32xf32>
    %1118 = arith.mulf %1117, %11 : vector<8x32xf32>
    %1119 = arith.addf %1116, %1118 : vector<8x32xf32>
    %1120 = vector.broadcast %1111 : vector<8x1xf32> to vector<8x32xf32>
    %1121 = arith.mulf %1120, %14 : vector<8x32xf32>
    %1122 = arith.addf %1119, %1121 : vector<8x32xf32>
    %1123 = math.tanh %1122 : vector<8x32xf32>
    %1124 = arith.mulf %1123, %1123 : vector<8x32xf32>
    %1125 = arith.mulf %1123, %17 : vector<8x32xf32>
    %cst_213 = arith.constant dense<0.000000e+00> : vector<8xf32>
    %1126 = vector.multi_reduction <add>, %1125, %cst_213 [1] : vector<8x32xf32> to vector<8xf32>
    %1127 = vector.shape_cast %1126 : vector<8xf32> to vector<8x1xf32>
    %1128 = vector.broadcast %21 : f32 to vector<8x1xf32>
    %1129 = arith.addf %1127, %1128 : vector<8x1xf32>
    %1130 = arith.mulf %1123, %20 : vector<8x32xf32>
    %cst_214 = arith.constant dense<0.000000e+00> : vector<8xf32>
    %1131 = vector.multi_reduction <add>, %1130, %cst_214 [1] : vector<8x32xf32> to vector<8xf32>
    %1132 = vector.shape_cast %1131 : vector<8xf32> to vector<8x1xf32>
    %1133 = vector.broadcast %22 : f32 to vector<8x1xf32>
    %1134 = arith.addf %1132, %1133 : vector<8x1xf32>
    %1135 = arith.mulf %1124, %8 : vector<8x32xf32>
    %cst_215 = arith.constant dense<0.000000e+00> : vector<8xf32>
    %1136 = vector.multi_reduction <add>, %1135, %cst_215 [1] : vector<8x32xf32> to vector<8xf32>
    %1137 = vector.shape_cast %1136 : vector<8xf32> to vector<8x1xf32>
    %1138 = vector.broadcast %24 : f32 to vector<8x1xf32>
    %1139 = arith.addf %1138, %1137 : vector<8x1xf32>
    %1140 = vector.broadcast %707 : f32 to vector<8x1xf32>
    %1141 = arith.mulf %1140, %1129 : vector<8x1xf32>
    %1142 = arith.addf %1017, %1141 : vector<8x1xf32>
    %1143 = vector.broadcast %707 : f32 to vector<8x1xf32>
    %1144 = arith.mulf %1143, %1134 : vector<8x1xf32>
    %1145 = arith.addf %1028, %1144 : vector<8x1xf32>
    %1146 = arith.addf %1041, %707 : f32
    %1147 = vector.broadcast %1146 : f32 to vector<8x32xf32>
    %1148 = arith.mulf %1147, %5 : vector<8x32xf32>
    %1149 = arith.addf %2, %1148 : vector<8x32xf32>
    %1150 = vector.broadcast %1142 : vector<8x1xf32> to vector<8x32xf32>
    %1151 = arith.mulf %1150, %11 : vector<8x32xf32>
    %1152 = arith.addf %1149, %1151 : vector<8x32xf32>
    %1153 = vector.broadcast %1145 : vector<8x1xf32> to vector<8x32xf32>
    %1154 = arith.mulf %1153, %14 : vector<8x32xf32>
    %1155 = arith.addf %1152, %1154 : vector<8x32xf32>
    %1156 = math.tanh %1155 : vector<8x32xf32>
    %1157 = arith.mulf %1156, %1156 : vector<8x32xf32>
    %1158 = arith.mulf %1156, %17 : vector<8x32xf32>
    %cst_216 = arith.constant dense<0.000000e+00> : vector<8xf32>
    %1159 = vector.multi_reduction <add>, %1158, %cst_216 [1] : vector<8x32xf32> to vector<8xf32>
    %1160 = vector.shape_cast %1159 : vector<8xf32> to vector<8x1xf32>
    %1161 = vector.broadcast %21 : f32 to vector<8x1xf32>
    %1162 = arith.addf %1160, %1161 : vector<8x1xf32>
    %1163 = arith.mulf %1156, %20 : vector<8x32xf32>
    %cst_217 = arith.constant dense<0.000000e+00> : vector<8xf32>
    %1164 = vector.multi_reduction <add>, %1163, %cst_217 [1] : vector<8x32xf32> to vector<8xf32>
    %1165 = vector.shape_cast %1164 : vector<8xf32> to vector<8x1xf32>
    %1166 = vector.broadcast %22 : f32 to vector<8x1xf32>
    %1167 = arith.addf %1165, %1166 : vector<8x1xf32>
    %1168 = arith.mulf %1157, %8 : vector<8x32xf32>
    %cst_218 = arith.constant dense<0.000000e+00> : vector<8xf32>
    %1169 = vector.multi_reduction <add>, %1168, %cst_218 [1] : vector<8x32xf32> to vector<8xf32>
    %1170 = vector.shape_cast %1169 : vector<8xf32> to vector<8x1xf32>
    %1171 = vector.broadcast %24 : f32 to vector<8x1xf32>
    %1172 = arith.addf %1171, %1170 : vector<8x1xf32>
    %cst_219 = arith.constant 6.000000e+00 : f32
    %1173 = arith.divf %707, %cst_219 : f32
    %cst_220 = arith.constant 2.000000e+00 : f32
    %1174 = vector.broadcast %cst_220 : f32 to vector<8x1xf32>
    %1175 = arith.mulf %1174, %1093 : vector<8x1xf32>
    %1176 = arith.addf %1057, %1175 : vector<8x1xf32>
    %cst_221 = arith.constant 2.000000e+00 : f32
    %1177 = vector.broadcast %cst_221 : f32 to vector<8x1xf32>
    %1178 = arith.mulf %1177, %1129 : vector<8x1xf32>
    %1179 = arith.addf %1176, %1178 : vector<8x1xf32>
    %1180 = arith.addf %1179, %1162 : vector<8x1xf32>
    %1181 = vector.broadcast %1173 : f32 to vector<8x1xf32>
    %1182 = arith.mulf %1181, %1180 : vector<8x1xf32>
    %1183 = arith.addf %1017, %1182 : vector<8x1xf32>
    %cst_222 = arith.constant 6.000000e+00 : f32
    %1184 = arith.divf %707, %cst_222 : f32
    %cst_223 = arith.constant 2.000000e+00 : f32
    %1185 = vector.broadcast %cst_223 : f32 to vector<8x1xf32>
    %1186 = arith.mulf %1185, %1098 : vector<8x1xf32>
    %1187 = arith.addf %1062, %1186 : vector<8x1xf32>
    %cst_224 = arith.constant 2.000000e+00 : f32
    %1188 = vector.broadcast %cst_224 : f32 to vector<8x1xf32>
    %1189 = arith.mulf %1188, %1134 : vector<8x1xf32>
    %1190 = arith.addf %1187, %1189 : vector<8x1xf32>
    %1191 = arith.addf %1190, %1167 : vector<8x1xf32>
    %1192 = vector.broadcast %1184 : f32 to vector<8x1xf32>
    %1193 = arith.mulf %1192, %1191 : vector<8x1xf32>
    %1194 = arith.addf %1028, %1193 : vector<8x1xf32>
    %cst_225 = arith.constant 6.000000e+00 : f32
    %1195 = arith.divf %707, %cst_225 : f32
    %cst_226 = arith.constant 2.000000e+00 : f32
    %1196 = vector.broadcast %cst_226 : f32 to vector<8x1xf32>
    %1197 = arith.mulf %1196, %1103 : vector<8x1xf32>
    %1198 = arith.addf %1067, %1197 : vector<8x1xf32>
    %cst_227 = arith.constant 2.000000e+00 : f32
    %1199 = vector.broadcast %cst_227 : f32 to vector<8x1xf32>
    %1200 = arith.mulf %1199, %1139 : vector<8x1xf32>
    %1201 = arith.addf %1198, %1200 : vector<8x1xf32>
    %1202 = arith.addf %1201, %1172 : vector<8x1xf32>
    %1203 = vector.broadcast %1195 : f32 to vector<8x1xf32>
    %1204 = arith.mulf %1203, %1202 : vector<8x1xf32>
    %1205 = arith.addf %1039, %1204 : vector<8x1xf32>
    %cst_228 = arith.constant 3.000000e+00 : f32
    %1206 = arith.mulf %cst_228, %707 : f32
    %1207 = arith.addf %704, %1206 : f32
    %1208 = vector.broadcast %1207 : f32 to vector<8x32xf32>
    %1209 = arith.mulf %1208, %5 : vector<8x32xf32>
    %1210 = arith.addf %2, %1209 : vector<8x32xf32>
    %1211 = vector.broadcast %1183 : vector<8x1xf32> to vector<8x32xf32>
    %1212 = arith.mulf %1211, %11 : vector<8x32xf32>
    %1213 = arith.addf %1210, %1212 : vector<8x32xf32>
    %1214 = vector.broadcast %1194 : vector<8x1xf32> to vector<8x32xf32>
    %1215 = arith.mulf %1214, %14 : vector<8x32xf32>
    %1216 = arith.addf %1213, %1215 : vector<8x32xf32>
    %1217 = math.tanh %1216 : vector<8x32xf32>
    %1218 = arith.mulf %1217, %1217 : vector<8x32xf32>
    %1219 = arith.mulf %1217, %17 : vector<8x32xf32>
    %cst_229 = arith.constant dense<0.000000e+00> : vector<8xf32>
    %1220 = vector.multi_reduction <add>, %1219, %cst_229 [1] : vector<8x32xf32> to vector<8xf32>
    %1221 = vector.shape_cast %1220 : vector<8xf32> to vector<8x1xf32>
    %1222 = vector.broadcast %21 : f32 to vector<8x1xf32>
    %1223 = arith.addf %1221, %1222 : vector<8x1xf32>
    %1224 = arith.mulf %1217, %20 : vector<8x32xf32>
    %cst_230 = arith.constant dense<0.000000e+00> : vector<8xf32>
    %1225 = vector.multi_reduction <add>, %1224, %cst_230 [1] : vector<8x32xf32> to vector<8xf32>
    %1226 = vector.shape_cast %1225 : vector<8xf32> to vector<8x1xf32>
    %1227 = vector.broadcast %22 : f32 to vector<8x1xf32>
    %1228 = arith.addf %1226, %1227 : vector<8x1xf32>
    %1229 = arith.mulf %1218, %8 : vector<8x32xf32>
    %cst_231 = arith.constant dense<0.000000e+00> : vector<8xf32>
    %1230 = vector.multi_reduction <add>, %1229, %cst_231 [1] : vector<8x32xf32> to vector<8xf32>
    %1231 = vector.shape_cast %1230 : vector<8xf32> to vector<8x1xf32>
    %1232 = vector.broadcast %24 : f32 to vector<8x1xf32>
    %1233 = arith.addf %1232, %1231 : vector<8x1xf32>
    %cst_232 = arith.constant 5.000000e-01 : f32
    %1234 = arith.mulf %cst_232, %707 : f32
    %1235 = vector.broadcast %1234 : f32 to vector<8x1xf32>
    %1236 = arith.mulf %1235, %1223 : vector<8x1xf32>
    %1237 = arith.addf %1183, %1236 : vector<8x1xf32>
    %cst_233 = arith.constant 5.000000e-01 : f32
    %1238 = arith.mulf %cst_233, %707 : f32
    %1239 = vector.broadcast %1238 : f32 to vector<8x1xf32>
    %1240 = arith.mulf %1239, %1228 : vector<8x1xf32>
    %1241 = arith.addf %1194, %1240 : vector<8x1xf32>
    %cst_234 = arith.constant 5.000000e-01 : f32
    %1242 = arith.mulf %cst_234, %707 : f32
    %1243 = arith.addf %1207, %1242 : f32
    %1244 = vector.broadcast %1243 : f32 to vector<8x32xf32>
    %1245 = arith.mulf %1244, %5 : vector<8x32xf32>
    %1246 = arith.addf %2, %1245 : vector<8x32xf32>
    %1247 = vector.broadcast %1237 : vector<8x1xf32> to vector<8x32xf32>
    %1248 = arith.mulf %1247, %11 : vector<8x32xf32>
    %1249 = arith.addf %1246, %1248 : vector<8x32xf32>
    %1250 = vector.broadcast %1241 : vector<8x1xf32> to vector<8x32xf32>
    %1251 = arith.mulf %1250, %14 : vector<8x32xf32>
    %1252 = arith.addf %1249, %1251 : vector<8x32xf32>
    %1253 = math.tanh %1252 : vector<8x32xf32>
    %1254 = arith.mulf %1253, %1253 : vector<8x32xf32>
    %1255 = arith.mulf %1253, %17 : vector<8x32xf32>
    %cst_235 = arith.constant dense<0.000000e+00> : vector<8xf32>
    %1256 = vector.multi_reduction <add>, %1255, %cst_235 [1] : vector<8x32xf32> to vector<8xf32>
    %1257 = vector.shape_cast %1256 : vector<8xf32> to vector<8x1xf32>
    %1258 = vector.broadcast %21 : f32 to vector<8x1xf32>
    %1259 = arith.addf %1257, %1258 : vector<8x1xf32>
    %1260 = arith.mulf %1253, %20 : vector<8x32xf32>
    %cst_236 = arith.constant dense<0.000000e+00> : vector<8xf32>
    %1261 = vector.multi_reduction <add>, %1260, %cst_236 [1] : vector<8x32xf32> to vector<8xf32>
    %1262 = vector.shape_cast %1261 : vector<8xf32> to vector<8x1xf32>
    %1263 = vector.broadcast %22 : f32 to vector<8x1xf32>
    %1264 = arith.addf %1262, %1263 : vector<8x1xf32>
    %1265 = arith.mulf %1254, %8 : vector<8x32xf32>
    %cst_237 = arith.constant dense<0.000000e+00> : vector<8xf32>
    %1266 = vector.multi_reduction <add>, %1265, %cst_237 [1] : vector<8x32xf32> to vector<8xf32>
    %1267 = vector.shape_cast %1266 : vector<8xf32> to vector<8x1xf32>
    %1268 = vector.broadcast %24 : f32 to vector<8x1xf32>
    %1269 = arith.addf %1268, %1267 : vector<8x1xf32>
    %cst_238 = arith.constant 5.000000e-01 : f32
    %1270 = arith.mulf %cst_238, %707 : f32
    %1271 = vector.broadcast %1270 : f32 to vector<8x1xf32>
    %1272 = arith.mulf %1271, %1259 : vector<8x1xf32>
    %1273 = arith.addf %1183, %1272 : vector<8x1xf32>
    %cst_239 = arith.constant 5.000000e-01 : f32
    %1274 = arith.mulf %cst_239, %707 : f32
    %1275 = vector.broadcast %1274 : f32 to vector<8x1xf32>
    %1276 = arith.mulf %1275, %1264 : vector<8x1xf32>
    %1277 = arith.addf %1194, %1276 : vector<8x1xf32>
    %cst_240 = arith.constant 5.000000e-01 : f32
    %1278 = arith.mulf %cst_240, %707 : f32
    %1279 = arith.addf %1207, %1278 : f32
    %1280 = vector.broadcast %1279 : f32 to vector<8x32xf32>
    %1281 = arith.mulf %1280, %5 : vector<8x32xf32>
    %1282 = arith.addf %2, %1281 : vector<8x32xf32>
    %1283 = vector.broadcast %1273 : vector<8x1xf32> to vector<8x32xf32>
    %1284 = arith.mulf %1283, %11 : vector<8x32xf32>
    %1285 = arith.addf %1282, %1284 : vector<8x32xf32>
    %1286 = vector.broadcast %1277 : vector<8x1xf32> to vector<8x32xf32>
    %1287 = arith.mulf %1286, %14 : vector<8x32xf32>
    %1288 = arith.addf %1285, %1287 : vector<8x32xf32>
    %1289 = math.tanh %1288 : vector<8x32xf32>
    %1290 = arith.mulf %1289, %1289 : vector<8x32xf32>
    %1291 = arith.mulf %1289, %17 : vector<8x32xf32>
    %cst_241 = arith.constant dense<0.000000e+00> : vector<8xf32>
    %1292 = vector.multi_reduction <add>, %1291, %cst_241 [1] : vector<8x32xf32> to vector<8xf32>
    %1293 = vector.shape_cast %1292 : vector<8xf32> to vector<8x1xf32>
    %1294 = vector.broadcast %21 : f32 to vector<8x1xf32>
    %1295 = arith.addf %1293, %1294 : vector<8x1xf32>
    %1296 = arith.mulf %1289, %20 : vector<8x32xf32>
    %cst_242 = arith.constant dense<0.000000e+00> : vector<8xf32>
    %1297 = vector.multi_reduction <add>, %1296, %cst_242 [1] : vector<8x32xf32> to vector<8xf32>
    %1298 = vector.shape_cast %1297 : vector<8xf32> to vector<8x1xf32>
    %1299 = vector.broadcast %22 : f32 to vector<8x1xf32>
    %1300 = arith.addf %1298, %1299 : vector<8x1xf32>
    %1301 = arith.mulf %1290, %8 : vector<8x32xf32>
    %cst_243 = arith.constant dense<0.000000e+00> : vector<8xf32>
    %1302 = vector.multi_reduction <add>, %1301, %cst_243 [1] : vector<8x32xf32> to vector<8xf32>
    %1303 = vector.shape_cast %1302 : vector<8xf32> to vector<8x1xf32>
    %1304 = vector.broadcast %24 : f32 to vector<8x1xf32>
    %1305 = arith.addf %1304, %1303 : vector<8x1xf32>
    %1306 = vector.broadcast %707 : f32 to vector<8x1xf32>
    %1307 = arith.mulf %1306, %1295 : vector<8x1xf32>
    %1308 = arith.addf %1183, %1307 : vector<8x1xf32>
    %1309 = vector.broadcast %707 : f32 to vector<8x1xf32>
    %1310 = arith.mulf %1309, %1300 : vector<8x1xf32>
    %1311 = arith.addf %1194, %1310 : vector<8x1xf32>
    %1312 = arith.addf %1207, %707 : f32
    %1313 = vector.broadcast %1312 : f32 to vector<8x32xf32>
    %1314 = arith.mulf %1313, %5 : vector<8x32xf32>
    %1315 = arith.addf %2, %1314 : vector<8x32xf32>
    %1316 = vector.broadcast %1308 : vector<8x1xf32> to vector<8x32xf32>
    %1317 = arith.mulf %1316, %11 : vector<8x32xf32>
    %1318 = arith.addf %1315, %1317 : vector<8x32xf32>
    %1319 = vector.broadcast %1311 : vector<8x1xf32> to vector<8x32xf32>
    %1320 = arith.mulf %1319, %14 : vector<8x32xf32>
    %1321 = arith.addf %1318, %1320 : vector<8x32xf32>
    %1322 = math.tanh %1321 : vector<8x32xf32>
    %1323 = arith.mulf %1322, %1322 : vector<8x32xf32>
    %1324 = arith.mulf %1322, %17 : vector<8x32xf32>
    %cst_244 = arith.constant dense<0.000000e+00> : vector<8xf32>
    %1325 = vector.multi_reduction <add>, %1324, %cst_244 [1] : vector<8x32xf32> to vector<8xf32>
    %1326 = vector.shape_cast %1325 : vector<8xf32> to vector<8x1xf32>
    %1327 = vector.broadcast %21 : f32 to vector<8x1xf32>
    %1328 = arith.addf %1326, %1327 : vector<8x1xf32>
    %1329 = arith.mulf %1322, %20 : vector<8x32xf32>
    %cst_245 = arith.constant dense<0.000000e+00> : vector<8xf32>
    %1330 = vector.multi_reduction <add>, %1329, %cst_245 [1] : vector<8x32xf32> to vector<8xf32>
    %1331 = vector.shape_cast %1330 : vector<8xf32> to vector<8x1xf32>
    %1332 = vector.broadcast %22 : f32 to vector<8x1xf32>
    %1333 = arith.addf %1331, %1332 : vector<8x1xf32>
    %1334 = arith.mulf %1323, %8 : vector<8x32xf32>
    %cst_246 = arith.constant dense<0.000000e+00> : vector<8xf32>
    %1335 = vector.multi_reduction <add>, %1334, %cst_246 [1] : vector<8x32xf32> to vector<8xf32>
    %1336 = vector.shape_cast %1335 : vector<8xf32> to vector<8x1xf32>
    %1337 = vector.broadcast %24 : f32 to vector<8x1xf32>
    %1338 = arith.addf %1337, %1336 : vector<8x1xf32>
    %cst_247 = arith.constant 6.000000e+00 : f32
    %1339 = arith.divf %707, %cst_247 : f32
    %cst_248 = arith.constant 2.000000e+00 : f32
    %1340 = vector.broadcast %cst_248 : f32 to vector<8x1xf32>
    %1341 = arith.mulf %1340, %1259 : vector<8x1xf32>
    %1342 = arith.addf %1223, %1341 : vector<8x1xf32>
    %cst_249 = arith.constant 2.000000e+00 : f32
    %1343 = vector.broadcast %cst_249 : f32 to vector<8x1xf32>
    %1344 = arith.mulf %1343, %1295 : vector<8x1xf32>
    %1345 = arith.addf %1342, %1344 : vector<8x1xf32>
    %1346 = arith.addf %1345, %1328 : vector<8x1xf32>
    %1347 = vector.broadcast %1339 : f32 to vector<8x1xf32>
    %1348 = arith.mulf %1347, %1346 : vector<8x1xf32>
    %1349 = arith.addf %1183, %1348 : vector<8x1xf32>
    %cst_250 = arith.constant 6.000000e+00 : f32
    %1350 = arith.divf %707, %cst_250 : f32
    %cst_251 = arith.constant 2.000000e+00 : f32
    %1351 = vector.broadcast %cst_251 : f32 to vector<8x1xf32>
    %1352 = arith.mulf %1351, %1264 : vector<8x1xf32>
    %1353 = arith.addf %1228, %1352 : vector<8x1xf32>
    %cst_252 = arith.constant 2.000000e+00 : f32
    %1354 = vector.broadcast %cst_252 : f32 to vector<8x1xf32>
    %1355 = arith.mulf %1354, %1300 : vector<8x1xf32>
    %1356 = arith.addf %1353, %1355 : vector<8x1xf32>
    %1357 = arith.addf %1356, %1333 : vector<8x1xf32>
    %1358 = vector.broadcast %1350 : f32 to vector<8x1xf32>
    %1359 = arith.mulf %1358, %1357 : vector<8x1xf32>
    %1360 = arith.addf %1194, %1359 : vector<8x1xf32>
    %cst_253 = arith.constant 6.000000e+00 : f32
    %1361 = arith.divf %707, %cst_253 : f32
    %cst_254 = arith.constant 2.000000e+00 : f32
    %1362 = vector.broadcast %cst_254 : f32 to vector<8x1xf32>
    %1363 = arith.mulf %1362, %1269 : vector<8x1xf32>
    %1364 = arith.addf %1233, %1363 : vector<8x1xf32>
    %cst_255 = arith.constant 2.000000e+00 : f32
    %1365 = vector.broadcast %cst_255 : f32 to vector<8x1xf32>
    %1366 = arith.mulf %1365, %1305 : vector<8x1xf32>
    %1367 = arith.addf %1364, %1366 : vector<8x1xf32>
    %1368 = arith.addf %1367, %1338 : vector<8x1xf32>
    %1369 = vector.broadcast %1361 : f32 to vector<8x1xf32>
    %1370 = arith.mulf %1369, %1368 : vector<8x1xf32>
    %1371 = arith.addf %1205, %1370 : vector<8x1xf32>
    %1372 = tpu.concatenate %1349, %1360, %1371 in 1 : vector<8x1xf32>, vector<8x1xf32>, vector<8x1xf32> -> vector<8x3xf32>
    %c2_256 = arith.constant 2 : index
    %c0_257 = arith.constant 0 : index
    %c0_258 = arith.constant 0 : index
    %1373 = vector.load %arg10[%c2_256, %c0_257, %c0_258] : memref<5x8x3xf32, #tpu.memory_space<vmem>>, vector<1x8x3xf32>
    %1374 = vector.shape_cast %1373 : vector<1x8x3xf32> to vector<8x3xf32>
    %1375 = vector.shape_cast %1372 : vector<8x3xf32> to vector<1x8x3xf32>
    tpu.vector_store %arg10[%c2_256, %c0_257, %c0_258], %1375 {strides = array<i32>} : memref<5x8x3xf32, #tpu.memory_space<vmem>>, vector<1x8x3xf32>,
    %c2_259 = arith.constant 2 : index
    %1376 = memref.load %arg0[%c2_259] : memref<5xf32, #tpu.memory_space<smem>>
    %c3 = arith.constant 3 : index
    %1377 = memref.load %arg0[%c3] : memref<5xf32, #tpu.memory_space<smem>>
    %1378 = arith.subf %1377, %1376 : f32
    %cst_260 = arith.constant 4.000000e+00 : f32
    %1379 = arith.divf %1378, %cst_260 : f32
    %cst_261 = arith.constant 0.000000e+00 : f32
    %1380 = arith.mulf %cst_261, %1379 : f32
    %1381 = arith.addf %1376, %1380 : f32
    %1382 = vector.broadcast %1381 : f32 to vector<8x32xf32>
    %1383 = arith.mulf %1382, %5 : vector<8x32xf32>
    %1384 = arith.addf %2, %1383 : vector<8x32xf32>
    %1385 = vector.broadcast %1349 : vector<8x1xf32> to vector<8x32xf32>
    %1386 = arith.mulf %1385, %11 : vector<8x32xf32>
    %1387 = arith.addf %1384, %1386 : vector<8x32xf32>
    %1388 = vector.broadcast %1360 : vector<8x1xf32> to vector<8x32xf32>
    %1389 = arith.mulf %1388, %14 : vector<8x32xf32>
    %1390 = arith.addf %1387, %1389 : vector<8x32xf32>
    %1391 = math.tanh %1390 : vector<8x32xf32>
    %1392 = arith.mulf %1391, %1391 : vector<8x32xf32>
    %1393 = arith.mulf %1391, %17 : vector<8x32xf32>
    %cst_262 = arith.constant dense<0.000000e+00> : vector<8xf32>
    %1394 = vector.multi_reduction <add>, %1393, %cst_262 [1] : vector<8x32xf32> to vector<8xf32>
    %1395 = vector.shape_cast %1394 : vector<8xf32> to vector<8x1xf32>
    %1396 = vector.broadcast %21 : f32 to vector<8x1xf32>
    %1397 = arith.addf %1395, %1396 : vector<8x1xf32>
    %1398 = arith.mulf %1391, %20 : vector<8x32xf32>
    %cst_263 = arith.constant dense<0.000000e+00> : vector<8xf32>
    %1399 = vector.multi_reduction <add>, %1398, %cst_263 [1] : vector<8x32xf32> to vector<8xf32>
    %1400 = vector.shape_cast %1399 : vector<8xf32> to vector<8x1xf32>
    %1401 = vector.broadcast %22 : f32 to vector<8x1xf32>
    %1402 = arith.addf %1400, %1401 : vector<8x1xf32>
    %1403 = arith.mulf %1392, %8 : vector<8x32xf32>
    %cst_264 = arith.constant dense<0.000000e+00> : vector<8xf32>
    %1404 = vector.multi_reduction <add>, %1403, %cst_264 [1] : vector<8x32xf32> to vector<8xf32>
    %1405 = vector.shape_cast %1404 : vector<8xf32> to vector<8x1xf32>
    %1406 = vector.broadcast %24 : f32 to vector<8x1xf32>
    %1407 = arith.addf %1406, %1405 : vector<8x1xf32>
    %cst_265 = arith.constant 5.000000e-01 : f32
    %1408 = arith.mulf %cst_265, %1379 : f32
    %1409 = vector.broadcast %1408 : f32 to vector<8x1xf32>
    %1410 = arith.mulf %1409, %1397 : vector<8x1xf32>
    %1411 = arith.addf %1349, %1410 : vector<8x1xf32>
    %cst_266 = arith.constant 5.000000e-01 : f32
    %1412 = arith.mulf %cst_266, %1379 : f32
    %1413 = vector.broadcast %1412 : f32 to vector<8x1xf32>
    %1414 = arith.mulf %1413, %1402 : vector<8x1xf32>
    %1415 = arith.addf %1360, %1414 : vector<8x1xf32>
    %cst_267 = arith.constant 5.000000e-01 : f32
    %1416 = arith.mulf %cst_267, %1379 : f32
    %1417 = arith.addf %1381, %1416 : f32
    %1418 = vector.broadcast %1417 : f32 to vector<8x32xf32>
    %1419 = arith.mulf %1418, %5 : vector<8x32xf32>
    %1420 = arith.addf %2, %1419 : vector<8x32xf32>
    %1421 = vector.broadcast %1411 : vector<8x1xf32> to vector<8x32xf32>
    %1422 = arith.mulf %1421, %11 : vector<8x32xf32>
    %1423 = arith.addf %1420, %1422 : vector<8x32xf32>
    %1424 = vector.broadcast %1415 : vector<8x1xf32> to vector<8x32xf32>
    %1425 = arith.mulf %1424, %14 : vector<8x32xf32>
    %1426 = arith.addf %1423, %1425 : vector<8x32xf32>
    %1427 = math.tanh %1426 : vector<8x32xf32>
    %1428 = arith.mulf %1427, %1427 : vector<8x32xf32>
    %1429 = arith.mulf %1427, %17 : vector<8x32xf32>
    %cst_268 = arith.constant dense<0.000000e+00> : vector<8xf32>
    %1430 = vector.multi_reduction <add>, %1429, %cst_268 [1] : vector<8x32xf32> to vector<8xf32>
    %1431 = vector.shape_cast %1430 : vector<8xf32> to vector<8x1xf32>
    %1432 = vector.broadcast %21 : f32 to vector<8x1xf32>
    %1433 = arith.addf %1431, %1432 : vector<8x1xf32>
    %1434 = arith.mulf %1427, %20 : vector<8x32xf32>
    %cst_269 = arith.constant dense<0.000000e+00> : vector<8xf32>
    %1435 = vector.multi_reduction <add>, %1434, %cst_269 [1] : vector<8x32xf32> to vector<8xf32>
    %1436 = vector.shape_cast %1435 : vector<8xf32> to vector<8x1xf32>
    %1437 = vector.broadcast %22 : f32 to vector<8x1xf32>
    %1438 = arith.addf %1436, %1437 : vector<8x1xf32>
    %1439 = arith.mulf %1428, %8 : vector<8x32xf32>
    %cst_270 = arith.constant dense<0.000000e+00> : vector<8xf32>
    %1440 = vector.multi_reduction <add>, %1439, %cst_270 [1] : vector<8x32xf32> to vector<8xf32>
    %1441 = vector.shape_cast %1440 : vector<8xf32> to vector<8x1xf32>
    %1442 = vector.broadcast %24 : f32 to vector<8x1xf32>
    %1443 = arith.addf %1442, %1441 : vector<8x1xf32>
    %cst_271 = arith.constant 5.000000e-01 : f32
    %1444 = arith.mulf %cst_271, %1379 : f32
    %1445 = vector.broadcast %1444 : f32 to vector<8x1xf32>
    %1446 = arith.mulf %1445, %1433 : vector<8x1xf32>
    %1447 = arith.addf %1349, %1446 : vector<8x1xf32>
    %cst_272 = arith.constant 5.000000e-01 : f32
    %1448 = arith.mulf %cst_272, %1379 : f32
    %1449 = vector.broadcast %1448 : f32 to vector<8x1xf32>
    %1450 = arith.mulf %1449, %1438 : vector<8x1xf32>
    %1451 = arith.addf %1360, %1450 : vector<8x1xf32>
    %cst_273 = arith.constant 5.000000e-01 : f32
    %1452 = arith.mulf %cst_273, %1379 : f32
    %1453 = arith.addf %1381, %1452 : f32
    %1454 = vector.broadcast %1453 : f32 to vector<8x32xf32>
    %1455 = arith.mulf %1454, %5 : vector<8x32xf32>
    %1456 = arith.addf %2, %1455 : vector<8x32xf32>
    %1457 = vector.broadcast %1447 : vector<8x1xf32> to vector<8x32xf32>
    %1458 = arith.mulf %1457, %11 : vector<8x32xf32>
    %1459 = arith.addf %1456, %1458 : vector<8x32xf32>
    %1460 = vector.broadcast %1451 : vector<8x1xf32> to vector<8x32xf32>
    %1461 = arith.mulf %1460, %14 : vector<8x32xf32>
    %1462 = arith.addf %1459, %1461 : vector<8x32xf32>
    %1463 = math.tanh %1462 : vector<8x32xf32>
    %1464 = arith.mulf %1463, %1463 : vector<8x32xf32>
    %1465 = arith.mulf %1463, %17 : vector<8x32xf32>
    %cst_274 = arith.constant dense<0.000000e+00> : vector<8xf32>
    %1466 = vector.multi_reduction <add>, %1465, %cst_274 [1] : vector<8x32xf32> to vector<8xf32>
    %1467 = vector.shape_cast %1466 : vector<8xf32> to vector<8x1xf32>
    %1468 = vector.broadcast %21 : f32 to vector<8x1xf32>
    %1469 = arith.addf %1467, %1468 : vector<8x1xf32>
    %1470 = arith.mulf %1463, %20 : vector<8x32xf32>
    %cst_275 = arith.constant dense<0.000000e+00> : vector<8xf32>
    %1471 = vector.multi_reduction <add>, %1470, %cst_275 [1] : vector<8x32xf32> to vector<8xf32>
    %1472 = vector.shape_cast %1471 : vector<8xf32> to vector<8x1xf32>
    %1473 = vector.broadcast %22 : f32 to vector<8x1xf32>
    %1474 = arith.addf %1472, %1473 : vector<8x1xf32>
    %1475 = arith.mulf %1464, %8 : vector<8x32xf32>
    %cst_276 = arith.constant dense<0.000000e+00> : vector<8xf32>
    %1476 = vector.multi_reduction <add>, %1475, %cst_276 [1] : vector<8x32xf32> to vector<8xf32>
    %1477 = vector.shape_cast %1476 : vector<8xf32> to vector<8x1xf32>
    %1478 = vector.broadcast %24 : f32 to vector<8x1xf32>
    %1479 = arith.addf %1478, %1477 : vector<8x1xf32>
    %1480 = vector.broadcast %1379 : f32 to vector<8x1xf32>
    %1481 = arith.mulf %1480, %1469 : vector<8x1xf32>
    %1482 = arith.addf %1349, %1481 : vector<8x1xf32>
    %1483 = vector.broadcast %1379 : f32 to vector<8x1xf32>
    %1484 = arith.mulf %1483, %1474 : vector<8x1xf32>
    %1485 = arith.addf %1360, %1484 : vector<8x1xf32>
    %1486 = arith.addf %1381, %1379 : f32
    %1487 = vector.broadcast %1486 : f32 to vector<8x32xf32>
    %1488 = arith.mulf %1487, %5 : vector<8x32xf32>
    %1489 = arith.addf %2, %1488 : vector<8x32xf32>
    %1490 = vector.broadcast %1482 : vector<8x1xf32> to vector<8x32xf32>
    %1491 = arith.mulf %1490, %11 : vector<8x32xf32>
    %1492 = arith.addf %1489, %1491 : vector<8x32xf32>
    %1493 = vector.broadcast %1485 : vector<8x1xf32> to vector<8x32xf32>
    %1494 = arith.mulf %1493, %14 : vector<8x32xf32>
    %1495 = arith.addf %1492, %1494 : vector<8x32xf32>
    %1496 = math.tanh %1495 : vector<8x32xf32>
    %1497 = arith.mulf %1496, %1496 : vector<8x32xf32>
    %1498 = arith.mulf %1496, %17 : vector<8x32xf32>
    %cst_277 = arith.constant dense<0.000000e+00> : vector<8xf32>
    %1499 = vector.multi_reduction <add>, %1498, %cst_277 [1] : vector<8x32xf32> to vector<8xf32>
    %1500 = vector.shape_cast %1499 : vector<8xf32> to vector<8x1xf32>
    %1501 = vector.broadcast %21 : f32 to vector<8x1xf32>
    %1502 = arith.addf %1500, %1501 : vector<8x1xf32>
    %1503 = arith.mulf %1496, %20 : vector<8x32xf32>
    %cst_278 = arith.constant dense<0.000000e+00> : vector<8xf32>
    %1504 = vector.multi_reduction <add>, %1503, %cst_278 [1] : vector<8x32xf32> to vector<8xf32>
    %1505 = vector.shape_cast %1504 : vector<8xf32> to vector<8x1xf32>
    %1506 = vector.broadcast %22 : f32 to vector<8x1xf32>
    %1507 = arith.addf %1505, %1506 : vector<8x1xf32>
    %1508 = arith.mulf %1497, %8 : vector<8x32xf32>
    %cst_279 = arith.constant dense<0.000000e+00> : vector<8xf32>
    %1509 = vector.multi_reduction <add>, %1508, %cst_279 [1] : vector<8x32xf32> to vector<8xf32>
    %1510 = vector.shape_cast %1509 : vector<8xf32> to vector<8x1xf32>
    %1511 = vector.broadcast %24 : f32 to vector<8x1xf32>
    %1512 = arith.addf %1511, %1510 : vector<8x1xf32>
    %cst_280 = arith.constant 6.000000e+00 : f32
    %1513 = arith.divf %1379, %cst_280 : f32
    %cst_281 = arith.constant 2.000000e+00 : f32
    %1514 = vector.broadcast %cst_281 : f32 to vector<8x1xf32>
    %1515 = arith.mulf %1514, %1433 : vector<8x1xf32>
    %1516 = arith.addf %1397, %1515 : vector<8x1xf32>
    %cst_282 = arith.constant 2.000000e+00 : f32
    %1517 = vector.broadcast %cst_282 : f32 to vector<8x1xf32>
    %1518 = arith.mulf %1517, %1469 : vector<8x1xf32>
    %1519 = arith.addf %1516, %1518 : vector<8x1xf32>
    %1520 = arith.addf %1519, %1502 : vector<8x1xf32>
    %1521 = vector.broadcast %1513 : f32 to vector<8x1xf32>
    %1522 = arith.mulf %1521, %1520 : vector<8x1xf32>
    %1523 = arith.addf %1349, %1522 : vector<8x1xf32>
    %cst_283 = arith.constant 6.000000e+00 : f32
    %1524 = arith.divf %1379, %cst_283 : f32
    %cst_284 = arith.constant 2.000000e+00 : f32
    %1525 = vector.broadcast %cst_284 : f32 to vector<8x1xf32>
    %1526 = arith.mulf %1525, %1438 : vector<8x1xf32>
    %1527 = arith.addf %1402, %1526 : vector<8x1xf32>
    %cst_285 = arith.constant 2.000000e+00 : f32
    %1528 = vector.broadcast %cst_285 : f32 to vector<8x1xf32>
    %1529 = arith.mulf %1528, %1474 : vector<8x1xf32>
    %1530 = arith.addf %1527, %1529 : vector<8x1xf32>
    %1531 = arith.addf %1530, %1507 : vector<8x1xf32>
    %1532 = vector.broadcast %1524 : f32 to vector<8x1xf32>
    %1533 = arith.mulf %1532, %1531 : vector<8x1xf32>
    %1534 = arith.addf %1360, %1533 : vector<8x1xf32>
    %cst_286 = arith.constant 6.000000e+00 : f32
    %1535 = arith.divf %1379, %cst_286 : f32
    %cst_287 = arith.constant 2.000000e+00 : f32
    %1536 = vector.broadcast %cst_287 : f32 to vector<8x1xf32>
    %1537 = arith.mulf %1536, %1443 : vector<8x1xf32>
    %1538 = arith.addf %1407, %1537 : vector<8x1xf32>
    %cst_288 = arith.constant 2.000000e+00 : f32
    %1539 = vector.broadcast %cst_288 : f32 to vector<8x1xf32>
    %1540 = arith.mulf %1539, %1479 : vector<8x1xf32>
    %1541 = arith.addf %1538, %1540 : vector<8x1xf32>
    %1542 = arith.addf %1541, %1512 : vector<8x1xf32>
    %1543 = vector.broadcast %1535 : f32 to vector<8x1xf32>
    %1544 = arith.mulf %1543, %1542 : vector<8x1xf32>
    %1545 = arith.addf %1371, %1544 : vector<8x1xf32>
    %cst_289 = arith.constant 1.000000e+00 : f32
    %1546 = arith.mulf %cst_289, %1379 : f32
    %1547 = arith.addf %1376, %1546 : f32
    %1548 = vector.broadcast %1547 : f32 to vector<8x32xf32>
    %1549 = arith.mulf %1548, %5 : vector<8x32xf32>
    %1550 = arith.addf %2, %1549 : vector<8x32xf32>
    %1551 = vector.broadcast %1523 : vector<8x1xf32> to vector<8x32xf32>
    %1552 = arith.mulf %1551, %11 : vector<8x32xf32>
    %1553 = arith.addf %1550, %1552 : vector<8x32xf32>
    %1554 = vector.broadcast %1534 : vector<8x1xf32> to vector<8x32xf32>
    %1555 = arith.mulf %1554, %14 : vector<8x32xf32>
    %1556 = arith.addf %1553, %1555 : vector<8x32xf32>
    %1557 = math.tanh %1556 : vector<8x32xf32>
    %1558 = arith.mulf %1557, %1557 : vector<8x32xf32>
    %1559 = arith.mulf %1557, %17 : vector<8x32xf32>
    %cst_290 = arith.constant dense<0.000000e+00> : vector<8xf32>
    %1560 = vector.multi_reduction <add>, %1559, %cst_290 [1] : vector<8x32xf32> to vector<8xf32>
    %1561 = vector.shape_cast %1560 : vector<8xf32> to vector<8x1xf32>
    %1562 = vector.broadcast %21 : f32 to vector<8x1xf32>
    %1563 = arith.addf %1561, %1562 : vector<8x1xf32>
    %1564 = arith.mulf %1557, %20 : vector<8x32xf32>
    %cst_291 = arith.constant dense<0.000000e+00> : vector<8xf32>
    %1565 = vector.multi_reduction <add>, %1564, %cst_291 [1] : vector<8x32xf32> to vector<8xf32>
    %1566 = vector.shape_cast %1565 : vector<8xf32> to vector<8x1xf32>
    %1567 = vector.broadcast %22 : f32 to vector<8x1xf32>
    %1568 = arith.addf %1566, %1567 : vector<8x1xf32>
    %1569 = arith.mulf %1558, %8 : vector<8x32xf32>
    %cst_292 = arith.constant dense<0.000000e+00> : vector<8xf32>
    %1570 = vector.multi_reduction <add>, %1569, %cst_292 [1] : vector<8x32xf32> to vector<8xf32>
    %1571 = vector.shape_cast %1570 : vector<8xf32> to vector<8x1xf32>
    %1572 = vector.broadcast %24 : f32 to vector<8x1xf32>
    %1573 = arith.addf %1572, %1571 : vector<8x1xf32>
    %cst_293 = arith.constant 5.000000e-01 : f32
    %1574 = arith.mulf %cst_293, %1379 : f32
    %1575 = vector.broadcast %1574 : f32 to vector<8x1xf32>
    %1576 = arith.mulf %1575, %1563 : vector<8x1xf32>
    %1577 = arith.addf %1523, %1576 : vector<8x1xf32>
    %cst_294 = arith.constant 5.000000e-01 : f32
    %1578 = arith.mulf %cst_294, %1379 : f32
    %1579 = vector.broadcast %1578 : f32 to vector<8x1xf32>
    %1580 = arith.mulf %1579, %1568 : vector<8x1xf32>
    %1581 = arith.addf %1534, %1580 : vector<8x1xf32>
    %cst_295 = arith.constant 5.000000e-01 : f32
    %1582 = arith.mulf %cst_295, %1379 : f32
    %1583 = arith.addf %1547, %1582 : f32
    %1584 = vector.broadcast %1583 : f32 to vector<8x32xf32>
    %1585 = arith.mulf %1584, %5 : vector<8x32xf32>
    %1586 = arith.addf %2, %1585 : vector<8x32xf32>
    %1587 = vector.broadcast %1577 : vector<8x1xf32> to vector<8x32xf32>
    %1588 = arith.mulf %1587, %11 : vector<8x32xf32>
    %1589 = arith.addf %1586, %1588 : vector<8x32xf32>
    %1590 = vector.broadcast %1581 : vector<8x1xf32> to vector<8x32xf32>
    %1591 = arith.mulf %1590, %14 : vector<8x32xf32>
    %1592 = arith.addf %1589, %1591 : vector<8x32xf32>
    %1593 = math.tanh %1592 : vector<8x32xf32>
    %1594 = arith.mulf %1593, %1593 : vector<8x32xf32>
    %1595 = arith.mulf %1593, %17 : vector<8x32xf32>
    %cst_296 = arith.constant dense<0.000000e+00> : vector<8xf32>
    %1596 = vector.multi_reduction <add>, %1595, %cst_296 [1] : vector<8x32xf32> to vector<8xf32>
    %1597 = vector.shape_cast %1596 : vector<8xf32> to vector<8x1xf32>
    %1598 = vector.broadcast %21 : f32 to vector<8x1xf32>
    %1599 = arith.addf %1597, %1598 : vector<8x1xf32>
    %1600 = arith.mulf %1593, %20 : vector<8x32xf32>
    %cst_297 = arith.constant dense<0.000000e+00> : vector<8xf32>
    %1601 = vector.multi_reduction <add>, %1600, %cst_297 [1] : vector<8x32xf32> to vector<8xf32>
    %1602 = vector.shape_cast %1601 : vector<8xf32> to vector<8x1xf32>
    %1603 = vector.broadcast %22 : f32 to vector<8x1xf32>
    %1604 = arith.addf %1602, %1603 : vector<8x1xf32>
    %1605 = arith.mulf %1594, %8 : vector<8x32xf32>
    %cst_298 = arith.constant dense<0.000000e+00> : vector<8xf32>
    %1606 = vector.multi_reduction <add>, %1605, %cst_298 [1] : vector<8x32xf32> to vector<8xf32>
    %1607 = vector.shape_cast %1606 : vector<8xf32> to vector<8x1xf32>
    %1608 = vector.broadcast %24 : f32 to vector<8x1xf32>
    %1609 = arith.addf %1608, %1607 : vector<8x1xf32>
    %cst_299 = arith.constant 5.000000e-01 : f32
    %1610 = arith.mulf %cst_299, %1379 : f32
    %1611 = vector.broadcast %1610 : f32 to vector<8x1xf32>
    %1612 = arith.mulf %1611, %1599 : vector<8x1xf32>
    %1613 = arith.addf %1523, %1612 : vector<8x1xf32>
    %cst_300 = arith.constant 5.000000e-01 : f32
    %1614 = arith.mulf %cst_300, %1379 : f32
    %1615 = vector.broadcast %1614 : f32 to vector<8x1xf32>
    %1616 = arith.mulf %1615, %1604 : vector<8x1xf32>
    %1617 = arith.addf %1534, %1616 : vector<8x1xf32>
    %cst_301 = arith.constant 5.000000e-01 : f32
    %1618 = arith.mulf %cst_301, %1379 : f32
    %1619 = arith.addf %1547, %1618 : f32
    %1620 = vector.broadcast %1619 : f32 to vector<8x32xf32>
    %1621 = arith.mulf %1620, %5 : vector<8x32xf32>
    %1622 = arith.addf %2, %1621 : vector<8x32xf32>
    %1623 = vector.broadcast %1613 : vector<8x1xf32> to vector<8x32xf32>
    %1624 = arith.mulf %1623, %11 : vector<8x32xf32>
    %1625 = arith.addf %1622, %1624 : vector<8x32xf32>
    %1626 = vector.broadcast %1617 : vector<8x1xf32> to vector<8x32xf32>
    %1627 = arith.mulf %1626, %14 : vector<8x32xf32>
    %1628 = arith.addf %1625, %1627 : vector<8x32xf32>
    %1629 = math.tanh %1628 : vector<8x32xf32>
    %1630 = arith.mulf %1629, %1629 : vector<8x32xf32>
    %1631 = arith.mulf %1629, %17 : vector<8x32xf32>
    %cst_302 = arith.constant dense<0.000000e+00> : vector<8xf32>
    %1632 = vector.multi_reduction <add>, %1631, %cst_302 [1] : vector<8x32xf32> to vector<8xf32>
    %1633 = vector.shape_cast %1632 : vector<8xf32> to vector<8x1xf32>
    %1634 = vector.broadcast %21 : f32 to vector<8x1xf32>
    %1635 = arith.addf %1633, %1634 : vector<8x1xf32>
    %1636 = arith.mulf %1629, %20 : vector<8x32xf32>
    %cst_303 = arith.constant dense<0.000000e+00> : vector<8xf32>
    %1637 = vector.multi_reduction <add>, %1636, %cst_303 [1] : vector<8x32xf32> to vector<8xf32>
    %1638 = vector.shape_cast %1637 : vector<8xf32> to vector<8x1xf32>
    %1639 = vector.broadcast %22 : f32 to vector<8x1xf32>
    %1640 = arith.addf %1638, %1639 : vector<8x1xf32>
    %1641 = arith.mulf %1630, %8 : vector<8x32xf32>
    %cst_304 = arith.constant dense<0.000000e+00> : vector<8xf32>
    %1642 = vector.multi_reduction <add>, %1641, %cst_304 [1] : vector<8x32xf32> to vector<8xf32>
    %1643 = vector.shape_cast %1642 : vector<8xf32> to vector<8x1xf32>
    %1644 = vector.broadcast %24 : f32 to vector<8x1xf32>
    %1645 = arith.addf %1644, %1643 : vector<8x1xf32>
    %1646 = vector.broadcast %1379 : f32 to vector<8x1xf32>
    %1647 = arith.mulf %1646, %1635 : vector<8x1xf32>
    %1648 = arith.addf %1523, %1647 : vector<8x1xf32>
    %1649 = vector.broadcast %1379 : f32 to vector<8x1xf32>
    %1650 = arith.mulf %1649, %1640 : vector<8x1xf32>
    %1651 = arith.addf %1534, %1650 : vector<8x1xf32>
    %1652 = arith.addf %1547, %1379 : f32
    %1653 = vector.broadcast %1652 : f32 to vector<8x32xf32>
    %1654 = arith.mulf %1653, %5 : vector<8x32xf32>
    %1655 = arith.addf %2, %1654 : vector<8x32xf32>
    %1656 = vector.broadcast %1648 : vector<8x1xf32> to vector<8x32xf32>
    %1657 = arith.mulf %1656, %11 : vector<8x32xf32>
    %1658 = arith.addf %1655, %1657 : vector<8x32xf32>
    %1659 = vector.broadcast %1651 : vector<8x1xf32> to vector<8x32xf32>
    %1660 = arith.mulf %1659, %14 : vector<8x32xf32>
    %1661 = arith.addf %1658, %1660 : vector<8x32xf32>
    %1662 = math.tanh %1661 : vector<8x32xf32>
    %1663 = arith.mulf %1662, %1662 : vector<8x32xf32>
    %1664 = arith.mulf %1662, %17 : vector<8x32xf32>
    %cst_305 = arith.constant dense<0.000000e+00> : vector<8xf32>
    %1665 = vector.multi_reduction <add>, %1664, %cst_305 [1] : vector<8x32xf32> to vector<8xf32>
    %1666 = vector.shape_cast %1665 : vector<8xf32> to vector<8x1xf32>
    %1667 = vector.broadcast %21 : f32 to vector<8x1xf32>
    %1668 = arith.addf %1666, %1667 : vector<8x1xf32>
    %1669 = arith.mulf %1662, %20 : vector<8x32xf32>
    %cst_306 = arith.constant dense<0.000000e+00> : vector<8xf32>
    %1670 = vector.multi_reduction <add>, %1669, %cst_306 [1] : vector<8x32xf32> to vector<8xf32>
    %1671 = vector.shape_cast %1670 : vector<8xf32> to vector<8x1xf32>
    %1672 = vector.broadcast %22 : f32 to vector<8x1xf32>
    %1673 = arith.addf %1671, %1672 : vector<8x1xf32>
    %1674 = arith.mulf %1663, %8 : vector<8x32xf32>
    %cst_307 = arith.constant dense<0.000000e+00> : vector<8xf32>
    %1675 = vector.multi_reduction <add>, %1674, %cst_307 [1] : vector<8x32xf32> to vector<8xf32>
    %1676 = vector.shape_cast %1675 : vector<8xf32> to vector<8x1xf32>
    %1677 = vector.broadcast %24 : f32 to vector<8x1xf32>
    %1678 = arith.addf %1677, %1676 : vector<8x1xf32>
    %cst_308 = arith.constant 6.000000e+00 : f32
    %1679 = arith.divf %1379, %cst_308 : f32
    %cst_309 = arith.constant 2.000000e+00 : f32
    %1680 = vector.broadcast %cst_309 : f32 to vector<8x1xf32>
    %1681 = arith.mulf %1680, %1599 : vector<8x1xf32>
    %1682 = arith.addf %1563, %1681 : vector<8x1xf32>
    %cst_310 = arith.constant 2.000000e+00 : f32
    %1683 = vector.broadcast %cst_310 : f32 to vector<8x1xf32>
    %1684 = arith.mulf %1683, %1635 : vector<8x1xf32>
    %1685 = arith.addf %1682, %1684 : vector<8x1xf32>
    %1686 = arith.addf %1685, %1668 : vector<8x1xf32>
    %1687 = vector.broadcast %1679 : f32 to vector<8x1xf32>
    %1688 = arith.mulf %1687, %1686 : vector<8x1xf32>
    %1689 = arith.addf %1523, %1688 : vector<8x1xf32>
    %cst_311 = arith.constant 6.000000e+00 : f32
    %1690 = arith.divf %1379, %cst_311 : f32
    %cst_312 = arith.constant 2.000000e+00 : f32
    %1691 = vector.broadcast %cst_312 : f32 to vector<8x1xf32>
    %1692 = arith.mulf %1691, %1604 : vector<8x1xf32>
    %1693 = arith.addf %1568, %1692 : vector<8x1xf32>
    %cst_313 = arith.constant 2.000000e+00 : f32
    %1694 = vector.broadcast %cst_313 : f32 to vector<8x1xf32>
    %1695 = arith.mulf %1694, %1640 : vector<8x1xf32>
    %1696 = arith.addf %1693, %1695 : vector<8x1xf32>
    %1697 = arith.addf %1696, %1673 : vector<8x1xf32>
    %1698 = vector.broadcast %1690 : f32 to vector<8x1xf32>
    %1699 = arith.mulf %1698, %1697 : vector<8x1xf32>
    %1700 = arith.addf %1534, %1699 : vector<8x1xf32>
    %cst_314 = arith.constant 6.000000e+00 : f32
    %1701 = arith.divf %1379, %cst_314 : f32
    %cst_315 = arith.constant 2.000000e+00 : f32
    %1702 = vector.broadcast %cst_315 : f32 to vector<8x1xf32>
    %1703 = arith.mulf %1702, %1609 : vector<8x1xf32>
    %1704 = arith.addf %1573, %1703 : vector<8x1xf32>
    %cst_316 = arith.constant 2.000000e+00 : f32
    %1705 = vector.broadcast %cst_316 : f32 to vector<8x1xf32>
    %1706 = arith.mulf %1705, %1645 : vector<8x1xf32>
    %1707 = arith.addf %1704, %1706 : vector<8x1xf32>
    %1708 = arith.addf %1707, %1678 : vector<8x1xf32>
    %1709 = vector.broadcast %1701 : f32 to vector<8x1xf32>
    %1710 = arith.mulf %1709, %1708 : vector<8x1xf32>
    %1711 = arith.addf %1545, %1710 : vector<8x1xf32>
    %cst_317 = arith.constant 2.000000e+00 : f32
    %1712 = arith.mulf %cst_317, %1379 : f32
    %1713 = arith.addf %1376, %1712 : f32
    %1714 = vector.broadcast %1713 : f32 to vector<8x32xf32>
    %1715 = arith.mulf %1714, %5 : vector<8x32xf32>
    %1716 = arith.addf %2, %1715 : vector<8x32xf32>
    %1717 = vector.broadcast %1689 : vector<8x1xf32> to vector<8x32xf32>
    %1718 = arith.mulf %1717, %11 : vector<8x32xf32>
    %1719 = arith.addf %1716, %1718 : vector<8x32xf32>
    %1720 = vector.broadcast %1700 : vector<8x1xf32> to vector<8x32xf32>
    %1721 = arith.mulf %1720, %14 : vector<8x32xf32>
    %1722 = arith.addf %1719, %1721 : vector<8x32xf32>
    %1723 = math.tanh %1722 : vector<8x32xf32>
    %1724 = arith.mulf %1723, %1723 : vector<8x32xf32>
    %1725 = arith.mulf %1723, %17 : vector<8x32xf32>
    %cst_318 = arith.constant dense<0.000000e+00> : vector<8xf32>
    %1726 = vector.multi_reduction <add>, %1725, %cst_318 [1] : vector<8x32xf32> to vector<8xf32>
    %1727 = vector.shape_cast %1726 : vector<8xf32> to vector<8x1xf32>
    %1728 = vector.broadcast %21 : f32 to vector<8x1xf32>
    %1729 = arith.addf %1727, %1728 : vector<8x1xf32>
    %1730 = arith.mulf %1723, %20 : vector<8x32xf32>
    %cst_319 = arith.constant dense<0.000000e+00> : vector<8xf32>
    %1731 = vector.multi_reduction <add>, %1730, %cst_319 [1] : vector<8x32xf32> to vector<8xf32>
    %1732 = vector.shape_cast %1731 : vector<8xf32> to vector<8x1xf32>
    %1733 = vector.broadcast %22 : f32 to vector<8x1xf32>
    %1734 = arith.addf %1732, %1733 : vector<8x1xf32>
    %1735 = arith.mulf %1724, %8 : vector<8x32xf32>
    %cst_320 = arith.constant dense<0.000000e+00> : vector<8xf32>
    %1736 = vector.multi_reduction <add>, %1735, %cst_320 [1] : vector<8x32xf32> to vector<8xf32>
    %1737 = vector.shape_cast %1736 : vector<8xf32> to vector<8x1xf32>
    %1738 = vector.broadcast %24 : f32 to vector<8x1xf32>
    %1739 = arith.addf %1738, %1737 : vector<8x1xf32>
    %cst_321 = arith.constant 5.000000e-01 : f32
    %1740 = arith.mulf %cst_321, %1379 : f32
    %1741 = vector.broadcast %1740 : f32 to vector<8x1xf32>
    %1742 = arith.mulf %1741, %1729 : vector<8x1xf32>
    %1743 = arith.addf %1689, %1742 : vector<8x1xf32>
    %cst_322 = arith.constant 5.000000e-01 : f32
    %1744 = arith.mulf %cst_322, %1379 : f32
    %1745 = vector.broadcast %1744 : f32 to vector<8x1xf32>
    %1746 = arith.mulf %1745, %1734 : vector<8x1xf32>
    %1747 = arith.addf %1700, %1746 : vector<8x1xf32>
    %cst_323 = arith.constant 5.000000e-01 : f32
    %1748 = arith.mulf %cst_323, %1379 : f32
    %1749 = arith.addf %1713, %1748 : f32
    %1750 = vector.broadcast %1749 : f32 to vector<8x32xf32>
    %1751 = arith.mulf %1750, %5 : vector<8x32xf32>
    %1752 = arith.addf %2, %1751 : vector<8x32xf32>
    %1753 = vector.broadcast %1743 : vector<8x1xf32> to vector<8x32xf32>
    %1754 = arith.mulf %1753, %11 : vector<8x32xf32>
    %1755 = arith.addf %1752, %1754 : vector<8x32xf32>
    %1756 = vector.broadcast %1747 : vector<8x1xf32> to vector<8x32xf32>
    %1757 = arith.mulf %1756, %14 : vector<8x32xf32>
    %1758 = arith.addf %1755, %1757 : vector<8x32xf32>
    %1759 = math.tanh %1758 : vector<8x32xf32>
    %1760 = arith.mulf %1759, %1759 : vector<8x32xf32>
    %1761 = arith.mulf %1759, %17 : vector<8x32xf32>
    %cst_324 = arith.constant dense<0.000000e+00> : vector<8xf32>
    %1762 = vector.multi_reduction <add>, %1761, %cst_324 [1] : vector<8x32xf32> to vector<8xf32>
    %1763 = vector.shape_cast %1762 : vector<8xf32> to vector<8x1xf32>
    %1764 = vector.broadcast %21 : f32 to vector<8x1xf32>
    %1765 = arith.addf %1763, %1764 : vector<8x1xf32>
    %1766 = arith.mulf %1759, %20 : vector<8x32xf32>
    %cst_325 = arith.constant dense<0.000000e+00> : vector<8xf32>
    %1767 = vector.multi_reduction <add>, %1766, %cst_325 [1] : vector<8x32xf32> to vector<8xf32>
    %1768 = vector.shape_cast %1767 : vector<8xf32> to vector<8x1xf32>
    %1769 = vector.broadcast %22 : f32 to vector<8x1xf32>
    %1770 = arith.addf %1768, %1769 : vector<8x1xf32>
    %1771 = arith.mulf %1760, %8 : vector<8x32xf32>
    %cst_326 = arith.constant dense<0.000000e+00> : vector<8xf32>
    %1772 = vector.multi_reduction <add>, %1771, %cst_326 [1] : vector<8x32xf32> to vector<8xf32>
    %1773 = vector.shape_cast %1772 : vector<8xf32> to vector<8x1xf32>
    %1774 = vector.broadcast %24 : f32 to vector<8x1xf32>
    %1775 = arith.addf %1774, %1773 : vector<8x1xf32>
    %cst_327 = arith.constant 5.000000e-01 : f32
    %1776 = arith.mulf %cst_327, %1379 : f32
    %1777 = vector.broadcast %1776 : f32 to vector<8x1xf32>
    %1778 = arith.mulf %1777, %1765 : vector<8x1xf32>
    %1779 = arith.addf %1689, %1778 : vector<8x1xf32>
    %cst_328 = arith.constant 5.000000e-01 : f32
    %1780 = arith.mulf %cst_328, %1379 : f32
    %1781 = vector.broadcast %1780 : f32 to vector<8x1xf32>
    %1782 = arith.mulf %1781, %1770 : vector<8x1xf32>
    %1783 = arith.addf %1700, %1782 : vector<8x1xf32>
    %cst_329 = arith.constant 5.000000e-01 : f32
    %1784 = arith.mulf %cst_329, %1379 : f32
    %1785 = arith.addf %1713, %1784 : f32
    %1786 = vector.broadcast %1785 : f32 to vector<8x32xf32>
    %1787 = arith.mulf %1786, %5 : vector<8x32xf32>
    %1788 = arith.addf %2, %1787 : vector<8x32xf32>
    %1789 = vector.broadcast %1779 : vector<8x1xf32> to vector<8x32xf32>
    %1790 = arith.mulf %1789, %11 : vector<8x32xf32>
    %1791 = arith.addf %1788, %1790 : vector<8x32xf32>
    %1792 = vector.broadcast %1783 : vector<8x1xf32> to vector<8x32xf32>
    %1793 = arith.mulf %1792, %14 : vector<8x32xf32>
    %1794 = arith.addf %1791, %1793 : vector<8x32xf32>
    %1795 = math.tanh %1794 : vector<8x32xf32>
    %1796 = arith.mulf %1795, %1795 : vector<8x32xf32>
    %1797 = arith.mulf %1795, %17 : vector<8x32xf32>
    %cst_330 = arith.constant dense<0.000000e+00> : vector<8xf32>
    %1798 = vector.multi_reduction <add>, %1797, %cst_330 [1] : vector<8x32xf32> to vector<8xf32>
    %1799 = vector.shape_cast %1798 : vector<8xf32> to vector<8x1xf32>
    %1800 = vector.broadcast %21 : f32 to vector<8x1xf32>
    %1801 = arith.addf %1799, %1800 : vector<8x1xf32>
    %1802 = arith.mulf %1795, %20 : vector<8x32xf32>
    %cst_331 = arith.constant dense<0.000000e+00> : vector<8xf32>
    %1803 = vector.multi_reduction <add>, %1802, %cst_331 [1] : vector<8x32xf32> to vector<8xf32>
    %1804 = vector.shape_cast %1803 : vector<8xf32> to vector<8x1xf32>
    %1805 = vector.broadcast %22 : f32 to vector<8x1xf32>
    %1806 = arith.addf %1804, %1805 : vector<8x1xf32>
    %1807 = arith.mulf %1796, %8 : vector<8x32xf32>
    %cst_332 = arith.constant dense<0.000000e+00> : vector<8xf32>
    %1808 = vector.multi_reduction <add>, %1807, %cst_332 [1] : vector<8x32xf32> to vector<8xf32>
    %1809 = vector.shape_cast %1808 : vector<8xf32> to vector<8x1xf32>
    %1810 = vector.broadcast %24 : f32 to vector<8x1xf32>
    %1811 = arith.addf %1810, %1809 : vector<8x1xf32>
    %1812 = vector.broadcast %1379 : f32 to vector<8x1xf32>
    %1813 = arith.mulf %1812, %1801 : vector<8x1xf32>
    %1814 = arith.addf %1689, %1813 : vector<8x1xf32>
    %1815 = vector.broadcast %1379 : f32 to vector<8x1xf32>
    %1816 = arith.mulf %1815, %1806 : vector<8x1xf32>
    %1817 = arith.addf %1700, %1816 : vector<8x1xf32>
    %1818 = arith.addf %1713, %1379 : f32
    %1819 = vector.broadcast %1818 : f32 to vector<8x32xf32>
    %1820 = arith.mulf %1819, %5 : vector<8x32xf32>
    %1821 = arith.addf %2, %1820 : vector<8x32xf32>
    %1822 = vector.broadcast %1814 : vector<8x1xf32> to vector<8x32xf32>
    %1823 = arith.mulf %1822, %11 : vector<8x32xf32>
    %1824 = arith.addf %1821, %1823 : vector<8x32xf32>
    %1825 = vector.broadcast %1817 : vector<8x1xf32> to vector<8x32xf32>
    %1826 = arith.mulf %1825, %14 : vector<8x32xf32>
    %1827 = arith.addf %1824, %1826 : vector<8x32xf32>
    %1828 = math.tanh %1827 : vector<8x32xf32>
    %1829 = arith.mulf %1828, %1828 : vector<8x32xf32>
    %1830 = arith.mulf %1828, %17 : vector<8x32xf32>
    %cst_333 = arith.constant dense<0.000000e+00> : vector<8xf32>
    %1831 = vector.multi_reduction <add>, %1830, %cst_333 [1] : vector<8x32xf32> to vector<8xf32>
    %1832 = vector.shape_cast %1831 : vector<8xf32> to vector<8x1xf32>
    %1833 = vector.broadcast %21 : f32 to vector<8x1xf32>
    %1834 = arith.addf %1832, %1833 : vector<8x1xf32>
    %1835 = arith.mulf %1828, %20 : vector<8x32xf32>
    %cst_334 = arith.constant dense<0.000000e+00> : vector<8xf32>
    %1836 = vector.multi_reduction <add>, %1835, %cst_334 [1] : vector<8x32xf32> to vector<8xf32>
    %1837 = vector.shape_cast %1836 : vector<8xf32> to vector<8x1xf32>
    %1838 = vector.broadcast %22 : f32 to vector<8x1xf32>
    %1839 = arith.addf %1837, %1838 : vector<8x1xf32>
    %1840 = arith.mulf %1829, %8 : vector<8x32xf32>
    %cst_335 = arith.constant dense<0.000000e+00> : vector<8xf32>
    %1841 = vector.multi_reduction <add>, %1840, %cst_335 [1] : vector<8x32xf32> to vector<8xf32>
    %1842 = vector.shape_cast %1841 : vector<8xf32> to vector<8x1xf32>
    %1843 = vector.broadcast %24 : f32 to vector<8x1xf32>
    %1844 = arith.addf %1843, %1842 : vector<8x1xf32>
    %cst_336 = arith.constant 6.000000e+00 : f32
    %1845 = arith.divf %1379, %cst_336 : f32
    %cst_337 = arith.constant 2.000000e+00 : f32
    %1846 = vector.broadcast %cst_337 : f32 to vector<8x1xf32>
    %1847 = arith.mulf %1846, %1765 : vector<8x1xf32>
    %1848 = arith.addf %1729, %1847 : vector<8x1xf32>
    %cst_338 = arith.constant 2.000000e+00 : f32
    %1849 = vector.broadcast %cst_338 : f32 to vector<8x1xf32>
    %1850 = arith.mulf %1849, %1801 : vector<8x1xf32>
    %1851 = arith.addf %1848, %1850 : vector<8x1xf32>
    %1852 = arith.addf %1851, %1834 : vector<8x1xf32>
    %1853 = vector.broadcast %1845 : f32 to vector<8x1xf32>
    %1854 = arith.mulf %1853, %1852 : vector<8x1xf32>
    %1855 = arith.addf %1689, %1854 : vector<8x1xf32>
    %cst_339 = arith.constant 6.000000e+00 : f32
    %1856 = arith.divf %1379, %cst_339 : f32
    %cst_340 = arith.constant 2.000000e+00 : f32
    %1857 = vector.broadcast %cst_340 : f32 to vector<8x1xf32>
    %1858 = arith.mulf %1857, %1770 : vector<8x1xf32>
    %1859 = arith.addf %1734, %1858 : vector<8x1xf32>
    %cst_341 = arith.constant 2.000000e+00 : f32
    %1860 = vector.broadcast %cst_341 : f32 to vector<8x1xf32>
    %1861 = arith.mulf %1860, %1806 : vector<8x1xf32>
    %1862 = arith.addf %1859, %1861 : vector<8x1xf32>
    %1863 = arith.addf %1862, %1839 : vector<8x1xf32>
    %1864 = vector.broadcast %1856 : f32 to vector<8x1xf32>
    %1865 = arith.mulf %1864, %1863 : vector<8x1xf32>
    %1866 = arith.addf %1700, %1865 : vector<8x1xf32>
    %cst_342 = arith.constant 6.000000e+00 : f32
    %1867 = arith.divf %1379, %cst_342 : f32
    %cst_343 = arith.constant 2.000000e+00 : f32
    %1868 = vector.broadcast %cst_343 : f32 to vector<8x1xf32>
    %1869 = arith.mulf %1868, %1775 : vector<8x1xf32>
    %1870 = arith.addf %1739, %1869 : vector<8x1xf32>
    %cst_344 = arith.constant 2.000000e+00 : f32
    %1871 = vector.broadcast %cst_344 : f32 to vector<8x1xf32>
    %1872 = arith.mulf %1871, %1811 : vector<8x1xf32>
    %1873 = arith.addf %1870, %1872 : vector<8x1xf32>
    %1874 = arith.addf %1873, %1844 : vector<8x1xf32>
    %1875 = vector.broadcast %1867 : f32 to vector<8x1xf32>
    %1876 = arith.mulf %1875, %1874 : vector<8x1xf32>
    %1877 = arith.addf %1711, %1876 : vector<8x1xf32>
    %cst_345 = arith.constant 3.000000e+00 : f32
    %1878 = arith.mulf %cst_345, %1379 : f32
    %1879 = arith.addf %1376, %1878 : f32
    %1880 = vector.broadcast %1879 : f32 to vector<8x32xf32>
    %1881 = arith.mulf %1880, %5 : vector<8x32xf32>
    %1882 = arith.addf %2, %1881 : vector<8x32xf32>
    %1883 = vector.broadcast %1855 : vector<8x1xf32> to vector<8x32xf32>
    %1884 = arith.mulf %1883, %11 : vector<8x32xf32>
    %1885 = arith.addf %1882, %1884 : vector<8x32xf32>
    %1886 = vector.broadcast %1866 : vector<8x1xf32> to vector<8x32xf32>
    %1887 = arith.mulf %1886, %14 : vector<8x32xf32>
    %1888 = arith.addf %1885, %1887 : vector<8x32xf32>
    %1889 = math.tanh %1888 : vector<8x32xf32>
    %1890 = arith.mulf %1889, %1889 : vector<8x32xf32>
    %1891 = arith.mulf %1889, %17 : vector<8x32xf32>
    %cst_346 = arith.constant dense<0.000000e+00> : vector<8xf32>
    %1892 = vector.multi_reduction <add>, %1891, %cst_346 [1] : vector<8x32xf32> to vector<8xf32>
    %1893 = vector.shape_cast %1892 : vector<8xf32> to vector<8x1xf32>
    %1894 = vector.broadcast %21 : f32 to vector<8x1xf32>
    %1895 = arith.addf %1893, %1894 : vector<8x1xf32>
    %1896 = arith.mulf %1889, %20 : vector<8x32xf32>
    %cst_347 = arith.constant dense<0.000000e+00> : vector<8xf32>
    %1897 = vector.multi_reduction <add>, %1896, %cst_347 [1] : vector<8x32xf32> to vector<8xf32>
    %1898 = vector.shape_cast %1897 : vector<8xf32> to vector<8x1xf32>
    %1899 = vector.broadcast %22 : f32 to vector<8x1xf32>
    %1900 = arith.addf %1898, %1899 : vector<8x1xf32>
    %1901 = arith.mulf %1890, %8 : vector<8x32xf32>
    %cst_348 = arith.constant dense<0.000000e+00> : vector<8xf32>
    %1902 = vector.multi_reduction <add>, %1901, %cst_348 [1] : vector<8x32xf32> to vector<8xf32>
    %1903 = vector.shape_cast %1902 : vector<8xf32> to vector<8x1xf32>
    %1904 = vector.broadcast %24 : f32 to vector<8x1xf32>
    %1905 = arith.addf %1904, %1903 : vector<8x1xf32>
    %cst_349 = arith.constant 5.000000e-01 : f32
    %1906 = arith.mulf %cst_349, %1379 : f32
    %1907 = vector.broadcast %1906 : f32 to vector<8x1xf32>
    %1908 = arith.mulf %1907, %1895 : vector<8x1xf32>
    %1909 = arith.addf %1855, %1908 : vector<8x1xf32>
    %cst_350 = arith.constant 5.000000e-01 : f32
    %1910 = arith.mulf %cst_350, %1379 : f32
    %1911 = vector.broadcast %1910 : f32 to vector<8x1xf32>
    %1912 = arith.mulf %1911, %1900 : vector<8x1xf32>
    %1913 = arith.addf %1866, %1912 : vector<8x1xf32>
    %cst_351 = arith.constant 5.000000e-01 : f32
    %1914 = arith.mulf %cst_351, %1379 : f32
    %1915 = arith.addf %1879, %1914 : f32
    %1916 = vector.broadcast %1915 : f32 to vector<8x32xf32>
    %1917 = arith.mulf %1916, %5 : vector<8x32xf32>
    %1918 = arith.addf %2, %1917 : vector<8x32xf32>
    %1919 = vector.broadcast %1909 : vector<8x1xf32> to vector<8x32xf32>
    %1920 = arith.mulf %1919, %11 : vector<8x32xf32>
    %1921 = arith.addf %1918, %1920 : vector<8x32xf32>
    %1922 = vector.broadcast %1913 : vector<8x1xf32> to vector<8x32xf32>
    %1923 = arith.mulf %1922, %14 : vector<8x32xf32>
    %1924 = arith.addf %1921, %1923 : vector<8x32xf32>
    %1925 = math.tanh %1924 : vector<8x32xf32>
    %1926 = arith.mulf %1925, %1925 : vector<8x32xf32>
    %1927 = arith.mulf %1925, %17 : vector<8x32xf32>
    %cst_352 = arith.constant dense<0.000000e+00> : vector<8xf32>
    %1928 = vector.multi_reduction <add>, %1927, %cst_352 [1] : vector<8x32xf32> to vector<8xf32>
    %1929 = vector.shape_cast %1928 : vector<8xf32> to vector<8x1xf32>
    %1930 = vector.broadcast %21 : f32 to vector<8x1xf32>
    %1931 = arith.addf %1929, %1930 : vector<8x1xf32>
    %1932 = arith.mulf %1925, %20 : vector<8x32xf32>
    %cst_353 = arith.constant dense<0.000000e+00> : vector<8xf32>
    %1933 = vector.multi_reduction <add>, %1932, %cst_353 [1] : vector<8x32xf32> to vector<8xf32>
    %1934 = vector.shape_cast %1933 : vector<8xf32> to vector<8x1xf32>
    %1935 = vector.broadcast %22 : f32 to vector<8x1xf32>
    %1936 = arith.addf %1934, %1935 : vector<8x1xf32>
    %1937 = arith.mulf %1926, %8 : vector<8x32xf32>
    %cst_354 = arith.constant dense<0.000000e+00> : vector<8xf32>
    %1938 = vector.multi_reduction <add>, %1937, %cst_354 [1] : vector<8x32xf32> to vector<8xf32>
    %1939 = vector.shape_cast %1938 : vector<8xf32> to vector<8x1xf32>
    %1940 = vector.broadcast %24 : f32 to vector<8x1xf32>
    %1941 = arith.addf %1940, %1939 : vector<8x1xf32>
    %cst_355 = arith.constant 5.000000e-01 : f32
    %1942 = arith.mulf %cst_355, %1379 : f32
    %1943 = vector.broadcast %1942 : f32 to vector<8x1xf32>
    %1944 = arith.mulf %1943, %1931 : vector<8x1xf32>
    %1945 = arith.addf %1855, %1944 : vector<8x1xf32>
    %cst_356 = arith.constant 5.000000e-01 : f32
    %1946 = arith.mulf %cst_356, %1379 : f32
    %1947 = vector.broadcast %1946 : f32 to vector<8x1xf32>
    %1948 = arith.mulf %1947, %1936 : vector<8x1xf32>
    %1949 = arith.addf %1866, %1948 : vector<8x1xf32>
    %cst_357 = arith.constant 5.000000e-01 : f32
    %1950 = arith.mulf %cst_357, %1379 : f32
    %1951 = arith.addf %1879, %1950 : f32
    %1952 = vector.broadcast %1951 : f32 to vector<8x32xf32>
    %1953 = arith.mulf %1952, %5 : vector<8x32xf32>
    %1954 = arith.addf %2, %1953 : vector<8x32xf32>
    %1955 = vector.broadcast %1945 : vector<8x1xf32> to vector<8x32xf32>
    %1956 = arith.mulf %1955, %11 : vector<8x32xf32>
    %1957 = arith.addf %1954, %1956 : vector<8x32xf32>
    %1958 = vector.broadcast %1949 : vector<8x1xf32> to vector<8x32xf32>
    %1959 = arith.mulf %1958, %14 : vector<8x32xf32>
    %1960 = arith.addf %1957, %1959 : vector<8x32xf32>
    %1961 = math.tanh %1960 : vector<8x32xf32>
    %1962 = arith.mulf %1961, %1961 : vector<8x32xf32>
    %1963 = arith.mulf %1961, %17 : vector<8x32xf32>
    %cst_358 = arith.constant dense<0.000000e+00> : vector<8xf32>
    %1964 = vector.multi_reduction <add>, %1963, %cst_358 [1] : vector<8x32xf32> to vector<8xf32>
    %1965 = vector.shape_cast %1964 : vector<8xf32> to vector<8x1xf32>
    %1966 = vector.broadcast %21 : f32 to vector<8x1xf32>
    %1967 = arith.addf %1965, %1966 : vector<8x1xf32>
    %1968 = arith.mulf %1961, %20 : vector<8x32xf32>
    %cst_359 = arith.constant dense<0.000000e+00> : vector<8xf32>
    %1969 = vector.multi_reduction <add>, %1968, %cst_359 [1] : vector<8x32xf32> to vector<8xf32>
    %1970 = vector.shape_cast %1969 : vector<8xf32> to vector<8x1xf32>
    %1971 = vector.broadcast %22 : f32 to vector<8x1xf32>
    %1972 = arith.addf %1970, %1971 : vector<8x1xf32>
    %1973 = arith.mulf %1962, %8 : vector<8x32xf32>
    %cst_360 = arith.constant dense<0.000000e+00> : vector<8xf32>
    %1974 = vector.multi_reduction <add>, %1973, %cst_360 [1] : vector<8x32xf32> to vector<8xf32>
    %1975 = vector.shape_cast %1974 : vector<8xf32> to vector<8x1xf32>
    %1976 = vector.broadcast %24 : f32 to vector<8x1xf32>
    %1977 = arith.addf %1976, %1975 : vector<8x1xf32>
    %1978 = vector.broadcast %1379 : f32 to vector<8x1xf32>
    %1979 = arith.mulf %1978, %1967 : vector<8x1xf32>
    %1980 = arith.addf %1855, %1979 : vector<8x1xf32>
    %1981 = vector.broadcast %1379 : f32 to vector<8x1xf32>
    %1982 = arith.mulf %1981, %1972 : vector<8x1xf32>
    %1983 = arith.addf %1866, %1982 : vector<8x1xf32>
    %1984 = arith.addf %1879, %1379 : f32
    %1985 = vector.broadcast %1984 : f32 to vector<8x32xf32>
    %1986 = arith.mulf %1985, %5 : vector<8x32xf32>
    %1987 = arith.addf %2, %1986 : vector<8x32xf32>
    %1988 = vector.broadcast %1980 : vector<8x1xf32> to vector<8x32xf32>
    %1989 = arith.mulf %1988, %11 : vector<8x32xf32>
    %1990 = arith.addf %1987, %1989 : vector<8x32xf32>
    %1991 = vector.broadcast %1983 : vector<8x1xf32> to vector<8x32xf32>
    %1992 = arith.mulf %1991, %14 : vector<8x32xf32>
    %1993 = arith.addf %1990, %1992 : vector<8x32xf32>
    %1994 = math.tanh %1993 : vector<8x32xf32>
    %1995 = arith.mulf %1994, %1994 : vector<8x32xf32>
    %1996 = arith.mulf %1994, %17 : vector<8x32xf32>
    %cst_361 = arith.constant dense<0.000000e+00> : vector<8xf32>
    %1997 = vector.multi_reduction <add>, %1996, %cst_361 [1] : vector<8x32xf32> to vector<8xf32>
    %1998 = vector.shape_cast %1997 : vector<8xf32> to vector<8x1xf32>
    %1999 = vector.broadcast %21 : f32 to vector<8x1xf32>
    %2000 = arith.addf %1998, %1999 : vector<8x1xf32>
    %2001 = arith.mulf %1994, %20 : vector<8x32xf32>
    %cst_362 = arith.constant dense<0.000000e+00> : vector<8xf32>
    %2002 = vector.multi_reduction <add>, %2001, %cst_362 [1] : vector<8x32xf32> to vector<8xf32>
    %2003 = vector.shape_cast %2002 : vector<8xf32> to vector<8x1xf32>
    %2004 = vector.broadcast %22 : f32 to vector<8x1xf32>
    %2005 = arith.addf %2003, %2004 : vector<8x1xf32>
    %2006 = arith.mulf %1995, %8 : vector<8x32xf32>
    %cst_363 = arith.constant dense<0.000000e+00> : vector<8xf32>
    %2007 = vector.multi_reduction <add>, %2006, %cst_363 [1] : vector<8x32xf32> to vector<8xf32>
    %2008 = vector.shape_cast %2007 : vector<8xf32> to vector<8x1xf32>
    %2009 = vector.broadcast %24 : f32 to vector<8x1xf32>
    %2010 = arith.addf %2009, %2008 : vector<8x1xf32>
    %cst_364 = arith.constant 6.000000e+00 : f32
    %2011 = arith.divf %1379, %cst_364 : f32
    %cst_365 = arith.constant 2.000000e+00 : f32
    %2012 = vector.broadcast %cst_365 : f32 to vector<8x1xf32>
    %2013 = arith.mulf %2012, %1931 : vector<8x1xf32>
    %2014 = arith.addf %1895, %2013 : vector<8x1xf32>
    %cst_366 = arith.constant 2.000000e+00 : f32
    %2015 = vector.broadcast %cst_366 : f32 to vector<8x1xf32>
    %2016 = arith.mulf %2015, %1967 : vector<8x1xf32>
    %2017 = arith.addf %2014, %2016 : vector<8x1xf32>
    %2018 = arith.addf %2017, %2000 : vector<8x1xf32>
    %2019 = vector.broadcast %2011 : f32 to vector<8x1xf32>
    %2020 = arith.mulf %2019, %2018 : vector<8x1xf32>
    %2021 = arith.addf %1855, %2020 : vector<8x1xf32>
    %cst_367 = arith.constant 6.000000e+00 : f32
    %2022 = arith.divf %1379, %cst_367 : f32
    %cst_368 = arith.constant 2.000000e+00 : f32
    %2023 = vector.broadcast %cst_368 : f32 to vector<8x1xf32>
    %2024 = arith.mulf %2023, %1936 : vector<8x1xf32>
    %2025 = arith.addf %1900, %2024 : vector<8x1xf32>
    %cst_369 = arith.constant 2.000000e+00 : f32
    %2026 = vector.broadcast %cst_369 : f32 to vector<8x1xf32>
    %2027 = arith.mulf %2026, %1972 : vector<8x1xf32>
    %2028 = arith.addf %2025, %2027 : vector<8x1xf32>
    %2029 = arith.addf %2028, %2005 : vector<8x1xf32>
    %2030 = vector.broadcast %2022 : f32 to vector<8x1xf32>
    %2031 = arith.mulf %2030, %2029 : vector<8x1xf32>
    %2032 = arith.addf %1866, %2031 : vector<8x1xf32>
    %cst_370 = arith.constant 6.000000e+00 : f32
    %2033 = arith.divf %1379, %cst_370 : f32
    %cst_371 = arith.constant 2.000000e+00 : f32
    %2034 = vector.broadcast %cst_371 : f32 to vector<8x1xf32>
    %2035 = arith.mulf %2034, %1941 : vector<8x1xf32>
    %2036 = arith.addf %1905, %2035 : vector<8x1xf32>
    %cst_372 = arith.constant 2.000000e+00 : f32
    %2037 = vector.broadcast %cst_372 : f32 to vector<8x1xf32>
    %2038 = arith.mulf %2037, %1977 : vector<8x1xf32>
    %2039 = arith.addf %2036, %2038 : vector<8x1xf32>
    %2040 = arith.addf %2039, %2010 : vector<8x1xf32>
    %2041 = vector.broadcast %2033 : f32 to vector<8x1xf32>
    %2042 = arith.mulf %2041, %2040 : vector<8x1xf32>
    %2043 = arith.addf %1877, %2042 : vector<8x1xf32>
    %2044 = tpu.concatenate %2021, %2032, %2043 in 1 : vector<8x1xf32>, vector<8x1xf32>, vector<8x1xf32> -> vector<8x3xf32>
    %c3_373 = arith.constant 3 : index
    %c0_374 = arith.constant 0 : index
    %c0_375 = arith.constant 0 : index
    %2045 = vector.load %arg10[%c3_373, %c0_374, %c0_375] : memref<5x8x3xf32, #tpu.memory_space<vmem>>, vector<1x8x3xf32>
    %2046 = vector.shape_cast %2045 : vector<1x8x3xf32> to vector<8x3xf32>
    %2047 = vector.shape_cast %2044 : vector<8x3xf32> to vector<1x8x3xf32>
    tpu.vector_store %arg10[%c3_373, %c0_374, %c0_375], %2047 {strides = array<i32>} : memref<5x8x3xf32, #tpu.memory_space<vmem>>, vector<1x8x3xf32>,
    %c3_376 = arith.constant 3 : index
    %2048 = memref.load %arg0[%c3_376] : memref<5xf32, #tpu.memory_space<smem>>
    %c4 = arith.constant 4 : index
    %2049 = memref.load %arg0[%c4] : memref<5xf32, #tpu.memory_space<smem>>
    %2050 = arith.subf %2049, %2048 : f32
    %cst_377 = arith.constant 4.000000e+00 : f32
    %2051 = arith.divf %2050, %cst_377 : f32
    %cst_378 = arith.constant 0.000000e+00 : f32
    %2052 = arith.mulf %cst_378, %2051 : f32
    %2053 = arith.addf %2048, %2052 : f32
    %2054 = vector.broadcast %2053 : f32 to vector<8x32xf32>
    %2055 = arith.mulf %2054, %5 : vector<8x32xf32>
    %2056 = arith.addf %2, %2055 : vector<8x32xf32>
    %2057 = vector.broadcast %2021 : vector<8x1xf32> to vector<8x32xf32>
    %2058 = arith.mulf %2057, %11 : vector<8x32xf32>
    %2059 = arith.addf %2056, %2058 : vector<8x32xf32>
    %2060 = vector.broadcast %2032 : vector<8x1xf32> to vector<8x32xf32>
    %2061 = arith.mulf %2060, %14 : vector<8x32xf32>
    %2062 = arith.addf %2059, %2061 : vector<8x32xf32>
    %2063 = math.tanh %2062 : vector<8x32xf32>
    %2064 = arith.mulf %2063, %2063 : vector<8x32xf32>
    %2065 = arith.mulf %2063, %17 : vector<8x32xf32>
    %cst_379 = arith.constant dense<0.000000e+00> : vector<8xf32>
    %2066 = vector.multi_reduction <add>, %2065, %cst_379 [1] : vector<8x32xf32> to vector<8xf32>
    %2067 = vector.shape_cast %2066 : vector<8xf32> to vector<8x1xf32>
    %2068 = vector.broadcast %21 : f32 to vector<8x1xf32>
    %2069 = arith.addf %2067, %2068 : vector<8x1xf32>
    %2070 = arith.mulf %2063, %20 : vector<8x32xf32>
    %cst_380 = arith.constant dense<0.000000e+00> : vector<8xf32>
    %2071 = vector.multi_reduction <add>, %2070, %cst_380 [1] : vector<8x32xf32> to vector<8xf32>
    %2072 = vector.shape_cast %2071 : vector<8xf32> to vector<8x1xf32>
    %2073 = vector.broadcast %22 : f32 to vector<8x1xf32>
    %2074 = arith.addf %2072, %2073 : vector<8x1xf32>
    %2075 = arith.mulf %2064, %8 : vector<8x32xf32>
    %cst_381 = arith.constant dense<0.000000e+00> : vector<8xf32>
    %2076 = vector.multi_reduction <add>, %2075, %cst_381 [1] : vector<8x32xf32> to vector<8xf32>
    %2077 = vector.shape_cast %2076 : vector<8xf32> to vector<8x1xf32>
    %2078 = vector.broadcast %24 : f32 to vector<8x1xf32>
    %2079 = arith.addf %2078, %2077 : vector<8x1xf32>
    %cst_382 = arith.constant 5.000000e-01 : f32
    %2080 = arith.mulf %cst_382, %2051 : f32
    %2081 = vector.broadcast %2080 : f32 to vector<8x1xf32>
    %2082 = arith.mulf %2081, %2069 : vector<8x1xf32>
    %2083 = arith.addf %2021, %2082 : vector<8x1xf32>
    %cst_383 = arith.constant 5.000000e-01 : f32
    %2084 = arith.mulf %cst_383, %2051 : f32
    %2085 = vector.broadcast %2084 : f32 to vector<8x1xf32>
    %2086 = arith.mulf %2085, %2074 : vector<8x1xf32>
    %2087 = arith.addf %2032, %2086 : vector<8x1xf32>
    %cst_384 = arith.constant 5.000000e-01 : f32
    %2088 = arith.mulf %cst_384, %2051 : f32
    %2089 = arith.addf %2053, %2088 : f32
    %2090 = vector.broadcast %2089 : f32 to vector<8x32xf32>
    %2091 = arith.mulf %2090, %5 : vector<8x32xf32>
    %2092 = arith.addf %2, %2091 : vector<8x32xf32>
    %2093 = vector.broadcast %2083 : vector<8x1xf32> to vector<8x32xf32>
    %2094 = arith.mulf %2093, %11 : vector<8x32xf32>
    %2095 = arith.addf %2092, %2094 : vector<8x32xf32>
    %2096 = vector.broadcast %2087 : vector<8x1xf32> to vector<8x32xf32>
    %2097 = arith.mulf %2096, %14 : vector<8x32xf32>
    %2098 = arith.addf %2095, %2097 : vector<8x32xf32>
    %2099 = math.tanh %2098 : vector<8x32xf32>
    %2100 = arith.mulf %2099, %2099 : vector<8x32xf32>
    %2101 = arith.mulf %2099, %17 : vector<8x32xf32>
    %cst_385 = arith.constant dense<0.000000e+00> : vector<8xf32>
    %2102 = vector.multi_reduction <add>, %2101, %cst_385 [1] : vector<8x32xf32> to vector<8xf32>
    %2103 = vector.shape_cast %2102 : vector<8xf32> to vector<8x1xf32>
    %2104 = vector.broadcast %21 : f32 to vector<8x1xf32>
    %2105 = arith.addf %2103, %2104 : vector<8x1xf32>
    %2106 = arith.mulf %2099, %20 : vector<8x32xf32>
    %cst_386 = arith.constant dense<0.000000e+00> : vector<8xf32>
    %2107 = vector.multi_reduction <add>, %2106, %cst_386 [1] : vector<8x32xf32> to vector<8xf32>
    %2108 = vector.shape_cast %2107 : vector<8xf32> to vector<8x1xf32>
    %2109 = vector.broadcast %22 : f32 to vector<8x1xf32>
    %2110 = arith.addf %2108, %2109 : vector<8x1xf32>
    %2111 = arith.mulf %2100, %8 : vector<8x32xf32>
    %cst_387 = arith.constant dense<0.000000e+00> : vector<8xf32>
    %2112 = vector.multi_reduction <add>, %2111, %cst_387 [1] : vector<8x32xf32> to vector<8xf32>
    %2113 = vector.shape_cast %2112 : vector<8xf32> to vector<8x1xf32>
    %2114 = vector.broadcast %24 : f32 to vector<8x1xf32>
    %2115 = arith.addf %2114, %2113 : vector<8x1xf32>
    %cst_388 = arith.constant 5.000000e-01 : f32
    %2116 = arith.mulf %cst_388, %2051 : f32
    %2117 = vector.broadcast %2116 : f32 to vector<8x1xf32>
    %2118 = arith.mulf %2117, %2105 : vector<8x1xf32>
    %2119 = arith.addf %2021, %2118 : vector<8x1xf32>
    %cst_389 = arith.constant 5.000000e-01 : f32
    %2120 = arith.mulf %cst_389, %2051 : f32
    %2121 = vector.broadcast %2120 : f32 to vector<8x1xf32>
    %2122 = arith.mulf %2121, %2110 : vector<8x1xf32>
    %2123 = arith.addf %2032, %2122 : vector<8x1xf32>
    %cst_390 = arith.constant 5.000000e-01 : f32
    %2124 = arith.mulf %cst_390, %2051 : f32
    %2125 = arith.addf %2053, %2124 : f32
    %2126 = vector.broadcast %2125 : f32 to vector<8x32xf32>
    %2127 = arith.mulf %2126, %5 : vector<8x32xf32>
    %2128 = arith.addf %2, %2127 : vector<8x32xf32>
    %2129 = vector.broadcast %2119 : vector<8x1xf32> to vector<8x32xf32>
    %2130 = arith.mulf %2129, %11 : vector<8x32xf32>
    %2131 = arith.addf %2128, %2130 : vector<8x32xf32>
    %2132 = vector.broadcast %2123 : vector<8x1xf32> to vector<8x32xf32>
    %2133 = arith.mulf %2132, %14 : vector<8x32xf32>
    %2134 = arith.addf %2131, %2133 : vector<8x32xf32>
    %2135 = math.tanh %2134 : vector<8x32xf32>
    %2136 = arith.mulf %2135, %2135 : vector<8x32xf32>
    %2137 = arith.mulf %2135, %17 : vector<8x32xf32>
    %cst_391 = arith.constant dense<0.000000e+00> : vector<8xf32>
    %2138 = vector.multi_reduction <add>, %2137, %cst_391 [1] : vector<8x32xf32> to vector<8xf32>
    %2139 = vector.shape_cast %2138 : vector<8xf32> to vector<8x1xf32>
    %2140 = vector.broadcast %21 : f32 to vector<8x1xf32>
    %2141 = arith.addf %2139, %2140 : vector<8x1xf32>
    %2142 = arith.mulf %2135, %20 : vector<8x32xf32>
    %cst_392 = arith.constant dense<0.000000e+00> : vector<8xf32>
    %2143 = vector.multi_reduction <add>, %2142, %cst_392 [1] : vector<8x32xf32> to vector<8xf32>
    %2144 = vector.shape_cast %2143 : vector<8xf32> to vector<8x1xf32>
    %2145 = vector.broadcast %22 : f32 to vector<8x1xf32>
    %2146 = arith.addf %2144, %2145 : vector<8x1xf32>
    %2147 = arith.mulf %2136, %8 : vector<8x32xf32>
    %cst_393 = arith.constant dense<0.000000e+00> : vector<8xf32>
    %2148 = vector.multi_reduction <add>, %2147, %cst_393 [1] : vector<8x32xf32> to vector<8xf32>
    %2149 = vector.shape_cast %2148 : vector<8xf32> to vector<8x1xf32>
    %2150 = vector.broadcast %24 : f32 to vector<8x1xf32>
    %2151 = arith.addf %2150, %2149 : vector<8x1xf32>
    %2152 = vector.broadcast %2051 : f32 to vector<8x1xf32>
    %2153 = arith.mulf %2152, %2141 : vector<8x1xf32>
    %2154 = arith.addf %2021, %2153 : vector<8x1xf32>
    %2155 = vector.broadcast %2051 : f32 to vector<8x1xf32>
    %2156 = arith.mulf %2155, %2146 : vector<8x1xf32>
    %2157 = arith.addf %2032, %2156 : vector<8x1xf32>
    %2158 = arith.addf %2053, %2051 : f32
    %2159 = vector.broadcast %2158 : f32 to vector<8x32xf32>
    %2160 = arith.mulf %2159, %5 : vector<8x32xf32>
    %2161 = arith.addf %2, %2160 : vector<8x32xf32>
    %2162 = vector.broadcast %2154 : vector<8x1xf32> to vector<8x32xf32>
    %2163 = arith.mulf %2162, %11 : vector<8x32xf32>
    %2164 = arith.addf %2161, %2163 : vector<8x32xf32>
    %2165 = vector.broadcast %2157 : vector<8x1xf32> to vector<8x32xf32>
    %2166 = arith.mulf %2165, %14 : vector<8x32xf32>
    %2167 = arith.addf %2164, %2166 : vector<8x32xf32>
    %2168 = math.tanh %2167 : vector<8x32xf32>
    %2169 = arith.mulf %2168, %2168 : vector<8x32xf32>
    %2170 = arith.mulf %2168, %17 : vector<8x32xf32>
    %cst_394 = arith.constant dense<0.000000e+00> : vector<8xf32>
    %2171 = vector.multi_reduction <add>, %2170, %cst_394 [1] : vector<8x32xf32> to vector<8xf32>
    %2172 = vector.shape_cast %2171 : vector<8xf32> to vector<8x1xf32>
    %2173 = vector.broadcast %21 : f32 to vector<8x1xf32>
    %2174 = arith.addf %2172, %2173 : vector<8x1xf32>
    %2175 = arith.mulf %2168, %20 : vector<8x32xf32>
    %cst_395 = arith.constant dense<0.000000e+00> : vector<8xf32>
    %2176 = vector.multi_reduction <add>, %2175, %cst_395 [1] : vector<8x32xf32> to vector<8xf32>
    %2177 = vector.shape_cast %2176 : vector<8xf32> to vector<8x1xf32>
    %2178 = vector.broadcast %22 : f32 to vector<8x1xf32>
    %2179 = arith.addf %2177, %2178 : vector<8x1xf32>
    %2180 = arith.mulf %2169, %8 : vector<8x32xf32>
    %cst_396 = arith.constant dense<0.000000e+00> : vector<8xf32>
    %2181 = vector.multi_reduction <add>, %2180, %cst_396 [1] : vector<8x32xf32> to vector<8xf32>
    %2182 = vector.shape_cast %2181 : vector<8xf32> to vector<8x1xf32>
    %2183 = vector.broadcast %24 : f32 to vector<8x1xf32>
    %2184 = arith.addf %2183, %2182 : vector<8x1xf32>
    %cst_397 = arith.constant 6.000000e+00 : f32
    %2185 = arith.divf %2051, %cst_397 : f32
    %cst_398 = arith.constant 2.000000e+00 : f32
    %2186 = vector.broadcast %cst_398 : f32 to vector<8x1xf32>
    %2187 = arith.mulf %2186, %2105 : vector<8x1xf32>
    %2188 = arith.addf %2069, %2187 : vector<8x1xf32>
    %cst_399 = arith.constant 2.000000e+00 : f32
    %2189 = vector.broadcast %cst_399 : f32 to vector<8x1xf32>
    %2190 = arith.mulf %2189, %2141 : vector<8x1xf32>
    %2191 = arith.addf %2188, %2190 : vector<8x1xf32>
    %2192 = arith.addf %2191, %2174 : vector<8x1xf32>
    %2193 = vector.broadcast %2185 : f32 to vector<8x1xf32>
    %2194 = arith.mulf %2193, %2192 : vector<8x1xf32>
    %2195 = arith.addf %2021, %2194 : vector<8x1xf32>
    %cst_400 = arith.constant 6.000000e+00 : f32
    %2196 = arith.divf %2051, %cst_400 : f32
    %cst_401 = arith.constant 2.000000e+00 : f32
    %2197 = vector.broadcast %cst_401 : f32 to vector<8x1xf32>
    %2198 = arith.mulf %2197, %2110 : vector<8x1xf32>
    %2199 = arith.addf %2074, %2198 : vector<8x1xf32>
    %cst_402 = arith.constant 2.000000e+00 : f32
    %2200 = vector.broadcast %cst_402 : f32 to vector<8x1xf32>
    %2201 = arith.mulf %2200, %2146 : vector<8x1xf32>
    %2202 = arith.addf %2199, %2201 : vector<8x1xf32>
    %2203 = arith.addf %2202, %2179 : vector<8x1xf32>
    %2204 = vector.broadcast %2196 : f32 to vector<8x1xf32>
    %2205 = arith.mulf %2204, %2203 : vector<8x1xf32>
    %2206 = arith.addf %2032, %2205 : vector<8x1xf32>
    %cst_403 = arith.constant 6.000000e+00 : f32
    %2207 = arith.divf %2051, %cst_403 : f32
    %cst_404 = arith.constant 2.000000e+00 : f32
    %2208 = vector.broadcast %cst_404 : f32 to vector<8x1xf32>
    %2209 = arith.mulf %2208, %2115 : vector<8x1xf32>
    %2210 = arith.addf %2079, %2209 : vector<8x1xf32>
    %cst_405 = arith.constant 2.000000e+00 : f32
    %2211 = vector.broadcast %cst_405 : f32 to vector<8x1xf32>
    %2212 = arith.mulf %2211, %2151 : vector<8x1xf32>
    %2213 = arith.addf %2210, %2212 : vector<8x1xf32>
    %2214 = arith.addf %2213, %2184 : vector<8x1xf32>
    %2215 = vector.broadcast %2207 : f32 to vector<8x1xf32>
    %2216 = arith.mulf %2215, %2214 : vector<8x1xf32>
    %2217 = arith.addf %2043, %2216 : vector<8x1xf32>
    %cst_406 = arith.constant 1.000000e+00 : f32
    %2218 = arith.mulf %cst_406, %2051 : f32
    %2219 = arith.addf %2048, %2218 : f32
    %2220 = vector.broadcast %2219 : f32 to vector<8x32xf32>
    %2221 = arith.mulf %2220, %5 : vector<8x32xf32>
    %2222 = arith.addf %2, %2221 : vector<8x32xf32>
    %2223 = vector.broadcast %2195 : vector<8x1xf32> to vector<8x32xf32>
    %2224 = arith.mulf %2223, %11 : vector<8x32xf32>
    %2225 = arith.addf %2222, %2224 : vector<8x32xf32>
    %2226 = vector.broadcast %2206 : vector<8x1xf32> to vector<8x32xf32>
    %2227 = arith.mulf %2226, %14 : vector<8x32xf32>
    %2228 = arith.addf %2225, %2227 : vector<8x32xf32>
    %2229 = math.tanh %2228 : vector<8x32xf32>
    %2230 = arith.mulf %2229, %2229 : vector<8x32xf32>
    %2231 = arith.mulf %2229, %17 : vector<8x32xf32>
    %cst_407 = arith.constant dense<0.000000e+00> : vector<8xf32>
    %2232 = vector.multi_reduction <add>, %2231, %cst_407 [1] : vector<8x32xf32> to vector<8xf32>
    %2233 = vector.shape_cast %2232 : vector<8xf32> to vector<8x1xf32>
    %2234 = vector.broadcast %21 : f32 to vector<8x1xf32>
    %2235 = arith.addf %2233, %2234 : vector<8x1xf32>
    %2236 = arith.mulf %2229, %20 : vector<8x32xf32>
    %cst_408 = arith.constant dense<0.000000e+00> : vector<8xf32>
    %2237 = vector.multi_reduction <add>, %2236, %cst_408 [1] : vector<8x32xf32> to vector<8xf32>
    %2238 = vector.shape_cast %2237 : vector<8xf32> to vector<8x1xf32>
    %2239 = vector.broadcast %22 : f32 to vector<8x1xf32>
    %2240 = arith.addf %2238, %2239 : vector<8x1xf32>
    %2241 = arith.mulf %2230, %8 : vector<8x32xf32>
    %cst_409 = arith.constant dense<0.000000e+00> : vector<8xf32>
    %2242 = vector.multi_reduction <add>, %2241, %cst_409 [1] : vector<8x32xf32> to vector<8xf32>
    %2243 = vector.shape_cast %2242 : vector<8xf32> to vector<8x1xf32>
    %2244 = vector.broadcast %24 : f32 to vector<8x1xf32>
    %2245 = arith.addf %2244, %2243 : vector<8x1xf32>
    %cst_410 = arith.constant 5.000000e-01 : f32
    %2246 = arith.mulf %cst_410, %2051 : f32
    %2247 = vector.broadcast %2246 : f32 to vector<8x1xf32>
    %2248 = arith.mulf %2247, %2235 : vector<8x1xf32>
    %2249 = arith.addf %2195, %2248 : vector<8x1xf32>
    %cst_411 = arith.constant 5.000000e-01 : f32
    %2250 = arith.mulf %cst_411, %2051 : f32
    %2251 = vector.broadcast %2250 : f32 to vector<8x1xf32>
    %2252 = arith.mulf %2251, %2240 : vector<8x1xf32>
    %2253 = arith.addf %2206, %2252 : vector<8x1xf32>
    %cst_412 = arith.constant 5.000000e-01 : f32
    %2254 = arith.mulf %cst_412, %2051 : f32
    %2255 = arith.addf %2219, %2254 : f32
    %2256 = vector.broadcast %2255 : f32 to vector<8x32xf32>
    %2257 = arith.mulf %2256, %5 : vector<8x32xf32>
    %2258 = arith.addf %2, %2257 : vector<8x32xf32>
    %2259 = vector.broadcast %2249 : vector<8x1xf32> to vector<8x32xf32>
    %2260 = arith.mulf %2259, %11 : vector<8x32xf32>
    %2261 = arith.addf %2258, %2260 : vector<8x32xf32>
    %2262 = vector.broadcast %2253 : vector<8x1xf32> to vector<8x32xf32>
    %2263 = arith.mulf %2262, %14 : vector<8x32xf32>
    %2264 = arith.addf %2261, %2263 : vector<8x32xf32>
    %2265 = math.tanh %2264 : vector<8x32xf32>
    %2266 = arith.mulf %2265, %2265 : vector<8x32xf32>
    %2267 = arith.mulf %2265, %17 : vector<8x32xf32>
    %cst_413 = arith.constant dense<0.000000e+00> : vector<8xf32>
    %2268 = vector.multi_reduction <add>, %2267, %cst_413 [1] : vector<8x32xf32> to vector<8xf32>
    %2269 = vector.shape_cast %2268 : vector<8xf32> to vector<8x1xf32>
    %2270 = vector.broadcast %21 : f32 to vector<8x1xf32>
    %2271 = arith.addf %2269, %2270 : vector<8x1xf32>
    %2272 = arith.mulf %2265, %20 : vector<8x32xf32>
    %cst_414 = arith.constant dense<0.000000e+00> : vector<8xf32>
    %2273 = vector.multi_reduction <add>, %2272, %cst_414 [1] : vector<8x32xf32> to vector<8xf32>
    %2274 = vector.shape_cast %2273 : vector<8xf32> to vector<8x1xf32>
    %2275 = vector.broadcast %22 : f32 to vector<8x1xf32>
    %2276 = arith.addf %2274, %2275 : vector<8x1xf32>
    %2277 = arith.mulf %2266, %8 : vector<8x32xf32>
    %cst_415 = arith.constant dense<0.000000e+00> : vector<8xf32>
    %2278 = vector.multi_reduction <add>, %2277, %cst_415 [1] : vector<8x32xf32> to vector<8xf32>
    %2279 = vector.shape_cast %2278 : vector<8xf32> to vector<8x1xf32>
    %2280 = vector.broadcast %24 : f32 to vector<8x1xf32>
    %2281 = arith.addf %2280, %2279 : vector<8x1xf32>
    %cst_416 = arith.constant 5.000000e-01 : f32
    %2282 = arith.mulf %cst_416, %2051 : f32
    %2283 = vector.broadcast %2282 : f32 to vector<8x1xf32>
    %2284 = arith.mulf %2283, %2271 : vector<8x1xf32>
    %2285 = arith.addf %2195, %2284 : vector<8x1xf32>
    %cst_417 = arith.constant 5.000000e-01 : f32
    %2286 = arith.mulf %cst_417, %2051 : f32
    %2287 = vector.broadcast %2286 : f32 to vector<8x1xf32>
    %2288 = arith.mulf %2287, %2276 : vector<8x1xf32>
    %2289 = arith.addf %2206, %2288 : vector<8x1xf32>
    %cst_418 = arith.constant 5.000000e-01 : f32
    %2290 = arith.mulf %cst_418, %2051 : f32
    %2291 = arith.addf %2219, %2290 : f32
    %2292 = vector.broadcast %2291 : f32 to vector<8x32xf32>
    %2293 = arith.mulf %2292, %5 : vector<8x32xf32>
    %2294 = arith.addf %2, %2293 : vector<8x32xf32>
    %2295 = vector.broadcast %2285 : vector<8x1xf32> to vector<8x32xf32>
    %2296 = arith.mulf %2295, %11 : vector<8x32xf32>
    %2297 = arith.addf %2294, %2296 : vector<8x32xf32>
    %2298 = vector.broadcast %2289 : vector<8x1xf32> to vector<8x32xf32>
    %2299 = arith.mulf %2298, %14 : vector<8x32xf32>
    %2300 = arith.addf %2297, %2299 : vector<8x32xf32>
    %2301 = math.tanh %2300 : vector<8x32xf32>
    %2302 = arith.mulf %2301, %2301 : vector<8x32xf32>
    %2303 = arith.mulf %2301, %17 : vector<8x32xf32>
    %cst_419 = arith.constant dense<0.000000e+00> : vector<8xf32>
    %2304 = vector.multi_reduction <add>, %2303, %cst_419 [1] : vector<8x32xf32> to vector<8xf32>
    %2305 = vector.shape_cast %2304 : vector<8xf32> to vector<8x1xf32>
    %2306 = vector.broadcast %21 : f32 to vector<8x1xf32>
    %2307 = arith.addf %2305, %2306 : vector<8x1xf32>
    %2308 = arith.mulf %2301, %20 : vector<8x32xf32>
    %cst_420 = arith.constant dense<0.000000e+00> : vector<8xf32>
    %2309 = vector.multi_reduction <add>, %2308, %cst_420 [1] : vector<8x32xf32> to vector<8xf32>
    %2310 = vector.shape_cast %2309 : vector<8xf32> to vector<8x1xf32>
    %2311 = vector.broadcast %22 : f32 to vector<8x1xf32>
    %2312 = arith.addf %2310, %2311 : vector<8x1xf32>
    %2313 = arith.mulf %2302, %8 : vector<8x32xf32>
    %cst_421 = arith.constant dense<0.000000e+00> : vector<8xf32>
    %2314 = vector.multi_reduction <add>, %2313, %cst_421 [1] : vector<8x32xf32> to vector<8xf32>
    %2315 = vector.shape_cast %2314 : vector<8xf32> to vector<8x1xf32>
    %2316 = vector.broadcast %24 : f32 to vector<8x1xf32>
    %2317 = arith.addf %2316, %2315 : vector<8x1xf32>
    %2318 = vector.broadcast %2051 : f32 to vector<8x1xf32>
    %2319 = arith.mulf %2318, %2307 : vector<8x1xf32>
    %2320 = arith.addf %2195, %2319 : vector<8x1xf32>
    %2321 = vector.broadcast %2051 : f32 to vector<8x1xf32>
    %2322 = arith.mulf %2321, %2312 : vector<8x1xf32>
    %2323 = arith.addf %2206, %2322 : vector<8x1xf32>
    %2324 = arith.addf %2219, %2051 : f32
    %2325 = vector.broadcast %2324 : f32 to vector<8x32xf32>
    %2326 = arith.mulf %2325, %5 : vector<8x32xf32>
    %2327 = arith.addf %2, %2326 : vector<8x32xf32>
    %2328 = vector.broadcast %2320 : vector<8x1xf32> to vector<8x32xf32>
    %2329 = arith.mulf %2328, %11 : vector<8x32xf32>
    %2330 = arith.addf %2327, %2329 : vector<8x32xf32>
    %2331 = vector.broadcast %2323 : vector<8x1xf32> to vector<8x32xf32>
    %2332 = arith.mulf %2331, %14 : vector<8x32xf32>
    %2333 = arith.addf %2330, %2332 : vector<8x32xf32>
    %2334 = math.tanh %2333 : vector<8x32xf32>
    %2335 = arith.mulf %2334, %2334 : vector<8x32xf32>
    %2336 = arith.mulf %2334, %17 : vector<8x32xf32>
    %cst_422 = arith.constant dense<0.000000e+00> : vector<8xf32>
    %2337 = vector.multi_reduction <add>, %2336, %cst_422 [1] : vector<8x32xf32> to vector<8xf32>
    %2338 = vector.shape_cast %2337 : vector<8xf32> to vector<8x1xf32>
    %2339 = vector.broadcast %21 : f32 to vector<8x1xf32>
    %2340 = arith.addf %2338, %2339 : vector<8x1xf32>
    %2341 = arith.mulf %2334, %20 : vector<8x32xf32>
    %cst_423 = arith.constant dense<0.000000e+00> : vector<8xf32>
    %2342 = vector.multi_reduction <add>, %2341, %cst_423 [1] : vector<8x32xf32> to vector<8xf32>
    %2343 = vector.shape_cast %2342 : vector<8xf32> to vector<8x1xf32>
    %2344 = vector.broadcast %22 : f32 to vector<8x1xf32>
    %2345 = arith.addf %2343, %2344 : vector<8x1xf32>
    %2346 = arith.mulf %2335, %8 : vector<8x32xf32>
    %cst_424 = arith.constant dense<0.000000e+00> : vector<8xf32>
    %2347 = vector.multi_reduction <add>, %2346, %cst_424 [1] : vector<8x32xf32> to vector<8xf32>
    %2348 = vector.shape_cast %2347 : vector<8xf32> to vector<8x1xf32>
    %2349 = vector.broadcast %24 : f32 to vector<8x1xf32>
    %2350 = arith.addf %2349, %2348 : vector<8x1xf32>
    %cst_425 = arith.constant 6.000000e+00 : f32
    %2351 = arith.divf %2051, %cst_425 : f32
    %cst_426 = arith.constant 2.000000e+00 : f32
    %2352 = vector.broadcast %cst_426 : f32 to vector<8x1xf32>
    %2353 = arith.mulf %2352, %2271 : vector<8x1xf32>
    %2354 = arith.addf %2235, %2353 : vector<8x1xf32>
    %cst_427 = arith.constant 2.000000e+00 : f32
    %2355 = vector.broadcast %cst_427 : f32 to vector<8x1xf32>
    %2356 = arith.mulf %2355, %2307 : vector<8x1xf32>
    %2357 = arith.addf %2354, %2356 : vector<8x1xf32>
    %2358 = arith.addf %2357, %2340 : vector<8x1xf32>
    %2359 = vector.broadcast %2351 : f32 to vector<8x1xf32>
    %2360 = arith.mulf %2359, %2358 : vector<8x1xf32>
    %2361 = arith.addf %2195, %2360 : vector<8x1xf32>
    %cst_428 = arith.constant 6.000000e+00 : f32
    %2362 = arith.divf %2051, %cst_428 : f32
    %cst_429 = arith.constant 2.000000e+00 : f32
    %2363 = vector.broadcast %cst_429 : f32 to vector<8x1xf32>
    %2364 = arith.mulf %2363, %2276 : vector<8x1xf32>
    %2365 = arith.addf %2240, %2364 : vector<8x1xf32>
    %cst_430 = arith.constant 2.000000e+00 : f32
    %2366 = vector.broadcast %cst_430 : f32 to vector<8x1xf32>
    %2367 = arith.mulf %2366, %2312 : vector<8x1xf32>
    %2368 = arith.addf %2365, %2367 : vector<8x1xf32>
    %2369 = arith.addf %2368, %2345 : vector<8x1xf32>
    %2370 = vector.broadcast %2362 : f32 to vector<8x1xf32>
    %2371 = arith.mulf %2370, %2369 : vector<8x1xf32>
    %2372 = arith.addf %2206, %2371 : vector<8x1xf32>
    %cst_431 = arith.constant 6.000000e+00 : f32
    %2373 = arith.divf %2051, %cst_431 : f32
    %cst_432 = arith.constant 2.000000e+00 : f32
    %2374 = vector.broadcast %cst_432 : f32 to vector<8x1xf32>
    %2375 = arith.mulf %2374, %2281 : vector<8x1xf32>
    %2376 = arith.addf %2245, %2375 : vector<8x1xf32>
    %cst_433 = arith.constant 2.000000e+00 : f32
    %2377 = vector.broadcast %cst_433 : f32 to vector<8x1xf32>
    %2378 = arith.mulf %2377, %2317 : vector<8x1xf32>
    %2379 = arith.addf %2376, %2378 : vector<8x1xf32>
    %2380 = arith.addf %2379, %2350 : vector<8x1xf32>
    %2381 = vector.broadcast %2373 : f32 to vector<8x1xf32>
    %2382 = arith.mulf %2381, %2380 : vector<8x1xf32>
    %2383 = arith.addf %2217, %2382 : vector<8x1xf32>
    %cst_434 = arith.constant 2.000000e+00 : f32
    %2384 = arith.mulf %cst_434, %2051 : f32
    %2385 = arith.addf %2048, %2384 : f32
    %2386 = vector.broadcast %2385 : f32 to vector<8x32xf32>
    %2387 = arith.mulf %2386, %5 : vector<8x32xf32>
    %2388 = arith.addf %2, %2387 : vector<8x32xf32>
    %2389 = vector.broadcast %2361 : vector<8x1xf32> to vector<8x32xf32>
    %2390 = arith.mulf %2389, %11 : vector<8x32xf32>
    %2391 = arith.addf %2388, %2390 : vector<8x32xf32>
    %2392 = vector.broadcast %2372 : vector<8x1xf32> to vector<8x32xf32>
    %2393 = arith.mulf %2392, %14 : vector<8x32xf32>
    %2394 = arith.addf %2391, %2393 : vector<8x32xf32>
    %2395 = math.tanh %2394 : vector<8x32xf32>
    %2396 = arith.mulf %2395, %2395 : vector<8x32xf32>
    %2397 = arith.mulf %2395, %17 : vector<8x32xf32>
    %cst_435 = arith.constant dense<0.000000e+00> : vector<8xf32>
    %2398 = vector.multi_reduction <add>, %2397, %cst_435 [1] : vector<8x32xf32> to vector<8xf32>
    %2399 = vector.shape_cast %2398 : vector<8xf32> to vector<8x1xf32>
    %2400 = vector.broadcast %21 : f32 to vector<8x1xf32>
    %2401 = arith.addf %2399, %2400 : vector<8x1xf32>
    %2402 = arith.mulf %2395, %20 : vector<8x32xf32>
    %cst_436 = arith.constant dense<0.000000e+00> : vector<8xf32>
    %2403 = vector.multi_reduction <add>, %2402, %cst_436 [1] : vector<8x32xf32> to vector<8xf32>
    %2404 = vector.shape_cast %2403 : vector<8xf32> to vector<8x1xf32>
    %2405 = vector.broadcast %22 : f32 to vector<8x1xf32>
    %2406 = arith.addf %2404, %2405 : vector<8x1xf32>
    %2407 = arith.mulf %2396, %8 : vector<8x32xf32>
    %cst_437 = arith.constant dense<0.000000e+00> : vector<8xf32>
    %2408 = vector.multi_reduction <add>, %2407, %cst_437 [1] : vector<8x32xf32> to vector<8xf32>
    %2409 = vector.shape_cast %2408 : vector<8xf32> to vector<8x1xf32>
    %2410 = vector.broadcast %24 : f32 to vector<8x1xf32>
    %2411 = arith.addf %2410, %2409 : vector<8x1xf32>
    %cst_438 = arith.constant 5.000000e-01 : f32
    %2412 = arith.mulf %cst_438, %2051 : f32
    %2413 = vector.broadcast %2412 : f32 to vector<8x1xf32>
    %2414 = arith.mulf %2413, %2401 : vector<8x1xf32>
    %2415 = arith.addf %2361, %2414 : vector<8x1xf32>
    %cst_439 = arith.constant 5.000000e-01 : f32
    %2416 = arith.mulf %cst_439, %2051 : f32
    %2417 = vector.broadcast %2416 : f32 to vector<8x1xf32>
    %2418 = arith.mulf %2417, %2406 : vector<8x1xf32>
    %2419 = arith.addf %2372, %2418 : vector<8x1xf32>
    %cst_440 = arith.constant 5.000000e-01 : f32
    %2420 = arith.mulf %cst_440, %2051 : f32
    %2421 = arith.addf %2385, %2420 : f32
    %2422 = vector.broadcast %2421 : f32 to vector<8x32xf32>
    %2423 = arith.mulf %2422, %5 : vector<8x32xf32>
    %2424 = arith.addf %2, %2423 : vector<8x32xf32>
    %2425 = vector.broadcast %2415 : vector<8x1xf32> to vector<8x32xf32>
    %2426 = arith.mulf %2425, %11 : vector<8x32xf32>
    %2427 = arith.addf %2424, %2426 : vector<8x32xf32>
    %2428 = vector.broadcast %2419 : vector<8x1xf32> to vector<8x32xf32>
    %2429 = arith.mulf %2428, %14 : vector<8x32xf32>
    %2430 = arith.addf %2427, %2429 : vector<8x32xf32>
    %2431 = math.tanh %2430 : vector<8x32xf32>
    %2432 = arith.mulf %2431, %2431 : vector<8x32xf32>
    %2433 = arith.mulf %2431, %17 : vector<8x32xf32>
    %cst_441 = arith.constant dense<0.000000e+00> : vector<8xf32>
    %2434 = vector.multi_reduction <add>, %2433, %cst_441 [1] : vector<8x32xf32> to vector<8xf32>
    %2435 = vector.shape_cast %2434 : vector<8xf32> to vector<8x1xf32>
    %2436 = vector.broadcast %21 : f32 to vector<8x1xf32>
    %2437 = arith.addf %2435, %2436 : vector<8x1xf32>
    %2438 = arith.mulf %2431, %20 : vector<8x32xf32>
    %cst_442 = arith.constant dense<0.000000e+00> : vector<8xf32>
    %2439 = vector.multi_reduction <add>, %2438, %cst_442 [1] : vector<8x32xf32> to vector<8xf32>
    %2440 = vector.shape_cast %2439 : vector<8xf32> to vector<8x1xf32>
    %2441 = vector.broadcast %22 : f32 to vector<8x1xf32>
    %2442 = arith.addf %2440, %2441 : vector<8x1xf32>
    %2443 = arith.mulf %2432, %8 : vector<8x32xf32>
    %cst_443 = arith.constant dense<0.000000e+00> : vector<8xf32>
    %2444 = vector.multi_reduction <add>, %2443, %cst_443 [1] : vector<8x32xf32> to vector<8xf32>
    %2445 = vector.shape_cast %2444 : vector<8xf32> to vector<8x1xf32>
    %2446 = vector.broadcast %24 : f32 to vector<8x1xf32>
    %2447 = arith.addf %2446, %2445 : vector<8x1xf32>
    %cst_444 = arith.constant 5.000000e-01 : f32
    %2448 = arith.mulf %cst_444, %2051 : f32
    %2449 = vector.broadcast %2448 : f32 to vector<8x1xf32>
    %2450 = arith.mulf %2449, %2437 : vector<8x1xf32>
    %2451 = arith.addf %2361, %2450 : vector<8x1xf32>
    %cst_445 = arith.constant 5.000000e-01 : f32
    %2452 = arith.mulf %cst_445, %2051 : f32
    %2453 = vector.broadcast %2452 : f32 to vector<8x1xf32>
    %2454 = arith.mulf %2453, %2442 : vector<8x1xf32>
    %2455 = arith.addf %2372, %2454 : vector<8x1xf32>
    %cst_446 = arith.constant 5.000000e-01 : f32
    %2456 = arith.mulf %cst_446, %2051 : f32
    %2457 = arith.addf %2385, %2456 : f32
    %2458 = vector.broadcast %2457 : f32 to vector<8x32xf32>
    %2459 = arith.mulf %2458, %5 : vector<8x32xf32>
    %2460 = arith.addf %2, %2459 : vector<8x32xf32>
    %2461 = vector.broadcast %2451 : vector<8x1xf32> to vector<8x32xf32>
    %2462 = arith.mulf %2461, %11 : vector<8x32xf32>
    %2463 = arith.addf %2460, %2462 : vector<8x32xf32>
    %2464 = vector.broadcast %2455 : vector<8x1xf32> to vector<8x32xf32>
    %2465 = arith.mulf %2464, %14 : vector<8x32xf32>
    %2466 = arith.addf %2463, %2465 : vector<8x32xf32>
    %2467 = math.tanh %2466 : vector<8x32xf32>
    %2468 = arith.mulf %2467, %2467 : vector<8x32xf32>
    %2469 = arith.mulf %2467, %17 : vector<8x32xf32>
    %cst_447 = arith.constant dense<0.000000e+00> : vector<8xf32>
    %2470 = vector.multi_reduction <add>, %2469, %cst_447 [1] : vector<8x32xf32> to vector<8xf32>
    %2471 = vector.shape_cast %2470 : vector<8xf32> to vector<8x1xf32>
    %2472 = vector.broadcast %21 : f32 to vector<8x1xf32>
    %2473 = arith.addf %2471, %2472 : vector<8x1xf32>
    %2474 = arith.mulf %2467, %20 : vector<8x32xf32>
    %cst_448 = arith.constant dense<0.000000e+00> : vector<8xf32>
    %2475 = vector.multi_reduction <add>, %2474, %cst_448 [1] : vector<8x32xf32> to vector<8xf32>
    %2476 = vector.shape_cast %2475 : vector<8xf32> to vector<8x1xf32>
    %2477 = vector.broadcast %22 : f32 to vector<8x1xf32>
    %2478 = arith.addf %2476, %2477 : vector<8x1xf32>
    %2479 = arith.mulf %2468, %8 : vector<8x32xf32>
    %cst_449 = arith.constant dense<0.000000e+00> : vector<8xf32>
    %2480 = vector.multi_reduction <add>, %2479, %cst_449 [1] : vector<8x32xf32> to vector<8xf32>
    %2481 = vector.shape_cast %2480 : vector<8xf32> to vector<8x1xf32>
    %2482 = vector.broadcast %24 : f32 to vector<8x1xf32>
    %2483 = arith.addf %2482, %2481 : vector<8x1xf32>
    %2484 = vector.broadcast %2051 : f32 to vector<8x1xf32>
    %2485 = arith.mulf %2484, %2473 : vector<8x1xf32>
    %2486 = arith.addf %2361, %2485 : vector<8x1xf32>
    %2487 = vector.broadcast %2051 : f32 to vector<8x1xf32>
    %2488 = arith.mulf %2487, %2478 : vector<8x1xf32>
    %2489 = arith.addf %2372, %2488 : vector<8x1xf32>
    %2490 = arith.addf %2385, %2051 : f32
    %2491 = vector.broadcast %2490 : f32 to vector<8x32xf32>
    %2492 = arith.mulf %2491, %5 : vector<8x32xf32>
    %2493 = arith.addf %2, %2492 : vector<8x32xf32>
    %2494 = vector.broadcast %2486 : vector<8x1xf32> to vector<8x32xf32>
    %2495 = arith.mulf %2494, %11 : vector<8x32xf32>
    %2496 = arith.addf %2493, %2495 : vector<8x32xf32>
    %2497 = vector.broadcast %2489 : vector<8x1xf32> to vector<8x32xf32>
    %2498 = arith.mulf %2497, %14 : vector<8x32xf32>
    %2499 = arith.addf %2496, %2498 : vector<8x32xf32>
    %2500 = math.tanh %2499 : vector<8x32xf32>
    %2501 = arith.mulf %2500, %2500 : vector<8x32xf32>
    %2502 = arith.mulf %2500, %17 : vector<8x32xf32>
    %cst_450 = arith.constant dense<0.000000e+00> : vector<8xf32>
    %2503 = vector.multi_reduction <add>, %2502, %cst_450 [1] : vector<8x32xf32> to vector<8xf32>
    %2504 = vector.shape_cast %2503 : vector<8xf32> to vector<8x1xf32>
    %2505 = vector.broadcast %21 : f32 to vector<8x1xf32>
    %2506 = arith.addf %2504, %2505 : vector<8x1xf32>
    %2507 = arith.mulf %2500, %20 : vector<8x32xf32>
    %cst_451 = arith.constant dense<0.000000e+00> : vector<8xf32>
    %2508 = vector.multi_reduction <add>, %2507, %cst_451 [1] : vector<8x32xf32> to vector<8xf32>
    %2509 = vector.shape_cast %2508 : vector<8xf32> to vector<8x1xf32>
    %2510 = vector.broadcast %22 : f32 to vector<8x1xf32>
    %2511 = arith.addf %2509, %2510 : vector<8x1xf32>
    %2512 = arith.mulf %2501, %8 : vector<8x32xf32>
    %cst_452 = arith.constant dense<0.000000e+00> : vector<8xf32>
    %2513 = vector.multi_reduction <add>, %2512, %cst_452 [1] : vector<8x32xf32> to vector<8xf32>
    %2514 = vector.shape_cast %2513 : vector<8xf32> to vector<8x1xf32>
    %2515 = vector.broadcast %24 : f32 to vector<8x1xf32>
    %2516 = arith.addf %2515, %2514 : vector<8x1xf32>
    %cst_453 = arith.constant 6.000000e+00 : f32
    %2517 = arith.divf %2051, %cst_453 : f32
    %cst_454 = arith.constant 2.000000e+00 : f32
    %2518 = vector.broadcast %cst_454 : f32 to vector<8x1xf32>
    %2519 = arith.mulf %2518, %2437 : vector<8x1xf32>
    %2520 = arith.addf %2401, %2519 : vector<8x1xf32>
    %cst_455 = arith.constant 2.000000e+00 : f32
    %2521 = vector.broadcast %cst_455 : f32 to vector<8x1xf32>
    %2522 = arith.mulf %2521, %2473 : vector<8x1xf32>
    %2523 = arith.addf %2520, %2522 : vector<8x1xf32>
    %2524 = arith.addf %2523, %2506 : vector<8x1xf32>
    %2525 = vector.broadcast %2517 : f32 to vector<8x1xf32>
    %2526 = arith.mulf %2525, %2524 : vector<8x1xf32>
    %2527 = arith.addf %2361, %2526 : vector<8x1xf32>
    %cst_456 = arith.constant 6.000000e+00 : f32
    %2528 = arith.divf %2051, %cst_456 : f32
    %cst_457 = arith.constant 2.000000e+00 : f32
    %2529 = vector.broadcast %cst_457 : f32 to vector<8x1xf32>
    %2530 = arith.mulf %2529, %2442 : vector<8x1xf32>
    %2531 = arith.addf %2406, %2530 : vector<8x1xf32>
    %cst_458 = arith.constant 2.000000e+00 : f32
    %2532 = vector.broadcast %cst_458 : f32 to vector<8x1xf32>
    %2533 = arith.mulf %2532, %2478 : vector<8x1xf32>
    %2534 = arith.addf %2531, %2533 : vector<8x1xf32>
    %2535 = arith.addf %2534, %2511 : vector<8x1xf32>
    %2536 = vector.broadcast %2528 : f32 to vector<8x1xf32>
    %2537 = arith.mulf %2536, %2535 : vector<8x1xf32>
    %2538 = arith.addf %2372, %2537 : vector<8x1xf32>
    %cst_459 = arith.constant 6.000000e+00 : f32
    %2539 = arith.divf %2051, %cst_459 : f32
    %cst_460 = arith.constant 2.000000e+00 : f32
    %2540 = vector.broadcast %cst_460 : f32 to vector<8x1xf32>
    %2541 = arith.mulf %2540, %2447 : vector<8x1xf32>
    %2542 = arith.addf %2411, %2541 : vector<8x1xf32>
    %cst_461 = arith.constant 2.000000e+00 : f32
    %2543 = vector.broadcast %cst_461 : f32 to vector<8x1xf32>
    %2544 = arith.mulf %2543, %2483 : vector<8x1xf32>
    %2545 = arith.addf %2542, %2544 : vector<8x1xf32>
    %2546 = arith.addf %2545, %2516 : vector<8x1xf32>
    %2547 = vector.broadcast %2539 : f32 to vector<8x1xf32>
    %2548 = arith.mulf %2547, %2546 : vector<8x1xf32>
    %2549 = arith.addf %2383, %2548 : vector<8x1xf32>
    %cst_462 = arith.constant 3.000000e+00 : f32
    %2550 = arith.mulf %cst_462, %2051 : f32
    %2551 = arith.addf %2048, %2550 : f32
    %2552 = vector.broadcast %2551 : f32 to vector<8x32xf32>
    %2553 = arith.mulf %2552, %5 : vector<8x32xf32>
    %2554 = arith.addf %2, %2553 : vector<8x32xf32>
    %2555 = vector.broadcast %2527 : vector<8x1xf32> to vector<8x32xf32>
    %2556 = arith.mulf %2555, %11 : vector<8x32xf32>
    %2557 = arith.addf %2554, %2556 : vector<8x32xf32>
    %2558 = vector.broadcast %2538 : vector<8x1xf32> to vector<8x32xf32>
    %2559 = arith.mulf %2558, %14 : vector<8x32xf32>
    %2560 = arith.addf %2557, %2559 : vector<8x32xf32>
    %2561 = math.tanh %2560 : vector<8x32xf32>
    %2562 = arith.mulf %2561, %2561 : vector<8x32xf32>
    %2563 = arith.mulf %2561, %17 : vector<8x32xf32>
    %cst_463 = arith.constant dense<0.000000e+00> : vector<8xf32>
    %2564 = vector.multi_reduction <add>, %2563, %cst_463 [1] : vector<8x32xf32> to vector<8xf32>
    %2565 = vector.shape_cast %2564 : vector<8xf32> to vector<8x1xf32>
    %2566 = vector.broadcast %21 : f32 to vector<8x1xf32>
    %2567 = arith.addf %2565, %2566 : vector<8x1xf32>
    %2568 = arith.mulf %2561, %20 : vector<8x32xf32>
    %cst_464 = arith.constant dense<0.000000e+00> : vector<8xf32>
    %2569 = vector.multi_reduction <add>, %2568, %cst_464 [1] : vector<8x32xf32> to vector<8xf32>
    %2570 = vector.shape_cast %2569 : vector<8xf32> to vector<8x1xf32>
    %2571 = vector.broadcast %22 : f32 to vector<8x1xf32>
    %2572 = arith.addf %2570, %2571 : vector<8x1xf32>
    %2573 = arith.mulf %2562, %8 : vector<8x32xf32>
    %cst_465 = arith.constant dense<0.000000e+00> : vector<8xf32>
    %2574 = vector.multi_reduction <add>, %2573, %cst_465 [1] : vector<8x32xf32> to vector<8xf32>
    %2575 = vector.shape_cast %2574 : vector<8xf32> to vector<8x1xf32>
    %2576 = vector.broadcast %24 : f32 to vector<8x1xf32>
    %2577 = arith.addf %2576, %2575 : vector<8x1xf32>
    %cst_466 = arith.constant 5.000000e-01 : f32
    %2578 = arith.mulf %cst_466, %2051 : f32
    %2579 = vector.broadcast %2578 : f32 to vector<8x1xf32>
    %2580 = arith.mulf %2579, %2567 : vector<8x1xf32>
    %2581 = arith.addf %2527, %2580 : vector<8x1xf32>
    %cst_467 = arith.constant 5.000000e-01 : f32
    %2582 = arith.mulf %cst_467, %2051 : f32
    %2583 = vector.broadcast %2582 : f32 to vector<8x1xf32>
    %2584 = arith.mulf %2583, %2572 : vector<8x1xf32>
    %2585 = arith.addf %2538, %2584 : vector<8x1xf32>
    %cst_468 = arith.constant 5.000000e-01 : f32
    %2586 = arith.mulf %cst_468, %2051 : f32
    %2587 = arith.addf %2551, %2586 : f32
    %2588 = vector.broadcast %2587 : f32 to vector<8x32xf32>
    %2589 = arith.mulf %2588, %5 : vector<8x32xf32>
    %2590 = arith.addf %2, %2589 : vector<8x32xf32>
    %2591 = vector.broadcast %2581 : vector<8x1xf32> to vector<8x32xf32>
    %2592 = arith.mulf %2591, %11 : vector<8x32xf32>
    %2593 = arith.addf %2590, %2592 : vector<8x32xf32>
    %2594 = vector.broadcast %2585 : vector<8x1xf32> to vector<8x32xf32>
    %2595 = arith.mulf %2594, %14 : vector<8x32xf32>
    %2596 = arith.addf %2593, %2595 : vector<8x32xf32>
    %2597 = math.tanh %2596 : vector<8x32xf32>
    %2598 = arith.mulf %2597, %2597 : vector<8x32xf32>
    %2599 = arith.mulf %2597, %17 : vector<8x32xf32>
    %cst_469 = arith.constant dense<0.000000e+00> : vector<8xf32>
    %2600 = vector.multi_reduction <add>, %2599, %cst_469 [1] : vector<8x32xf32> to vector<8xf32>
    %2601 = vector.shape_cast %2600 : vector<8xf32> to vector<8x1xf32>
    %2602 = vector.broadcast %21 : f32 to vector<8x1xf32>
    %2603 = arith.addf %2601, %2602 : vector<8x1xf32>
    %2604 = arith.mulf %2597, %20 : vector<8x32xf32>
    %cst_470 = arith.constant dense<0.000000e+00> : vector<8xf32>
    %2605 = vector.multi_reduction <add>, %2604, %cst_470 [1] : vector<8x32xf32> to vector<8xf32>
    %2606 = vector.shape_cast %2605 : vector<8xf32> to vector<8x1xf32>
    %2607 = vector.broadcast %22 : f32 to vector<8x1xf32>
    %2608 = arith.addf %2606, %2607 : vector<8x1xf32>
    %2609 = arith.mulf %2598, %8 : vector<8x32xf32>
    %cst_471 = arith.constant dense<0.000000e+00> : vector<8xf32>
    %2610 = vector.multi_reduction <add>, %2609, %cst_471 [1] : vector<8x32xf32> to vector<8xf32>
    %2611 = vector.shape_cast %2610 : vector<8xf32> to vector<8x1xf32>
    %2612 = vector.broadcast %24 : f32 to vector<8x1xf32>
    %2613 = arith.addf %2612, %2611 : vector<8x1xf32>
    %cst_472 = arith.constant 5.000000e-01 : f32
    %2614 = arith.mulf %cst_472, %2051 : f32
    %2615 = vector.broadcast %2614 : f32 to vector<8x1xf32>
    %2616 = arith.mulf %2615, %2603 : vector<8x1xf32>
    %2617 = arith.addf %2527, %2616 : vector<8x1xf32>
    %cst_473 = arith.constant 5.000000e-01 : f32
    %2618 = arith.mulf %cst_473, %2051 : f32
    %2619 = vector.broadcast %2618 : f32 to vector<8x1xf32>
    %2620 = arith.mulf %2619, %2608 : vector<8x1xf32>
    %2621 = arith.addf %2538, %2620 : vector<8x1xf32>
    %cst_474 = arith.constant 5.000000e-01 : f32
    %2622 = arith.mulf %cst_474, %2051 : f32
    %2623 = arith.addf %2551, %2622 : f32
    %2624 = vector.broadcast %2623 : f32 to vector<8x32xf32>
    %2625 = arith.mulf %2624, %5 : vector<8x32xf32>
    %2626 = arith.addf %2, %2625 : vector<8x32xf32>
    %2627 = vector.broadcast %2617 : vector<8x1xf32> to vector<8x32xf32>
    %2628 = arith.mulf %2627, %11 : vector<8x32xf32>
    %2629 = arith.addf %2626, %2628 : vector<8x32xf32>
    %2630 = vector.broadcast %2621 : vector<8x1xf32> to vector<8x32xf32>
    %2631 = arith.mulf %2630, %14 : vector<8x32xf32>
    %2632 = arith.addf %2629, %2631 : vector<8x32xf32>
    %2633 = math.tanh %2632 : vector<8x32xf32>
    %2634 = arith.mulf %2633, %2633 : vector<8x32xf32>
    %2635 = arith.mulf %2633, %17 : vector<8x32xf32>
    %cst_475 = arith.constant dense<0.000000e+00> : vector<8xf32>
    %2636 = vector.multi_reduction <add>, %2635, %cst_475 [1] : vector<8x32xf32> to vector<8xf32>
    %2637 = vector.shape_cast %2636 : vector<8xf32> to vector<8x1xf32>
    %2638 = vector.broadcast %21 : f32 to vector<8x1xf32>
    %2639 = arith.addf %2637, %2638 : vector<8x1xf32>
    %2640 = arith.mulf %2633, %20 : vector<8x32xf32>
    %cst_476 = arith.constant dense<0.000000e+00> : vector<8xf32>
    %2641 = vector.multi_reduction <add>, %2640, %cst_476 [1] : vector<8x32xf32> to vector<8xf32>
    %2642 = vector.shape_cast %2641 : vector<8xf32> to vector<8x1xf32>
    %2643 = vector.broadcast %22 : f32 to vector<8x1xf32>
    %2644 = arith.addf %2642, %2643 : vector<8x1xf32>
    %2645 = arith.mulf %2634, %8 : vector<8x32xf32>
    %cst_477 = arith.constant dense<0.000000e+00> : vector<8xf32>
    %2646 = vector.multi_reduction <add>, %2645, %cst_477 [1] : vector<8x32xf32> to vector<8xf32>
    %2647 = vector.shape_cast %2646 : vector<8xf32> to vector<8x1xf32>
    %2648 = vector.broadcast %24 : f32 to vector<8x1xf32>
    %2649 = arith.addf %2648, %2647 : vector<8x1xf32>
    %2650 = vector.broadcast %2051 : f32 to vector<8x1xf32>
    %2651 = arith.mulf %2650, %2639 : vector<8x1xf32>
    %2652 = arith.addf %2527, %2651 : vector<8x1xf32>
    %2653 = vector.broadcast %2051 : f32 to vector<8x1xf32>
    %2654 = arith.mulf %2653, %2644 : vector<8x1xf32>
    %2655 = arith.addf %2538, %2654 : vector<8x1xf32>
    %2656 = arith.addf %2551, %2051 : f32
    %2657 = vector.broadcast %2656 : f32 to vector<8x32xf32>
    %2658 = arith.mulf %2657, %5 : vector<8x32xf32>
    %2659 = arith.addf %2, %2658 : vector<8x32xf32>
    %2660 = vector.broadcast %2652 : vector<8x1xf32> to vector<8x32xf32>
    %2661 = arith.mulf %2660, %11 : vector<8x32xf32>
    %2662 = arith.addf %2659, %2661 : vector<8x32xf32>
    %2663 = vector.broadcast %2655 : vector<8x1xf32> to vector<8x32xf32>
    %2664 = arith.mulf %2663, %14 : vector<8x32xf32>
    %2665 = arith.addf %2662, %2664 : vector<8x32xf32>
    %2666 = math.tanh %2665 : vector<8x32xf32>
    %2667 = arith.mulf %2666, %2666 : vector<8x32xf32>
    %2668 = arith.mulf %2666, %17 : vector<8x32xf32>
    %cst_478 = arith.constant dense<0.000000e+00> : vector<8xf32>
    %2669 = vector.multi_reduction <add>, %2668, %cst_478 [1] : vector<8x32xf32> to vector<8xf32>
    %2670 = vector.shape_cast %2669 : vector<8xf32> to vector<8x1xf32>
    %2671 = vector.broadcast %21 : f32 to vector<8x1xf32>
    %2672 = arith.addf %2670, %2671 : vector<8x1xf32>
    %2673 = arith.mulf %2666, %20 : vector<8x32xf32>
    %cst_479 = arith.constant dense<0.000000e+00> : vector<8xf32>
    %2674 = vector.multi_reduction <add>, %2673, %cst_479 [1] : vector<8x32xf32> to vector<8xf32>
    %2675 = vector.shape_cast %2674 : vector<8xf32> to vector<8x1xf32>
    %2676 = vector.broadcast %22 : f32 to vector<8x1xf32>
    %2677 = arith.addf %2675, %2676 : vector<8x1xf32>
    %2678 = arith.mulf %2667, %8 : vector<8x32xf32>
    %cst_480 = arith.constant dense<0.000000e+00> : vector<8xf32>
    %2679 = vector.multi_reduction <add>, %2678, %cst_480 [1] : vector<8x32xf32> to vector<8xf32>
    %2680 = vector.shape_cast %2679 : vector<8xf32> to vector<8x1xf32>
    %2681 = vector.broadcast %24 : f32 to vector<8x1xf32>
    %2682 = arith.addf %2681, %2680 : vector<8x1xf32>
    %cst_481 = arith.constant 6.000000e+00 : f32
    %2683 = arith.divf %2051, %cst_481 : f32
    %cst_482 = arith.constant 2.000000e+00 : f32
    %2684 = vector.broadcast %cst_482 : f32 to vector<8x1xf32>
    %2685 = arith.mulf %2684, %2603 : vector<8x1xf32>
    %2686 = arith.addf %2567, %2685 : vector<8x1xf32>
    %cst_483 = arith.constant 2.000000e+00 : f32
    %2687 = vector.broadcast %cst_483 : f32 to vector<8x1xf32>
    %2688 = arith.mulf %2687, %2639 : vector<8x1xf32>
    %2689 = arith.addf %2686, %2688 : vector<8x1xf32>
    %2690 = arith.addf %2689, %2672 : vector<8x1xf32>
    %2691 = vector.broadcast %2683 : f32 to vector<8x1xf32>
    %2692 = arith.mulf %2691, %2690 : vector<8x1xf32>
    %2693 = arith.addf %2527, %2692 : vector<8x1xf32>
    %cst_484 = arith.constant 6.000000e+00 : f32
    %2694 = arith.divf %2051, %cst_484 : f32
    %cst_485 = arith.constant 2.000000e+00 : f32
    %2695 = vector.broadcast %cst_485 : f32 to vector<8x1xf32>
    %2696 = arith.mulf %2695, %2608 : vector<8x1xf32>
    %2697 = arith.addf %2572, %2696 : vector<8x1xf32>
    %cst_486 = arith.constant 2.000000e+00 : f32
    %2698 = vector.broadcast %cst_486 : f32 to vector<8x1xf32>
    %2699 = arith.mulf %2698, %2644 : vector<8x1xf32>
    %2700 = arith.addf %2697, %2699 : vector<8x1xf32>
    %2701 = arith.addf %2700, %2677 : vector<8x1xf32>
    %2702 = vector.broadcast %2694 : f32 to vector<8x1xf32>
    %2703 = arith.mulf %2702, %2701 : vector<8x1xf32>
    %2704 = arith.addf %2538, %2703 : vector<8x1xf32>
    %cst_487 = arith.constant 6.000000e+00 : f32
    %2705 = arith.divf %2051, %cst_487 : f32
    %cst_488 = arith.constant 2.000000e+00 : f32
    %2706 = vector.broadcast %cst_488 : f32 to vector<8x1xf32>
    %2707 = arith.mulf %2706, %2613 : vector<8x1xf32>
    %2708 = arith.addf %2577, %2707 : vector<8x1xf32>
    %cst_489 = arith.constant 2.000000e+00 : f32
    %2709 = vector.broadcast %cst_489 : f32 to vector<8x1xf32>
    %2710 = arith.mulf %2709, %2649 : vector<8x1xf32>
    %2711 = arith.addf %2708, %2710 : vector<8x1xf32>
    %2712 = arith.addf %2711, %2682 : vector<8x1xf32>
    %2713 = vector.broadcast %2705 : f32 to vector<8x1xf32>
    %2714 = arith.mulf %2713, %2712 : vector<8x1xf32>
    %2715 = arith.addf %2549, %2714 : vector<8x1xf32>
    %2716 = tpu.concatenate %2693, %2704, %2715 in 1 : vector<8x1xf32>, vector<8x1xf32>, vector<8x1xf32> -> vector<8x3xf32>
    %c4_490 = arith.constant 4 : index
    %c0_491 = arith.constant 0 : index
    %c0_492 = arith.constant 0 : index
    %2717 = vector.load %arg10[%c4_490, %c0_491, %c0_492] : memref<5x8x3xf32, #tpu.memory_space<vmem>>, vector<1x8x3xf32>
    %2718 = vector.shape_cast %2717 : vector<1x8x3xf32> to vector<8x3xf32>
    %2719 = vector.shape_cast %2716 : vector<8x3xf32> to vector<1x8x3xf32>
    tpu.vector_store %arg10[%c4_490, %c0_491, %c0_492], %2719 {strides = array<i32>} : memref<5x8x3xf32, #tpu.memory_space<vmem>>, vector<1x8x3xf32>,
    return
  }
}

</mosaic_0001>

<llo_original>
// kernel: tpu_custom_call.1
$region0: #{tpu_custom_call.1}
  #allocation0 [shape = 'u32[]', space=smem, size = 0x4, offset = 0x4, fixed_abs, tag = 'smem constant byte address 0x4 - core index']
  #allocation1 [shape = 'u32[144,128]{1,0:T(1,128)}', space=vmem, size = 0x12000, scoped, tag = 'internal scratch']
  #allocation2 [shape = 'f32[1]{0:T(128)S(6)}', space=smem, size = 0x200, scoped, tag = 'scoped memory for tpu_custom_call.1']
  %s0 = inlined_call_operand.vmem [shape: f32[5], index: 0, kind: input, shape index: {}]
  %s1 = inlined_call_operand.vmem [shape: f32[2], index: 1, kind: input, shape index: {}]
  %s2 = inlined_call_operand.<no memory space> [shape: f32[1], index: 2, kind: input, shape index: {}]
  %s3 = inlined_call_operand.vmem [shape: f32[8,2], index: 3, kind: input, shape index: {}]
  %s4 = inlined_call_operand.vmem [shape: f32[8,1], index: 4, kind: input, shape index: {}]
  %s5 = inlined_call_operand.vmem [shape: f32[2,32], index: 5, kind: input, shape index: {}]
  %s6 = inlined_call_operand.vmem [shape: f32[1,32], index: 6, kind: input, shape index: {}]
  %s7 = inlined_call_operand.vmem [shape: f32[1,32], index: 7, kind: input, shape index: {}]
  %s8 = inlined_call_operand.vmem [shape: f32[2,32], index: 8, kind: input, shape index: {}]
  %s9 = inlined_call_operand.vmem [shape: f32[1,32], index: 9, kind: input, shape index: {}]
  %s10 = inlined_call_operand.vmem [shape: f32[5,8,3], index: 10, kind: output, shape index: {}]
  %s11 = sld [smem:[#allocation0]]
  $region58: #{tpu_custom_call.1} parent=0
    _
  %s13 = ssub.s32 1, %s11
  %s14 = scalar_select 0, %s13, %s11
  %15 = sst [smem:[#allocation2]] %s2
  $region1: #{tpu_custom_call.1} parent=0
    #allocation3 [shape = 'u8[512]{0}', space=smem, size = 0x200, scoped, tag = 'input window, operand 0, single buffered']
    #allocation4 [shape = 's32[1]{0}', space=sflag, size = 0x4, scoped, tag = 'scoped memory for tpu_custom_call.1']
    #allocation5 [shape = 'u8[512]{0}', space=smem, size = 0x200, scoped, tag = 'input window, operand 1, single buffered']
    #allocation6 [shape = 's32[1]{0}', space=sflag, size = 0x4, scoped, tag = 'scoped memory for tpu_custom_call.1']
    %16 = vsyncpa [#allocation4], 0
    %17 = vsyncpa [#allocation6], 0
    // Predicated region
    $region2: #{tpu_custom_call.1} parent=1 // pred_check
      _
    $region3: #{tpu_custom_call.1} parent=1 // pred_check_branch
      %19 = sbr.rel (0) target = $region5
    $region4: #{tpu_custom_call.1} parent=1 // pred_region
      %s21 = ssub.s32 16, 16
      %22 = vsyncadd [#allocation4], %s21
      %s24 = sshll.u32 %s0, 4
      %s25 = int_to_ptr.vmem [resolvable:$true] %s24
      %27 = dma.vmem_to_smem %s25, 16, [#allocation3], [#allocation4]
    $region5: #{tpu_custom_call.1} parent=1 // pred_fallthru
      _
    // Predicated region
    $region6: #{tpu_custom_call.1} parent=1 // pred_check
      _
    $region7: #{tpu_custom_call.1} parent=1 // pred_check_branch
      %29 = sbr.rel (0) target = $region9
    $region8: #{tpu_custom_call.1} parent=1 // pred_region
      %s31 = ssub.s32 16, 16
      %32 = vsyncadd [#allocation6], %s31
      %s34 = sshll.u32 %s1, 4
      %s35 = int_to_ptr.vmem [resolvable:$true] %s34
      %37 = dma.vmem_to_smem %s35, 16, [#allocation5], [#allocation6]
    $region9: #{tpu_custom_call.1} parent=1 // pred_fallthru
      _
    // Predicated region
    $region10: #{tpu_custom_call.1} parent=1 // pred_check
      _
    $region11: #{tpu_custom_call.1} parent=1 // pred_check_branch
      %39 = sbr.rel (0) target = $region13
    $region12: #{tpu_custom_call.1} parent=1 // pred_region
      _
    $region13: #{tpu_custom_call.1} parent=1 // pred_fallthru
      _
    // Predicated region
    $region14: #{tpu_custom_call.1} parent=1 // pred_check
      _
    $region15: #{tpu_custom_call.1} parent=1 // pred_check_branch
      %41 = sbr.rel (0) target = $region17
    $region16: #{tpu_custom_call.1} parent=1 // pred_region
      _
    $region17: #{tpu_custom_call.1} parent=1 // pred_fallthru
      _
    // Predicated region
    $region18: #{tpu_custom_call.1} parent=1 // pred_check
      _
    $region19: #{tpu_custom_call.1} parent=1 // pred_check_branch
      %43 = sbr.rel (0) target = $region21
    $region20: #{tpu_custom_call.1} parent=1 // pred_region
      _
    $region21: #{tpu_custom_call.1} parent=1 // pred_fallthru
      _
    // Predicated region
    $region22: #{tpu_custom_call.1} parent=1 // pred_check
      _
    $region23: #{tpu_custom_call.1} parent=1 // pred_check_branch
      %45 = sbr.rel (0) target = $region25
    $region24: #{tpu_custom_call.1} parent=1 // pred_region
      _
    $region25: #{tpu_custom_call.1} parent=1 // pred_fallthru
      _
    // Predicated region
    $region26: #{tpu_custom_call.1} parent=1 // pred_check
      _
    $region27: #{tpu_custom_call.1} parent=1 // pred_check_branch
      %47 = sbr.rel (0) target = $region29
    $region28: #{tpu_custom_call.1} parent=1 // pred_region
      _
    $region29: #{tpu_custom_call.1} parent=1 // pred_fallthru
      _
    // Predicated region
    $region30: #{tpu_custom_call.1} parent=1 // pred_check
      _
    $region31: #{tpu_custom_call.1} parent=1 // pred_check_branch
      %49 = sbr.rel (0) target = $region33
    $region32: #{tpu_custom_call.1} parent=1 // pred_region
      _
    $region33: #{tpu_custom_call.1} parent=1 // pred_fallthru
      _
    // Predicated region
    $region34: #{tpu_custom_call.1} parent=1 // pred_check
      _
    $region35: #{tpu_custom_call.1} parent=1 // pred_check_branch
      %51 = sbr.rel (0) target = $region37
    $region36: #{tpu_custom_call.1} parent=1 // pred_region
      _
    $region37: #{tpu_custom_call.1} parent=1 // pred_fallthru
      _
    // Predicated region
    $region38: #{tpu_custom_call.1} parent=1 // pred_check
      _
    $region39: #{tpu_custom_call.1} parent=1 // pred_check_branch
      %53 = sbr.rel (0) target = $region41
    $region40: #{tpu_custom_call.1} parent=1 // pred_region
      _
    $region41: #{tpu_custom_call.1} parent=1 // pred_fallthru
      _
    // Predicated region
    $region42: #{tpu_custom_call.1} parent=1 // pred_check
      _
    $region43: #{tpu_custom_call.1} parent=1 // pred_check_branch
      %55 = sbr.rel (0) target = $region45
    $region44: #{tpu_custom_call.1} parent=1 // pred_region
      %56 = dma.done [#allocation4], 16
    $region45: #{tpu_custom_call.1} parent=1 // pred_fallthru
      _
    // Predicated region
    $region46: #{tpu_custom_call.1} parent=1 // pred_check
      _
    $region47: #{tpu_custom_call.1} parent=1 // pred_check_branch
      %58 = sbr.rel (0) target = $region49
    $region48: #{tpu_custom_call.1} parent=1 // pred_region
      %59 = dma.done [#allocation6], 16
    $region49: #{tpu_custom_call.1} parent=1 // pred_fallthru
      _
    %60 = sfence
    %v61 = vld [vmem:[%s6] sm:$0x1]
    %v63 = vlaneseq
    %v64 = vshrl.u32 %v63, 7
    %v65 = vsub.s32 0, %v64
    %v66 = vrot.slane %v61, %v65
    %v68 = vld [vmem:[%s7] sm:$0x1]
    %v70 = vlaneseq
    %v71 = vshrl.u32 %v70, 7
    %v72 = vsub.s32 0, %v71
    %v73 = vrot.slane %v68, %v72
    %v75 = vld [vmem:[%s9] sm:$0x1]
    %v77 = vlaneseq
    %v78 = vshrl.u32 %v77, 7
    %v79 = vsub.s32 0, %v78
    %v80 = vrot.slane %v75, %v79
    %v82 = vld [vmem:[%s5] sm:$0x1]
    %v83 = vlaneseq
    %v84 = vshrl.u32 %v83, 7
    %v85 = vsub.s32 0, %v84
    %v86 = vrot.slane %v82, %v85
    %v87 = vld [vmem:[%s5 + $0x1] sm:$0x1]
    %v88 = vlaneseq
    %v89 = vshrl.u32 %v88, 7
    %v90 = vsub.s32 0, %v89
    %v91 = vrot.slane %v87, %v90
    %v92 = vld [vmem:[%s8] sm:$0x1]
    %v93 = vlaneseq
    %v94 = vshrl.u32 %v93, 7
    %v95 = vsub.s32 0, %v94
    %v96 = vrot.slane %v92, %v95
    %v97 = vld [vmem:[%s8 + $0x1] sm:$0x1]
    %v98 = vlaneseq
    %v99 = vshrl.u32 %v98, 7
    %v100 = vsub.s32 0, %v99
    %v101 = vrot.slane %v97, %v100
    %s102 = sld [smem:[#allocation5]]
    %s103 = sld [smem:[#allocation5 + $0x1]]
    %s104 = sld [smem:[#allocation2]]
    %s105 = ssub.f32 0.0, %s104
    %v106 = vld [vmem:[%s3] sm:$0xff]
    %v107 = vld [vmem:[%s4] sm:$0xff]
    %109 = vrot.lane.b32.xlu0 %v107, 2
    %v110 = vpop.permute.xlu0 %109
    %vm112 = vcmask 7168
    %vm113 = vcmask 15360
    %v114 = vsel %vm113, %v106, %v110
    %vm115 = vcmask 23552
    %116 = vst.msk [vmem:[%s10] sm:$0xff] %vm115, %v114
    %s117 = sld [smem:[#allocation3]]
    %s118 = sld [smem:[#allocation3 + $0x1]]
    %s119 = ssub.f32 %s118, %s117
    %v120 = vrcp.pop 4.0
    %s121 = vtos %v120
    %s122 = smul.f32 %s119, %s121
    %s123 = smul.f32 %s122, 0.0
    %s124 = sadd.f32 %s117, %s123
    %v125 = vstv %s124
    %v126 = vmul.f32 %v125, %v73
    %v127 = vadd.f32 %v66, %v126
    %129 = vset.pattern.permute.xlu0 0
    %130 = vperm.xlu0 %129, %v106
    %v131 = vpop.permute.xlu0 %130
    %v133 = vmul.f32 %v131, %v86
    %v134 = vadd.f32 %v127, %v133
    %135 = vset.pattern.permute.xlu0 1
    %136 = vperm.xlu0 %135, %v106
    %v137 = vpop.permute.xlu0 %136
    %v139 = vmul.f32 %v137, %v91
    %v140 = vadd.f32 %v134, %v139
    %v141 = vtanh.pop %v140
    %v142 = vmul.f32 %v141, %v141
    %v143 = vmul.f32 %v141, %v96
    %vm144 = vcmask 261120
    %v145 = vsel %vm144, %v143, 0.0
    %146 = vadd.xlane.f32.xlu0 %v145
    %v147 = vpop.xlane.xlu0 %146
    %v148 = vstv %s102
    %v149 = vadd.f32 %v147, %v148
    %v150 = vmul.f32 %v141, %v101
    %v151 = vsel %vm144, %v150, 0.0
    %152 = vadd.xlane.f32.xlu0 %v151
    %v153 = vpop.xlane.xlu0 %152
    %v154 = vstv %s103
    %v155 = vadd.f32 %v153, %v154
    %v156 = vmul.f32 %v142, %v80
    %v157 = vsel %vm144, %v156, 0.0
    %158 = vadd.xlane.f32.xlu0 %v157
    %v159 = vpop.xlane.xlu0 %158
    %v160 = vstv %s105
    %v161 = vadd.f32 %v160, %v159
    %s162 = smul.f32 %s122, 0.5
    %v163 = vstv %s162
    %v164 = vmul.f32 %v163, %v149
    %v165 = vadd.f32 %v106, %v164
    %v166 = vmul.f32 %v163, %v155
    %v167 = vadd.f32 %v106, %v166
    %s168 = sadd.f32 %s124, %s162
    %v169 = vstv %s168
    %v170 = vmul.f32 %v169, %v73
    %v171 = vadd.f32 %v66, %v170
    %173 = vset.pattern.permute.xlu0 0
    %174 = vperm.xlu0 %173, %v165
    %v175 = vpop.permute.xlu0 %174
    %v177 = vmul.f32 %v175, %v86
    %v178 = vadd.f32 %v171, %v177
    %180 = vset.pattern.permute.xlu0 1
    %181 = vperm.xlu0 %180, %v167
    %v182 = vpop.permute.xlu0 %181
    %v184 = vmul.f32 %v182, %v91
    %v185 = vadd.f32 %v178, %v184
    %v186 = vtanh.pop %v185
    %v187 = vmul.f32 %v186, %v186
    %v188 = vmul.f32 %v186, %v96
    %v189 = vsel %vm144, %v188, 0.0
    %190 = vadd.xlane.f32.xlu0 %v189
    %v191 = vpop.xlane.xlu0 %190
    %v192 = vadd.f32 %v191, %v148
    %v193 = vmul.f32 %v186, %v101
    %v194 = vsel %vm144, %v193, 0.0
    %195 = vadd.xlane.f32.xlu0 %v194
    %v196 = vpop.xlane.xlu0 %195
    %v197 = vadd.f32 %v196, %v154
    %v198 = vmul.f32 %v187, %v80
    %v199 = vsel %vm144, %v198, 0.0
    %200 = vadd.xlane.f32.xlu0 %v199
    %v201 = vpop.xlane.xlu0 %200
    %v202 = vadd.f32 %v160, %v201
    %v203 = vmul.f32 %v163, %v192
    %v204 = vadd.f32 %v106, %v203
    %v205 = vmul.f32 %v163, %v197
    %v206 = vadd.f32 %v106, %v205
    %208 = vset.pattern.permute.xlu0 0
    %209 = vperm.xlu0 %208, %v204
    %v210 = vpop.permute.xlu0 %209
    %v212 = vmul.f32 %v210, %v86
    %v213 = vadd.f32 %v171, %v212
    %215 = vset.pattern.permute.xlu0 1
    %216 = vperm.xlu0 %215, %v206
    %v217 = vpop.permute.xlu0 %216
    %v219 = vmul.f32 %v217, %v91
    %v220 = vadd.f32 %v213, %v219
    %v221 = vtanh.pop %v220
    %v222 = vmul.f32 %v221, %v221
    %v223 = vmul.f32 %v221, %v96
    %v224 = vsel %vm144, %v223, 0.0
    %225 = vadd.xlane.f32.xlu0 %v224
    %v226 = vpop.xlane.xlu0 %225
    %v227 = vadd.f32 %v226, %v148
    %v228 = vmul.f32 %v221, %v101
    %v229 = vsel %vm144, %v228, 0.0
    %230 = vadd.xlane.f32.xlu0 %v229
    %v231 = vpop.xlane.xlu0 %230
    %v232 = vadd.f32 %v231, %v154
    %v233 = vmul.f32 %v222, %v80
    %v234 = vsel %vm144, %v233, 0.0
    %235 = vadd.xlane.f32.xlu0 %v234
    %v236 = vpop.xlane.xlu0 %235
    %v237 = vadd.f32 %v160, %v236
    %v238 = vstv %s122
    %v239 = vmul.f32 %v238, %v227
    %v240 = vadd.f32 %v106, %v239
    %v241 = vmul.f32 %v238, %v232
    %v242 = vadd.f32 %v106, %v241
    %s243 = sadd.f32 %s124, %s122
    %v244 = vstv %s243
    %v245 = vmul.f32 %v244, %v73
    %v246 = vadd.f32 %v66, %v245
    %248 = vset.pattern.permute.xlu0 0
    %249 = vperm.xlu0 %248, %v240
    %v250 = vpop.permute.xlu0 %249
    %v252 = vmul.f32 %v250, %v86
    %v253 = vadd.f32 %v246, %v252
    %255 = vset.pattern.permute.xlu0 1
    %256 = vperm.xlu0 %255, %v242
    %v257 = vpop.permute.xlu0 %256
    %v259 = vmul.f32 %v257, %v91
    %v260 = vadd.f32 %v253, %v259
    %v261 = vtanh.pop %v260
    %v262 = vmul.f32 %v261, %v261
    %v263 = vmul.f32 %v261, %v96
    %v264 = vsel %vm144, %v263, 0.0
    %265 = vadd.xlane.f32.xlu0 %v264
    %v266 = vpop.xlane.xlu0 %265
    %v267 = vadd.f32 %v266, %v148
    %v268 = vmul.f32 %v261, %v101
    %v269 = vsel %vm144, %v268, 0.0
    %270 = vadd.xlane.f32.xlu0 %v269
    %v271 = vpop.xlane.xlu0 %270
    %v272 = vadd.f32 %v271, %v154
    %v273 = vmul.f32 %v262, %v80
    %v274 = vsel %vm144, %v273, 0.0
    %275 = vadd.xlane.f32.xlu0 %v274
    %v276 = vpop.xlane.xlu0 %275
    %v277 = vadd.f32 %v160, %v276
    %v278 = vrcp.pop 6.0
    %s279 = vtos %v278
    %s280 = smul.f32 %s122, %s279
    %v281 = vmul.f32 %v192, 2.0
    %v282 = vadd.f32 %v149, %v281
    %v283 = vmul.f32 %v227, 2.0
    %v284 = vadd.f32 %v282, %v283
    %v285 = vadd.f32 %v284, %v267
    %v286 = vstv %s280
    %v287 = vmul.f32 %v286, %v285
    %v288 = vadd.f32 %v106, %v287
    %v289 = vmul.f32 %v197, 2.0
    %v290 = vadd.f32 %v155, %v289
    %v291 = vmul.f32 %v232, 2.0
    %v292 = vadd.f32 %v290, %v291
    %v293 = vadd.f32 %v292, %v272
    %v294 = vmul.f32 %v286, %v293
    %v295 = vadd.f32 %v106, %v294
    %v296 = vmul.f32 %v202, 2.0
    %v297 = vadd.f32 %v161, %v296
    %v298 = vmul.f32 %v237, 2.0
    %v299 = vadd.f32 %v297, %v298
    %v300 = vadd.f32 %v299, %v277
    %v301 = vmul.f32 %v286, %v300
    %v302 = vadd.f32 %v107, %v301
    %s303 = sadd.f32 %s117, %s122
    %v304 = vstv %s303
    %v305 = vmul.f32 %v304, %v73
    %v306 = vadd.f32 %v66, %v305
    %308 = vset.pattern.permute.xlu0 0
    %309 = vperm.xlu0 %308, %v288
    %v310 = vpop.permute.xlu0 %309
    %v312 = vmul.f32 %v310, %v86
    %v313 = vadd.f32 %v306, %v312
    %315 = vset.pattern.permute.xlu0 1
    %316 = vperm.xlu0 %315, %v295
    %v317 = vpop.permute.xlu0 %316
    %v319 = vmul.f32 %v317, %v91
    %v320 = vadd.f32 %v313, %v319
    %v321 = vtanh.pop %v320
    %v322 = vmul.f32 %v321, %v321
    %v323 = vmul.f32 %v321, %v96
    %v324 = vsel %vm144, %v323, 0.0
    %325 = vadd.xlane.f32.xlu0 %v324
    %v326 = vpop.xlane.xlu0 %325
    %v327 = vadd.f32 %v326, %v148
    %v328 = vmul.f32 %v321, %v101
    %v329 = vsel %vm144, %v328, 0.0
    %330 = vadd.xlane.f32.xlu0 %v329
    %v331 = vpop.xlane.xlu0 %330
    %v332 = vadd.f32 %v331, %v154
    %v333 = vmul.f32 %v322, %v80
    %v334 = vsel %vm144, %v333, 0.0
    %335 = vadd.xlane.f32.xlu0 %v334
    %v336 = vpop.xlane.xlu0 %335
    %v337 = vadd.f32 %v160, %v336
    %v338 = vmul.f32 %v163, %v327
    %v339 = vadd.f32 %v288, %v338
    %v340 = vmul.f32 %v163, %v332
    %v341 = vadd.f32 %v295, %v340
    %s342 = sadd.f32 %s303, %s162
    %v343 = vstv %s342
    %v344 = vmul.f32 %v343, %v73
    %v345 = vadd.f32 %v66, %v344
    %347 = vset.pattern.permute.xlu0 0
    %348 = vperm.xlu0 %347, %v339
    %v349 = vpop.permute.xlu0 %348
    %v351 = vmul.f32 %v349, %v86
    %v352 = vadd.f32 %v345, %v351
    %354 = vset.pattern.permute.xlu0 1
    %355 = vperm.xlu0 %354, %v341
    %v356 = vpop.permute.xlu0 %355
    %v358 = vmul.f32 %v356, %v91
    %v359 = vadd.f32 %v352, %v358
    %v360 = vtanh.pop %v359
    %v361 = vmul.f32 %v360, %v360
    %v362 = vmul.f32 %v360, %v96
    %v363 = vsel %vm144, %v362, 0.0
    %364 = vadd.xlane.f32.xlu0 %v363
    %v365 = vpop.xlane.xlu0 %364
    %v366 = vadd.f32 %v365, %v148
    %v367 = vmul.f32 %v360, %v101
    %v368 = vsel %vm144, %v367, 0.0
    %369 = vadd.xlane.f32.xlu0 %v368
    %v370 = vpop.xlane.xlu0 %369
    %v371 = vadd.f32 %v370, %v154
    %v372 = vmul.f32 %v361, %v80
    %v373 = vsel %vm144, %v372, 0.0
    %374 = vadd.xlane.f32.xlu0 %v373
    %v375 = vpop.xlane.xlu0 %374
    %v376 = vadd.f32 %v160, %v375
    %v377 = vmul.f32 %v163, %v366
    %v378 = vadd.f32 %v288, %v377
    %v379 = vmul.f32 %v163, %v371
    %v380 = vadd.f32 %v295, %v379
    %382 = vset.pattern.permute.xlu0 0
    %383 = vperm.xlu0 %382, %v378
    %v384 = vpop.permute.xlu0 %383
    %v386 = vmul.f32 %v384, %v86
    %v387 = vadd.f32 %v345, %v386
    %389 = vset.pattern.permute.xlu0 1
    %390 = vperm.xlu0 %389, %v380
    %v391 = vpop.permute.xlu0 %390
    %v393 = vmul.f32 %v391, %v91
    %v394 = vadd.f32 %v387, %v393
    %v395 = vtanh.pop %v394
    %v396 = vmul.f32 %v395, %v395
    %v397 = vmul.f32 %v395, %v96
    %v398 = vsel %vm144, %v397, 0.0
    %399 = vadd.xlane.f32.xlu0 %v398
    %v400 = vpop.xlane.xlu0 %399
    %v401 = vadd.f32 %v400, %v148
    %v402 = vmul.f32 %v395, %v101
    %v403 = vsel %vm144, %v402, 0.0
    %404 = vadd.xlane.f32.xlu0 %v403
    %v405 = vpop.xlane.xlu0 %404
    %v406 = vadd.f32 %v405, %v154
    %v407 = vmul.f32 %v396, %v80
    %v408 = vsel %vm144, %v407, 0.0
    %409 = vadd.xlane.f32.xlu0 %v408
    %v410 = vpop.xlane.xlu0 %409
    %v411 = vadd.f32 %v160, %v410
    %v412 = vmul.f32 %v238, %v401
    %v413 = vadd.f32 %v288, %v412
    %v414 = vmul.f32 %v238, %v406
    %v415 = vadd.f32 %v295, %v414
    %s416 = sadd.f32 %s303, %s122
    %v417 = vstv %s416
    %v418 = vmul.f32 %v417, %v73
    %v419 = vadd.f32 %v66, %v418
    %421 = vset.pattern.permute.xlu0 0
    %422 = vperm.xlu0 %421, %v413
    %v423 = vpop.permute.xlu0 %422
    %v425 = vmul.f32 %v423, %v86
    %v426 = vadd.f32 %v419, %v425
    %428 = vset.pattern.permute.xlu0 1
    %429 = vperm.xlu0 %428, %v415
    %v430 = vpop.permute.xlu0 %429
    %v432 = vmul.f32 %v430, %v91
    %v433 = vadd.f32 %v426, %v432
    %v434 = vtanh.pop %v433
    %v435 = vmul.f32 %v434, %v434
    %v436 = vmul.f32 %v434, %v96
    %v437 = vsel %vm144, %v436, 0.0
    %438 = vadd.xlane.f32.xlu0 %v437
    %v439 = vpop.xlane.xlu0 %438
    %v440 = vadd.f32 %v439, %v148
    %v441 = vmul.f32 %v434, %v101
    %v442 = vsel %vm144, %v441, 0.0
    %443 = vadd.xlane.f32.xlu0 %v442
    %v444 = vpop.xlane.xlu0 %443
    %v445 = vadd.f32 %v444, %v154
    %v446 = vmul.f32 %v435, %v80
    %v447 = vsel %vm144, %v446, 0.0
    %448 = vadd.xlane.f32.xlu0 %v447
    %v449 = vpop.xlane.xlu0 %448
    %v450 = vadd.f32 %v160, %v449
    %v451 = vmul.f32 %v366, 2.0
    %v452 = vadd.f32 %v327, %v451
    %v453 = vmul.f32 %v401, 2.0
    %v454 = vadd.f32 %v452, %v453
    %v455 = vadd.f32 %v454, %v440
    %v456 = vmul.f32 %v286, %v455
    %v457 = vadd.f32 %v288, %v456
    %v458 = vmul.f32 %v371, 2.0
    %v459 = vadd.f32 %v332, %v458
    %v460 = vmul.f32 %v406, 2.0
    %v461 = vadd.f32 %v459, %v460
    %v462 = vadd.f32 %v461, %v445
    %v463 = vmul.f32 %v286, %v462
    %v464 = vadd.f32 %v295, %v463
    %v465 = vmul.f32 %v376, 2.0
    %v466 = vadd.f32 %v337, %v465
    %v467 = vmul.f32 %v411, 2.0
    %v468 = vadd.f32 %v466, %v467
    %v469 = vadd.f32 %v468, %v450
    %v470 = vmul.f32 %v286, %v469
    %v471 = vadd.f32 %v302, %v470
    %s472 = smul.f32 %s122, 2.0
    %s473 = sadd.f32 %s117, %s472
    %v474 = vstv %s473
    %v475 = vmul.f32 %v474, %v73
    %v476 = vadd.f32 %v66, %v475
    %478 = vset.pattern.permute.xlu0 0
    %479 = vperm.xlu0 %478, %v457
    %v480 = vpop.permute.xlu0 %479
    %v482 = vmul.f32 %v480, %v86
    %v483 = vadd.f32 %v476, %v482
    %485 = vset.pattern.permute.xlu0 1
    %486 = vperm.xlu0 %485, %v464
    %v487 = vpop.permute.xlu0 %486
    %v489 = vmul.f32 %v487, %v91
    %v490 = vadd.f32 %v483, %v489
    %v491 = vtanh.pop %v490
    %v492 = vmul.f32 %v491, %v491
    %v493 = vmul.f32 %v491, %v96
    %v494 = vsel %vm144, %v493, 0.0
    %495 = vadd.xlane.f32.xlu0 %v494
    %v496 = vpop.xlane.xlu0 %495
    %v497 = vadd.f32 %v496, %v148
    %v498 = vmul.f32 %v491, %v101
    %v499 = vsel %vm144, %v498, 0.0
    %500 = vadd.xlane.f32.xlu0 %v499
    %v501 = vpop.xlane.xlu0 %500
    %v502 = vadd.f32 %v501, %v154
    %v503 = vmul.f32 %v492, %v80
    %v504 = vsel %vm144, %v503, 0.0
    %505 = vadd.xlane.f32.xlu0 %v504
    %v506 = vpop.xlane.xlu0 %505
    %v507 = vadd.f32 %v160, %v506
    %v508 = vmul.f32 %v163, %v497
    %v509 = vadd.f32 %v457, %v508
    %v510 = vmul.f32 %v163, %v502
    %v511 = vadd.f32 %v464, %v510
    %s512 = sadd.f32 %s473, %s162
    %v513 = vstv %s512
    %v514 = vmul.f32 %v513, %v73
    %v515 = vadd.f32 %v66, %v514
    %517 = vset.pattern.permute.xlu0 0
    %518 = vperm.xlu0 %517, %v509
    %v519 = vpop.permute.xlu0 %518
    %v521 = vmul.f32 %v519, %v86
    %v522 = vadd.f32 %v515, %v521
    %524 = vset.pattern.permute.xlu0 1
    %525 = vperm.xlu0 %524, %v511
    %v526 = vpop.permute.xlu0 %525
    %v528 = vmul.f32 %v526, %v91
    %v529 = vadd.f32 %v522, %v528
    %v530 = vtanh.pop %v529
    %v531 = vmul.f32 %v530, %v530
    %v532 = vmul.f32 %v530, %v96
    %v533 = vsel %vm144, %v532, 0.0
    %534 = vadd.xlane.f32.xlu0 %v533
    %v535 = vpop.xlane.xlu0 %534
    %v536 = vadd.f32 %v535, %v148
    %v537 = vmul.f32 %v530, %v101
    %v538 = vsel %vm144, %v537, 0.0
    %539 = vadd.xlane.f32.xlu0 %v538
    %v540 = vpop.xlane.xlu0 %539
    %v541 = vadd.f32 %v540, %v154
    %v542 = vmul.f32 %v531, %v80
    %v543 = vsel %vm144, %v542, 0.0
    %544 = vadd.xlane.f32.xlu0 %v543
    %v545 = vpop.xlane.xlu0 %544
    %v546 = vadd.f32 %v160, %v545
    %v547 = vmul.f32 %v163, %v536
    %v548 = vadd.f32 %v457, %v547
    %v549 = vmul.f32 %v163, %v541
    %v550 = vadd.f32 %v464, %v549
    %552 = vset.pattern.permute.xlu0 0
    %553 = vperm.xlu0 %552, %v548
    %v554 = vpop.permute.xlu0 %553
    %v556 = vmul.f32 %v554, %v86
    %v557 = vadd.f32 %v515, %v556
    %559 = vset.pattern.permute.xlu0 1
    %560 = vperm.xlu0 %559, %v550
    %v561 = vpop.permute.xlu0 %560
    %v563 = vmul.f32 %v561, %v91
    %v564 = vadd.f32 %v557, %v563
    %v565 = vtanh.pop %v564
    %v566 = vmul.f32 %v565, %v565
    %v567 = vmul.f32 %v565, %v96
    %v568 = vsel %vm144, %v567, 0.0
    %569 = vadd.xlane.f32.xlu0 %v568
    %v570 = vpop.xlane.xlu0 %569
    %v571 = vadd.f32 %v570, %v148
    %v572 = vmul.f32 %v565, %v101
    %v573 = vsel %vm144, %v572, 0.0
    %574 = vadd.xlane.f32.xlu0 %v573
    %v575 = vpop.xlane.xlu0 %574
    %v576 = vadd.f32 %v575, %v154
    %v577 = vmul.f32 %v566, %v80
    %v578 = vsel %vm144, %v577, 0.0
    %579 = vadd.xlane.f32.xlu0 %v578
    %v580 = vpop.xlane.xlu0 %579
    %v581 = vadd.f32 %v160, %v580
    %v582 = vmul.f32 %v238, %v571
    %v583 = vadd.f32 %v457, %v582
    %v584 = vmul.f32 %v238, %v576
    %v585 = vadd.f32 %v464, %v584
    %s586 = sadd.f32 %s473, %s122
    %v587 = vstv %s586
    %v588 = vmul.f32 %v587, %v73
    %v589 = vadd.f32 %v66, %v588
    %591 = vset.pattern.permute.xlu0 0
    %592 = vperm.xlu0 %591, %v583
    %v593 = vpop.permute.xlu0 %592
    %v595 = vmul.f32 %v593, %v86
    %v596 = vadd.f32 %v589, %v595
    %598 = vset.pattern.permute.xlu0 1
    %599 = vperm.xlu0 %598, %v585
    %v600 = vpop.permute.xlu0 %599
    %v602 = vmul.f32 %v600, %v91
    %v603 = vadd.f32 %v596, %v602
    %v604 = vtanh.pop %v603
    %v605 = vmul.f32 %v604, %v604
    %v606 = vmul.f32 %v604, %v96
    %v607 = vsel %vm144, %v606, 0.0
    %608 = vadd.xlane.f32.xlu0 %v607
    %v609 = vpop.xlane.xlu0 %608
    %v610 = vadd.f32 %v609, %v148
    %v611 = vmul.f32 %v604, %v101
    %v612 = vsel %vm144, %v611, 0.0
    %613 = vadd.xlane.f32.xlu0 %v612
    %v614 = vpop.xlane.xlu0 %613
    %v615 = vadd.f32 %v614, %v154
    %v616 = vmul.f32 %v605, %v80
    %v617 = vsel %vm144, %v616, 0.0
    %618 = vadd.xlane.f32.xlu0 %v617
    %v619 = vpop.xlane.xlu0 %618
    %v620 = vadd.f32 %v160, %v619
    %v621 = vmul.f32 %v536, 2.0
    %v622 = vadd.f32 %v497, %v621
    %v623 = vmul.f32 %v571, 2.0
    %v624 = vadd.f32 %v622, %v623
    %v625 = vadd.f32 %v624, %v610
    %v626 = vmul.f32 %v286, %v625
    %v627 = vadd.f32 %v457, %v626
    %v628 = vmul.f32 %v541, 2.0
    %v629 = vadd.f32 %v502, %v628
    %v630 = vmul.f32 %v576, 2.0
    %v631 = vadd.f32 %v629, %v630
    %v632 = vadd.f32 %v631, %v615
    %v633 = vmul.f32 %v286, %v632
    %v634 = vadd.f32 %v464, %v633
    %v635 = vmul.f32 %v546, 2.0
    %v636 = vadd.f32 %v507, %v635
    %v637 = vmul.f32 %v581, 2.0
    %v638 = vadd.f32 %v636, %v637
    %v639 = vadd.f32 %v638, %v620
    %v640 = vmul.f32 %v286, %v639
    %v641 = vadd.f32 %v471, %v640
    %s642 = smul.f32 %s122, 3.0
    %s643 = sadd.f32 %s117, %s642
    %v644 = vstv %s643
    %v645 = vmul.f32 %v644, %v73
    %v646 = vadd.f32 %v66, %v645
    %648 = vset.pattern.permute.xlu0 0
    %649 = vperm.xlu0 %648, %v627
    %v650 = vpop.permute.xlu0 %649
    %v652 = vmul.f32 %v650, %v86
    %v653 = vadd.f32 %v646, %v652
    %655 = vset.pattern.permute.xlu0 1
    %656 = vperm.xlu0 %655, %v634
    %v657 = vpop.permute.xlu0 %656
    %v659 = vmul.f32 %v657, %v91
    %v660 = vadd.f32 %v653, %v659
    %v661 = vtanh.pop %v660
    %v662 = vmul.f32 %v661, %v661
    %v663 = vmul.f32 %v661, %v96
    %v664 = vsel %vm144, %v663, 0.0
    %665 = vadd.xlane.f32.xlu0 %v664
    %v666 = vpop.xlane.xlu0 %665
    %v667 = vadd.f32 %v666, %v148
    %v668 = vmul.f32 %v661, %v101
    %v669 = vsel %vm144, %v668, 0.0
    %670 = vadd.xlane.f32.xlu0 %v669
    %v671 = vpop.xlane.xlu0 %670
    %v672 = vadd.f32 %v671, %v154
    %v673 = vmul.f32 %v662, %v80
    %v674 = vsel %vm144, %v673, 0.0
    %675 = vadd.xlane.f32.xlu0 %v674
    %v676 = vpop.xlane.xlu0 %675
    %v677 = vadd.f32 %v160, %v676
    %v678 = vmul.f32 %v163, %v667
    %v679 = vadd.f32 %v627, %v678
    %v680 = vmul.f32 %v163, %v672
    %v681 = vadd.f32 %v634, %v680
    %s682 = sadd.f32 %s643, %s162
    %v683 = vstv %s682
    %v684 = vmul.f32 %v683, %v73
    %v685 = vadd.f32 %v66, %v684
    %687 = vset.pattern.permute.xlu0 0
    %688 = vperm.xlu0 %687, %v679
    %v689 = vpop.permute.xlu0 %688
    %v691 = vmul.f32 %v689, %v86
    %v692 = vadd.f32 %v685, %v691
    %694 = vset.pattern.permute.xlu0 1
    %695 = vperm.xlu0 %694, %v681
    %v696 = vpop.permute.xlu0 %695
    %v698 = vmul.f32 %v696, %v91
    %v699 = vadd.f32 %v692, %v698
    %v700 = vtanh.pop %v699
    %v701 = vmul.f32 %v700, %v700
    %v702 = vmul.f32 %v700, %v96
    %v703 = vsel %vm144, %v702, 0.0
    %704 = vadd.xlane.f32.xlu0 %v703
    %v705 = vpop.xlane.xlu0 %704
    %v706 = vadd.f32 %v705, %v148
    %v707 = vmul.f32 %v700, %v101
    %v708 = vsel %vm144, %v707, 0.0
    %709 = vadd.xlane.f32.xlu0 %v708
    %v710 = vpop.xlane.xlu0 %709
    %v711 = vadd.f32 %v710, %v154
    %v712 = vmul.f32 %v701, %v80
    %v713 = vsel %vm144, %v712, 0.0
    %714 = vadd.xlane.f32.xlu0 %v713
    %v715 = vpop.xlane.xlu0 %714
    %v716 = vadd.f32 %v160, %v715
    %v717 = vmul.f32 %v163, %v706
    %v718 = vadd.f32 %v627, %v717
    %v719 = vmul.f32 %v163, %v711
    %v720 = vadd.f32 %v634, %v719
    %722 = vset.pattern.permute.xlu0 0
    %723 = vperm.xlu0 %722, %v718
    %v724 = vpop.permute.xlu0 %723
    %v726 = vmul.f32 %v724, %v86
    %v727 = vadd.f32 %v685, %v726
    %729 = vset.pattern.permute.xlu0 1
    %730 = vperm.xlu0 %729, %v720
    %v731 = vpop.permute.xlu0 %730
    %v733 = vmul.f32 %v731, %v91
    %v734 = vadd.f32 %v727, %v733
    %v735 = vtanh.pop %v734
    %v736 = vmul.f32 %v735, %v735
    %v737 = vmul.f32 %v735, %v96
    %v738 = vsel %vm144, %v737, 0.0
    %739 = vadd.xlane.f32.xlu0 %v738
    %v740 = vpop.xlane.xlu0 %739
    %v741 = vadd.f32 %v740, %v148
    %v742 = vmul.f32 %v735, %v101
    %v743 = vsel %vm144, %v742, 0.0
    %744 = vadd.xlane.f32.xlu0 %v743
    %v745 = vpop.xlane.xlu0 %744
    %v746 = vadd.f32 %v745, %v154
    %v747 = vmul.f32 %v736, %v80
    %v748 = vsel %vm144, %v747, 0.0
    %749 = vadd.xlane.f32.xlu0 %v748
    %v750 = vpop.xlane.xlu0 %749
    %v751 = vadd.f32 %v160, %v750
    %v752 = vmul.f32 %v238, %v741
    %v753 = vadd.f32 %v627, %v752
    %v754 = vmul.f32 %v238, %v746
    %v755 = vadd.f32 %v634, %v754
    %s756 = sadd.f32 %s643, %s122
    %v757 = vstv %s756
    %v758 = vmul.f32 %v757, %v73
    %v759 = vadd.f32 %v66, %v758
    %761 = vset.pattern.permute.xlu0 0
    %762 = vperm.xlu0 %761, %v753
    %v763 = vpop.permute.xlu0 %762
    %v765 = vmul.f32 %v763, %v86
    %v766 = vadd.f32 %v759, %v765
    %768 = vset.pattern.permute.xlu0 1
    %769 = vperm.xlu0 %768, %v755
    %v770 = vpop.permute.xlu0 %769
    %v772 = vmul.f32 %v770, %v91
    %v773 = vadd.f32 %v766, %v772
    %v774 = vtanh.pop %v773
    %v775 = vmul.f32 %v774, %v774
    %v776 = vmul.f32 %v774, %v96
    %v777 = vsel %vm144, %v776, 0.0
    %778 = vadd.xlane.f32.xlu0 %v777
    %v779 = vpop.xlane.xlu0 %778
    %v780 = vadd.f32 %v779, %v148
    %v781 = vmul.f32 %v774, %v101
    %v782 = vsel %vm144, %v781, 0.0
    %783 = vadd.xlane.f32.xlu0 %v782
    %v784 = vpop.xlane.xlu0 %783
    %v785 = vadd.f32 %v784, %v154
    %v786 = vmul.f32 %v775, %v80
    %v787 = vsel %vm144, %v786, 0.0
    %788 = vadd.xlane.f32.xlu0 %v787
    %v789 = vpop.xlane.xlu0 %788
    %v790 = vadd.f32 %v160, %v789
    %v791 = vmul.f32 %v706, 2.0
    %v792 = vadd.f32 %v667, %v791
    %v793 = vmul.f32 %v741, 2.0
    %v794 = vadd.f32 %v792, %v793
    %v795 = vadd.f32 %v794, %v780
    %v796 = vmul.f32 %v286, %v795
    %v797 = vadd.f32 %v627, %v796
    %v798 = vmul.f32 %v711, 2.0
    %v799 = vadd.f32 %v672, %v798
    %v800 = vmul.f32 %v746, 2.0
    %v801 = vadd.f32 %v799, %v800
    %v802 = vadd.f32 %v801, %v785
    %v803 = vmul.f32 %v286, %v802
    %v804 = vadd.f32 %v634, %v803
    %v805 = vmul.f32 %v716, 2.0
    %v806 = vadd.f32 %v677, %v805
    %v807 = vmul.f32 %v751, 2.0
    %v808 = vadd.f32 %v806, %v807
    %v809 = vadd.f32 %v808, %v790
    %v810 = vmul.f32 %v286, %v809
    %v811 = vadd.f32 %v641, %v810
    %813 = vrot.lane.b32.xlu0 %v811, 2
    %v814 = vpop.permute.xlu0 %813
    %v816 = vsel %vm112, %v797, %v804
    %v817 = vsel %vm113, %v816, %v814
    %s818 = scalar_lea.vmem %s10, 8
    %819 = vst.msk [vmem:[%s818] sm:$0xff] %vm115, %v817
    %s820 = sld [smem:[#allocation3 + $0x1]]
    %s821 = sld [smem:[#allocation3 + $0x2]]
    %s822 = ssub.f32 %s821, %s820
    %v823 = vrcp.pop 4.0
    %s824 = vtos %v823
    %s825 = smul.f32 %s822, %s824
    %s826 = smul.f32 %s825, 0.0
    %s827 = sadd.f32 %s820, %s826
    %v828 = vstv %s827
    %v829 = vmul.f32 %v828, %v73
    %v830 = vadd.f32 %v66, %v829
    %832 = vset.pattern.permute.xlu0 0
    %833 = vperm.xlu0 %832, %v797
    %v834 = vpop.permute.xlu0 %833
    %v836 = vmul.f32 %v834, %v86
    %v837 = vadd.f32 %v830, %v836
    %839 = vset.pattern.permute.xlu0 1
    %840 = vperm.xlu0 %839, %v804
    %v841 = vpop.permute.xlu0 %840
    %v843 = vmul.f32 %v841, %v91
    %v844 = vadd.f32 %v837, %v843
    %v845 = vtanh.pop %v844
    %v846 = vmul.f32 %v845, %v845
    %v847 = vmul.f32 %v845, %v96
    %v848 = vsel %vm144, %v847, 0.0
    %849 = vadd.xlane.f32.xlu0 %v848
    %v850 = vpop.xlane.xlu0 %849
    %v851 = vadd.f32 %v850, %v148
    %v852 = vmul.f32 %v845, %v101
    %v853 = vsel %vm144, %v852, 0.0
    %854 = vadd.xlane.f32.xlu0 %v853
    %v855 = vpop.xlane.xlu0 %854
    %v856 = vadd.f32 %v855, %v154
    %v857 = vmul.f32 %v846, %v80
    %v858 = vsel %vm144, %v857, 0.0
    %859 = vadd.xlane.f32.xlu0 %v858
    %v860 = vpop.xlane.xlu0 %859
    %v861 = vadd.f32 %v160, %v860
    %s862 = smul.f32 %s825, 0.5
    %v863 = vstv %s862
    %v864 = vmul.f32 %v863, %v851
    %v865 = vadd.f32 %v797, %v864
    %v866 = vmul.f32 %v863, %v856
    %v867 = vadd.f32 %v804, %v866
    %s868 = sadd.f32 %s827, %s862
    %v869 = vstv %s868
    %v870 = vmul.f32 %v869, %v73
    %v871 = vadd.f32 %v66, %v870
    %873 = vset.pattern.permute.xlu0 0
    %874 = vperm.xlu0 %873, %v865
    %v875 = vpop.permute.xlu0 %874
    %v877 = vmul.f32 %v875, %v86
    %v878 = vadd.f32 %v871, %v877
    %880 = vset.pattern.permute.xlu0 1
    %881 = vperm.xlu0 %880, %v867
    %v882 = vpop.permute.xlu0 %881
    %v884 = vmul.f32 %v882, %v91
    %v885 = vadd.f32 %v878, %v884
    %v886 = vtanh.pop %v885
    %v887 = vmul.f32 %v886, %v886
    %v888 = vmul.f32 %v886, %v96
    %v889 = vsel %vm144, %v888, 0.0
    %890 = vadd.xlane.f32.xlu0 %v889
    %v891 = vpop.xlane.xlu0 %890
    %v892 = vadd.f32 %v891, %v148
    %v893 = vmul.f32 %v886, %v101
    %v894 = vsel %vm144, %v893, 0.0
    %895 = vadd.xlane.f32.xlu0 %v894
    %v896 = vpop.xlane.xlu0 %895
    %v897 = vadd.f32 %v896, %v154
    %v898 = vmul.f32 %v887, %v80
    %v899 = vsel %vm144, %v898, 0.0
    %900 = vadd.xlane.f32.xlu0 %v899
    %v901 = vpop.xlane.xlu0 %900
    %v902 = vadd.f32 %v160, %v901
    %v903 = vmul.f32 %v863, %v892
    %v904 = vadd.f32 %v797, %v903
    %v905 = vmul.f32 %v863, %v897
    %v906 = vadd.f32 %v804, %v905
    %908 = vset.pattern.permute.xlu0 0
    %909 = vperm.xlu0 %908, %v904
    %v910 = vpop.permute.xlu0 %909
    %v912 = vmul.f32 %v910, %v86
    %v913 = vadd.f32 %v871, %v912
    %915 = vset.pattern.permute.xlu0 1
    %916 = vperm.xlu0 %915, %v906
    %v917 = vpop.permute.xlu0 %916
    %v919 = vmul.f32 %v917, %v91
    %v920 = vadd.f32 %v913, %v919
    %v921 = vtanh.pop %v920
    %v922 = vmul.f32 %v921, %v921
    %v923 = vmul.f32 %v921, %v96
    %v924 = vsel %vm144, %v923, 0.0
    %925 = vadd.xlane.f32.xlu0 %v924
    %v926 = vpop.xlane.xlu0 %925
    %v927 = vadd.f32 %v926, %v148
    %v928 = vmul.f32 %v921, %v101
    %v929 = vsel %vm144, %v928, 0.0
    %930 = vadd.xlane.f32.xlu0 %v929
    %v931 = vpop.xlane.xlu0 %930
    %v932 = vadd.f32 %v931, %v154
    %v933 = vmul.f32 %v922, %v80
    %v934 = vsel %vm144, %v933, 0.0
    %935 = vadd.xlane.f32.xlu0 %v934
    %v936 = vpop.xlane.xlu0 %935
    %v937 = vadd.f32 %v160, %v936
    %v938 = vstv %s825
    %v939 = vmul.f32 %v938, %v927
    %v940 = vadd.f32 %v797, %v939
    %v941 = vmul.f32 %v938, %v932
    %v942 = vadd.f32 %v804, %v941
    %s943 = sadd.f32 %s827, %s825
    %v944 = vstv %s943
    %v945 = vmul.f32 %v944, %v73
    %v946 = vadd.f32 %v66, %v945
    %948 = vset.pattern.permute.xlu0 0
    %949 = vperm.xlu0 %948, %v940
    %v950 = vpop.permute.xlu0 %949
    %v952 = vmul.f32 %v950, %v86
    %v953 = vadd.f32 %v946, %v952
    %955 = vset.pattern.permute.xlu0 1
    %956 = vperm.xlu0 %955, %v942
    %v957 = vpop.permute.xlu0 %956
    %v959 = vmul.f32 %v957, %v91
    %v960 = vadd.f32 %v953, %v959
    %v961 = vtanh.pop %v960
    %v962 = vmul.f32 %v961, %v961
    %v963 = vmul.f32 %v961, %v96
    %v964 = vsel %vm144, %v963, 0.0
    %965 = vadd.xlane.f32.xlu0 %v964
    %v966 = vpop.xlane.xlu0 %965
    %v967 = vadd.f32 %v966, %v148
    %v968 = vmul.f32 %v961, %v101
    %v969 = vsel %vm144, %v968, 0.0
    %970 = vadd.xlane.f32.xlu0 %v969
    %v971 = vpop.xlane.xlu0 %970
    %v972 = vadd.f32 %v971, %v154
    %v973 = vmul.f32 %v962, %v80
    %v974 = vsel %vm144, %v973, 0.0
    %975 = vadd.xlane.f32.xlu0 %v974
    %v976 = vpop.xlane.xlu0 %975
    %v977 = vadd.f32 %v160, %v976
    %v978 = vrcp.pop 6.0
    %s979 = vtos %v978
    %s980 = smul.f32 %s825, %s979
    %v981 = vmul.f32 %v892, 2.0
    %v982 = vadd.f32 %v851, %v981
    %v983 = vmul.f32 %v927, 2.0
    %v984 = vadd.f32 %v982, %v983
    %v985 = vadd.f32 %v984, %v967
    %v986 = vstv %s980
    %v987 = vmul.f32 %v986, %v985
    %v988 = vadd.f32 %v797, %v987
    %v989 = vmul.f32 %v897, 2.0
    %v990 = vadd.f32 %v856, %v989
    %v991 = vmul.f32 %v932, 2.0
    %v992 = vadd.f32 %v990, %v991
    %v993 = vadd.f32 %v992, %v972
    %v994 = vmul.f32 %v986, %v993
    %v995 = vadd.f32 %v804, %v994
    %v996 = vmul.f32 %v902, 2.0
    %v997 = vadd.f32 %v861, %v996
    %v998 = vmul.f32 %v937, 2.0
    %v999 = vadd.f32 %v997, %v998
    %v1000 = vadd.f32 %v999, %v977
    %v1001 = vmul.f32 %v986, %v1000
    %v1002 = vadd.f32 %v811, %v1001
    %s1003 = sadd.f32 %s820, %s825
    %v1004 = vstv %s1003
    %v1005 = vmul.f32 %v1004, %v73
    %v1006 = vadd.f32 %v66, %v1005
    %1008 = vset.pattern.permute.xlu0 0
    %1009 = vperm.xlu0 %1008, %v988
    %v1010 = vpop.permute.xlu0 %1009
    %v1012 = vmul.f32 %v1010, %v86
    %v1013 = vadd.f32 %v1006, %v1012
    %1015 = vset.pattern.permute.xlu0 1
    %1016 = vperm.xlu0 %1015, %v995
    %v1017 = vpop.permute.xlu0 %1016
    %v1019 = vmul.f32 %v1017, %v91
    %v1020 = vadd.f32 %v1013, %v1019
    %v1021 = vtanh.pop %v1020
    %v1022 = vmul.f32 %v1021, %v1021
    %v1023 = vmul.f32 %v1021, %v96
    %v1024 = vsel %vm144, %v1023, 0.0
    %1025 = vadd.xlane.f32.xlu0 %v1024
    %v1026 = vpop.xlane.xlu0 %1025
    %v1027 = vadd.f32 %v1026, %v148
    %v1028 = vmul.f32 %v1021, %v101
    %v1029 = vsel %vm144, %v1028, 0.0
    %1030 = vadd.xlane.f32.xlu0 %v1029
    %v1031 = vpop.xlane.xlu0 %1030
    %v1032 = vadd.f32 %v1031, %v154
    %v1033 = vmul.f32 %v1022, %v80
    %v1034 = vsel %vm144, %v1033, 0.0
    %1035 = vadd.xlane.f32.xlu0 %v1034
    %v1036 = vpop.xlane.xlu0 %1035
    %v1037 = vadd.f32 %v160, %v1036
    %v1038 = vmul.f32 %v863, %v1027
    %v1039 = vadd.f32 %v988, %v1038
    %v1040 = vmul.f32 %v863, %v1032
    %v1041 = vadd.f32 %v995, %v1040
    %s1042 = sadd.f32 %s1003, %s862
    %v1043 = vstv %s1042
    %v1044 = vmul.f32 %v1043, %v73
    %v1045 = vadd.f32 %v66, %v1044
    %1047 = vset.pattern.permute.xlu0 0
    %1048 = vperm.xlu0 %1047, %v1039
    %v1049 = vpop.permute.xlu0 %1048
    %v1051 = vmul.f32 %v1049, %v86
    %v1052 = vadd.f32 %v1045, %v1051
    %1054 = vset.pattern.permute.xlu0 1
    %1055 = vperm.xlu0 %1054, %v1041
    %v1056 = vpop.permute.xlu0 %1055
    %v1058 = vmul.f32 %v1056, %v91
    %v1059 = vadd.f32 %v1052, %v1058
    %v1060 = vtanh.pop %v1059
    %v1061 = vmul.f32 %v1060, %v1060
    %v1062 = vmul.f32 %v1060, %v96
    %v1063 = vsel %vm144, %v1062, 0.0
    %1064 = vadd.xlane.f32.xlu0 %v1063
    %v1065 = vpop.xlane.xlu0 %1064
    %v1066 = vadd.f32 %v1065, %v148
    %v1067 = vmul.f32 %v1060, %v101
    %v1068 = vsel %vm144, %v1067, 0.0
    %1069 = vadd.xlane.f32.xlu0 %v1068
    %v1070 = vpop.xlane.xlu0 %1069
    %v1071 = vadd.f32 %v1070, %v154
    %v1072 = vmul.f32 %v1061, %v80
    %v1073 = vsel %vm144, %v1072, 0.0
    %1074 = vadd.xlane.f32.xlu0 %v1073
    %v1075 = vpop.xlane.xlu0 %1074
    %v1076 = vadd.f32 %v160, %v1075
    %v1077 = vmul.f32 %v863, %v1066
    %v1078 = vadd.f32 %v988, %v1077
    %v1079 = vmul.f32 %v863, %v1071
    %v1080 = vadd.f32 %v995, %v1079
    %1082 = vset.pattern.permute.xlu0 0
    %1083 = vperm.xlu0 %1082, %v1078
    %v1084 = vpop.permute.xlu0 %1083
    %v1086 = vmul.f32 %v1084, %v86
    %v1087 = vadd.f32 %v1045, %v1086
    %1089 = vset.pattern.permute.xlu0 1
    %1090 = vperm.xlu0 %1089, %v1080
    %v1091 = vpop.permute.xlu0 %1090
    %v1093 = vmul.f32 %v1091, %v91
    %v1094 = vadd.f32 %v1087, %v1093
    %v1095 = vtanh.pop %v1094
    %v1096 = vmul.f32 %v1095, %v1095
    %v1097 = vmul.f32 %v1095, %v96
    %v1098 = vsel %vm144, %v1097, 0.0
    %1099 = vadd.xlane.f32.xlu0 %v1098
    %v1100 = vpop.xlane.xlu0 %1099
    %v1101 = vadd.f32 %v1100, %v148
    %v1102 = vmul.f32 %v1095, %v101
    %v1103 = vsel %vm144, %v1102, 0.0
    %1104 = vadd.xlane.f32.xlu0 %v1103
    %v1105 = vpop.xlane.xlu0 %1104
    %v1106 = vadd.f32 %v1105, %v154
    %v1107 = vmul.f32 %v1096, %v80
    %v1108 = vsel %vm144, %v1107, 0.0
    %1109 = vadd.xlane.f32.xlu0 %v1108
    %v1110 = vpop.xlane.xlu0 %1109
    %v1111 = vadd.f32 %v160, %v1110
    %v1112 = vmul.f32 %v938, %v1101
    %v1113 = vadd.f32 %v988, %v1112
    %v1114 = vmul.f32 %v938, %v1106
    %v1115 = vadd.f32 %v995, %v1114
    %s1116 = sadd.f32 %s1003, %s825
    %v1117 = vstv %s1116
    %v1118 = vmul.f32 %v1117, %v73
    %v1119 = vadd.f32 %v66, %v1118
    %1121 = vset.pattern.permute.xlu0 0
    %1122 = vperm.xlu0 %1121, %v1113
    %v1123 = vpop.permute.xlu0 %1122
    %v1125 = vmul.f32 %v1123, %v86
    %v1126 = vadd.f32 %v1119, %v1125
    %1128 = vset.pattern.permute.xlu0 1
    %1129 = vperm.xlu0 %1128, %v1115
    %v1130 = vpop.permute.xlu0 %1129
    %v1132 = vmul.f32 %v1130, %v91
    %v1133 = vadd.f32 %v1126, %v1132
    %v1134 = vtanh.pop %v1133
    %v1135 = vmul.f32 %v1134, %v1134
    %v1136 = vmul.f32 %v1134, %v96
    %v1137 = vsel %vm144, %v1136, 0.0
    %1138 = vadd.xlane.f32.xlu0 %v1137
    %v1139 = vpop.xlane.xlu0 %1138
    %v1140 = vadd.f32 %v1139, %v148
    %v1141 = vmul.f32 %v1134, %v101
    %v1142 = vsel %vm144, %v1141, 0.0
    %1143 = vadd.xlane.f32.xlu0 %v1142
    %v1144 = vpop.xlane.xlu0 %1143
    %v1145 = vadd.f32 %v1144, %v154
    %v1146 = vmul.f32 %v1135, %v80
    %v1147 = vsel %vm144, %v1146, 0.0
    %1148 = vadd.xlane.f32.xlu0 %v1147
    %v1149 = vpop.xlane.xlu0 %1148
    %v1150 = vadd.f32 %v160, %v1149
    %v1151 = vmul.f32 %v1066, 2.0
    %v1152 = vadd.f32 %v1027, %v1151
    %v1153 = vmul.f32 %v1101, 2.0
    %v1154 = vadd.f32 %v1152, %v1153
    %v1155 = vadd.f32 %v1154, %v1140
    %v1156 = vmul.f32 %v986, %v1155
    %v1157 = vadd.f32 %v988, %v1156
    %v1158 = vmul.f32 %v1071, 2.0
    %v1159 = vadd.f32 %v1032, %v1158
    %v1160 = vmul.f32 %v1106, 2.0
    %v1161 = vadd.f32 %v1159, %v1160
    %v1162 = vadd.f32 %v1161, %v1145
    %v1163 = vmul.f32 %v986, %v1162
    %v1164 = vadd.f32 %v995, %v1163
    %v1165 = vmul.f32 %v1076, 2.0
    %v1166 = vadd.f32 %v1037, %v1165
    %v1167 = vmul.f32 %v1111, 2.0
    %v1168 = vadd.f32 %v1166, %v1167
    %v1169 = vadd.f32 %v1168, %v1150
    %v1170 = vmul.f32 %v986, %v1169
    %v1171 = vadd.f32 %v1002, %v1170
    %s1172 = smul.f32 %s825, 2.0
    %s1173 = sadd.f32 %s820, %s1172
    %v1174 = vstv %s1173
    %v1175 = vmul.f32 %v1174, %v73
    %v1176 = vadd.f32 %v66, %v1175
    %1178 = vset.pattern.permute.xlu0 0
    %1179 = vperm.xlu0 %1178, %v1157
    %v1180 = vpop.permute.xlu0 %1179
    %v1182 = vmul.f32 %v1180, %v86
    %v1183 = vadd.f32 %v1176, %v1182
    %1185 = vset.pattern.permute.xlu0 1
    %1186 = vperm.xlu0 %1185, %v1164
    %v1187 = vpop.permute.xlu0 %1186
    %v1189 = vmul.f32 %v1187, %v91
    %v1190 = vadd.f32 %v1183, %v1189
    %v1191 = vtanh.pop %v1190
    %v1192 = vmul.f32 %v1191, %v1191
    %v1193 = vmul.f32 %v1191, %v96
    %v1194 = vsel %vm144, %v1193, 0.0
    %1195 = vadd.xlane.f32.xlu0 %v1194
    %v1196 = vpop.xlane.xlu0 %1195
    %v1197 = vadd.f32 %v1196, %v148
    %v1198 = vmul.f32 %v1191, %v101
    %v1199 = vsel %vm144, %v1198, 0.0
    %1200 = vadd.xlane.f32.xlu0 %v1199
    %v1201 = vpop.xlane.xlu0 %1200
    %v1202 = vadd.f32 %v1201, %v154
    %v1203 = vmul.f32 %v1192, %v80
    %v1204 = vsel %vm144, %v1203, 0.0
    %1205 = vadd.xlane.f32.xlu0 %v1204
    %v1206 = vpop.xlane.xlu0 %1205
    %v1207 = vadd.f32 %v160, %v1206
    %v1208 = vmul.f32 %v863, %v1197
    %v1209 = vadd.f32 %v1157, %v1208
    %v1210 = vmul.f32 %v863, %v1202
    %v1211 = vadd.f32 %v1164, %v1210
    %s1212 = sadd.f32 %s1173, %s862
    %v1213 = vstv %s1212
    %v1214 = vmul.f32 %v1213, %v73
    %v1215 = vadd.f32 %v66, %v1214
    %1217 = vset.pattern.permute.xlu0 0
    %1218 = vperm.xlu0 %1217, %v1209
    %v1219 = vpop.permute.xlu0 %1218
    %v1221 = vmul.f32 %v1219, %v86
    %v1222 = vadd.f32 %v1215, %v1221
    %1224 = vset.pattern.permute.xlu0 1
    %1225 = vperm.xlu0 %1224, %v1211
    %v1226 = vpop.permute.xlu0 %1225
    %v1228 = vmul.f32 %v1226, %v91
    %v1229 = vadd.f32 %v1222, %v1228
    %v1230 = vtanh.pop %v1229
    %v1231 = vmul.f32 %v1230, %v1230
    %v1232 = vmul.f32 %v1230, %v96
    %v1233 = vsel %vm144, %v1232, 0.0
    %1234 = vadd.xlane.f32.xlu0 %v1233
    %v1235 = vpop.xlane.xlu0 %1234
    %v1236 = vadd.f32 %v1235, %v148
    %v1237 = vmul.f32 %v1230, %v101
    %v1238 = vsel %vm144, %v1237, 0.0
    %1239 = vadd.xlane.f32.xlu0 %v1238
    %v1240 = vpop.xlane.xlu0 %1239
    %v1241 = vadd.f32 %v1240, %v154
    %v1242 = vmul.f32 %v1231, %v80
    %v1243 = vsel %vm144, %v1242, 0.0
    %1244 = vadd.xlane.f32.xlu0 %v1243
    %v1245 = vpop.xlane.xlu0 %1244
    %v1246 = vadd.f32 %v160, %v1245
    %v1247 = vmul.f32 %v863, %v1236
    %v1248 = vadd.f32 %v1157, %v1247
    %v1249 = vmul.f32 %v863, %v1241
    %v1250 = vadd.f32 %v1164, %v1249
    %1252 = vset.pattern.permute.xlu0 0
    %1253 = vperm.xlu0 %1252, %v1248
    %v1254 = vpop.permute.xlu0 %1253
    %v1256 = vmul.f32 %v1254, %v86
    %v1257 = vadd.f32 %v1215, %v1256
    %1259 = vset.pattern.permute.xlu0 1
    %1260 = vperm.xlu0 %1259, %v1250
    %v1261 = vpop.permute.xlu0 %1260
    %v1263 = vmul.f32 %v1261, %v91
    %v1264 = vadd.f32 %v1257, %v1263
    %v1265 = vtanh.pop %v1264
    %v1266 = vmul.f32 %v1265, %v1265
    %v1267 = vmul.f32 %v1265, %v96
    %v1268 = vsel %vm144, %v1267, 0.0
    %1269 = vadd.xlane.f32.xlu0 %v1268
    %v1270 = vpop.xlane.xlu0 %1269
    %v1271 = vadd.f32 %v1270, %v148
    %v1272 = vmul.f32 %v1265, %v101
    %v1273 = vsel %vm144, %v1272, 0.0
    %1274 = vadd.xlane.f32.xlu0 %v1273
    %v1275 = vpop.xlane.xlu0 %1274
    %v1276 = vadd.f32 %v1275, %v154
    %v1277 = vmul.f32 %v1266, %v80
    %v1278 = vsel %vm144, %v1277, 0.0
    %1279 = vadd.xlane.f32.xlu0 %v1278
    %v1280 = vpop.xlane.xlu0 %1279
    %v1281 = vadd.f32 %v160, %v1280
    %v1282 = vmul.f32 %v938, %v1271
    %v1283 = vadd.f32 %v1157, %v1282
    %v1284 = vmul.f32 %v938, %v1276
    %v1285 = vadd.f32 %v1164, %v1284
    %s1286 = sadd.f32 %s1173, %s825
    %v1287 = vstv %s1286
    %v1288 = vmul.f32 %v1287, %v73
    %v1289 = vadd.f32 %v66, %v1288
    %1291 = vset.pattern.permute.xlu0 0
    %1292 = vperm.xlu0 %1291, %v1283
    %v1293 = vpop.permute.xlu0 %1292
    %v1295 = vmul.f32 %v1293, %v86
    %v1296 = vadd.f32 %v1289, %v1295
    %1298 = vset.pattern.permute.xlu0 1
    %1299 = vperm.xlu0 %1298, %v1285
    %v1300 = vpop.permute.xlu0 %1299
    %v1302 = vmul.f32 %v1300, %v91
    %v1303 = vadd.f32 %v1296, %v1302
    %v1304 = vtanh.pop %v1303
    %v1305 = vmul.f32 %v1304, %v1304
    %v1306 = vmul.f32 %v1304, %v96
    %v1307 = vsel %vm144, %v1306, 0.0
    %1308 = vadd.xlane.f32.xlu0 %v1307
    %v1309 = vpop.xlane.xlu0 %1308
    %v1310 = vadd.f32 %v1309, %v148
    %v1311 = vmul.f32 %v1304, %v101
    %v1312 = vsel %vm144, %v1311, 0.0
    %1313 = vadd.xlane.f32.xlu0 %v1312
    %v1314 = vpop.xlane.xlu0 %1313
    %v1315 = vadd.f32 %v1314, %v154
    %v1316 = vmul.f32 %v1305, %v80
    %v1317 = vsel %vm144, %v1316, 0.0
    %1318 = vadd.xlane.f32.xlu0 %v1317
    %v1319 = vpop.xlane.xlu0 %1318
    %v1320 = vadd.f32 %v160, %v1319
    %v1321 = vmul.f32 %v1236, 2.0
    %v1322 = vadd.f32 %v1197, %v1321
    %v1323 = vmul.f32 %v1271, 2.0
    %v1324 = vadd.f32 %v1322, %v1323
    %v1325 = vadd.f32 %v1324, %v1310
    %v1326 = vmul.f32 %v986, %v1325
    %v1327 = vadd.f32 %v1157, %v1326
    %v1328 = vmul.f32 %v1241, 2.0
    %v1329 = vadd.f32 %v1202, %v1328
    %v1330 = vmul.f32 %v1276, 2.0
    %v1331 = vadd.f32 %v1329, %v1330
    %v1332 = vadd.f32 %v1331, %v1315
    %v1333 = vmul.f32 %v986, %v1332
    %v1334 = vadd.f32 %v1164, %v1333
    %v1335 = vmul.f32 %v1246, 2.0
    %v1336 = vadd.f32 %v1207, %v1335
    %v1337 = vmul.f32 %v1281, 2.0
    %v1338 = vadd.f32 %v1336, %v1337
    %v1339 = vadd.f32 %v1338, %v1320
    %v1340 = vmul.f32 %v986, %v1339
    %v1341 = vadd.f32 %v1171, %v1340
    %s1342 = smul.f32 %s825, 3.0
    %s1343 = sadd.f32 %s820, %s1342
    %v1344 = vstv %s1343
    %v1345 = vmul.f32 %v1344, %v73
    %v1346 = vadd.f32 %v66, %v1345
    %1348 = vset.pattern.permute.xlu0 0
    %1349 = vperm.xlu0 %1348, %v1327
    %v1350 = vpop.permute.xlu0 %1349
    %v1352 = vmul.f32 %v1350, %v86
    %v1353 = vadd.f32 %v1346, %v1352
    %1355 = vset.pattern.permute.xlu0 1
    %1356 = vperm.xlu0 %1355, %v1334
    %v1357 = vpop.permute.xlu0 %1356
    %v1359 = vmul.f32 %v1357, %v91
    %v1360 = vadd.f32 %v1353, %v1359
    %v1361 = vtanh.pop %v1360
    %v1362 = vmul.f32 %v1361, %v1361
    %v1363 = vmul.f32 %v1361, %v96
    %v1364 = vsel %vm144, %v1363, 0.0
    %1365 = vadd.xlane.f32.xlu0 %v1364
    %v1366 = vpop.xlane.xlu0 %1365
    %v1367 = vadd.f32 %v1366, %v148
    %v1368 = vmul.f32 %v1361, %v101
    %v1369 = vsel %vm144, %v1368, 0.0
    %1370 = vadd.xlane.f32.xlu0 %v1369
    %v1371 = vpop.xlane.xlu0 %1370
    %v1372 = vadd.f32 %v1371, %v154
    %v1373 = vmul.f32 %v1362, %v80
    %v1374 = vsel %vm144, %v1373, 0.0
    %1375 = vadd.xlane.f32.xlu0 %v1374
    %v1376 = vpop.xlane.xlu0 %1375
    %v1377 = vadd.f32 %v160, %v1376
    %v1378 = vmul.f32 %v863, %v1367
    %v1379 = vadd.f32 %v1327, %v1378
    %v1380 = vmul.f32 %v863, %v1372
    %v1381 = vadd.f32 %v1334, %v1380
    %s1382 = sadd.f32 %s1343, %s862
    %v1383 = vstv %s1382
    %v1384 = vmul.f32 %v1383, %v73
    %v1385 = vadd.f32 %v66, %v1384
    %1387 = vset.pattern.permute.xlu0 0
    %1388 = vperm.xlu0 %1387, %v1379
    %v1389 = vpop.permute.xlu0 %1388
    %v1391 = vmul.f32 %v1389, %v86
    %v1392 = vadd.f32 %v1385, %v1391
    %1394 = vset.pattern.permute.xlu0 1
    %1395 = vperm.xlu0 %1394, %v1381
    %v1396 = vpop.permute.xlu0 %1395
    %v1398 = vmul.f32 %v1396, %v91
    %v1399 = vadd.f32 %v1392, %v1398
    %v1400 = vtanh.pop %v1399
    %v1401 = vmul.f32 %v1400, %v1400
    %v1402 = vmul.f32 %v1400, %v96
    %v1403 = vsel %vm144, %v1402, 0.0
    %1404 = vadd.xlane.f32.xlu0 %v1403
    %v1405 = vpop.xlane.xlu0 %1404
    %v1406 = vadd.f32 %v1405, %v148
    %v1407 = vmul.f32 %v1400, %v101
    %v1408 = vsel %vm144, %v1407, 0.0
    %1409 = vadd.xlane.f32.xlu0 %v1408
    %v1410 = vpop.xlane.xlu0 %1409
    %v1411 = vadd.f32 %v1410, %v154
    %v1412 = vmul.f32 %v1401, %v80
    %v1413 = vsel %vm144, %v1412, 0.0
    %1414 = vadd.xlane.f32.xlu0 %v1413
    %v1415 = vpop.xlane.xlu0 %1414
    %v1416 = vadd.f32 %v160, %v1415
    %v1417 = vmul.f32 %v863, %v1406
    %v1418 = vadd.f32 %v1327, %v1417
    %v1419 = vmul.f32 %v863, %v1411
    %v1420 = vadd.f32 %v1334, %v1419
    %1422 = vset.pattern.permute.xlu0 0
    %1423 = vperm.xlu0 %1422, %v1418
    %v1424 = vpop.permute.xlu0 %1423
    %v1426 = vmul.f32 %v1424, %v86
    %v1427 = vadd.f32 %v1385, %v1426
    %1429 = vset.pattern.permute.xlu0 1
    %1430 = vperm.xlu0 %1429, %v1420
    %v1431 = vpop.permute.xlu0 %1430
    %v1433 = vmul.f32 %v1431, %v91
    %v1434 = vadd.f32 %v1427, %v1433
    %v1435 = vtanh.pop %v1434
    %v1436 = vmul.f32 %v1435, %v1435
    %v1437 = vmul.f32 %v1435, %v96
    %v1438 = vsel %vm144, %v1437, 0.0
    %1439 = vadd.xlane.f32.xlu0 %v1438
    %v1440 = vpop.xlane.xlu0 %1439
    %v1441 = vadd.f32 %v1440, %v148
    %v1442 = vmul.f32 %v1435, %v101
    %v1443 = vsel %vm144, %v1442, 0.0
    %1444 = vadd.xlane.f32.xlu0 %v1443
    %v1445 = vpop.xlane.xlu0 %1444
    %v1446 = vadd.f32 %v1445, %v154
    %v1447 = vmul.f32 %v1436, %v80
    %v1448 = vsel %vm144, %v1447, 0.0
    %1449 = vadd.xlane.f32.xlu0 %v1448
    %v1450 = vpop.xlane.xlu0 %1449
    %v1451 = vadd.f32 %v160, %v1450
    %v1452 = vmul.f32 %v938, %v1441
    %v1453 = vadd.f32 %v1327, %v1452
    %v1454 = vmul.f32 %v938, %v1446
    %v1455 = vadd.f32 %v1334, %v1454
    %s1456 = sadd.f32 %s1343, %s825
    %v1457 = vstv %s1456
    %v1458 = vmul.f32 %v1457, %v73
    %v1459 = vadd.f32 %v66, %v1458
    %1461 = vset.pattern.permute.xlu0 0
    %1462 = vperm.xlu0 %1461, %v1453
    %v1463 = vpop.permute.xlu0 %1462
    %v1465 = vmul.f32 %v1463, %v86
    %v1466 = vadd.f32 %v1459, %v1465
    %1468 = vset.pattern.permute.xlu0 1
    %1469 = vperm.xlu0 %1468, %v1455
    %v1470 = vpop.permute.xlu0 %1469
    %v1472 = vmul.f32 %v1470, %v91
    %v1473 = vadd.f32 %v1466, %v1472
    %v1474 = vtanh.pop %v1473
    %v1475 = vmul.f32 %v1474, %v1474
    %v1476 = vmul.f32 %v1474, %v96
    %v1477 = vsel %vm144, %v1476, 0.0
    %1478 = vadd.xlane.f32.xlu0 %v1477
    %v1479 = vpop.xlane.xlu0 %1478
    %v1480 = vadd.f32 %v1479, %v148
    %v1481 = vmul.f32 %v1474, %v101
    %v1482 = vsel %vm144, %v1481, 0.0
    %1483 = vadd.xlane.f32.xlu0 %v1482
    %v1484 = vpop.xlane.xlu0 %1483
    %v1485 = vadd.f32 %v1484, %v154
    %v1486 = vmul.f32 %v1475, %v80
    %v1487 = vsel %vm144, %v1486, 0.0
    %1488 = vadd.xlane.f32.xlu0 %v1487
    %v1489 = vpop.xlane.xlu0 %1488
    %v1490 = vadd.f32 %v160, %v1489
    %v1491 = vmul.f32 %v1406, 2.0
    %v1492 = vadd.f32 %v1367, %v1491
    %v1493 = vmul.f32 %v1441, 2.0
    %v1494 = vadd.f32 %v1492, %v1493
    %v1495 = vadd.f32 %v1494, %v1480
    %v1496 = vmul.f32 %v986, %v1495
    %v1497 = vadd.f32 %v1327, %v1496
    %v1498 = vmul.f32 %v1411, 2.0
    %v1499 = vadd.f32 %v1372, %v1498
    %v1500 = vmul.f32 %v1446, 2.0
    %v1501 = vadd.f32 %v1499, %v1500
    %v1502 = vadd.f32 %v1501, %v1485
    %v1503 = vmul.f32 %v986, %v1502
    %v1504 = vadd.f32 %v1334, %v1503
    %v1505 = vmul.f32 %v1416, 2.0
    %v1506 = vadd.f32 %v1377, %v1505
    %v1507 = vmul.f32 %v1451, 2.0
    %v1508 = vadd.f32 %v1506, %v1507
    %v1509 = vadd.f32 %v1508, %v1490
    %v1510 = vmul.f32 %v986, %v1509
    %v1511 = vadd.f32 %v1341, %v1510
    %1513 = vrot.lane.b32.xlu0 %v1511, 2
    %v1514 = vpop.permute.xlu0 %1513
    %v1516 = vsel %vm112, %v1497, %v1504
    %v1517 = vsel %vm113, %v1516, %v1514
    %s1518 = scalar_lea.vmem %s10, 16
    %1519 = vst.msk [vmem:[%s1518] sm:$0xff] %vm115, %v1517
    %s1520 = sld [smem:[#allocation3 + $0x2]]
    %s1521 = sld [smem:[#allocation3 + $0x3]]
    %s1522 = ssub.f32 %s1521, %s1520
    %v1523 = vrcp.pop 4.0
    %s1524 = vtos %v1523
    %s1525 = smul.f32 %s1522, %s1524
    %s1526 = smul.f32 %s1525, 0.0
    %s1527 = sadd.f32 %s1520, %s1526
    %v1528 = vstv %s1527
    %v1529 = vmul.f32 %v1528, %v73
    %v1530 = vadd.f32 %v66, %v1529
    %1532 = vset.pattern.permute.xlu0 0
    %1533 = vperm.xlu0 %1532, %v1497
    %v1534 = vpop.permute.xlu0 %1533
    %v1536 = vmul.f32 %v1534, %v86
    %v1537 = vadd.f32 %v1530, %v1536
    %1539 = vset.pattern.permute.xlu0 1
    %1540 = vperm.xlu0 %1539, %v1504
    %v1541 = vpop.permute.xlu0 %1540
    %v1543 = vmul.f32 %v1541, %v91
    %v1544 = vadd.f32 %v1537, %v1543
    %v1545 = vtanh.pop %v1544
    %v1546 = vmul.f32 %v1545, %v1545
    %v1547 = vmul.f32 %v1545, %v96
    %v1548 = vsel %vm144, %v1547, 0.0
    %1549 = vadd.xlane.f32.xlu0 %v1548
    %v1550 = vpop.xlane.xlu0 %1549
    %v1551 = vadd.f32 %v1550, %v148
    %v1552 = vmul.f32 %v1545, %v101
    %v1553 = vsel %vm144, %v1552, 0.0
    %1554 = vadd.xlane.f32.xlu0 %v1553
    %v1555 = vpop.xlane.xlu0 %1554
    %v1556 = vadd.f32 %v1555, %v154
    %v1557 = vmul.f32 %v1546, %v80
    %v1558 = vsel %vm144, %v1557, 0.0
    %1559 = vadd.xlane.f32.xlu0 %v1558
    %v1560 = vpop.xlane.xlu0 %1559
    %v1561 = vadd.f32 %v160, %v1560
    %s1562 = smul.f32 %s1525, 0.5
    %v1563 = vstv %s1562
    %v1564 = vmul.f32 %v1563, %v1551
    %v1565 = vadd.f32 %v1497, %v1564
    %v1566 = vmul.f32 %v1563, %v1556
    %v1567 = vadd.f32 %v1504, %v1566
    %s1568 = sadd.f32 %s1527, %s1562
    %v1569 = vstv %s1568
    %v1570 = vmul.f32 %v1569, %v73
    %v1571 = vadd.f32 %v66, %v1570
    %1573 = vset.pattern.permute.xlu0 0
    %1574 = vperm.xlu0 %1573, %v1565
    %v1575 = vpop.permute.xlu0 %1574
    %v1577 = vmul.f32 %v1575, %v86
    %v1578 = vadd.f32 %v1571, %v1577
    %1580 = vset.pattern.permute.xlu0 1
    %1581 = vperm.xlu0 %1580, %v1567
    %v1582 = vpop.permute.xlu0 %1581
    %v1584 = vmul.f32 %v1582, %v91
    %v1585 = vadd.f32 %v1578, %v1584
    %v1586 = vtanh.pop %v1585
    %v1587 = vmul.f32 %v1586, %v1586
    %v1588 = vmul.f32 %v1586, %v96
    %v1589 = vsel %vm144, %v1588, 0.0
    %1590 = vadd.xlane.f32.xlu0 %v1589
    %v1591 = vpop.xlane.xlu0 %1590
    %v1592 = vadd.f32 %v1591, %v148
    %v1593 = vmul.f32 %v1586, %v101
    %v1594 = vsel %vm144, %v1593, 0.0
    %1595 = vadd.xlane.f32.xlu0 %v1594
    %v1596 = vpop.xlane.xlu0 %1595
    %v1597 = vadd.f32 %v1596, %v154
    %v1598 = vmul.f32 %v1587, %v80
    %v1599 = vsel %vm144, %v1598, 0.0
    %1600 = vadd.xlane.f32.xlu0 %v1599
    %v1601 = vpop.xlane.xlu0 %1600
    %v1602 = vadd.f32 %v160, %v1601
    %v1603 = vmul.f32 %v1563, %v1592
    %v1604 = vadd.f32 %v1497, %v1603
    %v1605 = vmul.f32 %v1563, %v1597
    %v1606 = vadd.f32 %v1504, %v1605
    %1608 = vset.pattern.permute.xlu0 0
    %1609 = vperm.xlu0 %1608, %v1604
    %v1610 = vpop.permute.xlu0 %1609
    %v1612 = vmul.f32 %v1610, %v86
    %v1613 = vadd.f32 %v1571, %v1612
    %1615 = vset.pattern.permute.xlu0 1
    %1616 = vperm.xlu0 %1615, %v1606
    %v1617 = vpop.permute.xlu0 %1616
    %v1619 = vmul.f32 %v1617, %v91
    %v1620 = vadd.f32 %v1613, %v1619
    %v1621 = vtanh.pop %v1620
    %v1622 = vmul.f32 %v1621, %v1621
    %v1623 = vmul.f32 %v1621, %v96
    %v1624 = vsel %vm144, %v1623, 0.0
    %1625 = vadd.xlane.f32.xlu0 %v1624
    %v1626 = vpop.xlane.xlu0 %1625
    %v1627 = vadd.f32 %v1626, %v148
    %v1628 = vmul.f32 %v1621, %v101
    %v1629 = vsel %vm144, %v1628, 0.0
    %1630 = vadd.xlane.f32.xlu0 %v1629
    %v1631 = vpop.xlane.xlu0 %1630
    %v1632 = vadd.f32 %v1631, %v154
    %v1633 = vmul.f32 %v1622, %v80
    %v1634 = vsel %vm144, %v1633, 0.0
    %1635 = vadd.xlane.f32.xlu0 %v1634
    %v1636 = vpop.xlane.xlu0 %1635
    %v1637 = vadd.f32 %v160, %v1636
    %v1638 = vstv %s1525
    %v1639 = vmul.f32 %v1638, %v1627
    %v1640 = vadd.f32 %v1497, %v1639
    %v1641 = vmul.f32 %v1638, %v1632
    %v1642 = vadd.f32 %v1504, %v1641
    %s1643 = sadd.f32 %s1527, %s1525
    %v1644 = vstv %s1643
    %v1645 = vmul.f32 %v1644, %v73
    %v1646 = vadd.f32 %v66, %v1645
    %1648 = vset.pattern.permute.xlu0 0
    %1649 = vperm.xlu0 %1648, %v1640
    %v1650 = vpop.permute.xlu0 %1649
    %v1652 = vmul.f32 %v1650, %v86
    %v1653 = vadd.f32 %v1646, %v1652
    %1655 = vset.pattern.permute.xlu0 1
    %1656 = vperm.xlu0 %1655, %v1642
    %v1657 = vpop.permute.xlu0 %1656
    %v1659 = vmul.f32 %v1657, %v91
    %v1660 = vadd.f32 %v1653, %v1659
    %v1661 = vtanh.pop %v1660
    %v1662 = vmul.f32 %v1661, %v1661
    %v1663 = vmul.f32 %v1661, %v96
    %v1664 = vsel %vm144, %v1663, 0.0
    %1665 = vadd.xlane.f32.xlu0 %v1664
    %v1666 = vpop.xlane.xlu0 %1665
    %v1667 = vadd.f32 %v1666, %v148
    %v1668 = vmul.f32 %v1661, %v101
    %v1669 = vsel %vm144, %v1668, 0.0
    %1670 = vadd.xlane.f32.xlu0 %v1669
    %v1671 = vpop.xlane.xlu0 %1670
    %v1672 = vadd.f32 %v1671, %v154
    %v1673 = vmul.f32 %v1662, %v80
    %v1674 = vsel %vm144, %v1673, 0.0
    %1675 = vadd.xlane.f32.xlu0 %v1674
    %v1676 = vpop.xlane.xlu0 %1675
    %v1677 = vadd.f32 %v160, %v1676
    %v1678 = vrcp.pop 6.0
    %s1679 = vtos %v1678
    %s1680 = smul.f32 %s1525, %s1679
    %v1681 = vmul.f32 %v1592, 2.0
    %v1682 = vadd.f32 %v1551, %v1681
    %v1683 = vmul.f32 %v1627, 2.0
    %v1684 = vadd.f32 %v1682, %v1683
    %v1685 = vadd.f32 %v1684, %v1667
    %v1686 = vstv %s1680
    %v1687 = vmul.f32 %v1686, %v1685
    %v1688 = vadd.f32 %v1497, %v1687
    %v1689 = vmul.f32 %v1597, 2.0
    %v1690 = vadd.f32 %v1556, %v1689
    %v1691 = vmul.f32 %v1632, 2.0
    %v1692 = vadd.f32 %v1690, %v1691
    %v1693 = vadd.f32 %v1692, %v1672
    %v1694 = vmul.f32 %v1686, %v1693
    %v1695 = vadd.f32 %v1504, %v1694
    %v1696 = vmul.f32 %v1602, 2.0
    %v1697 = vadd.f32 %v1561, %v1696
    %v1698 = vmul.f32 %v1637, 2.0
    %v1699 = vadd.f32 %v1697, %v1698
    %v1700 = vadd.f32 %v1699, %v1677
    %v1701 = vmul.f32 %v1686, %v1700
    %v1702 = vadd.f32 %v1511, %v1701
    %s1703 = sadd.f32 %s1520, %s1525
    %v1704 = vstv %s1703
    %v1705 = vmul.f32 %v1704, %v73
    %v1706 = vadd.f32 %v66, %v1705
    %1708 = vset.pattern.permute.xlu0 0
    %1709 = vperm.xlu0 %1708, %v1688
    %v1710 = vpop.permute.xlu0 %1709
    %v1712 = vmul.f32 %v1710, %v86
    %v1713 = vadd.f32 %v1706, %v1712
    %1715 = vset.pattern.permute.xlu0 1
    %1716 = vperm.xlu0 %1715, %v1695
    %v1717 = vpop.permute.xlu0 %1716
    %v1719 = vmul.f32 %v1717, %v91
    %v1720 = vadd.f32 %v1713, %v1719
    %v1721 = vtanh.pop %v1720
    %v1722 = vmul.f32 %v1721, %v1721
    %v1723 = vmul.f32 %v1721, %v96
    %v1724 = vsel %vm144, %v1723, 0.0
    %1725 = vadd.xlane.f32.xlu0 %v1724
    %v1726 = vpop.xlane.xlu0 %1725
    %v1727 = vadd.f32 %v1726, %v148
    %v1728 = vmul.f32 %v1721, %v101
    %v1729 = vsel %vm144, %v1728, 0.0
    %1730 = vadd.xlane.f32.xlu0 %v1729
    %v1731 = vpop.xlane.xlu0 %1730
    %v1732 = vadd.f32 %v1731, %v154
    %v1733 = vmul.f32 %v1722, %v80
    %v1734 = vsel %vm144, %v1733, 0.0
    %1735 = vadd.xlane.f32.xlu0 %v1734
    %v1736 = vpop.xlane.xlu0 %1735
    %v1737 = vadd.f32 %v160, %v1736
    %v1738 = vmul.f32 %v1563, %v1727
    %v1739 = vadd.f32 %v1688, %v1738
    %v1740 = vmul.f32 %v1563, %v1732
    %v1741 = vadd.f32 %v1695, %v1740
    %s1742 = sadd.f32 %s1703, %s1562
    %v1743 = vstv %s1742
    %v1744 = vmul.f32 %v1743, %v73
    %v1745 = vadd.f32 %v66, %v1744
    %1747 = vset.pattern.permute.xlu0 0
    %1748 = vperm.xlu0 %1747, %v1739
    %v1749 = vpop.permute.xlu0 %1748
    %v1751 = vmul.f32 %v1749, %v86
    %v1752 = vadd.f32 %v1745, %v1751
    %1754 = vset.pattern.permute.xlu0 1
    %1755 = vperm.xlu0 %1754, %v1741
    %v1756 = vpop.permute.xlu0 %1755
    %v1758 = vmul.f32 %v1756, %v91
    %v1759 = vadd.f32 %v1752, %v1758
    %v1760 = vtanh.pop %v1759
    %v1761 = vmul.f32 %v1760, %v1760
    %v1762 = vmul.f32 %v1760, %v96
    %v1763 = vsel %vm144, %v1762, 0.0
    %1764 = vadd.xlane.f32.xlu0 %v1763
    %v1765 = vpop.xlane.xlu0 %1764
    %v1766 = vadd.f32 %v1765, %v148
    %v1767 = vmul.f32 %v1760, %v101
    %v1768 = vsel %vm144, %v1767, 0.0
    %1769 = vadd.xlane.f32.xlu0 %v1768
    %v1770 = vpop.xlane.xlu0 %1769
    %v1771 = vadd.f32 %v1770, %v154
    %v1772 = vmul.f32 %v1761, %v80
    %v1773 = vsel %vm144, %v1772, 0.0
    %1774 = vadd.xlane.f32.xlu0 %v1773
    %v1775 = vpop.xlane.xlu0 %1774
    %v1776 = vadd.f32 %v160, %v1775
    %v1777 = vmul.f32 %v1563, %v1766
    %v1778 = vadd.f32 %v1688, %v1777
    %v1779 = vmul.f32 %v1563, %v1771
    %v1780 = vadd.f32 %v1695, %v1779
    %1782 = vset.pattern.permute.xlu0 0
    %1783 = vperm.xlu0 %1782, %v1778
    %v1784 = vpop.permute.xlu0 %1783
    %v1786 = vmul.f32 %v1784, %v86
    %v1787 = vadd.f32 %v1745, %v1786
    %1789 = vset.pattern.permute.xlu0 1
    %1790 = vperm.xlu0 %1789, %v1780
    %v1791 = vpop.permute.xlu0 %1790
    %v1793 = vmul.f32 %v1791, %v91
    %v1794 = vadd.f32 %v1787, %v1793
    %v1795 = vtanh.pop %v1794
    %v1796 = vmul.f32 %v1795, %v1795
    %v1797 = vmul.f32 %v1795, %v96
    %v1798 = vsel %vm144, %v1797, 0.0
    %1799 = vadd.xlane.f32.xlu0 %v1798
    %v1800 = vpop.xlane.xlu0 %1799
    %v1801 = vadd.f32 %v1800, %v148
    %v1802 = vmul.f32 %v1795, %v101
    %v1803 = vsel %vm144, %v1802, 0.0
    %1804 = vadd.xlane.f32.xlu0 %v1803
    %v1805 = vpop.xlane.xlu0 %1804
    %v1806 = vadd.f32 %v1805, %v154
    %v1807 = vmul.f32 %v1796, %v80
    %v1808 = vsel %vm144, %v1807, 0.0
    %1809 = vadd.xlane.f32.xlu0 %v1808
    %v1810 = vpop.xlane.xlu0 %1809
    %v1811 = vadd.f32 %v160, %v1810
    %v1812 = vmul.f32 %v1638, %v1801
    %v1813 = vadd.f32 %v1688, %v1812
    %v1814 = vmul.f32 %v1638, %v1806
    %v1815 = vadd.f32 %v1695, %v1814
    %s1816 = sadd.f32 %s1703, %s1525
    %v1817 = vstv %s1816
    %v1818 = vmul.f32 %v1817, %v73
    %v1819 = vadd.f32 %v66, %v1818
    %1821 = vset.pattern.permute.xlu0 0
    %1822 = vperm.xlu0 %1821, %v1813
    %v1823 = vpop.permute.xlu0 %1822
    %v1825 = vmul.f32 %v1823, %v86
    %v1826 = vadd.f32 %v1819, %v1825
    %1828 = vset.pattern.permute.xlu0 1
    %1829 = vperm.xlu0 %1828, %v1815
    %v1830 = vpop.permute.xlu0 %1829
    %v1832 = vmul.f32 %v1830, %v91
    %v1833 = vadd.f32 %v1826, %v1832
    %v1834 = vtanh.pop %v1833
    %v1835 = vmul.f32 %v1834, %v1834
    %v1836 = vmul.f32 %v1834, %v96
    %v1837 = vsel %vm144, %v1836, 0.0
    %1838 = vadd.xlane.f32.xlu0 %v1837
    %v1839 = vpop.xlane.xlu0 %1838
    %v1840 = vadd.f32 %v1839, %v148
    %v1841 = vmul.f32 %v1834, %v101
    %v1842 = vsel %vm144, %v1841, 0.0
    %1843 = vadd.xlane.f32.xlu0 %v1842
    %v1844 = vpop.xlane.xlu0 %1843
    %v1845 = vadd.f32 %v1844, %v154
    %v1846 = vmul.f32 %v1835, %v80
    %v1847 = vsel %vm144, %v1846, 0.0
    %1848 = vadd.xlane.f32.xlu0 %v1847
    %v1849 = vpop.xlane.xlu0 %1848
    %v1850 = vadd.f32 %v160, %v1849
    %v1851 = vmul.f32 %v1766, 2.0
    %v1852 = vadd.f32 %v1727, %v1851
    %v1853 = vmul.f32 %v1801, 2.0
    %v1854 = vadd.f32 %v1852, %v1853
    %v1855 = vadd.f32 %v1854, %v1840
    %v1856 = vmul.f32 %v1686, %v1855
    %v1857 = vadd.f32 %v1688, %v1856
    %v1858 = vmul.f32 %v1771, 2.0
    %v1859 = vadd.f32 %v1732, %v1858
    %v1860 = vmul.f32 %v1806, 2.0
    %v1861 = vadd.f32 %v1859, %v1860
    %v1862 = vadd.f32 %v1861, %v1845
    %v1863 = vmul.f32 %v1686, %v1862
    %v1864 = vadd.f32 %v1695, %v1863
    %v1865 = vmul.f32 %v1776, 2.0
    %v1866 = vadd.f32 %v1737, %v1865
    %v1867 = vmul.f32 %v1811, 2.0
    %v1868 = vadd.f32 %v1866, %v1867
    %v1869 = vadd.f32 %v1868, %v1850
    %v1870 = vmul.f32 %v1686, %v1869
    %v1871 = vadd.f32 %v1702, %v1870
    %s1872 = smul.f32 %s1525, 2.0
    %s1873 = sadd.f32 %s1520, %s1872
    %v1874 = vstv %s1873
    %v1875 = vmul.f32 %v1874, %v73
    %v1876 = vadd.f32 %v66, %v1875
    %1878 = vset.pattern.permute.xlu0 0
    %1879 = vperm.xlu0 %1878, %v1857
    %v1880 = vpop.permute.xlu0 %1879
    %v1882 = vmul.f32 %v1880, %v86
    %v1883 = vadd.f32 %v1876, %v1882
    %1885 = vset.pattern.permute.xlu0 1
    %1886 = vperm.xlu0 %1885, %v1864
    %v1887 = vpop.permute.xlu0 %1886
    %v1889 = vmul.f32 %v1887, %v91
    %v1890 = vadd.f32 %v1883, %v1889
    %v1891 = vtanh.pop %v1890
    %v1892 = vmul.f32 %v1891, %v1891
    %v1893 = vmul.f32 %v1891, %v96
    %v1894 = vsel %vm144, %v1893, 0.0
    %1895 = vadd.xlane.f32.xlu0 %v1894
    %v1896 = vpop.xlane.xlu0 %1895
    %v1897 = vadd.f32 %v1896, %v148
    %v1898 = vmul.f32 %v1891, %v101
    %v1899 = vsel %vm144, %v1898, 0.0
    %1900 = vadd.xlane.f32.xlu0 %v1899
    %v1901 = vpop.xlane.xlu0 %1900
    %v1902 = vadd.f32 %v1901, %v154
    %v1903 = vmul.f32 %v1892, %v80
    %v1904 = vsel %vm144, %v1903, 0.0
    %1905 = vadd.xlane.f32.xlu0 %v1904
    %v1906 = vpop.xlane.xlu0 %1905
    %v1907 = vadd.f32 %v160, %v1906
    %v1908 = vmul.f32 %v1563, %v1897
    %v1909 = vadd.f32 %v1857, %v1908
    %v1910 = vmul.f32 %v1563, %v1902
    %v1911 = vadd.f32 %v1864, %v1910
    %s1912 = sadd.f32 %s1873, %s1562
    %v1913 = vstv %s1912
    %v1914 = vmul.f32 %v1913, %v73
    %v1915 = vadd.f32 %v66, %v1914
    %1917 = vset.pattern.permute.xlu0 0
    %1918 = vperm.xlu0 %1917, %v1909
    %v1919 = vpop.permute.xlu0 %1918
    %v1921 = vmul.f32 %v1919, %v86
    %v1922 = vadd.f32 %v1915, %v1921
    %1924 = vset.pattern.permute.xlu0 1
    %1925 = vperm.xlu0 %1924, %v1911
    %v1926 = vpop.permute.xlu0 %1925
    %v1928 = vmul.f32 %v1926, %v91
    %v1929 = vadd.f32 %v1922, %v1928
    %v1930 = vtanh.pop %v1929
    %v1931 = vmul.f32 %v1930, %v1930
    %v1932 = vmul.f32 %v1930, %v96
    %v1933 = vsel %vm144, %v1932, 0.0
    %1934 = vadd.xlane.f32.xlu0 %v1933
    %v1935 = vpop.xlane.xlu0 %1934
    %v1936 = vadd.f32 %v1935, %v148
    %v1937 = vmul.f32 %v1930, %v101
    %v1938 = vsel %vm144, %v1937, 0.0
    %1939 = vadd.xlane.f32.xlu0 %v1938
    %v1940 = vpop.xlane.xlu0 %1939
    %v1941 = vadd.f32 %v1940, %v154
    %v1942 = vmul.f32 %v1931, %v80
    %v1943 = vsel %vm144, %v1942, 0.0
    %1944 = vadd.xlane.f32.xlu0 %v1943
    %v1945 = vpop.xlane.xlu0 %1944
    %v1946 = vadd.f32 %v160, %v1945
    %v1947 = vmul.f32 %v1563, %v1936
    %v1948 = vadd.f32 %v1857, %v1947
    %v1949 = vmul.f32 %v1563, %v1941
    %v1950 = vadd.f32 %v1864, %v1949
    %1952 = vset.pattern.permute.xlu0 0
    %1953 = vperm.xlu0 %1952, %v1948
    %v1954 = vpop.permute.xlu0 %1953
    %v1956 = vmul.f32 %v1954, %v86
    %v1957 = vadd.f32 %v1915, %v1956
    %1959 = vset.pattern.permute.xlu0 1
    %1960 = vperm.xlu0 %1959, %v1950
    %v1961 = vpop.permute.xlu0 %1960
    %v1963 = vmul.f32 %v1961, %v91
    %v1964 = vadd.f32 %v1957, %v1963
    %v1965 = vtanh.pop %v1964
    %v1966 = vmul.f32 %v1965, %v1965
    %v1967 = vmul.f32 %v1965, %v96
    %v1968 = vsel %vm144, %v1967, 0.0
    %1969 = vadd.xlane.f32.xlu0 %v1968
    %v1970 = vpop.xlane.xlu0 %1969
    %v1971 = vadd.f32 %v1970, %v148
    %v1972 = vmul.f32 %v1965, %v101
    %v1973 = vsel %vm144, %v1972, 0.0
    %1974 = vadd.xlane.f32.xlu0 %v1973
    %v1975 = vpop.xlane.xlu0 %1974
    %v1976 = vadd.f32 %v1975, %v154
    %v1977 = vmul.f32 %v1966, %v80
    %v1978 = vsel %vm144, %v1977, 0.0
    %1979 = vadd.xlane.f32.xlu0 %v1978
    %v1980 = vpop.xlane.xlu0 %1979
    %v1981 = vadd.f32 %v160, %v1980
    %v1982 = vmul.f32 %v1638, %v1971
    %v1983 = vadd.f32 %v1857, %v1982
    %v1984 = vmul.f32 %v1638, %v1976
    %v1985 = vadd.f32 %v1864, %v1984
    %s1986 = sadd.f32 %s1873, %s1525
    %v1987 = vstv %s1986
    %v1988 = vmul.f32 %v1987, %v73
    %v1989 = vadd.f32 %v66, %v1988
    %1991 = vset.pattern.permute.xlu0 0
    %1992 = vperm.xlu0 %1991, %v1983
    %v1993 = vpop.permute.xlu0 %1992
    %v1995 = vmul.f32 %v1993, %v86
    %v1996 = vadd.f32 %v1989, %v1995
    %1998 = vset.pattern.permute.xlu0 1
    %1999 = vperm.xlu0 %1998, %v1985
    %v2000 = vpop.permute.xlu0 %1999
    %v2002 = vmul.f32 %v2000, %v91
    %v2003 = vadd.f32 %v1996, %v2002
    %v2004 = vtanh.pop %v2003
    %v2005 = vmul.f32 %v2004, %v2004
    %v2006 = vmul.f32 %v2004, %v96
    %v2007 = vsel %vm144, %v2006, 0.0
    %2008 = vadd.xlane.f32.xlu0 %v2007
    %v2009 = vpop.xlane.xlu0 %2008
    %v2010 = vadd.f32 %v2009, %v148
    %v2011 = vmul.f32 %v2004, %v101
    %v2012 = vsel %vm144, %v2011, 0.0
    %2013 = vadd.xlane.f32.xlu0 %v2012
    %v2014 = vpop.xlane.xlu0 %2013
    %v2015 = vadd.f32 %v2014, %v154
    %v2016 = vmul.f32 %v2005, %v80
    %v2017 = vsel %vm144, %v2016, 0.0
    %2018 = vadd.xlane.f32.xlu0 %v2017
    %v2019 = vpop.xlane.xlu0 %2018
    %v2020 = vadd.f32 %v160, %v2019
    %v2021 = vmul.f32 %v1936, 2.0
    %v2022 = vadd.f32 %v1897, %v2021
    %v2023 = vmul.f32 %v1971, 2.0
    %v2024 = vadd.f32 %v2022, %v2023
    %v2025 = vadd.f32 %v2024, %v2010
    %v2026 = vmul.f32 %v1686, %v2025
    %v2027 = vadd.f32 %v1857, %v2026
    %v2028 = vmul.f32 %v1941, 2.0
    %v2029 = vadd.f32 %v1902, %v2028
    %v2030 = vmul.f32 %v1976, 2.0
    %v2031 = vadd.f32 %v2029, %v2030
    %v2032 = vadd.f32 %v2031, %v2015
    %v2033 = vmul.f32 %v1686, %v2032
    %v2034 = vadd.f32 %v1864, %v2033
    %v2035 = vmul.f32 %v1946, 2.0
    %v2036 = vadd.f32 %v1907, %v2035
    %v2037 = vmul.f32 %v1981, 2.0
    %v2038 = vadd.f32 %v2036, %v2037
    %v2039 = vadd.f32 %v2038, %v2020
    %v2040 = vmul.f32 %v1686, %v2039
    %v2041 = vadd.f32 %v1871, %v2040
    %s2042 = smul.f32 %s1525, 3.0
    %s2043 = sadd.f32 %s1520, %s2042
    %v2044 = vstv %s2043
    %v2045 = vmul.f32 %v2044, %v73
    %v2046 = vadd.f32 %v66, %v2045
    %2048 = vset.pattern.permute.xlu0 0
    %2049 = vperm.xlu0 %2048, %v2027
    %v2050 = vpop.permute.xlu0 %2049
    %v2052 = vmul.f32 %v2050, %v86
    %v2053 = vadd.f32 %v2046, %v2052
    %2055 = vset.pattern.permute.xlu0 1
    %2056 = vperm.xlu0 %2055, %v2034
    %v2057 = vpop.permute.xlu0 %2056
    %v2059 = vmul.f32 %v2057, %v91
    %v2060 = vadd.f32 %v2053, %v2059
    %v2061 = vtanh.pop %v2060
    %v2062 = vmul.f32 %v2061, %v2061
    %v2063 = vmul.f32 %v2061, %v96
    %v2064 = vsel %vm144, %v2063, 0.0
    %2065 = vadd.xlane.f32.xlu0 %v2064
    %v2066 = vpop.xlane.xlu0 %2065
    %v2067 = vadd.f32 %v2066, %v148
    %v2068 = vmul.f32 %v2061, %v101
    %v2069 = vsel %vm144, %v2068, 0.0
    %2070 = vadd.xlane.f32.xlu0 %v2069
    %v2071 = vpop.xlane.xlu0 %2070
    %v2072 = vadd.f32 %v2071, %v154
    %v2073 = vmul.f32 %v2062, %v80
    %v2074 = vsel %vm144, %v2073, 0.0
    %2075 = vadd.xlane.f32.xlu0 %v2074
    %v2076 = vpop.xlane.xlu0 %2075
    %v2077 = vadd.f32 %v160, %v2076
    %v2078 = vmul.f32 %v1563, %v2067
    %v2079 = vadd.f32 %v2027, %v2078
    %v2080 = vmul.f32 %v1563, %v2072
    %v2081 = vadd.f32 %v2034, %v2080
    %s2082 = sadd.f32 %s2043, %s1562
    %v2083 = vstv %s2082
    %v2084 = vmul.f32 %v2083, %v73
    %v2085 = vadd.f32 %v66, %v2084
    %2087 = vset.pattern.permute.xlu0 0
    %2088 = vperm.xlu0 %2087, %v2079
    %v2089 = vpop.permute.xlu0 %2088
    %v2091 = vmul.f32 %v2089, %v86
    %v2092 = vadd.f32 %v2085, %v2091
    %2094 = vset.pattern.permute.xlu0 1
    %2095 = vperm.xlu0 %2094, %v2081
    %v2096 = vpop.permute.xlu0 %2095
    %v2098 = vmul.f32 %v2096, %v91
    %v2099 = vadd.f32 %v2092, %v2098
    %v2100 = vtanh.pop %v2099
    %v2101 = vmul.f32 %v2100, %v2100
    %v2102 = vmul.f32 %v2100, %v96
    %v2103 = vsel %vm144, %v2102, 0.0
    %2104 = vadd.xlane.f32.xlu0 %v2103
    %v2105 = vpop.xlane.xlu0 %2104
    %v2106 = vadd.f32 %v2105, %v148
    %v2107 = vmul.f32 %v2100, %v101
    %v2108 = vsel %vm144, %v2107, 0.0
    %2109 = vadd.xlane.f32.xlu0 %v2108
    %v2110 = vpop.xlane.xlu0 %2109
    %v2111 = vadd.f32 %v2110, %v154
    %v2112 = vmul.f32 %v2101, %v80
    %v2113 = vsel %vm144, %v2112, 0.0
    %2114 = vadd.xlane.f32.xlu0 %v2113
    %v2115 = vpop.xlane.xlu0 %2114
    %v2116 = vadd.f32 %v160, %v2115
    %v2117 = vmul.f32 %v1563, %v2106
    %v2118 = vadd.f32 %v2027, %v2117
    %v2119 = vmul.f32 %v1563, %v2111
    %v2120 = vadd.f32 %v2034, %v2119
    %2122 = vset.pattern.permute.xlu0 0
    %2123 = vperm.xlu0 %2122, %v2118
    %v2124 = vpop.permute.xlu0 %2123
    %v2126 = vmul.f32 %v2124, %v86
    %v2127 = vadd.f32 %v2085, %v2126
    %2129 = vset.pattern.permute.xlu0 1
    %2130 = vperm.xlu0 %2129, %v2120
    %v2131 = vpop.permute.xlu0 %2130
    %v2133 = vmul.f32 %v2131, %v91
    %v2134 = vadd.f32 %v2127, %v2133
    %v2135 = vtanh.pop %v2134
    %v2136 = vmul.f32 %v2135, %v2135
    %v2137 = vmul.f32 %v2135, %v96
    %v2138 = vsel %vm144, %v2137, 0.0
    %2139 = vadd.xlane.f32.xlu0 %v2138
    %v2140 = vpop.xlane.xlu0 %2139
    %v2141 = vadd.f32 %v2140, %v148
    %v2142 = vmul.f32 %v2135, %v101
    %v2143 = vsel %vm144, %v2142, 0.0
    %2144 = vadd.xlane.f32.xlu0 %v2143
    %v2145 = vpop.xlane.xlu0 %2144
    %v2146 = vadd.f32 %v2145, %v154
    %v2147 = vmul.f32 %v2136, %v80
    %v2148 = vsel %vm144, %v2147, 0.0
    %2149 = vadd.xlane.f32.xlu0 %v2148
    %v2150 = vpop.xlane.xlu0 %2149
    %v2151 = vadd.f32 %v160, %v2150
    %v2152 = vmul.f32 %v1638, %v2141
    %v2153 = vadd.f32 %v2027, %v2152
    %v2154 = vmul.f32 %v1638, %v2146
    %v2155 = vadd.f32 %v2034, %v2154
    %s2156 = sadd.f32 %s2043, %s1525
    %v2157 = vstv %s2156
    %v2158 = vmul.f32 %v2157, %v73
    %v2159 = vadd.f32 %v66, %v2158
    %2161 = vset.pattern.permute.xlu0 0
    %2162 = vperm.xlu0 %2161, %v2153
    %v2163 = vpop.permute.xlu0 %2162
    %v2165 = vmul.f32 %v2163, %v86
    %v2166 = vadd.f32 %v2159, %v2165
    %2168 = vset.pattern.permute.xlu0 1
    %2169 = vperm.xlu0 %2168, %v2155
    %v2170 = vpop.permute.xlu0 %2169
    %v2172 = vmul.f32 %v2170, %v91
    %v2173 = vadd.f32 %v2166, %v2172
    %v2174 = vtanh.pop %v2173
    %v2175 = vmul.f32 %v2174, %v2174
    %v2176 = vmul.f32 %v2174, %v96
    %v2177 = vsel %vm144, %v2176, 0.0
    %2178 = vadd.xlane.f32.xlu0 %v2177
    %v2179 = vpop.xlane.xlu0 %2178
    %v2180 = vadd.f32 %v2179, %v148
    %v2181 = vmul.f32 %v2174, %v101
    %v2182 = vsel %vm144, %v2181, 0.0
    %2183 = vadd.xlane.f32.xlu0 %v2182
    %v2184 = vpop.xlane.xlu0 %2183
    %v2185 = vadd.f32 %v2184, %v154
    %v2186 = vmul.f32 %v2175, %v80
    %v2187 = vsel %vm144, %v2186, 0.0
    %2188 = vadd.xlane.f32.xlu0 %v2187
    %v2189 = vpop.xlane.xlu0 %2188
    %v2190 = vadd.f32 %v160, %v2189
    %v2191 = vmul.f32 %v2106, 2.0
    %v2192 = vadd.f32 %v2067, %v2191
    %v2193 = vmul.f32 %v2141, 2.0
    %v2194 = vadd.f32 %v2192, %v2193
    %v2195 = vadd.f32 %v2194, %v2180
    %v2196 = vmul.f32 %v1686, %v2195
    %v2197 = vadd.f32 %v2027, %v2196
    %v2198 = vmul.f32 %v2111, 2.0
    %v2199 = vadd.f32 %v2072, %v2198
    %v2200 = vmul.f32 %v2146, 2.0
    %v2201 = vadd.f32 %v2199, %v2200
    %v2202 = vadd.f32 %v2201, %v2185
    %v2203 = vmul.f32 %v1686, %v2202
    %v2204 = vadd.f32 %v2034, %v2203
    %v2205 = vmul.f32 %v2116, 2.0
    %v2206 = vadd.f32 %v2077, %v2205
    %v2207 = vmul.f32 %v2151, 2.0
    %v2208 = vadd.f32 %v2206, %v2207
    %v2209 = vadd.f32 %v2208, %v2190
    %v2210 = vmul.f32 %v1686, %v2209
    %v2211 = vadd.f32 %v2041, %v2210
    %2213 = vrot.lane.b32.xlu0 %v2211, 2
    %v2214 = vpop.permute.xlu0 %2213
    %v2216 = vsel %vm112, %v2197, %v2204
    %v2217 = vsel %vm113, %v2216, %v2214
    %s2218 = scalar_lea.vmem %s10, 24
    %2219 = vst.msk [vmem:[%s2218] sm:$0xff] %vm115, %v2217
    %s2220 = sld [smem:[#allocation3 + $0x3]]
    %s2221 = sld [smem:[#allocation3 + $0x4]]
    %s2222 = ssub.f32 %s2221, %s2220
    %v2223 = vrcp.pop 4.0
    %s2224 = vtos %v2223
    %s2225 = smul.f32 %s2222, %s2224
    %s2226 = smul.f32 %s2225, 0.0
    %s2227 = sadd.f32 %s2220, %s2226
    %v2228 = vstv %s2227
    %v2229 = vmul.f32 %v2228, %v73
    %v2230 = vadd.f32 %v66, %v2229
    %2232 = vset.pattern.permute.xlu0 0
    %2233 = vperm.xlu0 %2232, %v2197
    %v2234 = vpop.permute.xlu0 %2233
    %v2236 = vmul.f32 %v2234, %v86
    %v2237 = vadd.f32 %v2230, %v2236
    %2239 = vset.pattern.permute.xlu0 1
    %2240 = vperm.xlu0 %2239, %v2204
    %v2241 = vpop.permute.xlu0 %2240
    %v2243 = vmul.f32 %v2241, %v91
    %v2244 = vadd.f32 %v2237, %v2243
    %v2245 = vtanh.pop %v2244
    %v2246 = vmul.f32 %v2245, %v2245
    %v2247 = vmul.f32 %v2245, %v96
    %v2248 = vsel %vm144, %v2247, 0.0
    %2249 = vadd.xlane.f32.xlu0 %v2248
    %v2250 = vpop.xlane.xlu0 %2249
    %v2251 = vadd.f32 %v2250, %v148
    %v2252 = vmul.f32 %v2245, %v101
    %v2253 = vsel %vm144, %v2252, 0.0
    %2254 = vadd.xlane.f32.xlu0 %v2253
    %v2255 = vpop.xlane.xlu0 %2254
    %v2256 = vadd.f32 %v2255, %v154
    %v2257 = vmul.f32 %v2246, %v80
    %v2258 = vsel %vm144, %v2257, 0.0
    %2259 = vadd.xlane.f32.xlu0 %v2258
    %v2260 = vpop.xlane.xlu0 %2259
    %v2261 = vadd.f32 %v160, %v2260
    %s2262 = smul.f32 %s2225, 0.5
    %v2263 = vstv %s2262
    %v2264 = vmul.f32 %v2263, %v2251
    %v2265 = vadd.f32 %v2197, %v2264
    %v2266 = vmul.f32 %v2263, %v2256
    %v2267 = vadd.f32 %v2204, %v2266
    %s2268 = sadd.f32 %s2227, %s2262
    %v2269 = vstv %s2268
    %v2270 = vmul.f32 %v2269, %v73
    %v2271 = vadd.f32 %v66, %v2270
    %2273 = vset.pattern.permute.xlu0 0
    %2274 = vperm.xlu0 %2273, %v2265
    %v2275 = vpop.permute.xlu0 %2274
    %v2277 = vmul.f32 %v2275, %v86
    %v2278 = vadd.f32 %v2271, %v2277
    %2280 = vset.pattern.permute.xlu0 1
    %2281 = vperm.xlu0 %2280, %v2267
    %v2282 = vpop.permute.xlu0 %2281
    %v2284 = vmul.f32 %v2282, %v91
    %v2285 = vadd.f32 %v2278, %v2284
    %v2286 = vtanh.pop %v2285
    %v2287 = vmul.f32 %v2286, %v2286
    %v2288 = vmul.f32 %v2286, %v96
    %v2289 = vsel %vm144, %v2288, 0.0
    %2290 = vadd.xlane.f32.xlu0 %v2289
    %v2291 = vpop.xlane.xlu0 %2290
    %v2292 = vadd.f32 %v2291, %v148
    %v2293 = vmul.f32 %v2286, %v101
    %v2294 = vsel %vm144, %v2293, 0.0
    %2295 = vadd.xlane.f32.xlu0 %v2294
    %v2296 = vpop.xlane.xlu0 %2295
    %v2297 = vadd.f32 %v2296, %v154
    %v2298 = vmul.f32 %v2287, %v80
    %v2299 = vsel %vm144, %v2298, 0.0
    %2300 = vadd.xlane.f32.xlu0 %v2299
    %v2301 = vpop.xlane.xlu0 %2300
    %v2302 = vadd.f32 %v160, %v2301
    %v2303 = vmul.f32 %v2263, %v2292
    %v2304 = vadd.f32 %v2197, %v2303
    %v2305 = vmul.f32 %v2263, %v2297
    %v2306 = vadd.f32 %v2204, %v2305
    %2308 = vset.pattern.permute.xlu0 0
    %2309 = vperm.xlu0 %2308, %v2304
    %v2310 = vpop.permute.xlu0 %2309
    %v2312 = vmul.f32 %v2310, %v86
    %v2313 = vadd.f32 %v2271, %v2312
    %2315 = vset.pattern.permute.xlu0 1
    %2316 = vperm.xlu0 %2315, %v2306
    %v2317 = vpop.permute.xlu0 %2316
    %v2319 = vmul.f32 %v2317, %v91
    %v2320 = vadd.f32 %v2313, %v2319
    %v2321 = vtanh.pop %v2320
    %v2322 = vmul.f32 %v2321, %v2321
    %v2323 = vmul.f32 %v2321, %v96
    %v2324 = vsel %vm144, %v2323, 0.0
    %2325 = vadd.xlane.f32.xlu0 %v2324
    %v2326 = vpop.xlane.xlu0 %2325
    %v2327 = vadd.f32 %v2326, %v148
    %v2328 = vmul.f32 %v2321, %v101
    %v2329 = vsel %vm144, %v2328, 0.0
    %2330 = vadd.xlane.f32.xlu0 %v2329
    %v2331 = vpop.xlane.xlu0 %2330
    %v2332 = vadd.f32 %v2331, %v154
    %v2333 = vmul.f32 %v2322, %v80
    %v2334 = vsel %vm144, %v2333, 0.0
    %2335 = vadd.xlane.f32.xlu0 %v2334
    %v2336 = vpop.xlane.xlu0 %2335
    %v2337 = vadd.f32 %v160, %v2336
    %v2338 = vstv %s2225
    %v2339 = vmul.f32 %v2338, %v2327
    %v2340 = vadd.f32 %v2197, %v2339
    %v2341 = vmul.f32 %v2338, %v2332
    %v2342 = vadd.f32 %v2204, %v2341
    %s2343 = sadd.f32 %s2227, %s2225
    %v2344 = vstv %s2343
    %v2345 = vmul.f32 %v2344, %v73
    %v2346 = vadd.f32 %v66, %v2345
    %2348 = vset.pattern.permute.xlu0 0
    %2349 = vperm.xlu0 %2348, %v2340
    %v2350 = vpop.permute.xlu0 %2349
    %v2352 = vmul.f32 %v2350, %v86
    %v2353 = vadd.f32 %v2346, %v2352
    %2355 = vset.pattern.permute.xlu0 1
    %2356 = vperm.xlu0 %2355, %v2342
    %v2357 = vpop.permute.xlu0 %2356
    %v2359 = vmul.f32 %v2357, %v91
    %v2360 = vadd.f32 %v2353, %v2359
    %v2361 = vtanh.pop %v2360
    %v2362 = vmul.f32 %v2361, %v2361
    %v2363 = vmul.f32 %v2361, %v96
    %v2364 = vsel %vm144, %v2363, 0.0
    %2365 = vadd.xlane.f32.xlu0 %v2364
    %v2366 = vpop.xlane.xlu0 %2365
    %v2367 = vadd.f32 %v2366, %v148
    %v2368 = vmul.f32 %v2361, %v101
    %v2369 = vsel %vm144, %v2368, 0.0
    %2370 = vadd.xlane.f32.xlu0 %v2369
    %v2371 = vpop.xlane.xlu0 %2370
    %v2372 = vadd.f32 %v2371, %v154
    %v2373 = vmul.f32 %v2362, %v80
    %v2374 = vsel %vm144, %v2373, 0.0
    %2375 = vadd.xlane.f32.xlu0 %v2374
    %v2376 = vpop.xlane.xlu0 %2375
    %v2377 = vadd.f32 %v160, %v2376
    %v2378 = vrcp.pop 6.0
    %s2379 = vtos %v2378
    %s2380 = smul.f32 %s2225, %s2379
    %v2381 = vmul.f32 %v2292, 2.0
    %v2382 = vadd.f32 %v2251, %v2381
    %v2383 = vmul.f32 %v2327, 2.0
    %v2384 = vadd.f32 %v2382, %v2383
    %v2385 = vadd.f32 %v2384, %v2367
    %v2386 = vstv %s2380
    %v2387 = vmul.f32 %v2386, %v2385
    %v2388 = vadd.f32 %v2197, %v2387
    %v2389 = vmul.f32 %v2297, 2.0
    %v2390 = vadd.f32 %v2256, %v2389
    %v2391 = vmul.f32 %v2332, 2.0
    %v2392 = vadd.f32 %v2390, %v2391
    %v2393 = vadd.f32 %v2392, %v2372
    %v2394 = vmul.f32 %v2386, %v2393
    %v2395 = vadd.f32 %v2204, %v2394
    %v2396 = vmul.f32 %v2302, 2.0
    %v2397 = vadd.f32 %v2261, %v2396
    %v2398 = vmul.f32 %v2337, 2.0
    %v2399 = vadd.f32 %v2397, %v2398
    %v2400 = vadd.f32 %v2399, %v2377
    %v2401 = vmul.f32 %v2386, %v2400
    %v2402 = vadd.f32 %v2211, %v2401
    %s2403 = sadd.f32 %s2220, %s2225
    %v2404 = vstv %s2403
    %v2405 = vmul.f32 %v2404, %v73
    %v2406 = vadd.f32 %v66, %v2405
    %2408 = vset.pattern.permute.xlu0 0
    %2409 = vperm.xlu0 %2408, %v2388
    %v2410 = vpop.permute.xlu0 %2409
    %v2412 = vmul.f32 %v2410, %v86
    %v2413 = vadd.f32 %v2406, %v2412
    %2415 = vset.pattern.permute.xlu0 1
    %2416 = vperm.xlu0 %2415, %v2395
    %v2417 = vpop.permute.xlu0 %2416
    %v2419 = vmul.f32 %v2417, %v91
    %v2420 = vadd.f32 %v2413, %v2419
    %v2421 = vtanh.pop %v2420
    %v2422 = vmul.f32 %v2421, %v2421
    %v2423 = vmul.f32 %v2421, %v96
    %v2424 = vsel %vm144, %v2423, 0.0
    %2425 = vadd.xlane.f32.xlu0 %v2424
    %v2426 = vpop.xlane.xlu0 %2425
    %v2427 = vadd.f32 %v2426, %v148
    %v2428 = vmul.f32 %v2421, %v101
    %v2429 = vsel %vm144, %v2428, 0.0
    %2430 = vadd.xlane.f32.xlu0 %v2429
    %v2431 = vpop.xlane.xlu0 %2430
    %v2432 = vadd.f32 %v2431, %v154
    %v2433 = vmul.f32 %v2422, %v80
    %v2434 = vsel %vm144, %v2433, 0.0
    %2435 = vadd.xlane.f32.xlu0 %v2434
    %v2436 = vpop.xlane.xlu0 %2435
    %v2437 = vadd.f32 %v160, %v2436
    %v2438 = vmul.f32 %v2263, %v2427
    %v2439 = vadd.f32 %v2388, %v2438
    %v2440 = vmul.f32 %v2263, %v2432
    %v2441 = vadd.f32 %v2395, %v2440
    %s2442 = sadd.f32 %s2403, %s2262
    %v2443 = vstv %s2442
    %v2444 = vmul.f32 %v2443, %v73
    %v2445 = vadd.f32 %v66, %v2444
    %2447 = vset.pattern.permute.xlu0 0
    %2448 = vperm.xlu0 %2447, %v2439
    %v2449 = vpop.permute.xlu0 %2448
    %v2451 = vmul.f32 %v2449, %v86
    %v2452 = vadd.f32 %v2445, %v2451
    %2454 = vset.pattern.permute.xlu0 1
    %2455 = vperm.xlu0 %2454, %v2441
    %v2456 = vpop.permute.xlu0 %2455
    %v2458 = vmul.f32 %v2456, %v91
    %v2459 = vadd.f32 %v2452, %v2458
    %v2460 = vtanh.pop %v2459
    %v2461 = vmul.f32 %v2460, %v2460
    %v2462 = vmul.f32 %v2460, %v96
    %v2463 = vsel %vm144, %v2462, 0.0
    %2464 = vadd.xlane.f32.xlu0 %v2463
    %v2465 = vpop.xlane.xlu0 %2464
    %v2466 = vadd.f32 %v2465, %v148
    %v2467 = vmul.f32 %v2460, %v101
    %v2468 = vsel %vm144, %v2467, 0.0
    %2469 = vadd.xlane.f32.xlu0 %v2468
    %v2470 = vpop.xlane.xlu0 %2469
    %v2471 = vadd.f32 %v2470, %v154
    %v2472 = vmul.f32 %v2461, %v80
    %v2473 = vsel %vm144, %v2472, 0.0
    %2474 = vadd.xlane.f32.xlu0 %v2473
    %v2475 = vpop.xlane.xlu0 %2474
    %v2476 = vadd.f32 %v160, %v2475
    %v2477 = vmul.f32 %v2263, %v2466
    %v2478 = vadd.f32 %v2388, %v2477
    %v2479 = vmul.f32 %v2263, %v2471
    %v2480 = vadd.f32 %v2395, %v2479
    %2482 = vset.pattern.permute.xlu0 0
    %2483 = vperm.xlu0 %2482, %v2478
    %v2484 = vpop.permute.xlu0 %2483
    %v2486 = vmul.f32 %v2484, %v86
    %v2487 = vadd.f32 %v2445, %v2486
    %2489 = vset.pattern.permute.xlu0 1
    %2490 = vperm.xlu0 %2489, %v2480
    %v2491 = vpop.permute.xlu0 %2490
    %v2493 = vmul.f32 %v2491, %v91
    %v2494 = vadd.f32 %v2487, %v2493
    %v2495 = vtanh.pop %v2494
    %v2496 = vmul.f32 %v2495, %v2495
    %v2497 = vmul.f32 %v2495, %v96
    %v2498 = vsel %vm144, %v2497, 0.0
    %2499 = vadd.xlane.f32.xlu0 %v2498
    %v2500 = vpop.xlane.xlu0 %2499
    %v2501 = vadd.f32 %v2500, %v148
    %v2502 = vmul.f32 %v2495, %v101
    %v2503 = vsel %vm144, %v2502, 0.0
    %2504 = vadd.xlane.f32.xlu0 %v2503
    %v2505 = vpop.xlane.xlu0 %2504
    %v2506 = vadd.f32 %v2505, %v154
    %v2507 = vmul.f32 %v2496, %v80
    %v2508 = vsel %vm144, %v2507, 0.0
    %2509 = vadd.xlane.f32.xlu0 %v2508
    %v2510 = vpop.xlane.xlu0 %2509
    %v2511 = vadd.f32 %v160, %v2510
    %v2512 = vmul.f32 %v2338, %v2501
    %v2513 = vadd.f32 %v2388, %v2512
    %v2514 = vmul.f32 %v2338, %v2506
    %v2515 = vadd.f32 %v2395, %v2514
    %s2516 = sadd.f32 %s2403, %s2225
    %v2517 = vstv %s2516
    %v2518 = vmul.f32 %v2517, %v73
    %v2519 = vadd.f32 %v66, %v2518
    %2521 = vset.pattern.permute.xlu0 0
    %2522 = vperm.xlu0 %2521, %v2513
    %v2523 = vpop.permute.xlu0 %2522
    %v2525 = vmul.f32 %v2523, %v86
    %v2526 = vadd.f32 %v2519, %v2525
    %2528 = vset.pattern.permute.xlu0 1
    %2529 = vperm.xlu0 %2528, %v2515
    %v2530 = vpop.permute.xlu0 %2529
    %v2532 = vmul.f32 %v2530, %v91
    %v2533 = vadd.f32 %v2526, %v2532
    %v2534 = vtanh.pop %v2533
    %v2535 = vmul.f32 %v2534, %v2534
    %v2536 = vmul.f32 %v2534, %v96
    %v2537 = vsel %vm144, %v2536, 0.0
    %2538 = vadd.xlane.f32.xlu0 %v2537
    %v2539 = vpop.xlane.xlu0 %2538
    %v2540 = vadd.f32 %v2539, %v148
    %v2541 = vmul.f32 %v2534, %v101
    %v2542 = vsel %vm144, %v2541, 0.0
    %2543 = vadd.xlane.f32.xlu0 %v2542
    %v2544 = vpop.xlane.xlu0 %2543
    %v2545 = vadd.f32 %v2544, %v154
    %v2546 = vmul.f32 %v2535, %v80
    %v2547 = vsel %vm144, %v2546, 0.0
    %2548 = vadd.xlane.f32.xlu0 %v2547
    %v2549 = vpop.xlane.xlu0 %2548
    %v2550 = vadd.f32 %v160, %v2549
    %v2551 = vmul.f32 %v2466, 2.0
    %v2552 = vadd.f32 %v2427, %v2551
    %v2553 = vmul.f32 %v2501, 2.0
    %v2554 = vadd.f32 %v2552, %v2553
    %v2555 = vadd.f32 %v2554, %v2540
    %v2556 = vmul.f32 %v2386, %v2555
    %v2557 = vadd.f32 %v2388, %v2556
    %v2558 = vmul.f32 %v2471, 2.0
    %v2559 = vadd.f32 %v2432, %v2558
    %v2560 = vmul.f32 %v2506, 2.0
    %v2561 = vadd.f32 %v2559, %v2560
    %v2562 = vadd.f32 %v2561, %v2545
    %v2563 = vmul.f32 %v2386, %v2562
    %v2564 = vadd.f32 %v2395, %v2563
    %v2565 = vmul.f32 %v2476, 2.0
    %v2566 = vadd.f32 %v2437, %v2565
    %v2567 = vmul.f32 %v2511, 2.0
    %v2568 = vadd.f32 %v2566, %v2567
    %v2569 = vadd.f32 %v2568, %v2550
    %v2570 = vmul.f32 %v2386, %v2569
    %v2571 = vadd.f32 %v2402, %v2570
    %s2572 = smul.f32 %s2225, 2.0
    %s2573 = sadd.f32 %s2220, %s2572
    %v2574 = vstv %s2573
    %v2575 = vmul.f32 %v2574, %v73
    %v2576 = vadd.f32 %v66, %v2575
    %2578 = vset.pattern.permute.xlu0 0
    %2579 = vperm.xlu0 %2578, %v2557
    %v2580 = vpop.permute.xlu0 %2579
    %v2582 = vmul.f32 %v2580, %v86
    %v2583 = vadd.f32 %v2576, %v2582
    %2585 = vset.pattern.permute.xlu0 1
    %2586 = vperm.xlu0 %2585, %v2564
    %v2587 = vpop.permute.xlu0 %2586
    %v2589 = vmul.f32 %v2587, %v91
    %v2590 = vadd.f32 %v2583, %v2589
    %v2591 = vtanh.pop %v2590
    %v2592 = vmul.f32 %v2591, %v2591
    %v2593 = vmul.f32 %v2591, %v96
    %v2594 = vsel %vm144, %v2593, 0.0
    %2595 = vadd.xlane.f32.xlu0 %v2594
    %v2596 = vpop.xlane.xlu0 %2595
    %v2597 = vadd.f32 %v2596, %v148
    %v2598 = vmul.f32 %v2591, %v101
    %v2599 = vsel %vm144, %v2598, 0.0
    %2600 = vadd.xlane.f32.xlu0 %v2599
    %v2601 = vpop.xlane.xlu0 %2600
    %v2602 = vadd.f32 %v2601, %v154
    %v2603 = vmul.f32 %v2592, %v80
    %v2604 = vsel %vm144, %v2603, 0.0
    %2605 = vadd.xlane.f32.xlu0 %v2604
    %v2606 = vpop.xlane.xlu0 %2605
    %v2607 = vadd.f32 %v160, %v2606
    %v2608 = vmul.f32 %v2263, %v2597
    %v2609 = vadd.f32 %v2557, %v2608
    %v2610 = vmul.f32 %v2263, %v2602
    %v2611 = vadd.f32 %v2564, %v2610
    %s2612 = sadd.f32 %s2573, %s2262
    %v2613 = vstv %s2612
    %v2614 = vmul.f32 %v2613, %v73
    %v2615 = vadd.f32 %v66, %v2614
    %2617 = vset.pattern.permute.xlu0 0
    %2618 = vperm.xlu0 %2617, %v2609
    %v2619 = vpop.permute.xlu0 %2618
    %v2621 = vmul.f32 %v2619, %v86
    %v2622 = vadd.f32 %v2615, %v2621
    %2624 = vset.pattern.permute.xlu0 1
    %2625 = vperm.xlu0 %2624, %v2611
    %v2626 = vpop.permute.xlu0 %2625
    %v2628 = vmul.f32 %v2626, %v91
    %v2629 = vadd.f32 %v2622, %v2628
    %v2630 = vtanh.pop %v2629
    %v2631 = vmul.f32 %v2630, %v2630
    %v2632 = vmul.f32 %v2630, %v96
    %v2633 = vsel %vm144, %v2632, 0.0
    %2634 = vadd.xlane.f32.xlu0 %v2633
    %v2635 = vpop.xlane.xlu0 %2634
    %v2636 = vadd.f32 %v2635, %v148
    %v2637 = vmul.f32 %v2630, %v101
    %v2638 = vsel %vm144, %v2637, 0.0
    %2639 = vadd.xlane.f32.xlu0 %v2638
    %v2640 = vpop.xlane.xlu0 %2639
    %v2641 = vadd.f32 %v2640, %v154
    %v2642 = vmul.f32 %v2631, %v80
    %v2643 = vsel %vm144, %v2642, 0.0
    %2644 = vadd.xlane.f32.xlu0 %v2643
    %v2645 = vpop.xlane.xlu0 %2644
    %v2646 = vadd.f32 %v160, %v2645
    %v2647 = vmul.f32 %v2263, %v2636
    %v2648 = vadd.f32 %v2557, %v2647
    %v2649 = vmul.f32 %v2263, %v2641
    %v2650 = vadd.f32 %v2564, %v2649
    %2652 = vset.pattern.permute.xlu0 0
    %2653 = vperm.xlu0 %2652, %v2648
    %v2654 = vpop.permute.xlu0 %2653
    %v2656 = vmul.f32 %v2654, %v86
    %v2657 = vadd.f32 %v2615, %v2656
    %2659 = vset.pattern.permute.xlu0 1
    %2660 = vperm.xlu0 %2659, %v2650
    %v2661 = vpop.permute.xlu0 %2660
    %v2663 = vmul.f32 %v2661, %v91
    %v2664 = vadd.f32 %v2657, %v2663
    %v2665 = vtanh.pop %v2664
    %v2666 = vmul.f32 %v2665, %v2665
    %v2667 = vmul.f32 %v2665, %v96
    %v2668 = vsel %vm144, %v2667, 0.0
    %2669 = vadd.xlane.f32.xlu0 %v2668
    %v2670 = vpop.xlane.xlu0 %2669
    %v2671 = vadd.f32 %v2670, %v148
    %v2672 = vmul.f32 %v2665, %v101
    %v2673 = vsel %vm144, %v2672, 0.0
    %2674 = vadd.xlane.f32.xlu0 %v2673
    %v2675 = vpop.xlane.xlu0 %2674
    %v2676 = vadd.f32 %v2675, %v154
    %v2677 = vmul.f32 %v2666, %v80
    %v2678 = vsel %vm144, %v2677, 0.0
    %2679 = vadd.xlane.f32.xlu0 %v2678
    %v2680 = vpop.xlane.xlu0 %2679
    %v2681 = vadd.f32 %v160, %v2680
    %v2682 = vmul.f32 %v2338, %v2671
    %v2683 = vadd.f32 %v2557, %v2682
    %v2684 = vmul.f32 %v2338, %v2676
    %v2685 = vadd.f32 %v2564, %v2684
    %s2686 = sadd.f32 %s2573, %s2225
    %v2687 = vstv %s2686
    %v2688 = vmul.f32 %v2687, %v73
    %v2689 = vadd.f32 %v66, %v2688
    %2691 = vset.pattern.permute.xlu0 0
    %2692 = vperm.xlu0 %2691, %v2683
    %v2693 = vpop.permute.xlu0 %2692
    %v2695 = vmul.f32 %v2693, %v86
    %v2696 = vadd.f32 %v2689, %v2695
    %2698 = vset.pattern.permute.xlu0 1
    %2699 = vperm.xlu0 %2698, %v2685
    %v2700 = vpop.permute.xlu0 %2699
    %v2702 = vmul.f32 %v2700, %v91
    %v2703 = vadd.f32 %v2696, %v2702
    %v2704 = vtanh.pop %v2703
    %v2705 = vmul.f32 %v2704, %v2704
    %v2706 = vmul.f32 %v2704, %v96
    %v2707 = vsel %vm144, %v2706, 0.0
    %2708 = vadd.xlane.f32.xlu0 %v2707
    %v2709 = vpop.xlane.xlu0 %2708
    %v2710 = vadd.f32 %v2709, %v148
    %v2711 = vmul.f32 %v2704, %v101
    %v2712 = vsel %vm144, %v2711, 0.0
    %2713 = vadd.xlane.f32.xlu0 %v2712
    %v2714 = vpop.xlane.xlu0 %2713
    %v2715 = vadd.f32 %v2714, %v154
    %v2716 = vmul.f32 %v2705, %v80
    %v2717 = vsel %vm144, %v2716, 0.0
    %2718 = vadd.xlane.f32.xlu0 %v2717
    %v2719 = vpop.xlane.xlu0 %2718
    %v2720 = vadd.f32 %v160, %v2719
    %v2721 = vmul.f32 %v2636, 2.0
    %v2722 = vadd.f32 %v2597, %v2721
    %v2723 = vmul.f32 %v2671, 2.0
    %v2724 = vadd.f32 %v2722, %v2723
    %v2725 = vadd.f32 %v2724, %v2710
    %v2726 = vmul.f32 %v2386, %v2725
    %v2727 = vadd.f32 %v2557, %v2726
    %v2728 = vmul.f32 %v2641, 2.0
    %v2729 = vadd.f32 %v2602, %v2728
    %v2730 = vmul.f32 %v2676, 2.0
    %v2731 = vadd.f32 %v2729, %v2730
    %v2732 = vadd.f32 %v2731, %v2715
    %v2733 = vmul.f32 %v2386, %v2732
    %v2734 = vadd.f32 %v2564, %v2733
    %v2735 = vmul.f32 %v2646, 2.0
    %v2736 = vadd.f32 %v2607, %v2735
    %v2737 = vmul.f32 %v2681, 2.0
    %v2738 = vadd.f32 %v2736, %v2737
    %v2739 = vadd.f32 %v2738, %v2720
    %v2740 = vmul.f32 %v2386, %v2739
    %v2741 = vadd.f32 %v2571, %v2740
    %s2742 = smul.f32 %s2225, 3.0
    %s2743 = sadd.f32 %s2220, %s2742
    %v2744 = vstv %s2743
    %v2745 = vmul.f32 %v2744, %v73
    %v2746 = vadd.f32 %v66, %v2745
    %2748 = vset.pattern.permute.xlu0 0
    %2749 = vperm.xlu0 %2748, %v2727
    %v2750 = vpop.permute.xlu0 %2749
    %v2752 = vmul.f32 %v2750, %v86
    %v2753 = vadd.f32 %v2746, %v2752
    %2755 = vset.pattern.permute.xlu0 1
    %2756 = vperm.xlu0 %2755, %v2734
    %v2757 = vpop.permute.xlu0 %2756
    %v2759 = vmul.f32 %v2757, %v91
    %v2760 = vadd.f32 %v2753, %v2759
    %v2761 = vtanh.pop %v2760
    %v2762 = vmul.f32 %v2761, %v2761
    %v2763 = vmul.f32 %v2761, %v96
    %v2764 = vsel %vm144, %v2763, 0.0
    %2765 = vadd.xlane.f32.xlu0 %v2764
    %v2766 = vpop.xlane.xlu0 %2765
    %v2767 = vadd.f32 %v2766, %v148
    %v2768 = vmul.f32 %v2761, %v101
    %v2769 = vsel %vm144, %v2768, 0.0
    %2770 = vadd.xlane.f32.xlu0 %v2769
    %v2771 = vpop.xlane.xlu0 %2770
    %v2772 = vadd.f32 %v2771, %v154
    %v2773 = vmul.f32 %v2762, %v80
    %v2774 = vsel %vm144, %v2773, 0.0
    %2775 = vadd.xlane.f32.xlu0 %v2774
    %v2776 = vpop.xlane.xlu0 %2775
    %v2777 = vadd.f32 %v160, %v2776
    %v2778 = vmul.f32 %v2263, %v2767
    %v2779 = vadd.f32 %v2727, %v2778
    %v2780 = vmul.f32 %v2263, %v2772
    %v2781 = vadd.f32 %v2734, %v2780
    %s2782 = sadd.f32 %s2743, %s2262
    %v2783 = vstv %s2782
    %v2784 = vmul.f32 %v2783, %v73
    %v2785 = vadd.f32 %v66, %v2784
    %2787 = vset.pattern.permute.xlu0 0
    %2788 = vperm.xlu0 %2787, %v2779
    %v2789 = vpop.permute.xlu0 %2788
    %v2791 = vmul.f32 %v2789, %v86
    %v2792 = vadd.f32 %v2785, %v2791
    %2794 = vset.pattern.permute.xlu0 1
    %2795 = vperm.xlu0 %2794, %v2781
    %v2796 = vpop.permute.xlu0 %2795
    %v2798 = vmul.f32 %v2796, %v91
    %v2799 = vadd.f32 %v2792, %v2798
    %v2800 = vtanh.pop %v2799
    %v2801 = vmul.f32 %v2800, %v2800
    %v2802 = vmul.f32 %v2800, %v96
    %v2803 = vsel %vm144, %v2802, 0.0
    %2804 = vadd.xlane.f32.xlu0 %v2803
    %v2805 = vpop.xlane.xlu0 %2804
    %v2806 = vadd.f32 %v2805, %v148
    %v2807 = vmul.f32 %v2800, %v101
    %v2808 = vsel %vm144, %v2807, 0.0
    %2809 = vadd.xlane.f32.xlu0 %v2808
    %v2810 = vpop.xlane.xlu0 %2809
    %v2811 = vadd.f32 %v2810, %v154
    %v2812 = vmul.f32 %v2801, %v80
    %v2813 = vsel %vm144, %v2812, 0.0
    %2814 = vadd.xlane.f32.xlu0 %v2813
    %v2815 = vpop.xlane.xlu0 %2814
    %v2816 = vadd.f32 %v160, %v2815
    %v2817 = vmul.f32 %v2263, %v2806
    %v2818 = vadd.f32 %v2727, %v2817
    %v2819 = vmul.f32 %v2263, %v2811
    %v2820 = vadd.f32 %v2734, %v2819
    %2822 = vset.pattern.permute.xlu0 0
    %2823 = vperm.xlu0 %2822, %v2818
    %v2824 = vpop.permute.xlu0 %2823
    %v2826 = vmul.f32 %v2824, %v86
    %v2827 = vadd.f32 %v2785, %v2826
    %2829 = vset.pattern.permute.xlu0 1
    %2830 = vperm.xlu0 %2829, %v2820
    %v2831 = vpop.permute.xlu0 %2830
    %v2833 = vmul.f32 %v2831, %v91
    %v2834 = vadd.f32 %v2827, %v2833
    %v2835 = vtanh.pop %v2834
    %v2836 = vmul.f32 %v2835, %v2835
    %v2837 = vmul.f32 %v2835, %v96
    %v2838 = vsel %vm144, %v2837, 0.0
    %2839 = vadd.xlane.f32.xlu0 %v2838
    %v2840 = vpop.xlane.xlu0 %2839
    %v2841 = vadd.f32 %v2840, %v148
    %v2842 = vmul.f32 %v2835, %v101
    %v2843 = vsel %vm144, %v2842, 0.0
    %2844 = vadd.xlane.f32.xlu0 %v2843
    %v2845 = vpop.xlane.xlu0 %2844
    %v2846 = vadd.f32 %v2845, %v154
    %v2847 = vmul.f32 %v2836, %v80
    %v2848 = vsel %vm144, %v2847, 0.0
    %2849 = vadd.xlane.f32.xlu0 %v2848
    %v2850 = vpop.xlane.xlu0 %2849
    %v2851 = vadd.f32 %v160, %v2850
    %v2852 = vmul.f32 %v2338, %v2841
    %v2853 = vadd.f32 %v2727, %v2852
    %v2854 = vmul.f32 %v2338, %v2846
    %v2855 = vadd.f32 %v2734, %v2854
    %s2856 = sadd.f32 %s2743, %s2225
    %v2857 = vstv %s2856
    %v2858 = vmul.f32 %v2857, %v73
    %v2859 = vadd.f32 %v66, %v2858
    %2861 = vset.pattern.permute.xlu0 0
    %2862 = vperm.xlu0 %2861, %v2853
    %v2863 = vpop.permute.xlu0 %2862
    %v2865 = vmul.f32 %v2863, %v86
    %v2866 = vadd.f32 %v2859, %v2865
    %2868 = vset.pattern.permute.xlu0 1
    %2869 = vperm.xlu0 %2868, %v2855
    %v2870 = vpop.permute.xlu0 %2869
    %v2872 = vmul.f32 %v2870, %v91
    %v2873 = vadd.f32 %v2866, %v2872
    %v2874 = vtanh.pop %v2873
    %v2875 = vmul.f32 %v2874, %v2874
    %v2876 = vmul.f32 %v2874, %v96
    %v2877 = vsel %vm144, %v2876, 0.0
    %2878 = vadd.xlane.f32.xlu0 %v2877
    %v2879 = vpop.xlane.xlu0 %2878
    %v2880 = vadd.f32 %v2879, %v148
    %v2881 = vmul.f32 %v2874, %v101
    %v2882 = vsel %vm144, %v2881, 0.0
    %2883 = vadd.xlane.f32.xlu0 %v2882
    %v2884 = vpop.xlane.xlu0 %2883
    %v2885 = vadd.f32 %v2884, %v154
    %v2886 = vmul.f32 %v2875, %v80
    %v2887 = vsel %vm144, %v2886, 0.0
    %2888 = vadd.xlane.f32.xlu0 %v2887
    %v2889 = vpop.xlane.xlu0 %2888
    %v2890 = vadd.f32 %v160, %v2889
    %v2891 = vmul.f32 %v2806, 2.0
    %v2892 = vadd.f32 %v2767, %v2891
    %v2893 = vmul.f32 %v2841, 2.0
    %v2894 = vadd.f32 %v2892, %v2893
    %v2895 = vadd.f32 %v2894, %v2880
    %v2896 = vmul.f32 %v2386, %v2895
    %v2897 = vadd.f32 %v2727, %v2896
    %v2898 = vmul.f32 %v2811, 2.0
    %v2899 = vadd.f32 %v2772, %v2898
    %v2900 = vmul.f32 %v2846, 2.0
    %v2901 = vadd.f32 %v2899, %v2900
    %v2902 = vadd.f32 %v2901, %v2885
    %v2903 = vmul.f32 %v2386, %v2902
    %v2904 = vadd.f32 %v2734, %v2903
    %v2905 = vmul.f32 %v2816, 2.0
    %v2906 = vadd.f32 %v2777, %v2905
    %v2907 = vmul.f32 %v2851, 2.0
    %v2908 = vadd.f32 %v2906, %v2907
    %v2909 = vadd.f32 %v2908, %v2890
    %v2910 = vmul.f32 %v2386, %v2909
    %v2911 = vadd.f32 %v2741, %v2910
    %2913 = vrot.lane.b32.xlu0 %v2911, 2
    %v2914 = vpop.permute.xlu0 %2913
    %v2916 = vsel %vm112, %v2897, %v2904
    %v2917 = vsel %vm113, %v2916, %v2914
    %s2918 = scalar_lea.vmem %s10, 32
    %2919 = vst.msk [vmem:[%s2918] sm:$0xff] %vm115, %v2917
    // Predicated region
    $region50: #{tpu_custom_call.1} parent=1 // pred_check
      _
    $region51: #{tpu_custom_call.1} parent=1 // pred_check_branch
      %2921 = sbr.rel (0) target = $region53
    $region52: #{tpu_custom_call.1} parent=1 // pred_region
      _
    $region53: #{tpu_custom_call.1} parent=1 // pred_fallthru
      _
    // Predicated region
    $region54: #{tpu_custom_call.1} parent=1 // pred_check
      _
    $region55: #{tpu_custom_call.1} parent=1 // pred_check_branch
      %2923 = sbr.rel (0) target = $region57
    $region56: #{tpu_custom_call.1} parent=1 // pred_region
      _
    $region57: #{tpu_custom_call.1} parent=1 // pred_fallthru
      _
    %2924 = vsyncpa [#allocation4], 1
    %2925 = vsyncpa [#allocation6], 1

</llo_original>
